<compile_context>
chip_gen: v7x
topology: tpu7x:2x2x1
jax: 0.10.0
libtpu: 0.0.40
codegen_flags: <defaults>
</compile_context>

<pallas_src>
import functools
import math

import jax
import jax.numpy as jnp
import numpy as np
from jax.experimental import pallas as pl
from jax.experimental.pallas import tpu as pltpu


# --------------------------- in-kernel math helpers --------------------------
def _erf(x):
    # Abramowitz & Stegun 7.1.26 polynomial (|err| < 1.5e-7); divide goes to the EUP.
    a1, a2, a3, a4, a5 = (0.254829592, -0.284496736, 1.421413741,
                          -1.453152027, 1.061405429)
    p = 0.3275911
    sgn = jnp.where(x >= 0.0, 1.0, -1.0)
    z = jnp.abs(x)
    t = pl.reciprocal(1.0 + p * z, approx=True)
    poly = ((((a5 * t + a4) * t + a3) * t + a2) * t + a1) * t
    return sgn * (1.0 - poly * jnp.exp(-z * z))


def _gelu(x):
    # exact (erf-based) GELU to match torch.nn.GELU() default.
    return 0.5 * x * (1.0 + _erf(x * (1.0 / math.sqrt(2.0))))


def _group_norm(x, gamma, beta, gavg, eps=1e-5):
    """GroupNorm of one sample on a channel-major [C, HW] f32 slab.

    gamma/beta are (C, 1) columns.  gavg is a precomputed (C, C) matrix with
    gavg[i, j] = 1/(HW*cpg) when channels i, j share a group (else 0), so one
    (C,C)@(C,2) dot turns per-channel [sum, sum-of-squares] into group means.
    """
    s = jnp.sum(x, axis=1, keepdims=True)                       # (C, 1)
    ss = jnp.sum(x * x, axis=1, keepdims=True)                  # (C, 1)
    g = jnp.dot(gavg, jnp.concatenate([s, ss], axis=1),
                preferred_element_type=jnp.float32)             # (C, 2)
    mean = g[:, 0:1]
    # NOTE: single-pass E[x^2]-E[x]^2 in f32; fine at these scales/tolerance.
    inv = jax.lax.rsqrt(g[:, 1:2] - mean * mean + eps)
    return (x - mean) * (inv * gamma) + beta


def _shift_lanes(x, off, hw):
    """out[:, p] = x[:, p + off] when 0 <= p + off < hw, else 0 (zero fill)."""
    if off == 0:
        return x
    c = x.shape[0]
    z = jnp.zeros((c, abs(off)), x.dtype)
    if off > 0:
        return jnp.concatenate([x[:, off:], z], axis=1)
    return jnp.concatenate([z, x[:, :hw + off]], axis=1)


def _conv3x3(h, w9_ref, cmask_ref, hw, ww):
    """3x3 / pad=1 conv on a channel-major (Cin, HW) f32 slab -> (Cout, HW) f32.

    Nine accumulating bf16 (Cout,Cin)@(Cin,HW) matmuls on lane-shifted activation
    copies: the slab-end zero fill of _shift_lanes handles the top/bottom image
    border, the two precomputed column masks handle the left/right border.
    """
    cout = w9_ref.shape[1]
    h_r = h * cmask_ref[0:1, :]        # source for dx = +1 (w == 0 column zeroed)
    h_l = h * cmask_ref[1:2, :]        # source for dx = -1 (w == W-1 column zeroed)
    src = {-1: h_l, 0: h, 1: h_r}
    acc = jnp.zeros((cout, hw), jnp.float32)
    k = 0
    for dy in (-1, 0, 1):
        for dx in (-1, 0, 1):
            xs = _shift_lanes(src[dx], dy * ww + dx, hw).astype(jnp.bfloat16)
            acc = acc + jnp.dot(w9_ref[k], xs, preferred_element_type=jnp.float32)
            k += 1
    return acc


# ------------------------------- fused kernel --------------------------------
def _upblock_kernel(*refs, ww, n_heads, dim_head, has_res, has_attn):
    (x_ref, tcb_ref, cmask_ref,
     g1_ref, b1_ref, a1_ref, w1_ref,
     g2_ref, b2_ref, a2_ref, w2_ref, cb2_ref) = refs[:12]
    pos = 12
    if has_res:
        rw_ref, rb_ref = refs[pos:pos + 2]
        pos += 2
    if has_attn:
        (ga_ref, ba_ref, aat_ref, wk_ref, bk_ref, wqt_ref, bq_ref,
         wvt_ref, bv_ref, wot_ref, bo_ref) = refs[pos:pos + 11]
        pos += 11
    o_ref = refs[pos]

    hw = x_ref.shape[-1]
    bf16 = jnp.bfloat16
    x2 = x_ref[0]                                                # (Cin, HW) f32

    # ---- ConvResBlock stage 1: h1 = conv1(gelu(gn1(x))) + (time_emb + conv1 bias) ----
    h = _gelu(_group_norm(x2, g1_ref[...], b1_ref[...], a1_ref[...]))
    h1 = _conv3x3(h, w1_ref, cmask_ref, hw, ww) + tcb_ref[0]     # (Cout, HW)

    # ---- ConvResBlock stage 2: out = conv2(gelu(gn2(h1))) + res(x) ----
    h1n = _gelu(_group_norm(h1, g2_ref[...], b2_ref[...], a2_ref[...]))
    # TODO(synk): nn.Dropout(0.1) is identity in eval mode; training-mode dropout not implemented.
    h2 = _conv3x3(h1n, w2_ref, cmask_ref, hw, ww) + cb2_ref[...]
    if has_res:
        h2 = h2 + jnp.dot(rw_ref[...], x2.astype(bf16),
                          preferred_element_type=jnp.float32) + rb_ref[...]
    else:
        h2 = h2 + x2                                             # nn.Identity residual

    # ---- AttentionBlock (optional): out = to_out(softmax(q k^T * scale) v) + h2 ----
    if has_attn:
        cout = h2.shape[0]
        hn = _group_norm(h2, ga_ref[...], ba_ref[...], aat_ref[...])     # (Cout, HW) f32
        hnb = hn.astype(bf16)                                            # (Cout, HW)
        hnt = hn.T.astype(bf16)                                          # (HW, Cout)
        # K stays channel-major; Q (scale pre-folded in the wrapper) and V are produced
        # transposed so the score and PV matmuls are in natural MXU orientation.
        k_all = (jnp.dot(wk_ref[...], hnb, preferred_element_type=jnp.float32)
                 + bk_ref[...]).astype(bf16)                             # (HD, HW)
        qt_all = (jnp.dot(hnt, wqt_ref[...], preferred_element_type=jnp.float32)
                  + bq_ref[...]).astype(bf16)                            # (HW, HD)
        vt_all = (jnp.dot(hnt, wvt_ref[...], preferred_element_type=jnp.float32)
                  + bv_ref[...]).astype(bf16)                            # (HW, HD)

        qblk = 128 if (hw % 128 == 0 and hw > 128) else hw
        blocks = []
        for q0 in range(0, hw, qblk):            # blocked softmax: live S tile <= 32 vregs
            acc = jnp.zeros((qblk, cout), jnp.float32)
            qt_blk = qt_all[q0:q0 + qblk, :]                             # sublane slice
            for head in range(n_heads):
                lo = head * dim_head
                s = jnp.dot(qt_blk[:, lo:lo + dim_head], k_all[lo:lo + dim_head, :],
                            preferred_element_type=jnp.float32)          # (qblk, HW)
                s = s - jnp.max(s, axis=-1, keepdims=True)
                p = jnp.exp(s)
                p = (p * pl.reciprocal(jnp.sum(p, axis=-1, keepdims=True),
                                       approx=True)).astype(bf16)
                o_t = jnp.dot(p, vt_all[:, lo:lo + dim_head],
                              preferred_element_type=jnp.float32)        # (qblk, dh)
                # per-head accumulation of the output projection against a
                # sublane-aligned weight slice (no 4x32 -> 128 lane concat).
                acc = acc + jnp.dot(o_t.astype(bf16), wot_ref[lo:lo + dim_head, :],
                                    preferred_element_type=jnp.float32)  # (qblk, Cout)
            blocks.append(acc)
        attn = blocks[0] if len(blocks) == 1 else jnp.concatenate(blocks, axis=0)
        h2 = h2 + attn.T + bo_ref[...]

    o_ref[0] = h2                                                # lane-dense (Cout, HW) store


# --------------------------------- wrapper -----------------------------------
def _full(shape):
    nd = len(shape)
    return pl.BlockSpec(shape, lambda b, _nd=nd: (0,) * _nd)


def _group_avg_matrix(c, n_groups, hw):
    cpg = c // n_groups
    g = np.arange(c) // cpg
    m = (g[:, None] == g[None, :]).astype(np.float32) / float(hw * cpg)
    return jnp.asarray(m)


def _gelu_ref(x):
    return 0.5 * x * (1.0 + jax.scipy.special.erf(x / math.sqrt(2.0)))


def upblock_forward(x_nchw, t, params, *, n_groups=8, n_heads=4, dim_head=32,
                    has_attn=True, attn_n_groups=8):
    B, Cin, H, W = x_nchw.shape
    Cout = params["conv1_w"].shape[0]
    HW = H * W
    HD = n_heads * dim_head
    has_res = (Cin != Cout)
    bf16, f32 = jnp.bfloat16, jnp.float32
    col_vec = lambda v: v.reshape(-1, 1).astype(f32)

    # channel-major activations: NCHW -> (B, C, HW); no HBM transpose needed.
    x = x_nchw.reshape(B, Cin, HW).astype(f32)

    # time embedding Linear(GELU(t)) + conv1 bias, hoisted out of the kernel: (B, Cout, 1)
    tcb = (_gelu_ref(t.astype(f32)) @ params["time_w"].T + params["time_b"]
           + params["conv1_b"]).reshape(B, Cout, 1)

    # left/right image-edge column masks for the lane-shifted conv inputs.
    col = np.arange(HW) % W
    cmask = jnp.asarray(np.stack([(col != 0), (col != W - 1)]).astype(np.float32))

    g1, b1 = col_vec(params["gn1_g"]), col_vec(params["gn1_b"])
    a1 = _group_avg_matrix(Cin, n_groups, HW)
    w1 = jnp.transpose(params["conv1_w"], (2, 3, 0, 1)).reshape(9, Cout, Cin).astype(bf16)
    g2, b2 = col_vec(params["gn2_g"]), col_vec(params["gn2_b"])
    a2 = _group_avg_matrix(Cout, n_groups, HW)
    w2 = jnp.transpose(params["conv2_w"], (2, 3, 0, 1)).reshape(9, Cout, Cout).astype(bf16)
    cb2 = col_vec(params["conv2_b"])

    inputs = [x, tcb, cmask, g1, b1, a1, w1, g2, b2, a2, w2, cb2]
    in_specs = [
        pl.BlockSpec((1, Cin, HW), lambda b: (b, 0, 0)),
        pl.BlockSpec((1, Cout, 1), lambda b: (b, 0, 0)),
        _full((2, HW)),
        _full((Cin, 1)), _full((Cin, 1)), _full((Cin, Cin)), _full((9, Cout, Cin)),
        _full((Cout, 1)), _full((Cout, 1)), _full((Cout, Cout)), _full((9, Cout, Cout)),
        _full((Cout, 1)),
    ]

    if has_res:
        inputs += [params["res_w"][:, :, 0, 0].astype(bf16), col_vec(params["res_b"])]
        in_specs += [_full((Cout, Cin)), _full((Cout, 1))]

    if has_attn:
        scale = dim_head ** -0.5
        qw, qb = params["attn_qkv_w"], params["attn_qkv_b"]      # (3*HD, Cout), (3*HD,)
        # torch packs qkv per head as [q|k|v]; split into per-role row sets.
        idx = np.arange(n_heads)[:, None] * (3 * dim_head) + np.arange(dim_head)[None, :]
        q_rows = idx.reshape(-1)
        k_rows = (idx + dim_head).reshape(-1)
        v_rows = (idx + 2 * dim_head).reshape(-1)
        ga, ba = col_vec(params["attn_gn_g"]), col_vec(params["attn_gn_b"])
        aat = _group_avg_matrix(Cout, attn_n_groups, HW)   # AttentionBlock default n_groups=8
        inputs += [
            ga, ba, aat,
            qw[k_rows].astype(bf16), col_vec(qb[k_rows]),            # K: channel-major
            (qw[q_rows] * scale).T.astype(bf16),                     # Q^T (scale folded)
            (qb[q_rows] * scale).reshape(1, HD).astype(f32),
            qw[v_rows].T.astype(bf16), qb[v_rows].reshape(1, HD).astype(f32),  # V^T
            params["attn_out_w"].T.astype(bf16), col_vec(params["attn_out_b"]),
        ]
        in_specs += [_full((Cout, 1)), _full((Cout, 1)), _full((Cout, Cout)),
                     _full((HD, Cout)), _full((HD, 1)),
                     _full((Cout, HD)), _full((1, HD)),
                     _full((Cout, HD)), _full((1, HD)),
                     _full((HD, Cout)), _full((Cout, 1))]

    out = pl.pallas_call(
        functools.partial(_upblock_kernel, ww=W, n_heads=n_heads,
                          dim_head=dim_head, has_res=has_res, has_attn=has_attn),
        out_shape=jax.ShapeDtypeStruct((B, Cout, HW), jnp.float32),
        grid=(B,),
        in_specs=in_specs,
        out_specs=pl.BlockSpec((1, Cout, HW), lambda b: (b, 0, 0)),
        compiler_params=pltpu.CompilerParams(
            dimension_semantics=("parallel",)),     # batch axis independent (v7x 2 TCs)
    )(*inputs)

    return out.reshape(B, Cout, H, W)                            # NCHW, no transpose


# ----------------------------- pure-JAX reference ----------------------------
def _group_norm_ref(x, gamma, beta, n_groups, eps=1e-5):
    B, C, H, W = x.shape
    xg = x.reshape(B, n_groups, C // n_groups, H, W)
    mean = xg.mean(axis=(2, 3, 4), keepdims=True)
    var = ((xg - mean) ** 2).mean(axis=(2, 3, 4), keepdims=True)
    xn = ((xg - mean) / jnp.sqrt(var + eps)).reshape(B, C, H, W)
    return xn * gamma[None, :, None, None] + beta[None, :, None, None]


def _conv_ref(x, w, b, pad):
    y = jax.lax.conv_general_dilated(
        x, w, window_strides=(1, 1), padding=((pad, pad), (pad, pad)),
        dimension_numbers=("NCHW", "OIHW", "NCHW"))
    return y + b[None, :, None, None]


def upblock_ref(x, t, p, *, n_groups=8, n_heads=4, dim_head=32, has_attn=True):
    B, Cin, H, W = x.shape
    Cout = p["conv1_w"].shape[0]
    h = _gelu_ref(_group_norm_ref(x, p["gn1_g"], p["gn1_b"], n_groups))
    h = _conv_ref(h, p["conv1_w"], p["conv1_b"], 1)
    temb = _gelu_ref(t) @ p["time_w"].T + p["time_b"]
    h = h + temb[:, :, None, None]
    h = _gelu_ref(_group_norm_ref(h, p["gn2_g"], p["gn2_b"], n_groups))
    h = _conv_ref(h, p["conv2_w"], p["conv2_b"], 1)
    res = _conv_ref(x, p["res_w"], p["res_b"], 0) if Cin != Cout else x
    h = h + res
    if not has_attn:
        return h
    C = h.shape[1]
    hn = _group_norm_ref(h, p["attn_gn_g"], p["attn_gn_b"], 8)
    hn = hn.reshape(B, C, H * W).transpose(0, 2, 1)
    qkv = hn @ p["attn_qkv_w"].T + p["attn_qkv_b"]
    qkv = qkv.reshape(B, H * W, n_heads, 3 * dim_head)
    q = qkv[..., :dim_head]
    k = qkv[..., dim_head:2 * dim_head]
    v = qkv[..., 2 * dim_head:]
    attn = jnp.einsum("bihd,bjhd->bijh", q, k) * (dim_head ** -0.5)
    attn = jax.nn.softmax(attn, axis=2)
    out = jnp.einsum("bijh,bjhd->bihd", attn, v)
    out = out.reshape(B, H * W, n_heads * dim_head)
    out = out @ p["attn_out_w"].T + p["attn_out_b"]
    out = out.transpose(0, 2, 1).reshape(B, C, H, W)
    return out + h


# ------------------------------- params & main --------------------------------
def init_params(key, in_dim, out_dim, time_dim, n_heads, dim_head):
    ks = jax.random.split(key, 16)
    nrm = lambda k, s, sc: jax.random.normal(k, s, jnp.float32) * sc
    qkv_dim = 3 * n_heads * dim_head
    return {
        "gn1_g": 1.0 + 0.1 * nrm(ks[0], (in_dim,), 1.0),
        "gn1_b": 0.1 * nrm(ks[1], (in_dim,), 1.0),
        "conv1_w": nrm(ks[2], (out_dim, in_dim, 3, 3), 1.0 / math.sqrt(in_dim * 9)),
        "conv1_b": 0.05 * nrm(ks[3], (out_dim,), 1.0),
        "time_w": nrm(ks[4], (out_dim, time_dim), 1.0 / math.sqrt(time_dim)),
        "time_b": 0.05 * nrm(ks[5], (out_dim,), 1.0),
        "gn2_g": 1.0 + 0.1 * nrm(ks[6], (out_dim,), 1.0),
        "gn2_b": 0.1 * nrm(ks[7], (out_dim,), 1.0),
        "conv2_w": nrm(ks[8], (out_dim, out_dim, 3, 3), 1.0 / math.sqrt(out_dim * 9)),
        "conv2_b": 0.05 * nrm(ks[9], (out_dim,), 1.0),
        "res_w": nrm(ks[10], (out_dim, in_dim, 1, 1), 1.0 / math.sqrt(in_dim)),
        "res_b": 0.05 * nrm(ks[11], (out_dim,), 1.0),
        "attn_gn_g": 1.0 + 0.1 * nrm(ks[12], (out_dim,), 1.0),
        "attn_gn_b": 0.1 * nrm(ks[13], (out_dim,), 1.0),
        "attn_qkv_w": nrm(ks[14], (qkv_dim, out_dim), 1.0 / math.sqrt(out_dim)),
        "attn_qkv_b": jnp.zeros((qkv_dim,), jnp.float32),
        "attn_out_w": nrm(ks[15], (out_dim, n_heads * dim_head),
                          1.0 / math.sqrt(n_heads * dim_head)),
        "attn_out_b": jnp.zeros((out_dim,), jnp.float32),
    }


if __name__ == "__main__":
    B, Cin, Cout, H, W, Td = 2, 16, 32, 16, 16, 32
    n_groups, n_heads, dim_head = 8, 4, 32

    key = jax.random.PRNGKey(0)
    kx, kt, kp = jax.random.split(key, 3)
    x = jax.random.normal(kx, (B, Cin, H, W), jnp.float32)   # PyTorch NCHW input
    t = jax.random.normal(kt, (B, Td), jnp.float32)
    params = init_params(kp, Cin, Cout, Td, n_heads, dim_head)

    out = upblock_forward(x, t, params, n_groups=n_groups, n_heads=n_heads,
                          dim_head=dim_head, has_attn=True)
    out = jax.block_until_ready(out)

    ref = upblock_ref(x, t, params, n_groups=n_groups, n_heads=n_heads,
                      dim_head=dim_head, has_attn=True)
    assert out.shape == (B, Cout, H, W)
    # bf16 MXU operands (f32 accumulation) -> compare at bf16-level tolerance.
    np.testing.assert_allclose(np.asarray(out), np.asarray(ref),
                               atol=3e-2, rtol=3e-2)
    print("KERNEL_OK")
</pallas_src>

<mosaic_0001>
module attributes {stable_mosaic.version = 11 : i64} {
  func.func @_upblock_kernel(%arg0: i32, %arg1: memref<1x16x256xf32, #tpu.memory_space<vmem>>, %arg2: memref<1x32x1xf32, #tpu.memory_space<vmem>>, %arg3: memref<2x256xf32, #tpu.memory_space<vmem>>, %arg4: memref<16x1xf32, #tpu.memory_space<vmem>>, %arg5: memref<16x1xf32, #tpu.memory_space<vmem>>, %arg6: memref<16x16xf32, #tpu.memory_space<vmem>>, %arg7: memref<9x32x16xbf16, #tpu.memory_space<vmem>>, %arg8: memref<32x1xf32, #tpu.memory_space<vmem>>, %arg9: memref<32x1xf32, #tpu.memory_space<vmem>>, %arg10: memref<32x32xf32, #tpu.memory_space<vmem>>, %arg11: memref<9x32x32xbf16, #tpu.memory_space<vmem>>, %arg12: memref<32x1xf32, #tpu.memory_space<vmem>>, %arg13: memref<32x16xbf16, #tpu.memory_space<vmem>>, %arg14: memref<32x1xf32, #tpu.memory_space<vmem>>, %arg15: memref<32x1xf32, #tpu.memory_space<vmem>>, %arg16: memref<32x1xf32, #tpu.memory_space<vmem>>, %arg17: memref<32x32xf32, #tpu.memory_space<vmem>>, %arg18: memref<128x32xbf16, #tpu.memory_space<vmem>>, %arg19: memref<128x1xf32, #tpu.memory_space<vmem>>, %arg20: memref<32x128xbf16, #tpu.memory_space<vmem>>, %arg21: memref<1x128xf32, #tpu.memory_space<vmem>>, %arg22: memref<32x128xbf16, #tpu.memory_space<vmem>>, %arg23: memref<1x128xf32, #tpu.memory_space<vmem>>, %arg24: memref<128x32xbf16, #tpu.memory_space<vmem>>, %arg25: memref<32x1xf32, #tpu.memory_space<vmem>>, %arg26: memref<1x32x256xf32, #tpu.memory_space<vmem>>) attributes {dimension_semantics = [#tpu.dimension_semantics<parallel>], iteration_bounds = array<i64: 2>, scalar_prefetch = 0 : i64, scratch_operands = 0 : i64, tpu.core_type = #tpu.core_type<tc>, window_params = [{transform_indices = @transform_0, window_bounds = array<i64: 1, 16, 256>}, {transform_indices = @transform_1, window_bounds = array<i64: 1, 32, 1>}, {pipeline_mode = #tpu.pipeline_mode<synchronous>, transform_indices = @transform_2, window_bounds = array<i64: 2, 256>}, {pipeline_mode = #tpu.pipeline_mode<synchronous>, transform_indices = @transform_3, window_bounds = array<i64: 16, 1>}, {pipeline_mode = #tpu.pipeline_mode<synchronous>, transform_indices = @transform_4, window_bounds = array<i64: 16, 1>}, {pipeline_mode = #tpu.pipeline_mode<synchronous>, transform_indices = @transform_5, window_bounds = array<i64: 16, 16>}, {pipeline_mode = #tpu.pipeline_mode<synchronous>, transform_indices = @transform_6, window_bounds = array<i64: 9, 32, 16>}, {pipeline_mode = #tpu.pipeline_mode<synchronous>, transform_indices = @transform_7, window_bounds = array<i64: 32, 1>}, {pipeline_mode = #tpu.pipeline_mode<synchronous>, transform_indices = @transform_8, window_bounds = array<i64: 32, 1>}, {pipeline_mode = #tpu.pipeline_mode<synchronous>, transform_indices = @transform_9, window_bounds = array<i64: 32, 32>}, {pipeline_mode = #tpu.pipeline_mode<synchronous>, transform_indices = @transform_10, window_bounds = array<i64: 9, 32, 32>}, {pipeline_mode = #tpu.pipeline_mode<synchronous>, transform_indices = @transform_11, window_bounds = array<i64: 32, 1>}, {pipeline_mode = #tpu.pipeline_mode<synchronous>, transform_indices = @transform_12, window_bounds = array<i64: 32, 16>}, {pipeline_mode = #tpu.pipeline_mode<synchronous>, transform_indices = @transform_13, window_bounds = array<i64: 32, 1>}, {pipeline_mode = #tpu.pipeline_mode<synchronous>, transform_indices = @transform_14, window_bounds = array<i64: 32, 1>}, {pipeline_mode = #tpu.pipeline_mode<synchronous>, transform_indices = @transform_15, window_bounds = array<i64: 32, 1>}, {pipeline_mode = #tpu.pipeline_mode<synchronous>, transform_indices = @transform_16, window_bounds = array<i64: 32, 32>}, {pipeline_mode = #tpu.pipeline_mode<synchronous>, transform_indices = @transform_17, window_bounds = array<i64: 128, 32>}, {pipeline_mode = #tpu.pipeline_mode<synchronous>, transform_indices = @transform_18, window_bounds = array<i64: 128, 1>}, {pipeline_mode = #tpu.pipeline_mode<synchronous>, transform_indices = @transform_19, window_bounds = array<i64: 32, 128>}, {pipeline_mode = #tpu.pipeline_mode<synchronous>, transform_indices = @transform_20, window_bounds = array<i64: 1, 128>}, {pipeline_mode = #tpu.pipeline_mode<synchronous>, transform_indices = @transform_21, window_bounds = array<i64: 32, 128>}, {pipeline_mode = #tpu.pipeline_mode<synchronous>, transform_indices = @transform_22, window_bounds = array<i64: 1, 128>}, {pipeline_mode = #tpu.pipeline_mode<synchronous>, transform_indices = @transform_23, window_bounds = array<i64: 128, 32>}, {pipeline_mode = #tpu.pipeline_mode<synchronous>, transform_indices = @transform_24, window_bounds = array<i64: 32, 1>}, {transform_indices = @transform_25, window_bounds = array<i64: 1, 32, 256>}]} {
    %c0 = arith.constant 0 : index
    %c0_0 = arith.constant 0 : index
    %c0_1 = arith.constant 0 : index
    %0 = vector.load %arg1[%c0, %c0_0, %c0_1] : memref<1x16x256xf32, #tpu.memory_space<vmem>>, vector<1x16x256xf32>
    %1 = vector.shape_cast %0 : vector<1x16x256xf32> to vector<16x256xf32>
    %c0_2 = arith.constant 0 : index
    %c0_3 = arith.constant 0 : index
    %2 = vector.load %arg4[%c0_2, %c0_3] : memref<16x1xf32, #tpu.memory_space<vmem>>, vector<16x1xf32>
    %c0_4 = arith.constant 0 : index
    %c0_5 = arith.constant 0 : index
    %3 = vector.load %arg5[%c0_4, %c0_5] : memref<16x1xf32, #tpu.memory_space<vmem>>, vector<16x1xf32>
    %c0_6 = arith.constant 0 : index
    %c0_7 = arith.constant 0 : index
    %4 = vector.load %arg6[%c0_6, %c0_7] : memref<16x16xf32, #tpu.memory_space<vmem>>, vector<16x16xf32>
    %cst = arith.constant dense<0.000000e+00> : vector<16xf32>
    %5 = vector.multi_reduction <add>, %1, %cst [1] : vector<16x256xf32> to vector<16xf32>
    %6 = vector.shape_cast %5 : vector<16xf32> to vector<16x1xf32>
    %7 = arith.mulf %1, %1 : vector<16x256xf32>
    %cst_8 = arith.constant dense<0.000000e+00> : vector<16xf32>
    %8 = vector.multi_reduction <add>, %7, %cst_8 [1] : vector<16x256xf32> to vector<16xf32>
    %9 = vector.shape_cast %8 : vector<16xf32> to vector<16x1xf32>
    %10 = tpu.concatenate %6, %9 in 1 : vector<16x1xf32>, vector<16x1xf32> -> vector<16x2xf32>
    %cst_9 = arith.constant dense<0.000000e+00> : vector<16x2xf32>
    %11 = tpu.matmul %4, %10, %cst_9 {dimension_numbers = #tpu.dot_dimension_numbers<[1], [0], [0], [1], [0, 0, 1, 1], [], []>} : vector<16x16xf32>, vector<16x2xf32>, vector<16x2xf32> -> vector<16x2xf32>
    %12 = vector.extract_strided_slice %11 {offsets = [0, 0], sizes = [16, 1], strides = [1, 1]} : vector<16x2xf32> to vector<16x1xf32>
    %13 = vector.extract_strided_slice %11 {offsets = [0, 1], sizes = [16, 1], strides = [1, 1]} : vector<16x2xf32> to vector<16x1xf32>
    %14 = arith.mulf %12, %12 : vector<16x1xf32>
    %15 = arith.subf %13, %14 : vector<16x1xf32>
    %cst_10 = arith.constant 9.99999974E-6 : f32
    %16 = vector.broadcast %cst_10 : f32 to vector<16x1xf32>
    %17 = arith.addf %15, %16 : vector<16x1xf32>
    %18 = math.rsqrt %17 : vector<16x1xf32>
    %19 = vector.broadcast %12 : vector<16x1xf32> to vector<16x256xf32>
    %20 = arith.subf %1, %19 : vector<16x256xf32>
    %21 = arith.mulf %18, %2 : vector<16x1xf32>
    %22 = vector.broadcast %21 : vector<16x1xf32> to vector<16x256xf32>
    %23 = arith.mulf %20, %22 : vector<16x256xf32>
    %24 = vector.broadcast %3 : vector<16x1xf32> to vector<16x256xf32>
    %25 = arith.addf %23, %24 : vector<16x256xf32>
    %cst_11 = arith.constant 5.000000e-01 : f32
    %26 = vector.broadcast %cst_11 : f32 to vector<16x256xf32>
    %27 = arith.mulf %26, %25 : vector<16x256xf32>
    %cst_12 = arith.constant 0.707106769 : f32
    %28 = vector.broadcast %cst_12 : f32 to vector<16x256xf32>
    %29 = arith.mulf %25, %28 : vector<16x256xf32>
    %cst_13 = arith.constant 0.000000e+00 : f32
    %30 = vector.broadcast %cst_13 : f32 to vector<16x256xf32>
    %31 = arith.cmpf oge, %29, %30 : vector<16x256xf32>
    %cst_14 = arith.constant 1.000000e+00 : f32
    %cst_15 = arith.constant -1.000000e+00 : f32
    %32 = vector.broadcast %cst_14 : f32 to vector<16x256xf32>
    %33 = vector.broadcast %cst_15 : f32 to vector<16x256xf32>
    %34 = arith.select %31, %32, %33 : vector<16x256xi1>, vector<16x256xf32>
    %35 = math.absf %29 : vector<16x256xf32>
    %cst_16 = arith.constant 0.327591091 : f32
    %36 = vector.broadcast %cst_16 : f32 to vector<16x256xf32>
    %37 = arith.mulf %36, %35 : vector<16x256xf32>
    %cst_17 = arith.constant 1.000000e+00 : f32
    %38 = vector.broadcast %cst_17 : f32 to vector<16x256xf32>
    %39 = arith.addf %38, %37 : vector<16x256xf32>
    %40 = tpu.reciprocal %39 {approx = true} : vector<16x256xf32> -> vector<16x256xf32>
    %cst_18 = arith.constant 1.06140542 : f32
    %41 = vector.broadcast %cst_18 : f32 to vector<16x256xf32>
    %42 = arith.mulf %41, %40 : vector<16x256xf32>
    %cst_19 = arith.constant -1.45315206 : f32
    %43 = vector.broadcast %cst_19 : f32 to vector<16x256xf32>
    %44 = arith.addf %42, %43 : vector<16x256xf32>
    %45 = arith.mulf %44, %40 : vector<16x256xf32>
    %cst_20 = arith.constant 1.42141378 : f32
    %46 = vector.broadcast %cst_20 : f32 to vector<16x256xf32>
    %47 = arith.addf %45, %46 : vector<16x256xf32>
    %48 = arith.mulf %47, %40 : vector<16x256xf32>
    %cst_21 = arith.constant -0.284496725 : f32
    %49 = vector.broadcast %cst_21 : f32 to vector<16x256xf32>
    %50 = arith.addf %48, %49 : vector<16x256xf32>
    %51 = arith.mulf %50, %40 : vector<16x256xf32>
    %cst_22 = arith.constant 0.254829586 : f32
    %52 = vector.broadcast %cst_22 : f32 to vector<16x256xf32>
    %53 = arith.addf %51, %52 : vector<16x256xf32>
    %54 = arith.mulf %53, %40 : vector<16x256xf32>
    %cst_23 = arith.constant 0.000000e+00 : f32
    %55 = vector.broadcast %cst_23 : f32 to vector<16x256xf32>
    %56 = arith.subf %55, %35 : vector<16x256xf32>
    %57 = arith.mulf %56, %35 : vector<16x256xf32>
    %58 = math.exp %57 : vector<16x256xf32>
    %59 = arith.mulf %54, %58 : vector<16x256xf32>
    %cst_24 = arith.constant 1.000000e+00 : f32
    %60 = vector.broadcast %cst_24 : f32 to vector<16x256xf32>
    %61 = arith.subf %60, %59 : vector<16x256xf32>
    %62 = arith.mulf %34, %61 : vector<16x256xf32>
    %cst_25 = arith.constant 1.000000e+00 : f32
    %63 = vector.broadcast %cst_25 : f32 to vector<16x256xf32>
    %64 = arith.addf %63, %62 : vector<16x256xf32>
    %65 = arith.mulf %27, %64 : vector<16x256xf32>
    %c0_26 = arith.constant 0 : index
    %c0_27 = arith.constant 0 : index
    %66 = vector.load %arg3[%c0_26, %c0_27] : memref<2x256xf32, #tpu.memory_space<vmem>>, vector<1x256xf32>
    %67 = vector.broadcast %66 : vector<1x256xf32> to vector<16x256xf32>
    %68 = arith.mulf %65, %67 : vector<16x256xf32>
    %c1 = arith.constant 1 : index
    %c0_28 = arith.constant 0 : index
    %69 = vector.load %arg3[%c1, %c0_28] : memref<2x256xf32, #tpu.memory_space<vmem>>, vector<1x256xf32>
    %70 = vector.broadcast %69 : vector<1x256xf32> to vector<16x256xf32>
    %71 = arith.mulf %65, %70 : vector<16x256xf32>
    %cst_29 = arith.constant 0.000000e+00 : f32
    %72 = vector.broadcast %cst_29 : f32 to vector<32x256xf32>
    %cst_30 = arith.constant 0.000000e+00 : f32
    %73 = vector.broadcast %cst_30 : f32 to vector<16x17xf32>
    %74 = vector.extract_strided_slice %71 {offsets = [0, 0], sizes = [16, 239], strides = [1, 1]} : vector<16x256xf32> to vector<16x239xf32>
    %75 = tpu.concatenate %73, %74 in 1 : vector<16x17xf32>, vector<16x239xf32> -> vector<16x256xf32>
    %76 = arith.truncf %75 : vector<16x256xf32> to vector<16x256xbf16>
    %c0_31 = arith.constant 0 : index
    %c0_32 = arith.constant 0 : index
    %c0_33 = arith.constant 0 : index
    %77 = vector.load %arg7[%c0_31, %c0_32, %c0_33] : memref<9x32x16xbf16, #tpu.memory_space<vmem>>, vector<1x32x16xbf16>
    %78 = vector.shape_cast %77 : vector<1x32x16xbf16> to vector<32x16xbf16>
    %cst_34 = arith.constant dense<0.000000e+00> : vector<32x256xf32>
    %79 = tpu.matmul %78, %76, %cst_34 {dimension_numbers = #tpu.dot_dimension_numbers<[1], [0], [0], [1], [0, 0, 1, 1], [], []>} : vector<32x16xbf16>, vector<16x256xbf16>, vector<32x256xf32> -> vector<32x256xf32>
    %80 = arith.addf %72, %79 : vector<32x256xf32>
    %cst_35 = arith.constant 0.000000e+00 : f32
    %81 = vector.broadcast %cst_35 : f32 to vector<16x16xf32>
    %82 = vector.extract_strided_slice %65 {offsets = [0, 0], sizes = [16, 240], strides = [1, 1]} : vector<16x256xf32> to vector<16x240xf32>
    %83 = tpu.concatenate %81, %82 in 1 : vector<16x16xf32>, vector<16x240xf32> -> vector<16x256xf32>
    %84 = arith.truncf %83 : vector<16x256xf32> to vector<16x256xbf16>
    %c1_36 = arith.constant 1 : index
    %c0_37 = arith.constant 0 : index
    %c0_38 = arith.constant 0 : index
    %85 = vector.load %arg7[%c1_36, %c0_37, %c0_38] : memref<9x32x16xbf16, #tpu.memory_space<vmem>>, vector<1x32x16xbf16>
    %86 = vector.shape_cast %85 : vector<1x32x16xbf16> to vector<32x16xbf16>
    %cst_39 = arith.constant dense<0.000000e+00> : vector<32x256xf32>
    %87 = tpu.matmul %86, %84, %cst_39 {dimension_numbers = #tpu.dot_dimension_numbers<[1], [0], [0], [1], [0, 0, 1, 1], [], []>} : vector<32x16xbf16>, vector<16x256xbf16>, vector<32x256xf32> -> vector<32x256xf32>
    %88 = arith.addf %80, %87 : vector<32x256xf32>
    %cst_40 = arith.constant 0.000000e+00 : f32
    %89 = vector.broadcast %cst_40 : f32 to vector<16x15xf32>
    %90 = vector.extract_strided_slice %68 {offsets = [0, 0], sizes = [16, 241], strides = [1, 1]} : vector<16x256xf32> to vector<16x241xf32>
    %91 = tpu.concatenate %89, %90 in 1 : vector<16x15xf32>, vector<16x241xf32> -> vector<16x256xf32>
    %92 = arith.truncf %91 : vector<16x256xf32> to vector<16x256xbf16>
    %c2 = arith.constant 2 : index
    %c0_41 = arith.constant 0 : index
    %c0_42 = arith.constant 0 : index
    %93 = vector.load %arg7[%c2, %c0_41, %c0_42] : memref<9x32x16xbf16, #tpu.memory_space<vmem>>, vector<1x32x16xbf16>
    %94 = vector.shape_cast %93 : vector<1x32x16xbf16> to vector<32x16xbf16>
    %cst_43 = arith.constant dense<0.000000e+00> : vector<32x256xf32>
    %95 = tpu.matmul %94, %92, %cst_43 {dimension_numbers = #tpu.dot_dimension_numbers<[1], [0], [0], [1], [0, 0, 1, 1], [], []>} : vector<32x16xbf16>, vector<16x256xbf16>, vector<32x256xf32> -> vector<32x256xf32>
    %96 = arith.addf %88, %95 : vector<32x256xf32>
    %cst_44 = arith.constant 0.000000e+00 : f32
    %97 = vector.broadcast %cst_44 : f32 to vector<16x1xf32>
    %98 = vector.extract_strided_slice %71 {offsets = [0, 0], sizes = [16, 255], strides = [1, 1]} : vector<16x256xf32> to vector<16x255xf32>
    %99 = tpu.concatenate %97, %98 in 1 : vector<16x1xf32>, vector<16x255xf32> -> vector<16x256xf32>
    %100 = arith.truncf %99 : vector<16x256xf32> to vector<16x256xbf16>
    %c3 = arith.constant 3 : index
    %c0_45 = arith.constant 0 : index
    %c0_46 = arith.constant 0 : index
    %101 = vector.load %arg7[%c3, %c0_45, %c0_46] : memref<9x32x16xbf16, #tpu.memory_space<vmem>>, vector<1x32x16xbf16>
    %102 = vector.shape_cast %101 : vector<1x32x16xbf16> to vector<32x16xbf16>
    %cst_47 = arith.constant dense<0.000000e+00> : vector<32x256xf32>
    %103 = tpu.matmul %102, %100, %cst_47 {dimension_numbers = #tpu.dot_dimension_numbers<[1], [0], [0], [1], [0, 0, 1, 1], [], []>} : vector<32x16xbf16>, vector<16x256xbf16>, vector<32x256xf32> -> vector<32x256xf32>
    %104 = arith.addf %96, %103 : vector<32x256xf32>
    %105 = arith.truncf %65 : vector<16x256xf32> to vector<16x256xbf16>
    %c4 = arith.constant 4 : index
    %c0_48 = arith.constant 0 : index
    %c0_49 = arith.constant 0 : index
    %106 = vector.load %arg7[%c4, %c0_48, %c0_49] : memref<9x32x16xbf16, #tpu.memory_space<vmem>>, vector<1x32x16xbf16>
    %107 = vector.shape_cast %106 : vector<1x32x16xbf16> to vector<32x16xbf16>
    %cst_50 = arith.constant dense<0.000000e+00> : vector<32x256xf32>
    %108 = tpu.matmul %107, %105, %cst_50 {dimension_numbers = #tpu.dot_dimension_numbers<[1], [0], [0], [1], [0, 0, 1, 1], [], []>} : vector<32x16xbf16>, vector<16x256xbf16>, vector<32x256xf32> -> vector<32x256xf32>
    %109 = arith.addf %104, %108 : vector<32x256xf32>
    %cst_51 = arith.constant 0.000000e+00 : f32
    %110 = vector.broadcast %cst_51 : f32 to vector<16x1xf32>
    %111 = vector.extract_strided_slice %68 {offsets = [0, 1], sizes = [16, 255], strides = [1, 1]} : vector<16x256xf32> to vector<16x255xf32>
    %112 = tpu.concatenate %111, %110 in 1 : vector<16x255xf32>, vector<16x1xf32> -> vector<16x256xf32>
    %113 = arith.truncf %112 : vector<16x256xf32> to vector<16x256xbf16>
    %c5 = arith.constant 5 : index
    %c0_52 = arith.constant 0 : index
    %c0_53 = arith.constant 0 : index
    %114 = vector.load %arg7[%c5, %c0_52, %c0_53] : memref<9x32x16xbf16, #tpu.memory_space<vmem>>, vector<1x32x16xbf16>
    %115 = vector.shape_cast %114 : vector<1x32x16xbf16> to vector<32x16xbf16>
    %cst_54 = arith.constant dense<0.000000e+00> : vector<32x256xf32>
    %116 = tpu.matmul %115, %113, %cst_54 {dimension_numbers = #tpu.dot_dimension_numbers<[1], [0], [0], [1], [0, 0, 1, 1], [], []>} : vector<32x16xbf16>, vector<16x256xbf16>, vector<32x256xf32> -> vector<32x256xf32>
    %117 = arith.addf %109, %116 : vector<32x256xf32>
    %cst_55 = arith.constant 0.000000e+00 : f32
    %118 = vector.broadcast %cst_55 : f32 to vector<16x15xf32>
    %119 = vector.extract_strided_slice %71 {offsets = [0, 15], sizes = [16, 241], strides = [1, 1]} : vector<16x256xf32> to vector<16x241xf32>
    %120 = tpu.concatenate %119, %118 in 1 : vector<16x241xf32>, vector<16x15xf32> -> vector<16x256xf32>
    %121 = arith.truncf %120 : vector<16x256xf32> to vector<16x256xbf16>
    %c6 = arith.constant 6 : index
    %c0_56 = arith.constant 0 : index
    %c0_57 = arith.constant 0 : index
    %122 = vector.load %arg7[%c6, %c0_56, %c0_57] : memref<9x32x16xbf16, #tpu.memory_space<vmem>>, vector<1x32x16xbf16>
    %123 = vector.shape_cast %122 : vector<1x32x16xbf16> to vector<32x16xbf16>
    %cst_58 = arith.constant dense<0.000000e+00> : vector<32x256xf32>
    %124 = tpu.matmul %123, %121, %cst_58 {dimension_numbers = #tpu.dot_dimension_numbers<[1], [0], [0], [1], [0, 0, 1, 1], [], []>} : vector<32x16xbf16>, vector<16x256xbf16>, vector<32x256xf32> -> vector<32x256xf32>
    %125 = arith.addf %117, %124 : vector<32x256xf32>
    %cst_59 = arith.constant 0.000000e+00 : f32
    %126 = vector.broadcast %cst_59 : f32 to vector<16x16xf32>
    %127 = vector.extract_strided_slice %65 {offsets = [0, 16], sizes = [16, 240], strides = [1, 1]} : vector<16x256xf32> to vector<16x240xf32>
    %128 = tpu.concatenate %127, %126 in 1 : vector<16x240xf32>, vector<16x16xf32> -> vector<16x256xf32>
    %129 = arith.truncf %128 : vector<16x256xf32> to vector<16x256xbf16>
    %c7 = arith.constant 7 : index
    %c0_60 = arith.constant 0 : index
    %c0_61 = arith.constant 0 : index
    %130 = vector.load %arg7[%c7, %c0_60, %c0_61] : memref<9x32x16xbf16, #tpu.memory_space<vmem>>, vector<1x32x16xbf16>
    %131 = vector.shape_cast %130 : vector<1x32x16xbf16> to vector<32x16xbf16>
    %cst_62 = arith.constant dense<0.000000e+00> : vector<32x256xf32>
    %132 = tpu.matmul %131, %129, %cst_62 {dimension_numbers = #tpu.dot_dimension_numbers<[1], [0], [0], [1], [0, 0, 1, 1], [], []>} : vector<32x16xbf16>, vector<16x256xbf16>, vector<32x256xf32> -> vector<32x256xf32>
    %133 = arith.addf %125, %132 : vector<32x256xf32>
    %cst_63 = arith.constant 0.000000e+00 : f32
    %134 = vector.broadcast %cst_63 : f32 to vector<16x17xf32>
    %135 = vector.extract_strided_slice %68 {offsets = [0, 17], sizes = [16, 239], strides = [1, 1]} : vector<16x256xf32> to vector<16x239xf32>
    %136 = tpu.concatenate %135, %134 in 1 : vector<16x239xf32>, vector<16x17xf32> -> vector<16x256xf32>
    %137 = arith.truncf %136 : vector<16x256xf32> to vector<16x256xbf16>
    %c8 = arith.constant 8 : index
    %c0_64 = arith.constant 0 : index
    %c0_65 = arith.constant 0 : index
    %138 = vector.load %arg7[%c8, %c0_64, %c0_65] : memref<9x32x16xbf16, #tpu.memory_space<vmem>>, vector<1x32x16xbf16>
    %139 = vector.shape_cast %138 : vector<1x32x16xbf16> to vector<32x16xbf16>
    %cst_66 = arith.constant dense<0.000000e+00> : vector<32x256xf32>
    %140 = tpu.matmul %139, %137, %cst_66 {dimension_numbers = #tpu.dot_dimension_numbers<[1], [0], [0], [1], [0, 0, 1, 1], [], []>} : vector<32x16xbf16>, vector<16x256xbf16>, vector<32x256xf32> -> vector<32x256xf32>
    %141 = arith.addf %133, %140 : vector<32x256xf32>
    %c0_67 = arith.constant 0 : index
    %c0_68 = arith.constant 0 : index
    %c0_69 = arith.constant 0 : index
    %142 = vector.load %arg2[%c0_67, %c0_68, %c0_69] : memref<1x32x1xf32, #tpu.memory_space<vmem>>, vector<1x32x1xf32>
    %143 = vector.shape_cast %142 : vector<1x32x1xf32> to vector<32x1xf32>
    %144 = vector.broadcast %143 : vector<32x1xf32> to vector<32x256xf32>
    %145 = arith.addf %141, %144 : vector<32x256xf32>
    %c0_70 = arith.constant 0 : index
    %c0_71 = arith.constant 0 : index
    %146 = vector.load %arg8[%c0_70, %c0_71] : memref<32x1xf32, #tpu.memory_space<vmem>>, vector<32x1xf32>
    %c0_72 = arith.constant 0 : index
    %c0_73 = arith.constant 0 : index
    %147 = vector.load %arg9[%c0_72, %c0_73] : memref<32x1xf32, #tpu.memory_space<vmem>>, vector<32x1xf32>
    %c0_74 = arith.constant 0 : index
    %c0_75 = arith.constant 0 : index
    %148 = vector.load %arg10[%c0_74, %c0_75] : memref<32x32xf32, #tpu.memory_space<vmem>>, vector<32x32xf32>
    %cst_76 = arith.constant dense<0.000000e+00> : vector<32xf32>
    %149 = vector.multi_reduction <add>, %145, %cst_76 [1] : vector<32x256xf32> to vector<32xf32>
    %150 = vector.shape_cast %149 : vector<32xf32> to vector<32x1xf32>
    %151 = arith.mulf %145, %145 : vector<32x256xf32>
    %cst_77 = arith.constant dense<0.000000e+00> : vector<32xf32>
    %152 = vector.multi_reduction <add>, %151, %cst_77 [1] : vector<32x256xf32> to vector<32xf32>
    %153 = vector.shape_cast %152 : vector<32xf32> to vector<32x1xf32>
    %154 = tpu.concatenate %150, %153 in 1 : vector<32x1xf32>, vector<32x1xf32> -> vector<32x2xf32>
    %cst_78 = arith.constant dense<0.000000e+00> : vector<32x2xf32>
    %155 = tpu.matmul %148, %154, %cst_78 {dimension_numbers = #tpu.dot_dimension_numbers<[1], [0], [0], [1], [0, 0, 1, 1], [], []>} : vector<32x32xf32>, vector<32x2xf32>, vector<32x2xf32> -> vector<32x2xf32>
    %156 = vector.extract_strided_slice %155 {offsets = [0, 0], sizes = [32, 1], strides = [1, 1]} : vector<32x2xf32> to vector<32x1xf32>
    %157 = vector.extract_strided_slice %155 {offsets = [0, 1], sizes = [32, 1], strides = [1, 1]} : vector<32x2xf32> to vector<32x1xf32>
    %158 = arith.mulf %156, %156 : vector<32x1xf32>
    %159 = arith.subf %157, %158 : vector<32x1xf32>
    %cst_79 = arith.constant 9.99999974E-6 : f32
    %160 = vector.broadcast %cst_79 : f32 to vector<32x1xf32>
    %161 = arith.addf %159, %160 : vector<32x1xf32>
    %162 = math.rsqrt %161 : vector<32x1xf32>
    %163 = vector.broadcast %156 : vector<32x1xf32> to vector<32x256xf32>
    %164 = arith.subf %145, %163 : vector<32x256xf32>
    %165 = arith.mulf %162, %146 : vector<32x1xf32>
    %166 = vector.broadcast %165 : vector<32x1xf32> to vector<32x256xf32>
    %167 = arith.mulf %164, %166 : vector<32x256xf32>
    %168 = vector.broadcast %147 : vector<32x1xf32> to vector<32x256xf32>
    %169 = arith.addf %167, %168 : vector<32x256xf32>
    %cst_80 = arith.constant 5.000000e-01 : f32
    %170 = vector.broadcast %cst_80 : f32 to vector<32x256xf32>
    %171 = arith.mulf %170, %169 : vector<32x256xf32>
    %cst_81 = arith.constant 0.707106769 : f32
    %172 = vector.broadcast %cst_81 : f32 to vector<32x256xf32>
    %173 = arith.mulf %169, %172 : vector<32x256xf32>
    %cst_82 = arith.constant 0.000000e+00 : f32
    %174 = vector.broadcast %cst_82 : f32 to vector<32x256xf32>
    %175 = arith.cmpf oge, %173, %174 : vector<32x256xf32>
    %cst_83 = arith.constant 1.000000e+00 : f32
    %cst_84 = arith.constant -1.000000e+00 : f32
    %176 = vector.broadcast %cst_83 : f32 to vector<32x256xf32>
    %177 = vector.broadcast %cst_84 : f32 to vector<32x256xf32>
    %178 = arith.select %175, %176, %177 : vector<32x256xi1>, vector<32x256xf32>
    %179 = math.absf %173 : vector<32x256xf32>
    %cst_85 = arith.constant 0.327591091 : f32
    %180 = vector.broadcast %cst_85 : f32 to vector<32x256xf32>
    %181 = arith.mulf %180, %179 : vector<32x256xf32>
    %cst_86 = arith.constant 1.000000e+00 : f32
    %182 = vector.broadcast %cst_86 : f32 to vector<32x256xf32>
    %183 = arith.addf %182, %181 : vector<32x256xf32>
    %184 = tpu.reciprocal %183 {approx = true} : vector<32x256xf32> -> vector<32x256xf32>
    %cst_87 = arith.constant 1.06140542 : f32
    %185 = vector.broadcast %cst_87 : f32 to vector<32x256xf32>
    %186 = arith.mulf %185, %184 : vector<32x256xf32>
    %cst_88 = arith.constant -1.45315206 : f32
    %187 = vector.broadcast %cst_88 : f32 to vector<32x256xf32>
    %188 = arith.addf %186, %187 : vector<32x256xf32>
    %189 = arith.mulf %188, %184 : vector<32x256xf32>
    %cst_89 = arith.constant 1.42141378 : f32
    %190 = vector.broadcast %cst_89 : f32 to vector<32x256xf32>
    %191 = arith.addf %189, %190 : vector<32x256xf32>
    %192 = arith.mulf %191, %184 : vector<32x256xf32>
    %cst_90 = arith.constant -0.284496725 : f32
    %193 = vector.broadcast %cst_90 : f32 to vector<32x256xf32>
    %194 = arith.addf %192, %193 : vector<32x256xf32>
    %195 = arith.mulf %194, %184 : vector<32x256xf32>
    %cst_91 = arith.constant 0.254829586 : f32
    %196 = vector.broadcast %cst_91 : f32 to vector<32x256xf32>
    %197 = arith.addf %195, %196 : vector<32x256xf32>
    %198 = arith.mulf %197, %184 : vector<32x256xf32>
    %cst_92 = arith.constant 0.000000e+00 : f32
    %199 = vector.broadcast %cst_92 : f32 to vector<32x256xf32>
    %200 = arith.subf %199, %179 : vector<32x256xf32>
    %201 = arith.mulf %200, %179 : vector<32x256xf32>
    %202 = math.exp %201 : vector<32x256xf32>
    %203 = arith.mulf %198, %202 : vector<32x256xf32>
    %cst_93 = arith.constant 1.000000e+00 : f32
    %204 = vector.broadcast %cst_93 : f32 to vector<32x256xf32>
    %205 = arith.subf %204, %203 : vector<32x256xf32>
    %206 = arith.mulf %178, %205 : vector<32x256xf32>
    %cst_94 = arith.constant 1.000000e+00 : f32
    %207 = vector.broadcast %cst_94 : f32 to vector<32x256xf32>
    %208 = arith.addf %207, %206 : vector<32x256xf32>
    %209 = arith.mulf %171, %208 : vector<32x256xf32>
    %c0_95 = arith.constant 0 : index
    %c0_96 = arith.constant 0 : index
    %210 = vector.load %arg3[%c0_95, %c0_96] : memref<2x256xf32, #tpu.memory_space<vmem>>, vector<1x256xf32>
    %211 = vector.broadcast %210 : vector<1x256xf32> to vector<32x256xf32>
    %212 = arith.mulf %209, %211 : vector<32x256xf32>
    %c1_97 = arith.constant 1 : index
    %c0_98 = arith.constant 0 : index
    %213 = vector.load %arg3[%c1_97, %c0_98] : memref<2x256xf32, #tpu.memory_space<vmem>>, vector<1x256xf32>
    %214 = vector.broadcast %213 : vector<1x256xf32> to vector<32x256xf32>
    %215 = arith.mulf %209, %214 : vector<32x256xf32>
    %cst_99 = arith.constant 0.000000e+00 : f32
    %216 = vector.broadcast %cst_99 : f32 to vector<32x256xf32>
    %cst_100 = arith.constant 0.000000e+00 : f32
    %217 = vector.broadcast %cst_100 : f32 to vector<32x17xf32>
    %218 = vector.extract_strided_slice %215 {offsets = [0, 0], sizes = [32, 239], strides = [1, 1]} : vector<32x256xf32> to vector<32x239xf32>
    %219 = tpu.concatenate %217, %218 in 1 : vector<32x17xf32>, vector<32x239xf32> -> vector<32x256xf32>
    %220 = arith.truncf %219 : vector<32x256xf32> to vector<32x256xbf16>
    %c0_101 = arith.constant 0 : index
    %c0_102 = arith.constant 0 : index
    %c0_103 = arith.constant 0 : index
    %221 = vector.load %arg11[%c0_101, %c0_102, %c0_103] : memref<9x32x32xbf16, #tpu.memory_space<vmem>>, vector<1x32x32xbf16>
    %222 = vector.shape_cast %221 : vector<1x32x32xbf16> to vector<32x32xbf16>
    %cst_104 = arith.constant dense<0.000000e+00> : vector<32x256xf32>
    %223 = tpu.matmul %222, %220, %cst_104 {dimension_numbers = #tpu.dot_dimension_numbers<[1], [0], [0], [1], [0, 0, 1, 1], [], []>} : vector<32x32xbf16>, vector<32x256xbf16>, vector<32x256xf32> -> vector<32x256xf32>
    %224 = arith.addf %216, %223 : vector<32x256xf32>
    %cst_105 = arith.constant 0.000000e+00 : f32
    %225 = vector.broadcast %cst_105 : f32 to vector<32x16xf32>
    %226 = vector.extract_strided_slice %209 {offsets = [0, 0], sizes = [32, 240], strides = [1, 1]} : vector<32x256xf32> to vector<32x240xf32>
    %227 = tpu.concatenate %225, %226 in 1 : vector<32x16xf32>, vector<32x240xf32> -> vector<32x256xf32>
    %228 = arith.truncf %227 : vector<32x256xf32> to vector<32x256xbf16>
    %c1_106 = arith.constant 1 : index
    %c0_107 = arith.constant 0 : index
    %c0_108 = arith.constant 0 : index
    %229 = vector.load %arg11[%c1_106, %c0_107, %c0_108] : memref<9x32x32xbf16, #tpu.memory_space<vmem>>, vector<1x32x32xbf16>
    %230 = vector.shape_cast %229 : vector<1x32x32xbf16> to vector<32x32xbf16>
    %cst_109 = arith.constant dense<0.000000e+00> : vector<32x256xf32>
    %231 = tpu.matmul %230, %228, %cst_109 {dimension_numbers = #tpu.dot_dimension_numbers<[1], [0], [0], [1], [0, 0, 1, 1], [], []>} : vector<32x32xbf16>, vector<32x256xbf16>, vector<32x256xf32> -> vector<32x256xf32>
    %232 = arith.addf %224, %231 : vector<32x256xf32>
    %cst_110 = arith.constant 0.000000e+00 : f32
    %233 = vector.broadcast %cst_110 : f32 to vector<32x15xf32>
    %234 = vector.extract_strided_slice %212 {offsets = [0, 0], sizes = [32, 241], strides = [1, 1]} : vector<32x256xf32> to vector<32x241xf32>
    %235 = tpu.concatenate %233, %234 in 1 : vector<32x15xf32>, vector<32x241xf32> -> vector<32x256xf32>
    %236 = arith.truncf %235 : vector<32x256xf32> to vector<32x256xbf16>
    %c2_111 = arith.constant 2 : index
    %c0_112 = arith.constant 0 : index
    %c0_113 = arith.constant 0 : index
    %237 = vector.load %arg11[%c2_111, %c0_112, %c0_113] : memref<9x32x32xbf16, #tpu.memory_space<vmem>>, vector<1x32x32xbf16>
    %238 = vector.shape_cast %237 : vector<1x32x32xbf16> to vector<32x32xbf16>
    %cst_114 = arith.constant dense<0.000000e+00> : vector<32x256xf32>
    %239 = tpu.matmul %238, %236, %cst_114 {dimension_numbers = #tpu.dot_dimension_numbers<[1], [0], [0], [1], [0, 0, 1, 1], [], []>} : vector<32x32xbf16>, vector<32x256xbf16>, vector<32x256xf32> -> vector<32x256xf32>
    %240 = arith.addf %232, %239 : vector<32x256xf32>
    %cst_115 = arith.constant 0.000000e+00 : f32
    %241 = vector.broadcast %cst_115 : f32 to vector<32x1xf32>
    %242 = vector.extract_strided_slice %215 {offsets = [0, 0], sizes = [32, 255], strides = [1, 1]} : vector<32x256xf32> to vector<32x255xf32>
    %243 = tpu.concatenate %241, %242 in 1 : vector<32x1xf32>, vector<32x255xf32> -> vector<32x256xf32>
    %244 = arith.truncf %243 : vector<32x256xf32> to vector<32x256xbf16>
    %c3_116 = arith.constant 3 : index
    %c0_117 = arith.constant 0 : index
    %c0_118 = arith.constant 0 : index
    %245 = vector.load %arg11[%c3_116, %c0_117, %c0_118] : memref<9x32x32xbf16, #tpu.memory_space<vmem>>, vector<1x32x32xbf16>
    %246 = vector.shape_cast %245 : vector<1x32x32xbf16> to vector<32x32xbf16>
    %cst_119 = arith.constant dense<0.000000e+00> : vector<32x256xf32>
    %247 = tpu.matmul %246, %244, %cst_119 {dimension_numbers = #tpu.dot_dimension_numbers<[1], [0], [0], [1], [0, 0, 1, 1], [], []>} : vector<32x32xbf16>, vector<32x256xbf16>, vector<32x256xf32> -> vector<32x256xf32>
    %248 = arith.addf %240, %247 : vector<32x256xf32>
    %249 = arith.truncf %209 : vector<32x256xf32> to vector<32x256xbf16>
    %c4_120 = arith.constant 4 : index
    %c0_121 = arith.constant 0 : index
    %c0_122 = arith.constant 0 : index
    %250 = vector.load %arg11[%c4_120, %c0_121, %c0_122] : memref<9x32x32xbf16, #tpu.memory_space<vmem>>, vector<1x32x32xbf16>
    %251 = vector.shape_cast %250 : vector<1x32x32xbf16> to vector<32x32xbf16>
    %cst_123 = arith.constant dense<0.000000e+00> : vector<32x256xf32>
    %252 = tpu.matmul %251, %249, %cst_123 {dimension_numbers = #tpu.dot_dimension_numbers<[1], [0], [0], [1], [0, 0, 1, 1], [], []>} : vector<32x32xbf16>, vector<32x256xbf16>, vector<32x256xf32> -> vector<32x256xf32>
    %253 = arith.addf %248, %252 : vector<32x256xf32>
    %cst_124 = arith.constant 0.000000e+00 : f32
    %254 = vector.broadcast %cst_124 : f32 to vector<32x1xf32>
    %255 = vector.extract_strided_slice %212 {offsets = [0, 1], sizes = [32, 255], strides = [1, 1]} : vector<32x256xf32> to vector<32x255xf32>
    %256 = tpu.concatenate %255, %254 in 1 : vector<32x255xf32>, vector<32x1xf32> -> vector<32x256xf32>
    %257 = arith.truncf %256 : vector<32x256xf32> to vector<32x256xbf16>
    %c5_125 = arith.constant 5 : index
    %c0_126 = arith.constant 0 : index
    %c0_127 = arith.constant 0 : index
    %258 = vector.load %arg11[%c5_125, %c0_126, %c0_127] : memref<9x32x32xbf16, #tpu.memory_space<vmem>>, vector<1x32x32xbf16>
    %259 = vector.shape_cast %258 : vector<1x32x32xbf16> to vector<32x32xbf16>
    %cst_128 = arith.constant dense<0.000000e+00> : vector<32x256xf32>
    %260 = tpu.matmul %259, %257, %cst_128 {dimension_numbers = #tpu.dot_dimension_numbers<[1], [0], [0], [1], [0, 0, 1, 1], [], []>} : vector<32x32xbf16>, vector<32x256xbf16>, vector<32x256xf32> -> vector<32x256xf32>
    %261 = arith.addf %253, %260 : vector<32x256xf32>
    %cst_129 = arith.constant 0.000000e+00 : f32
    %262 = vector.broadcast %cst_129 : f32 to vector<32x15xf32>
    %263 = vector.extract_strided_slice %215 {offsets = [0, 15], sizes = [32, 241], strides = [1, 1]} : vector<32x256xf32> to vector<32x241xf32>
    %264 = tpu.concatenate %263, %262 in 1 : vector<32x241xf32>, vector<32x15xf32> -> vector<32x256xf32>
    %265 = arith.truncf %264 : vector<32x256xf32> to vector<32x256xbf16>
    %c6_130 = arith.constant 6 : index
    %c0_131 = arith.constant 0 : index
    %c0_132 = arith.constant 0 : index
    %266 = vector.load %arg11[%c6_130, %c0_131, %c0_132] : memref<9x32x32xbf16, #tpu.memory_space<vmem>>, vector<1x32x32xbf16>
    %267 = vector.shape_cast %266 : vector<1x32x32xbf16> to vector<32x32xbf16>
    %cst_133 = arith.constant dense<0.000000e+00> : vector<32x256xf32>
    %268 = tpu.matmul %267, %265, %cst_133 {dimension_numbers = #tpu.dot_dimension_numbers<[1], [0], [0], [1], [0, 0, 1, 1], [], []>} : vector<32x32xbf16>, vector<32x256xbf16>, vector<32x256xf32> -> vector<32x256xf32>
    %269 = arith.addf %261, %268 : vector<32x256xf32>
    %cst_134 = arith.constant 0.000000e+00 : f32
    %270 = vector.broadcast %cst_134 : f32 to vector<32x16xf32>
    %271 = vector.extract_strided_slice %209 {offsets = [0, 16], sizes = [32, 240], strides = [1, 1]} : vector<32x256xf32> to vector<32x240xf32>
    %272 = tpu.concatenate %271, %270 in 1 : vector<32x240xf32>, vector<32x16xf32> -> vector<32x256xf32>
    %273 = arith.truncf %272 : vector<32x256xf32> to vector<32x256xbf16>
    %c7_135 = arith.constant 7 : index
    %c0_136 = arith.constant 0 : index
    %c0_137 = arith.constant 0 : index
    %274 = vector.load %arg11[%c7_135, %c0_136, %c0_137] : memref<9x32x32xbf16, #tpu.memory_space<vmem>>, vector<1x32x32xbf16>
    %275 = vector.shape_cast %274 : vector<1x32x32xbf16> to vector<32x32xbf16>
    %cst_138 = arith.constant dense<0.000000e+00> : vector<32x256xf32>
    %276 = tpu.matmul %275, %273, %cst_138 {dimension_numbers = #tpu.dot_dimension_numbers<[1], [0], [0], [1], [0, 0, 1, 1], [], []>} : vector<32x32xbf16>, vector<32x256xbf16>, vector<32x256xf32> -> vector<32x256xf32>
    %277 = arith.addf %269, %276 : vector<32x256xf32>
    %cst_139 = arith.constant 0.000000e+00 : f32
    %278 = vector.broadcast %cst_139 : f32 to vector<32x17xf32>
    %279 = vector.extract_strided_slice %212 {offsets = [0, 17], sizes = [32, 239], strides = [1, 1]} : vector<32x256xf32> to vector<32x239xf32>
    %280 = tpu.concatenate %279, %278 in 1 : vector<32x239xf32>, vector<32x17xf32> -> vector<32x256xf32>
    %281 = arith.truncf %280 : vector<32x256xf32> to vector<32x256xbf16>
    %c8_140 = arith.constant 8 : index
    %c0_141 = arith.constant 0 : index
    %c0_142 = arith.constant 0 : index
    %282 = vector.load %arg11[%c8_140, %c0_141, %c0_142] : memref<9x32x32xbf16, #tpu.memory_space<vmem>>, vector<1x32x32xbf16>
    %283 = vector.shape_cast %282 : vector<1x32x32xbf16> to vector<32x32xbf16>
    %cst_143 = arith.constant dense<0.000000e+00> : vector<32x256xf32>
    %284 = tpu.matmul %283, %281, %cst_143 {dimension_numbers = #tpu.dot_dimension_numbers<[1], [0], [0], [1], [0, 0, 1, 1], [], []>} : vector<32x32xbf16>, vector<32x256xbf16>, vector<32x256xf32> -> vector<32x256xf32>
    %285 = arith.addf %277, %284 : vector<32x256xf32>
    %c0_144 = arith.constant 0 : index
    %c0_145 = arith.constant 0 : index
    %286 = vector.load %arg12[%c0_144, %c0_145] : memref<32x1xf32, #tpu.memory_space<vmem>>, vector<32x1xf32>
    %287 = vector.broadcast %286 : vector<32x1xf32> to vector<32x256xf32>
    %288 = arith.addf %285, %287 : vector<32x256xf32>
    %c0_146 = arith.constant 0 : index
    %c0_147 = arith.constant 0 : index
    %289 = vector.load %arg13[%c0_146, %c0_147] : memref<32x16xbf16, #tpu.memory_space<vmem>>, vector<32x16xbf16>
    %290 = arith.truncf %1 : vector<16x256xf32> to vector<16x256xbf16>
    %cst_148 = arith.constant dense<0.000000e+00> : vector<32x256xf32>
    %291 = tpu.matmul %289, %290, %cst_148 {dimension_numbers = #tpu.dot_dimension_numbers<[1], [0], [0], [1], [0, 0, 1, 1], [], []>} : vector<32x16xbf16>, vector<16x256xbf16>, vector<32x256xf32> -> vector<32x256xf32>
    %292 = arith.addf %288, %291 : vector<32x256xf32>
    %c0_149 = arith.constant 0 : index
    %c0_150 = arith.constant 0 : index
    %293 = vector.load %arg14[%c0_149, %c0_150] : memref<32x1xf32, #tpu.memory_space<vmem>>, vector<32x1xf32>
    %294 = vector.broadcast %293 : vector<32x1xf32> to vector<32x256xf32>
    %295 = arith.addf %292, %294 : vector<32x256xf32>
    %c0_151 = arith.constant 0 : index
    %c0_152 = arith.constant 0 : index
    %296 = vector.load %arg15[%c0_151, %c0_152] : memref<32x1xf32, #tpu.memory_space<vmem>>, vector<32x1xf32>
    %c0_153 = arith.constant 0 : index
    %c0_154 = arith.constant 0 : index
    %297 = vector.load %arg16[%c0_153, %c0_154] : memref<32x1xf32, #tpu.memory_space<vmem>>, vector<32x1xf32>
    %c0_155 = arith.constant 0 : index
    %c0_156 = arith.constant 0 : index
    %298 = vector.load %arg17[%c0_155, %c0_156] : memref<32x32xf32, #tpu.memory_space<vmem>>, vector<32x32xf32>
    %cst_157 = arith.constant dense<0.000000e+00> : vector<32xf32>
    %299 = vector.multi_reduction <add>, %295, %cst_157 [1] : vector<32x256xf32> to vector<32xf32>
    %300 = vector.shape_cast %299 : vector<32xf32> to vector<32x1xf32>
    %301 = arith.mulf %295, %295 : vector<32x256xf32>
    %cst_158 = arith.constant dense<0.000000e+00> : vector<32xf32>
    %302 = vector.multi_reduction <add>, %301, %cst_158 [1] : vector<32x256xf32> to vector<32xf32>
    %303 = vector.shape_cast %302 : vector<32xf32> to vector<32x1xf32>
    %304 = tpu.concatenate %300, %303 in 1 : vector<32x1xf32>, vector<32x1xf32> -> vector<32x2xf32>
    %cst_159 = arith.constant dense<0.000000e+00> : vector<32x2xf32>
    %305 = tpu.matmul %298, %304, %cst_159 {dimension_numbers = #tpu.dot_dimension_numbers<[1], [0], [0], [1], [0, 0, 1, 1], [], []>} : vector<32x32xf32>, vector<32x2xf32>, vector<32x2xf32> -> vector<32x2xf32>
    %306 = vector.extract_strided_slice %305 {offsets = [0, 0], sizes = [32, 1], strides = [1, 1]} : vector<32x2xf32> to vector<32x1xf32>
    %307 = vector.extract_strided_slice %305 {offsets = [0, 1], sizes = [32, 1], strides = [1, 1]} : vector<32x2xf32> to vector<32x1xf32>
    %308 = arith.mulf %306, %306 : vector<32x1xf32>
    %309 = arith.subf %307, %308 : vector<32x1xf32>
    %cst_160 = arith.constant 9.99999974E-6 : f32
    %310 = vector.broadcast %cst_160 : f32 to vector<32x1xf32>
    %311 = arith.addf %309, %310 : vector<32x1xf32>
    %312 = math.rsqrt %311 : vector<32x1xf32>
    %313 = vector.broadcast %306 : vector<32x1xf32> to vector<32x256xf32>
    %314 = arith.subf %295, %313 : vector<32x256xf32>
    %315 = arith.mulf %312, %296 : vector<32x1xf32>
    %316 = vector.broadcast %315 : vector<32x1xf32> to vector<32x256xf32>
    %317 = arith.mulf %314, %316 : vector<32x256xf32>
    %318 = vector.broadcast %297 : vector<32x1xf32> to vector<32x256xf32>
    %319 = arith.addf %317, %318 : vector<32x256xf32>
    %320 = arith.truncf %319 : vector<32x256xf32> to vector<32x256xbf16>
    %321 = tpu.transpose %319, [1, 0] : vector<32x256xf32> -> vector<256x32xf32>
    %322 = arith.truncf %321 : vector<256x32xf32> to vector<256x32xbf16>
    %c0_161 = arith.constant 0 : index
    %c0_162 = arith.constant 0 : index
    %323 = vector.load %arg18[%c0_161, %c0_162] : memref<128x32xbf16, #tpu.memory_space<vmem>>, vector<128x32xbf16>
    %cst_163 = arith.constant dense<0.000000e+00> : vector<128x256xf32>
    %324 = tpu.matmul %323, %320, %cst_163 {dimension_numbers = #tpu.dot_dimension_numbers<[1], [0], [0], [1], [0, 0, 1, 1], [], []>} : vector<128x32xbf16>, vector<32x256xbf16>, vector<128x256xf32> -> vector<128x256xf32>
    %c0_164 = arith.constant 0 : index
    %c0_165 = arith.constant 0 : index
    %325 = vector.load %arg19[%c0_164, %c0_165] : memref<128x1xf32, #tpu.memory_space<vmem>>, vector<128x1xf32>
    %326 = vector.broadcast %325 : vector<128x1xf32> to vector<128x256xf32>
    %327 = arith.addf %324, %326 : vector<128x256xf32>
    %328 = arith.truncf %327 : vector<128x256xf32> to vector<128x256xbf16>
    %c0_166 = arith.constant 0 : index
    %c0_167 = arith.constant 0 : index
    %329 = vector.load %arg20[%c0_166, %c0_167] : memref<32x128xbf16, #tpu.memory_space<vmem>>, vector<32x128xbf16>
    %cst_168 = arith.constant dense<0.000000e+00> : vector<256x128xf32>
    %330 = tpu.matmul %322, %329, %cst_168 {dimension_numbers = #tpu.dot_dimension_numbers<[1], [0], [0], [1], [0, 0, 1, 1], [], []>} : vector<256x32xbf16>, vector<32x128xbf16>, vector<256x128xf32> -> vector<256x128xf32>
    %c0_169 = arith.constant 0 : index
    %c0_170 = arith.constant 0 : index
    %331 = vector.load %arg21[%c0_169, %c0_170] : memref<1x128xf32, #tpu.memory_space<vmem>>, vector<1x128xf32>
    %332 = vector.broadcast %331 : vector<1x128xf32> to vector<256x128xf32>
    %333 = arith.addf %330, %332 : vector<256x128xf32>
    %334 = arith.truncf %333 : vector<256x128xf32> to vector<256x128xbf16>
    %c0_171 = arith.constant 0 : index
    %c0_172 = arith.constant 0 : index
    %335 = vector.load %arg22[%c0_171, %c0_172] : memref<32x128xbf16, #tpu.memory_space<vmem>>, vector<32x128xbf16>
    %cst_173 = arith.constant dense<0.000000e+00> : vector<256x128xf32>
    %336 = tpu.matmul %322, %335, %cst_173 {dimension_numbers = #tpu.dot_dimension_numbers<[1], [0], [0], [1], [0, 0, 1, 1], [], []>} : vector<256x32xbf16>, vector<32x128xbf16>, vector<256x128xf32> -> vector<256x128xf32>
    %c0_174 = arith.constant 0 : index
    %c0_175 = arith.constant 0 : index
    %337 = vector.load %arg23[%c0_174, %c0_175] : memref<1x128xf32, #tpu.memory_space<vmem>>, vector<1x128xf32>
    %338 = vector.broadcast %337 : vector<1x128xf32> to vector<256x128xf32>
    %339 = arith.addf %336, %338 : vector<256x128xf32>
    %340 = arith.truncf %339 : vector<256x128xf32> to vector<256x128xbf16>
    %cst_176 = arith.constant 0.000000e+00 : f32
    %341 = vector.broadcast %cst_176 : f32 to vector<128x32xf32>
    %342 = vector.extract_strided_slice %334 {offsets = [0, 0], sizes = [128, 128], strides = [1, 1]} : vector<256x128xbf16> to vector<128x128xbf16>
    %343 = vector.extract_strided_slice %342 {offsets = [0, 0], sizes = [128, 32], strides = [1, 1]} : vector<128x128xbf16> to vector<128x32xbf16>
    %344 = vector.extract_strided_slice %328 {offsets = [0, 0], sizes = [32, 256], strides = [1, 1]} : vector<128x256xbf16> to vector<32x256xbf16>
    %cst_177 = arith.constant dense<0.000000e+00> : vector<128x256xf32>
    %345 = tpu.matmul %343, %344, %cst_177 {dimension_numbers = #tpu.dot_dimension_numbers<[1], [0], [0], [1], [0, 0, 1, 1], [], []>} : vector<128x32xbf16>, vector<32x256xbf16>, vector<128x256xf32> -> vector<128x256xf32>
    %cst_178 = arith.constant dense<0xFF800000> : vector<128xf32>
    %346 = vector.multi_reduction <maximumf>, %345, %cst_178 [1] : vector<128x256xf32> to vector<128xf32>
    %347 = vector.shape_cast %346 : vector<128xf32> to vector<128x1xf32>
    %348 = vector.broadcast %347 : vector<128x1xf32> to vector<128x256xf32>
    %349 = arith.subf %345, %348 : vector<128x256xf32>
    %350 = math.exp %349 : vector<128x256xf32>
    %cst_179 = arith.constant dense<0.000000e+00> : vector<128xf32>
    %351 = vector.multi_reduction <add>, %350, %cst_179 [1] : vector<128x256xf32> to vector<128xf32>
    %352 = vector.shape_cast %351 : vector<128xf32> to vector<128x1xf32>
    %353 = tpu.reciprocal %352 {approx = true} : vector<128x1xf32> -> vector<128x1xf32>
    %354 = vector.broadcast %353 : vector<128x1xf32> to vector<128x256xf32>
    %355 = arith.mulf %350, %354 : vector<128x256xf32>
    %356 = arith.truncf %355 : vector<128x256xf32> to vector<128x256xbf16>
    %357 = vector.extract_strided_slice %340 {offsets = [0, 0], sizes = [256, 32], strides = [1, 1]} : vector<256x128xbf16> to vector<256x32xbf16>
    %cst_180 = arith.constant dense<0.000000e+00> : vector<128x32xf32>
    %358 = tpu.matmul %356, %357, %cst_180 {dimension_numbers = #tpu.dot_dimension_numbers<[1], [0], [0], [1], [0, 0, 1, 1], [], []>} : vector<128x256xbf16>, vector<256x32xbf16>, vector<128x32xf32> -> vector<128x32xf32>
    %359 = arith.truncf %358 : vector<128x32xf32> to vector<128x32xbf16>
    %c0_181 = arith.constant 0 : index
    %c0_182 = arith.constant 0 : index
    %360 = vector.load %arg24[%c0_181, %c0_182] : memref<128x32xbf16, #tpu.memory_space<vmem>>, vector<32x32xbf16>
    %cst_183 = arith.constant dense<0.000000e+00> : vector<128x32xf32>
    %361 = tpu.matmul %359, %360, %cst_183 {dimension_numbers = #tpu.dot_dimension_numbers<[1], [0], [0], [1], [0, 0, 1, 1], [], []>} : vector<128x32xbf16>, vector<32x32xbf16>, vector<128x32xf32> -> vector<128x32xf32>
    %362 = arith.addf %341, %361 : vector<128x32xf32>
    %363 = vector.extract_strided_slice %342 {offsets = [0, 32], sizes = [128, 32], strides = [1, 1]} : vector<128x128xbf16> to vector<128x32xbf16>
    %364 = vector.extract_strided_slice %328 {offsets = [32, 0], sizes = [32, 256], strides = [1, 1]} : vector<128x256xbf16> to vector<32x256xbf16>
    %cst_184 = arith.constant dense<0.000000e+00> : vector<128x256xf32>
    %365 = tpu.matmul %363, %364, %cst_184 {dimension_numbers = #tpu.dot_dimension_numbers<[1], [0], [0], [1], [0, 0, 1, 1], [], []>} : vector<128x32xbf16>, vector<32x256xbf16>, vector<128x256xf32> -> vector<128x256xf32>
    %cst_185 = arith.constant dense<0xFF800000> : vector<128xf32>
    %366 = vector.multi_reduction <maximumf>, %365, %cst_185 [1] : vector<128x256xf32> to vector<128xf32>
    %367 = vector.shape_cast %366 : vector<128xf32> to vector<128x1xf32>
    %368 = vector.broadcast %367 : vector<128x1xf32> to vector<128x256xf32>
    %369 = arith.subf %365, %368 : vector<128x256xf32>
    %370 = math.exp %369 : vector<128x256xf32>
    %cst_186 = arith.constant dense<0.000000e+00> : vector<128xf32>
    %371 = vector.multi_reduction <add>, %370, %cst_186 [1] : vector<128x256xf32> to vector<128xf32>
    %372 = vector.shape_cast %371 : vector<128xf32> to vector<128x1xf32>
    %373 = tpu.reciprocal %372 {approx = true} : vector<128x1xf32> -> vector<128x1xf32>
    %374 = vector.broadcast %373 : vector<128x1xf32> to vector<128x256xf32>
    %375 = arith.mulf %370, %374 : vector<128x256xf32>
    %376 = arith.truncf %375 : vector<128x256xf32> to vector<128x256xbf16>
    %377 = vector.extract_strided_slice %340 {offsets = [0, 32], sizes = [256, 32], strides = [1, 1]} : vector<256x128xbf16> to vector<256x32xbf16>
    %cst_187 = arith.constant dense<0.000000e+00> : vector<128x32xf32>
    %378 = tpu.matmul %376, %377, %cst_187 {dimension_numbers = #tpu.dot_dimension_numbers<[1], [0], [0], [1], [0, 0, 1, 1], [], []>} : vector<128x256xbf16>, vector<256x32xbf16>, vector<128x32xf32> -> vector<128x32xf32>
    %379 = arith.truncf %378 : vector<128x32xf32> to vector<128x32xbf16>
    %c32 = arith.constant 32 : index
    %c0_188 = arith.constant 0 : index
    %380 = vector.load %arg24[%c32, %c0_188] : memref<128x32xbf16, #tpu.memory_space<vmem>>, vector<32x32xbf16>
    %cst_189 = arith.constant dense<0.000000e+00> : vector<128x32xf32>
    %381 = tpu.matmul %379, %380, %cst_189 {dimension_numbers = #tpu.dot_dimension_numbers<[1], [0], [0], [1], [0, 0, 1, 1], [], []>} : vector<128x32xbf16>, vector<32x32xbf16>, vector<128x32xf32> -> vector<128x32xf32>
    %382 = arith.addf %362, %381 : vector<128x32xf32>
    %383 = vector.extract_strided_slice %342 {offsets = [0, 64], sizes = [128, 32], strides = [1, 1]} : vector<128x128xbf16> to vector<128x32xbf16>
    %384 = vector.extract_strided_slice %328 {offsets = [64, 0], sizes = [32, 256], strides = [1, 1]} : vector<128x256xbf16> to vector<32x256xbf16>
    %cst_190 = arith.constant dense<0.000000e+00> : vector<128x256xf32>
    %385 = tpu.matmul %383, %384, %cst_190 {dimension_numbers = #tpu.dot_dimension_numbers<[1], [0], [0], [1], [0, 0, 1, 1], [], []>} : vector<128x32xbf16>, vector<32x256xbf16>, vector<128x256xf32> -> vector<128x256xf32>
    %cst_191 = arith.constant dense<0xFF800000> : vector<128xf32>
    %386 = vector.multi_reduction <maximumf>, %385, %cst_191 [1] : vector<128x256xf32> to vector<128xf32>
    %387 = vector.shape_cast %386 : vector<128xf32> to vector<128x1xf32>
    %388 = vector.broadcast %387 : vector<128x1xf32> to vector<128x256xf32>
    %389 = arith.subf %385, %388 : vector<128x256xf32>
    %390 = math.exp %389 : vector<128x256xf32>
    %cst_192 = arith.constant dense<0.000000e+00> : vector<128xf32>
    %391 = vector.multi_reduction <add>, %390, %cst_192 [1] : vector<128x256xf32> to vector<128xf32>
    %392 = vector.shape_cast %391 : vector<128xf32> to vector<128x1xf32>
    %393 = tpu.reciprocal %392 {approx = true} : vector<128x1xf32> -> vector<128x1xf32>
    %394 = vector.broadcast %393 : vector<128x1xf32> to vector<128x256xf32>
    %395 = arith.mulf %390, %394 : vector<128x256xf32>
    %396 = arith.truncf %395 : vector<128x256xf32> to vector<128x256xbf16>
    %397 = vector.extract_strided_slice %340 {offsets = [0, 64], sizes = [256, 32], strides = [1, 1]} : vector<256x128xbf16> to vector<256x32xbf16>
    %cst_193 = arith.constant dense<0.000000e+00> : vector<128x32xf32>
    %398 = tpu.matmul %396, %397, %cst_193 {dimension_numbers = #tpu.dot_dimension_numbers<[1], [0], [0], [1], [0, 0, 1, 1], [], []>} : vector<128x256xbf16>, vector<256x32xbf16>, vector<128x32xf32> -> vector<128x32xf32>
    %399 = arith.truncf %398 : vector<128x32xf32> to vector<128x32xbf16>
    %c64 = arith.constant 64 : index
    %c0_194 = arith.constant 0 : index
    %400 = vector.load %arg24[%c64, %c0_194] : memref<128x32xbf16, #tpu.memory_space<vmem>>, vector<32x32xbf16>
    %cst_195 = arith.constant dense<0.000000e+00> : vector<128x32xf32>
    %401 = tpu.matmul %399, %400, %cst_195 {dimension_numbers = #tpu.dot_dimension_numbers<[1], [0], [0], [1], [0, 0, 1, 1], [], []>} : vector<128x32xbf16>, vector<32x32xbf16>, vector<128x32xf32> -> vector<128x32xf32>
    %402 = arith.addf %382, %401 : vector<128x32xf32>
    %403 = vector.extract_strided_slice %342 {offsets = [0, 96], sizes = [128, 32], strides = [1, 1]} : vector<128x128xbf16> to vector<128x32xbf16>
    %404 = vector.extract_strided_slice %328 {offsets = [96, 0], sizes = [32, 256], strides = [1, 1]} : vector<128x256xbf16> to vector<32x256xbf16>
    %cst_196 = arith.constant dense<0.000000e+00> : vector<128x256xf32>
    %405 = tpu.matmul %403, %404, %cst_196 {dimension_numbers = #tpu.dot_dimension_numbers<[1], [0], [0], [1], [0, 0, 1, 1], [], []>} : vector<128x32xbf16>, vector<32x256xbf16>, vector<128x256xf32> -> vector<128x256xf32>
    %cst_197 = arith.constant dense<0xFF800000> : vector<128xf32>
    %406 = vector.multi_reduction <maximumf>, %405, %cst_197 [1] : vector<128x256xf32> to vector<128xf32>
    %407 = vector.shape_cast %406 : vector<128xf32> to vector<128x1xf32>
    %408 = vector.broadcast %407 : vector<128x1xf32> to vector<128x256xf32>
    %409 = arith.subf %405, %408 : vector<128x256xf32>
    %410 = math.exp %409 : vector<128x256xf32>
    %cst_198 = arith.constant dense<0.000000e+00> : vector<128xf32>
    %411 = vector.multi_reduction <add>, %410, %cst_198 [1] : vector<128x256xf32> to vector<128xf32>
    %412 = vector.shape_cast %411 : vector<128xf32> to vector<128x1xf32>
    %413 = tpu.reciprocal %412 {approx = true} : vector<128x1xf32> -> vector<128x1xf32>
    %414 = vector.broadcast %413 : vector<128x1xf32> to vector<128x256xf32>
    %415 = arith.mulf %410, %414 : vector<128x256xf32>
    %416 = arith.truncf %415 : vector<128x256xf32> to vector<128x256xbf16>
    %417 = vector.extract_strided_slice %340 {offsets = [0, 96], sizes = [256, 32], strides = [1, 1]} : vector<256x128xbf16> to vector<256x32xbf16>
    %cst_199 = arith.constant dense<0.000000e+00> : vector<128x32xf32>
    %418 = tpu.matmul %416, %417, %cst_199 {dimension_numbers = #tpu.dot_dimension_numbers<[1], [0], [0], [1], [0, 0, 1, 1], [], []>} : vector<128x256xbf16>, vector<256x32xbf16>, vector<128x32xf32> -> vector<128x32xf32>
    %419 = arith.truncf %418 : vector<128x32xf32> to vector<128x32xbf16>
    %c96 = arith.constant 96 : index
    %c0_200 = arith.constant 0 : index
    %420 = vector.load %arg24[%c96, %c0_200] : memref<128x32xbf16, #tpu.memory_space<vmem>>, vector<32x32xbf16>
    %cst_201 = arith.constant dense<0.000000e+00> : vector<128x32xf32>
    %421 = tpu.matmul %419, %420, %cst_201 {dimension_numbers = #tpu.dot_dimension_numbers<[1], [0], [0], [1], [0, 0, 1, 1], [], []>} : vector<128x32xbf16>, vector<32x32xbf16>, vector<128x32xf32> -> vector<128x32xf32>
    %422 = arith.addf %402, %421 : vector<128x32xf32>
    %cst_202 = arith.constant 0.000000e+00 : f32
    %423 = vector.broadcast %cst_202 : f32 to vector<128x32xf32>
    %424 = vector.extract_strided_slice %334 {offsets = [128, 0], sizes = [128, 128], strides = [1, 1]} : vector<256x128xbf16> to vector<128x128xbf16>
    %425 = vector.extract_strided_slice %424 {offsets = [0, 0], sizes = [128, 32], strides = [1, 1]} : vector<128x128xbf16> to vector<128x32xbf16>
    %426 = vector.extract_strided_slice %328 {offsets = [0, 0], sizes = [32, 256], strides = [1, 1]} : vector<128x256xbf16> to vector<32x256xbf16>
    %cst_203 = arith.constant dense<0.000000e+00> : vector<128x256xf32>
    %427 = tpu.matmul %425, %426, %cst_203 {dimension_numbers = #tpu.dot_dimension_numbers<[1], [0], [0], [1], [0, 0, 1, 1], [], []>} : vector<128x32xbf16>, vector<32x256xbf16>, vector<128x256xf32> -> vector<128x256xf32>
    %cst_204 = arith.constant dense<0xFF800000> : vector<128xf32>
    %428 = vector.multi_reduction <maximumf>, %427, %cst_204 [1] : vector<128x256xf32> to vector<128xf32>
    %429 = vector.shape_cast %428 : vector<128xf32> to vector<128x1xf32>
    %430 = vector.broadcast %429 : vector<128x1xf32> to vector<128x256xf32>
    %431 = arith.subf %427, %430 : vector<128x256xf32>
    %432 = math.exp %431 : vector<128x256xf32>
    %cst_205 = arith.constant dense<0.000000e+00> : vector<128xf32>
    %433 = vector.multi_reduction <add>, %432, %cst_205 [1] : vector<128x256xf32> to vector<128xf32>
    %434 = vector.shape_cast %433 : vector<128xf32> to vector<128x1xf32>
    %435 = tpu.reciprocal %434 {approx = true} : vector<128x1xf32> -> vector<128x1xf32>
    %436 = vector.broadcast %435 : vector<128x1xf32> to vector<128x256xf32>
    %437 = arith.mulf %432, %436 : vector<128x256xf32>
    %438 = arith.truncf %437 : vector<128x256xf32> to vector<128x256xbf16>
    %439 = vector.extract_strided_slice %340 {offsets = [0, 0], sizes = [256, 32], strides = [1, 1]} : vector<256x128xbf16> to vector<256x32xbf16>
    %cst_206 = arith.constant dense<0.000000e+00> : vector<128x32xf32>
    %440 = tpu.matmul %438, %439, %cst_206 {dimension_numbers = #tpu.dot_dimension_numbers<[1], [0], [0], [1], [0, 0, 1, 1], [], []>} : vector<128x256xbf16>, vector<256x32xbf16>, vector<128x32xf32> -> vector<128x32xf32>
    %441 = arith.truncf %440 : vector<128x32xf32> to vector<128x32xbf16>
    %c0_207 = arith.constant 0 : index
    %c0_208 = arith.constant 0 : index
    %442 = vector.load %arg24[%c0_207, %c0_208] : memref<128x32xbf16, #tpu.memory_space<vmem>>, vector<32x32xbf16>
    %cst_209 = arith.constant dense<0.000000e+00> : vector<128x32xf32>
    %443 = tpu.matmul %441, %442, %cst_209 {dimension_numbers = #tpu.dot_dimension_numbers<[1], [0], [0], [1], [0, 0, 1, 1], [], []>} : vector<128x32xbf16>, vector<32x32xbf16>, vector<128x32xf32> -> vector<128x32xf32>
    %444 = arith.addf %423, %443 : vector<128x32xf32>
    %445 = vector.extract_strided_slice %424 {offsets = [0, 32], sizes = [128, 32], strides = [1, 1]} : vector<128x128xbf16> to vector<128x32xbf16>
    %446 = vector.extract_strided_slice %328 {offsets = [32, 0], sizes = [32, 256], strides = [1, 1]} : vector<128x256xbf16> to vector<32x256xbf16>
    %cst_210 = arith.constant dense<0.000000e+00> : vector<128x256xf32>
    %447 = tpu.matmul %445, %446, %cst_210 {dimension_numbers = #tpu.dot_dimension_numbers<[1], [0], [0], [1], [0, 0, 1, 1], [], []>} : vector<128x32xbf16>, vector<32x256xbf16>, vector<128x256xf32> -> vector<128x256xf32>
    %cst_211 = arith.constant dense<0xFF800000> : vector<128xf32>
    %448 = vector.multi_reduction <maximumf>, %447, %cst_211 [1] : vector<128x256xf32> to vector<128xf32>
    %449 = vector.shape_cast %448 : vector<128xf32> to vector<128x1xf32>
    %450 = vector.broadcast %449 : vector<128x1xf32> to vector<128x256xf32>
    %451 = arith.subf %447, %450 : vector<128x256xf32>
    %452 = math.exp %451 : vector<128x256xf32>
    %cst_212 = arith.constant dense<0.000000e+00> : vector<128xf32>
    %453 = vector.multi_reduction <add>, %452, %cst_212 [1] : vector<128x256xf32> to vector<128xf32>
    %454 = vector.shape_cast %453 : vector<128xf32> to vector<128x1xf32>
    %455 = tpu.reciprocal %454 {approx = true} : vector<128x1xf32> -> vector<128x1xf32>
    %456 = vector.broadcast %455 : vector<128x1xf32> to vector<128x256xf32>
    %457 = arith.mulf %452, %456 : vector<128x256xf32>
    %458 = arith.truncf %457 : vector<128x256xf32> to vector<128x256xbf16>
    %459 = vector.extract_strided_slice %340 {offsets = [0, 32], sizes = [256, 32], strides = [1, 1]} : vector<256x128xbf16> to vector<256x32xbf16>
    %cst_213 = arith.constant dense<0.000000e+00> : vector<128x32xf32>
    %460 = tpu.matmul %458, %459, %cst_213 {dimension_numbers = #tpu.dot_dimension_numbers<[1], [0], [0], [1], [0, 0, 1, 1], [], []>} : vector<128x256xbf16>, vector<256x32xbf16>, vector<128x32xf32> -> vector<128x32xf32>
    %461 = arith.truncf %460 : vector<128x32xf32> to vector<128x32xbf16>
    %c32_214 = arith.constant 32 : index
    %c0_215 = arith.constant 0 : index
    %462 = vector.load %arg24[%c32_214, %c0_215] : memref<128x32xbf16, #tpu.memory_space<vmem>>, vector<32x32xbf16>
    %cst_216 = arith.constant dense<0.000000e+00> : vector<128x32xf32>
    %463 = tpu.matmul %461, %462, %cst_216 {dimension_numbers = #tpu.dot_dimension_numbers<[1], [0], [0], [1], [0, 0, 1, 1], [], []>} : vector<128x32xbf16>, vector<32x32xbf16>, vector<128x32xf32> -> vector<128x32xf32>
    %464 = arith.addf %444, %463 : vector<128x32xf32>
    %465 = vector.extract_strided_slice %424 {offsets = [0, 64], sizes = [128, 32], strides = [1, 1]} : vector<128x128xbf16> to vector<128x32xbf16>
    %466 = vector.extract_strided_slice %328 {offsets = [64, 0], sizes = [32, 256], strides = [1, 1]} : vector<128x256xbf16> to vector<32x256xbf16>
    %cst_217 = arith.constant dense<0.000000e+00> : vector<128x256xf32>
    %467 = tpu.matmul %465, %466, %cst_217 {dimension_numbers = #tpu.dot_dimension_numbers<[1], [0], [0], [1], [0, 0, 1, 1], [], []>} : vector<128x32xbf16>, vector<32x256xbf16>, vector<128x256xf32> -> vector<128x256xf32>
    %cst_218 = arith.constant dense<0xFF800000> : vector<128xf32>
    %468 = vector.multi_reduction <maximumf>, %467, %cst_218 [1] : vector<128x256xf32> to vector<128xf32>
    %469 = vector.shape_cast %468 : vector<128xf32> to vector<128x1xf32>
    %470 = vector.broadcast %469 : vector<128x1xf32> to vector<128x256xf32>
    %471 = arith.subf %467, %470 : vector<128x256xf32>
    %472 = math.exp %471 : vector<128x256xf32>
    %cst_219 = arith.constant dense<0.000000e+00> : vector<128xf32>
    %473 = vector.multi_reduction <add>, %472, %cst_219 [1] : vector<128x256xf32> to vector<128xf32>
    %474 = vector.shape_cast %473 : vector<128xf32> to vector<128x1xf32>
    %475 = tpu.reciprocal %474 {approx = true} : vector<128x1xf32> -> vector<128x1xf32>
    %476 = vector.broadcast %475 : vector<128x1xf32> to vector<128x256xf32>
    %477 = arith.mulf %472, %476 : vector<128x256xf32>
    %478 = arith.truncf %477 : vector<128x256xf32> to vector<128x256xbf16>
    %479 = vector.extract_strided_slice %340 {offsets = [0, 64], sizes = [256, 32], strides = [1, 1]} : vector<256x128xbf16> to vector<256x32xbf16>
    %cst_220 = arith.constant dense<0.000000e+00> : vector<128x32xf32>
    %480 = tpu.matmul %478, %479, %cst_220 {dimension_numbers = #tpu.dot_dimension_numbers<[1], [0], [0], [1], [0, 0, 1, 1], [], []>} : vector<128x256xbf16>, vector<256x32xbf16>, vector<128x32xf32> -> vector<128x32xf32>
    %481 = arith.truncf %480 : vector<128x32xf32> to vector<128x32xbf16>
    %c64_221 = arith.constant 64 : index
    %c0_222 = arith.constant 0 : index
    %482 = vector.load %arg24[%c64_221, %c0_222] : memref<128x32xbf16, #tpu.memory_space<vmem>>, vector<32x32xbf16>
    %cst_223 = arith.constant dense<0.000000e+00> : vector<128x32xf32>
    %483 = tpu.matmul %481, %482, %cst_223 {dimension_numbers = #tpu.dot_dimension_numbers<[1], [0], [0], [1], [0, 0, 1, 1], [], []>} : vector<128x32xbf16>, vector<32x32xbf16>, vector<128x32xf32> -> vector<128x32xf32>
    %484 = arith.addf %464, %483 : vector<128x32xf32>
    %485 = vector.extract_strided_slice %424 {offsets = [0, 96], sizes = [128, 32], strides = [1, 1]} : vector<128x128xbf16> to vector<128x32xbf16>
    %486 = vector.extract_strided_slice %328 {offsets = [96, 0], sizes = [32, 256], strides = [1, 1]} : vector<128x256xbf16> to vector<32x256xbf16>
    %cst_224 = arith.constant dense<0.000000e+00> : vector<128x256xf32>
    %487 = tpu.matmul %485, %486, %cst_224 {dimension_numbers = #tpu.dot_dimension_numbers<[1], [0], [0], [1], [0, 0, 1, 1], [], []>} : vector<128x32xbf16>, vector<32x256xbf16>, vector<128x256xf32> -> vector<128x256xf32>
    %cst_225 = arith.constant dense<0xFF800000> : vector<128xf32>
    %488 = vector.multi_reduction <maximumf>, %487, %cst_225 [1] : vector<128x256xf32> to vector<128xf32>
    %489 = vector.shape_cast %488 : vector<128xf32> to vector<128x1xf32>
    %490 = vector.broadcast %489 : vector<128x1xf32> to vector<128x256xf32>
    %491 = arith.subf %487, %490 : vector<128x256xf32>
    %492 = math.exp %491 : vector<128x256xf32>
    %cst_226 = arith.constant dense<0.000000e+00> : vector<128xf32>
    %493 = vector.multi_reduction <add>, %492, %cst_226 [1] : vector<128x256xf32> to vector<128xf32>
    %494 = vector.shape_cast %493 : vector<128xf32> to vector<128x1xf32>
    %495 = tpu.reciprocal %494 {approx = true} : vector<128x1xf32> -> vector<128x1xf32>
    %496 = vector.broadcast %495 : vector<128x1xf32> to vector<128x256xf32>
    %497 = arith.mulf %492, %496 : vector<128x256xf32>
    %498 = arith.truncf %497 : vector<128x256xf32> to vector<128x256xbf16>
    %499 = vector.extract_strided_slice %340 {offsets = [0, 96], sizes = [256, 32], strides = [1, 1]} : vector<256x128xbf16> to vector<256x32xbf16>
    %cst_227 = arith.constant dense<0.000000e+00> : vector<128x32xf32>
    %500 = tpu.matmul %498, %499, %cst_227 {dimension_numbers = #tpu.dot_dimension_numbers<[1], [0], [0], [1], [0, 0, 1, 1], [], []>} : vector<128x256xbf16>, vector<256x32xbf16>, vector<128x32xf32> -> vector<128x32xf32>
    %501 = arith.truncf %500 : vector<128x32xf32> to vector<128x32xbf16>
    %c96_228 = arith.constant 96 : index
    %c0_229 = arith.constant 0 : index
    %502 = vector.load %arg24[%c96_228, %c0_229] : memref<128x32xbf16, #tpu.memory_space<vmem>>, vector<32x32xbf16>
    %cst_230 = arith.constant dense<0.000000e+00> : vector<128x32xf32>
    %503 = tpu.matmul %501, %502, %cst_230 {dimension_numbers = #tpu.dot_dimension_numbers<[1], [0], [0], [1], [0, 0, 1, 1], [], []>} : vector<128x32xbf16>, vector<32x32xbf16>, vector<128x32xf32> -> vector<128x32xf32>
    %504 = arith.addf %484, %503 : vector<128x32xf32>
    %505 = tpu.concatenate %422, %504 in 0 : vector<128x32xf32>, vector<128x32xf32> -> vector<256x32xf32>
    %506 = tpu.transpose %505, [1, 0] : vector<256x32xf32> -> vector<32x256xf32>
    %507 = arith.addf %295, %506 : vector<32x256xf32>
    %c0_231 = arith.constant 0 : index
    %c0_232 = arith.constant 0 : index
    %508 = vector.load %arg25[%c0_231, %c0_232] : memref<32x1xf32, #tpu.memory_space<vmem>>, vector<32x1xf32>
    %509 = vector.broadcast %508 : vector<32x1xf32> to vector<32x256xf32>
    %510 = arith.addf %507, %509 : vector<32x256xf32>
    %c0_233 = arith.constant 0 : index
    %c0_234 = arith.constant 0 : index
    %c0_235 = arith.constant 0 : index
    %511 = vector.load %arg26[%c0_233, %c0_234, %c0_235] : memref<1x32x256xf32, #tpu.memory_space<vmem>>, vector<1x32x256xf32>
    %512 = vector.shape_cast %511 : vector<1x32x256xf32> to vector<32x256xf32>
    %513 = vector.shape_cast %510 : vector<32x256xf32> to vector<1x32x256xf32>
    tpu.vector_store %arg26[%c0_233, %c0_234, %c0_235], %513 {strides = array<i32>} : memref<1x32x256xf32, #tpu.memory_space<vmem>>, vector<1x32x256xf32>,
    return
  }
  func.func @transform_0(%arg0: i32) -> (i32, i32, i32) {
    %c0_i32 = arith.constant 0 : i32
    %c0_i32_0 = arith.constant 0 : i32
    %c0_i32_1 = arith.constant 0 : i32
    return %arg0, %c0_i32, %c0_i32_0 : i32, i32, i32
  }
  func.func @transform_1(%arg0: i32) -> (i32, i32, i32) {
    %c0_i32 = arith.constant 0 : i32
    %c0_i32_0 = arith.constant 0 : i32
    %c0_i32_1 = arith.constant 0 : i32
    return %arg0, %c0_i32, %c0_i32_0 : i32, i32, i32
  }
  func.func @transform_2(%arg0: i32) -> (i32, i32) {
    %c0_i32 = arith.constant 0 : i32
    %c0_i32_0 = arith.constant 0 : i32
    %c0_i32_1 = arith.constant 0 : i32
    return %c0_i32, %c0_i32_0 : i32, i32
  }
  func.func @transform_3(%arg0: i32) -> (i32, i32) {
    %c0_i32 = arith.constant 0 : i32
    %c0_i32_0 = arith.constant 0 : i32
    %c0_i32_1 = arith.constant 0 : i32
    return %c0_i32, %c0_i32_0 : i32, i32
  }
  func.func @transform_4(%arg0: i32) -> (i32, i32) {
    %c0_i32 = arith.constant 0 : i32
    %c0_i32_0 = arith.constant 0 : i32
    %c0_i32_1 = arith.constant 0 : i32
    return %c0_i32, %c0_i32_0 : i32, i32
  }
  func.func @transform_5(%arg0: i32) -> (i32, i32) {
    %c0_i32 = arith.constant 0 : i32
    %c0_i32_0 = arith.constant 0 : i32
    %c0_i32_1 = arith.constant 0 : i32
    return %c0_i32, %c0_i32_0 : i32, i32
  }
  func.func @transform_6(%arg0: i32) -> (i32, i32, i32) {
    %c0_i32 = arith.constant 0 : i32
    %c0_i32_0 = arith.constant 0 : i32
    %c0_i32_1 = arith.constant 0 : i32
    %c0_i32_2 = arith.constant 0 : i32
    return %c0_i32, %c0_i32_0, %c0_i32_1 : i32, i32, i32
  }
  func.func @transform_7(%arg0: i32) -> (i32, i32) {
    %c0_i32 = arith.constant 0 : i32
    %c0_i32_0 = arith.constant 0 : i32
    %c0_i32_1 = arith.constant 0 : i32
    return %c0_i32, %c0_i32_0 : i32, i32
  }
  func.func @transform_8(%arg0: i32) -> (i32, i32) {
    %c0_i32 = arith.constant 0 : i32
    %c0_i32_0 = arith.constant 0 : i32
    %c0_i32_1 = arith.constant 0 : i32
    return %c0_i32, %c0_i32_0 : i32, i32
  }
  func.func @transform_9(%arg0: i32) -> (i32, i32) {
    %c0_i32 = arith.constant 0 : i32
    %c0_i32_0 = arith.constant 0 : i32
    %c0_i32_1 = arith.constant 0 : i32
    return %c0_i32, %c0_i32_0 : i32, i32
  }
  func.func @transform_10(%arg0: i32) -> (i32, i32, i32) {
    %c0_i32 = arith.constant 0 : i32
    %c0_i32_0 = arith.constant 0 : i32
    %c0_i32_1 = arith.constant 0 : i32
    %c0_i32_2 = arith.constant 0 : i32
    return %c0_i32, %c0_i32_0, %c0_i32_1 : i32, i32, i32
  }
  func.func @transform_11(%arg0: i32) -> (i32, i32) {
    %c0_i32 = arith.constant 0 : i32
    %c0_i32_0 = arith.constant 0 : i32
    %c0_i32_1 = arith.constant 0 : i32
    return %c0_i32, %c0_i32_0 : i32, i32
  }
  func.func @transform_12(%arg0: i32) -> (i32, i32) {
    %c0_i32 = arith.constant 0 : i32
    %c0_i32_0 = arith.constant 0 : i32
    %c0_i32_1 = arith.constant 0 : i32
    return %c0_i32, %c0_i32_0 : i32, i32
  }
  func.func @transform_13(%arg0: i32) -> (i32, i32) {
    %c0_i32 = arith.constant 0 : i32
    %c0_i32_0 = arith.constant 0 : i32
    %c0_i32_1 = arith.constant 0 : i32
    return %c0_i32, %c0_i32_0 : i32, i32
  }
  func.func @transform_14(%arg0: i32) -> (i32, i32) {
    %c0_i32 = arith.constant 0 : i32
    %c0_i32_0 = arith.constant 0 : i32
    %c0_i32_1 = arith.constant 0 : i32
    return %c0_i32, %c0_i32_0 : i32, i32
  }
  func.func @transform_15(%arg0: i32) -> (i32, i32) {
    %c0_i32 = arith.constant 0 : i32
    %c0_i32_0 = arith.constant 0 : i32
    %c0_i32_1 = arith.constant 0 : i32
    return %c0_i32, %c0_i32_0 : i32, i32
  }
  func.func @transform_16(%arg0: i32) -> (i32, i32) {
    %c0_i32 = arith.constant 0 : i32
    %c0_i32_0 = arith.constant 0 : i32
    %c0_i32_1 = arith.constant 0 : i32
    return %c0_i32, %c0_i32_0 : i32, i32
  }
  func.func @transform_17(%arg0: i32) -> (i32, i32) {
    %c0_i32 = arith.constant 0 : i32
    %c0_i32_0 = arith.constant 0 : i32
    %c0_i32_1 = arith.constant 0 : i32
    return %c0_i32, %c0_i32_0 : i32, i32
  }
  func.func @transform_18(%arg0: i32) -> (i32, i32) {
    %c0_i32 = arith.constant 0 : i32
    %c0_i32_0 = arith.constant 0 : i32
    %c0_i32_1 = arith.constant 0 : i32
    return %c0_i32, %c0_i32_0 : i32, i32
  }
  func.func @transform_19(%arg0: i32) -> (i32, i32) {
    %c0_i32 = arith.constant 0 : i32
    %c0_i32_0 = arith.constant 0 : i32
    %c0_i32_1 = arith.constant 0 : i32
    return %c0_i32, %c0_i32_0 : i32, i32
  }
  func.func @transform_20(%arg0: i32) -> (i32, i32) {
    %c0_i32 = arith.constant 0 : i32
    %c0_i32_0 = arith.constant 0 : i32
    %c0_i32_1 = arith.constant 0 : i32
    return %c0_i32, %c0_i32_0 : i32, i32
  }
  func.func @transform_21(%arg0: i32) -> (i32, i32) {
    %c0_i32 = arith.constant 0 : i32
    %c0_i32_0 = arith.constant 0 : i32
    %c0_i32_1 = arith.constant 0 : i32
    return %c0_i32, %c0_i32_0 : i32, i32
  }
  func.func @transform_22(%arg0: i32) -> (i32, i32) {
    %c0_i32 = arith.constant 0 : i32
    %c0_i32_0 = arith.constant 0 : i32
    %c0_i32_1 = arith.constant 0 : i32
    return %c0_i32, %c0_i32_0 : i32, i32
  }
  func.func @transform_23(%arg0: i32) -> (i32, i32) {
    %c0_i32 = arith.constant 0 : i32
    %c0_i32_0 = arith.constant 0 : i32
    %c0_i32_1 = arith.constant 0 : i32
    return %c0_i32, %c0_i32_0 : i32, i32
  }
  func.func @transform_24(%arg0: i32) -> (i32, i32) {
    %c0_i32 = arith.constant 0 : i32
    %c0_i32_0 = arith.constant 0 : i32
    %c0_i32_1 = arith.constant 0 : i32
    return %c0_i32, %c0_i32_0 : i32, i32
  }
  func.func @transform_25(%arg0: i32) -> (i32, i32, i32) {
    %c0_i32 = arith.constant 0 : i32
    %c0_i32_0 = arith.constant 0 : i32
    %c0_i32_1 = arith.constant 0 : i32
    return %arg0, %c0_i32, %c0_i32_0 : i32, i32, i32
  }
}

</mosaic_0001>

<llo_original>
// kernel: tpu_custom_call.1
$region0: #{tpu_custom_call.1}
  #allocation0 [shape = 'u32[]', space=smem, size = 0x4, offset = 0x4, fixed_abs, tag = 'smem constant byte address 0x4 - core index']
  #allocation1 [shape = 'u32[144,128]{1,0:T(1,128)}', space=vmem, size = 0x12000, scoped, tag = 'internal scratch']
  %s0 = inlined_call_operand.vmem [shape: f32[2,16,256], index: 0, kind: input, shape index: {}]
  %s1 = inlined_call_operand.vmem [shape: f32[2,32,1], index: 1, kind: input, shape index: {}]
  %s2 = inlined_call_operand.vmem [shape: f32[2,256], index: 2, kind: input, shape index: {}]
  %s3 = inlined_call_operand.vmem [shape: f32[16,1], index: 3, kind: input, shape index: {}]
  %s4 = inlined_call_operand.vmem [shape: f32[16,1], index: 4, kind: input, shape index: {}]
  %s5 = inlined_call_operand.vmem [shape: f32[16,16], index: 5, kind: input, shape index: {}]
  %s6 = inlined_call_operand.vmem [shape: bf16[9,32,16], index: 6, kind: input, shape index: {}]
  %s7 = inlined_call_operand.vmem [shape: f32[32,1], index: 7, kind: input, shape index: {}]
  %s8 = inlined_call_operand.vmem [shape: f32[32,1], index: 8, kind: input, shape index: {}]
  %s9 = inlined_call_operand.vmem [shape: f32[32,32], index: 9, kind: input, shape index: {}]
  %s10 = inlined_call_operand.vmem [shape: bf16[9,32,32], index: 10, kind: input, shape index: {}]
  %s11 = inlined_call_operand.vmem [shape: f32[32,1], index: 11, kind: input, shape index: {}]
  %s12 = inlined_call_operand.vmem [shape: bf16[32,16], index: 12, kind: input, shape index: {}]
  %s13 = inlined_call_operand.vmem [shape: f32[32,1], index: 13, kind: input, shape index: {}]
  %s14 = inlined_call_operand.vmem [shape: f32[32,1], index: 14, kind: input, shape index: {}]
  %s15 = inlined_call_operand.vmem [shape: f32[32,1], index: 15, kind: input, shape index: {}]
  %s16 = inlined_call_operand.vmem [shape: f32[32,32], index: 16, kind: input, shape index: {}]
  %s17 = inlined_call_operand.vmem [shape: bf16[128,32], index: 17, kind: input, shape index: {}]
  %s18 = inlined_call_operand.vmem [shape: f32[128,1], index: 18, kind: input, shape index: {}]
  %s19 = inlined_call_operand.vmem [shape: bf16[32,128], index: 19, kind: input, shape index: {}]
  %s20 = inlined_call_operand.vmem [shape: f32[1,128], index: 20, kind: input, shape index: {}]
  %s21 = inlined_call_operand.vmem [shape: bf16[32,128], index: 21, kind: input, shape index: {}]
  %s22 = inlined_call_operand.vmem [shape: f32[1,128], index: 22, kind: input, shape index: {}]
  %s23 = inlined_call_operand.vmem [shape: bf16[128,32], index: 23, kind: input, shape index: {}]
  %s24 = inlined_call_operand.vmem [shape: f32[32,1], index: 24, kind: input, shape index: {}]
  %s25 = inlined_call_operand.hbm [shape: f32[2,32,256], index: 25, kind: output, shape index: {}]
  %s26 = sld [smem:[#allocation0]]
  $region133: #{tpu_custom_call.1} parent=0
    _
  %s28 = ssub.s32 1, %s26
  %s29 = scalar_select 0, %s28, %s26
  $region1: #{tpu_custom_call.1} parent=0
    #allocation2 [shape = 'u8[65536]{0}', space=vmem, size = 0x10000, scoped, tag = 'output window, operand 0']
    #allocation3 [shape = 's32[2]{0}', space=sflag, size = 0x8, scoped, tag = 'scoped memory for tpu_custom_call.1']
    %30 = vsyncpa [#allocation3], 0
    %s31 = scalar_lea.sflag [#allocation3], 1
    %32 = vsyncpa %s31, 0
    loop: start=0, step=1, limit=4
    $region2: #{tpu_custom_call.1} parent=1 // loop_pre_header
      _
    $region3: #{tpu_custom_call.1} parent=1 // loop_header
      %s34 = sphi 0, %s38
      %p35 = scmp.ge.s32.totalorder %s34, 4
      %s44 = sphi 0, %s46
      %s47 = sphi 0, %s44
      %s48 = sphi 0, %s47
      %s64 = sphi 0, %s48
      %s70 = sphi 0, %s72
      %s73 = sphi 0, %s70
      %s74 = sphi 0, %s73
      %s90 = sphi 0, %s74
      %s94 = sphi 0, %s94
      %s96 = sphi 0, %s94
      %s97 = sphi 0, %s96
      %s111 = sphi 0, %s97
      %s115 = sphi 0, %s115
      %s117 = sphi 0, %s115
      %s118 = sphi 0, %s117
      %s132 = sphi 0, %s118
      %s136 = sphi 0, %s136
      %s138 = sphi 0, %s136
      %s139 = sphi 0, %s138
      %s153 = sphi 0, %s139
      %s157 = sphi 0, %s157
      %s159 = sphi 0, %s157
      %s160 = sphi 0, %s159
      %s174 = sphi 0, %s160
      %s178 = sphi 0, %s178
      %s180 = sphi 0, %s178
      %s181 = sphi 0, %s180
      %s195 = sphi 0, %s181
      %s199 = sphi 0, %s199
      %s201 = sphi 0, %s199
      %s202 = sphi 0, %s201
      %s216 = sphi 0, %s202
      %s220 = sphi 0, %s220
      %s222 = sphi 0, %s220
      %s223 = sphi 0, %s222
      %s237 = sphi 0, %s223
      %s241 = sphi 0, %s241
      %s243 = sphi 0, %s241
      %s244 = sphi 0, %s243
      %s258 = sphi 0, %s244
      %s262 = sphi 0, %s262
      %s264 = sphi 0, %s262
      %s265 = sphi 0, %s264
      %s279 = sphi 0, %s265
      %s283 = sphi 0, %s283
      %s285 = sphi 0, %s283
      %s286 = sphi 0, %s285
      %s300 = sphi 0, %s286
      %s304 = sphi 0, %s304
      %s306 = sphi 0, %s304
      %s307 = sphi 0, %s306
      %s321 = sphi 0, %s307
      %s325 = sphi 0, %s325
      %s327 = sphi 0, %s325
      %s328 = sphi 0, %s327
      %s342 = sphi 0, %s328
      %s346 = sphi 0, %s346
      %s348 = sphi 0, %s346
      %s349 = sphi 0, %s348
      %s363 = sphi 0, %s349
      %s367 = sphi 0, %s367
      %s369 = sphi 0, %s367
      %s370 = sphi 0, %s369
      %s384 = sphi 0, %s370
      %s388 = sphi 0, %s388
      %s390 = sphi 0, %s388
      %s391 = sphi 0, %s390
      %s405 = sphi 0, %s391
      %s409 = sphi 0, %s409
      %s411 = sphi 0, %s409
      %s412 = sphi 0, %s411
      %s426 = sphi 0, %s412
      %s430 = sphi 0, %s430
      %s432 = sphi 0, %s430
      %s433 = sphi 0, %s432
      %s447 = sphi 0, %s433
      %s451 = sphi 0, %s451
      %s453 = sphi 0, %s451
      %s454 = sphi 0, %s453
      %s468 = sphi 0, %s454
      %s472 = sphi 0, %s472
      %s474 = sphi 0, %s472
      %s475 = sphi 0, %s474
      %s489 = sphi 0, %s475
      %s493 = sphi 0, %s493
      %s495 = sphi 0, %s493
      %s496 = sphi 0, %s495
      %s510 = sphi 0, %s496
      %s514 = sphi 0, %s514
      %s516 = sphi 0, %s514
      %s517 = sphi 0, %s516
      %s531 = sphi 0, %s517
      %s535 = sphi 0, %s535
      %s537 = sphi 0, %s535
      %s538 = sphi 0, %s537
      %s552 = sphi 0, %s538
      %s556 = sphi 0, %s556
      %s558 = sphi 0, %s556
      %s559 = sphi 0, %s558
      %s573 = sphi 0, %s559
      %s579 = sphi 0, %s581
      %s582 = sphi 0, %s579
      %s583 = sphi 0, %s582
      %s599 = sphi 0, %s583
    $region4: #{tpu_custom_call.1} parent=1 // loop_header_branch
      %37 = sbr.rel (%p35) target = $region8
    $region5: #{tpu_custom_call.1} parent=1 // loop_body
      %s39 = ssub.s32 %s34, 1
      %s40 = ssub.s32 %s34, 2
      %s41 = sadd.s32 %s34, 1
      %s42 = ssub.s32 %s34, %s41
      %p43 = scmp.eq.s32.totalorder %s42, 0
      %s45 = sadd.s32 %s44, 1
      %s46 = scalar_select %p43, %s44, %s45
      %p49 = pneg %p43
      %p50 = scmp.eq.s32.totalorder %s34, 1
      %p51 = por %p49, %p50
      %p52 = scmp.ne.s32.totalorder %s44, %s47
      %p53 = scmp.eq.s32.totalorder %s34, 0
      %p54 = por %p52, %p53
      %p55 = scmp.ne.s32.totalorder %s44, %s47
      %p56 = scmp.eq.s32.totalorder %s39, 1
      %p57 = por %p55, %p56
      %p58 = scmp.ne.s32.totalorder %s47, %s48
      %p59 = scmp.eq.s32.totalorder %s39, 0
      %p60 = por %p58, %p59
      %p61 = scmp.ne.s32.totalorder %s47, %s48
      %p62 = scmp.eq.s32.totalorder %s40, 1
      %p63 = por %p61, %p62
      %p65 = scmp.ne.s32.totalorder %s48, %s64
      %p66 = scmp.eq.s32.totalorder %s40, 0
      %p67 = por %p65, %p66
      %s68 = ssub.s32 %s34, %s41
      %p69 = scmp.eq.s32.totalorder %s68, 0
      %s71 = sadd.s32 %s70, 1
      %s72 = scalar_select %p69, %s70, %s71
      %p75 = pneg %p69
      %p76 = scmp.eq.s32.totalorder %s34, 1
      %p77 = por %p75, %p76
      %p78 = scmp.ne.s32.totalorder %s70, %s73
      %p79 = scmp.eq.s32.totalorder %s34, 0
      %p80 = por %p78, %p79
      %p81 = scmp.ne.s32.totalorder %s70, %s73
      %p82 = scmp.eq.s32.totalorder %s39, 1
      %p83 = por %p81, %p82
      %p84 = scmp.ne.s32.totalorder %s73, %s74
      %p85 = scmp.eq.s32.totalorder %s39, 0
      %p86 = por %p84, %p85
      %p87 = scmp.ne.s32.totalorder %s73, %s74
      %p88 = scmp.eq.s32.totalorder %s40, 1
      %p89 = por %p87, %p88
      %p91 = scmp.ne.s32.totalorder %s74, %s90
      %p92 = scmp.eq.s32.totalorder %s40, 0
      %p93 = por %p91, %p92
      %s95 = sadd.s32 %s94, 1
      %p98 = scmp.eq.s32.totalorder %s34, 1
      %p99 = scmp.ne.s32.totalorder %s94, %s96
      %p100 = scmp.eq.s32.totalorder %s34, 0
      %p101 = por %p99, %p100
      %p102 = scmp.ne.s32.totalorder %s94, %s96
      %p103 = scmp.eq.s32.totalorder %s39, 1
      %p104 = por %p102, %p103
      %p105 = scmp.ne.s32.totalorder %s96, %s97
      %p106 = scmp.eq.s32.totalorder %s39, 0
      %p107 = por %p105, %p106
      %p108 = scmp.ne.s32.totalorder %s96, %s97
      %p109 = scmp.eq.s32.totalorder %s40, 1
      %p110 = por %p108, %p109
      %p112 = scmp.ne.s32.totalorder %s97, %s111
      %p113 = scmp.eq.s32.totalorder %s40, 0
      %p114 = por %p112, %p113
      %s116 = sadd.s32 %s115, 1
      %p119 = scmp.eq.s32.totalorder %s34, 1
      %p120 = scmp.ne.s32.totalorder %s115, %s117
      %p121 = scmp.eq.s32.totalorder %s34, 0
      %p122 = por %p120, %p121
      %p123 = scmp.ne.s32.totalorder %s115, %s117
      %p124 = scmp.eq.s32.totalorder %s39, 1
      %p125 = por %p123, %p124
      %p126 = scmp.ne.s32.totalorder %s117, %s118
      %p127 = scmp.eq.s32.totalorder %s39, 0
      %p128 = por %p126, %p127
      %p129 = scmp.ne.s32.totalorder %s117, %s118
      %p130 = scmp.eq.s32.totalorder %s40, 1
      %p131 = por %p129, %p130
      %p133 = scmp.ne.s32.totalorder %s118, %s132
      %p134 = scmp.eq.s32.totalorder %s40, 0
      %p135 = por %p133, %p134
      %s137 = sadd.s32 %s136, 1
      %p140 = scmp.eq.s32.totalorder %s34, 1
      %p141 = scmp.ne.s32.totalorder %s136, %s138
      %p142 = scmp.eq.s32.totalorder %s34, 0
      %p143 = por %p141, %p142
      %p144 = scmp.ne.s32.totalorder %s136, %s138
      %p145 = scmp.eq.s32.totalorder %s39, 1
      %p146 = por %p144, %p145
      %p147 = scmp.ne.s32.totalorder %s138, %s139
      %p148 = scmp.eq.s32.totalorder %s39, 0
      %p149 = por %p147, %p148
      %p150 = scmp.ne.s32.totalorder %s138, %s139
      %p151 = scmp.eq.s32.totalorder %s40, 1
      %p152 = por %p150, %p151
      %p154 = scmp.ne.s32.totalorder %s139, %s153
      %p155 = scmp.eq.s32.totalorder %s40, 0
      %p156 = por %p154, %p155
      %s158 = sadd.s32 %s157, 1
      %p161 = scmp.eq.s32.totalorder %s34, 1
      %p162 = scmp.ne.s32.totalorder %s157, %s159
      %p163 = scmp.eq.s32.totalorder %s34, 0
      %p164 = por %p162, %p163
      %p165 = scmp.ne.s32.totalorder %s157, %s159
      %p166 = scmp.eq.s32.totalorder %s39, 1
      %p167 = por %p165, %p166
      %p168 = scmp.ne.s32.totalorder %s159, %s160
      %p169 = scmp.eq.s32.totalorder %s39, 0
      %p170 = por %p168, %p169
      %p171 = scmp.ne.s32.totalorder %s159, %s160
      %p172 = scmp.eq.s32.totalorder %s40, 1
      %p173 = por %p171, %p172
      %p175 = scmp.ne.s32.totalorder %s160, %s174
      %p176 = scmp.eq.s32.totalorder %s40, 0
      %p177 = por %p175, %p176
      %s179 = sadd.s32 %s178, 1
      %p182 = scmp.eq.s32.totalorder %s34, 1
      %p183 = scmp.ne.s32.totalorder %s178, %s180
      %p184 = scmp.eq.s32.totalorder %s34, 0
      %p185 = por %p183, %p184
      %p186 = scmp.ne.s32.totalorder %s178, %s180
      %p187 = scmp.eq.s32.totalorder %s39, 1
      %p188 = por %p186, %p187
      %p189 = scmp.ne.s32.totalorder %s180, %s181
      %p190 = scmp.eq.s32.totalorder %s39, 0
      %p191 = por %p189, %p190
      %p192 = scmp.ne.s32.totalorder %s180, %s181
      %p193 = scmp.eq.s32.totalorder %s40, 1
      %p194 = por %p192, %p193
      %p196 = scmp.ne.s32.totalorder %s181, %s195
      %p197 = scmp.eq.s32.totalorder %s40, 0
      %p198 = por %p196, %p197
      %s200 = sadd.s32 %s199, 1
      %p203 = scmp.eq.s32.totalorder %s34, 1
      %p204 = scmp.ne.s32.totalorder %s199, %s201
      %p205 = scmp.eq.s32.totalorder %s34, 0
      %p206 = por %p204, %p205
      %p207 = scmp.ne.s32.totalorder %s199, %s201
      %p208 = scmp.eq.s32.totalorder %s39, 1
      %p209 = por %p207, %p208
      %p210 = scmp.ne.s32.totalorder %s201, %s202
      %p211 = scmp.eq.s32.totalorder %s39, 0
      %p212 = por %p210, %p211
      %p213 = scmp.ne.s32.totalorder %s201, %s202
      %p214 = scmp.eq.s32.totalorder %s40, 1
      %p215 = por %p213, %p214
      %p217 = scmp.ne.s32.totalorder %s202, %s216
      %p218 = scmp.eq.s32.totalorder %s40, 0
      %p219 = por %p217, %p218
      %s221 = sadd.s32 %s220, 1
      %p224 = scmp.eq.s32.totalorder %s34, 1
      %p225 = scmp.ne.s32.totalorder %s220, %s222
      %p226 = scmp.eq.s32.totalorder %s34, 0
      %p227 = por %p225, %p226
      %p228 = scmp.ne.s32.totalorder %s220, %s222
      %p229 = scmp.eq.s32.totalorder %s39, 1
      %p230 = por %p228, %p229
      %p231 = scmp.ne.s32.totalorder %s222, %s223
      %p232 = scmp.eq.s32.totalorder %s39, 0
      %p233 = por %p231, %p232
      %p234 = scmp.ne.s32.totalorder %s222, %s223
      %p235 = scmp.eq.s32.totalorder %s40, 1
      %p236 = por %p234, %p235
      %p238 = scmp.ne.s32.totalorder %s223, %s237
      %p239 = scmp.eq.s32.totalorder %s40, 0
      %p240 = por %p238, %p239
      %s242 = sadd.s32 %s241, 1
      %p245 = scmp.eq.s32.totalorder %s34, 1
      %p246 = scmp.ne.s32.totalorder %s241, %s243
      %p247 = scmp.eq.s32.totalorder %s34, 0
      %p248 = por %p246, %p247
      %p249 = scmp.ne.s32.totalorder %s241, %s243
      %p250 = scmp.eq.s32.totalorder %s39, 1
      %p251 = por %p249, %p250
      %p252 = scmp.ne.s32.totalorder %s243, %s244
      %p253 = scmp.eq.s32.totalorder %s39, 0
      %p254 = por %p252, %p253
      %p255 = scmp.ne.s32.totalorder %s243, %s244
      %p256 = scmp.eq.s32.totalorder %s40, 1
      %p257 = por %p255, %p256
      %p259 = scmp.ne.s32.totalorder %s244, %s258
      %p260 = scmp.eq.s32.totalorder %s40, 0
      %p261 = por %p259, %p260
      %s263 = sadd.s32 %s262, 1
      %p266 = scmp.eq.s32.totalorder %s34, 1
      %p267 = scmp.ne.s32.totalorder %s262, %s264
      %p268 = scmp.eq.s32.totalorder %s34, 0
      %p269 = por %p267, %p268
      %p270 = scmp.ne.s32.totalorder %s262, %s264
      %p271 = scmp.eq.s32.totalorder %s39, 1
      %p272 = por %p270, %p271
      %p273 = scmp.ne.s32.totalorder %s264, %s265
      %p274 = scmp.eq.s32.totalorder %s39, 0
      %p275 = por %p273, %p274
      %p276 = scmp.ne.s32.totalorder %s264, %s265
      %p277 = scmp.eq.s32.totalorder %s40, 1
      %p278 = por %p276, %p277
      %p280 = scmp.ne.s32.totalorder %s265, %s279
      %p281 = scmp.eq.s32.totalorder %s40, 0
      %p282 = por %p280, %p281
      %s284 = sadd.s32 %s283, 1
      %p287 = scmp.eq.s32.totalorder %s34, 1
      %p288 = scmp.ne.s32.totalorder %s283, %s285
      %p289 = scmp.eq.s32.totalorder %s34, 0
      %p290 = por %p288, %p289
      %p291 = scmp.ne.s32.totalorder %s283, %s285
      %p292 = scmp.eq.s32.totalorder %s39, 1
      %p293 = por %p291, %p292
      %p294 = scmp.ne.s32.totalorder %s285, %s286
      %p295 = scmp.eq.s32.totalorder %s39, 0
      %p296 = por %p294, %p295
      %p297 = scmp.ne.s32.totalorder %s285, %s286
      %p298 = scmp.eq.s32.totalorder %s40, 1
      %p299 = por %p297, %p298
      %p301 = scmp.ne.s32.totalorder %s286, %s300
      %p302 = scmp.eq.s32.totalorder %s40, 0
      %p303 = por %p301, %p302
      %s305 = sadd.s32 %s304, 1
      %p308 = scmp.eq.s32.totalorder %s34, 1
      %p309 = scmp.ne.s32.totalorder %s304, %s306
      %p310 = scmp.eq.s32.totalorder %s34, 0
      %p311 = por %p309, %p310
      %p312 = scmp.ne.s32.totalorder %s304, %s306
      %p313 = scmp.eq.s32.totalorder %s39, 1
      %p314 = por %p312, %p313
      %p315 = scmp.ne.s32.totalorder %s306, %s307
      %p316 = scmp.eq.s32.totalorder %s39, 0
      %p317 = por %p315, %p316
      %p318 = scmp.ne.s32.totalorder %s306, %s307
      %p319 = scmp.eq.s32.totalorder %s40, 1
      %p320 = por %p318, %p319
      %p322 = scmp.ne.s32.totalorder %s307, %s321
      %p323 = scmp.eq.s32.totalorder %s40, 0
      %p324 = por %p322, %p323
      %s326 = sadd.s32 %s325, 1
      %p329 = scmp.eq.s32.totalorder %s34, 1
      %p330 = scmp.ne.s32.totalorder %s325, %s327
      %p331 = scmp.eq.s32.totalorder %s34, 0
      %p332 = por %p330, %p331
      %p333 = scmp.ne.s32.totalorder %s325, %s327
      %p334 = scmp.eq.s32.totalorder %s39, 1
      %p335 = por %p333, %p334
      %p336 = scmp.ne.s32.totalorder %s327, %s328
      %p337 = scmp.eq.s32.totalorder %s39, 0
      %p338 = por %p336, %p337
      %p339 = scmp.ne.s32.totalorder %s327, %s328
      %p340 = scmp.eq.s32.totalorder %s40, 1
      %p341 = por %p339, %p340
      %p343 = scmp.ne.s32.totalorder %s328, %s342
      %p344 = scmp.eq.s32.totalorder %s40, 0
      %p345 = por %p343, %p344
      %s347 = sadd.s32 %s346, 1
      %p350 = scmp.eq.s32.totalorder %s34, 1
      %p351 = scmp.ne.s32.totalorder %s346, %s348
      %p352 = scmp.eq.s32.totalorder %s34, 0
      %p353 = por %p351, %p352
      %p354 = scmp.ne.s32.totalorder %s346, %s348
      %p355 = scmp.eq.s32.totalorder %s39, 1
      %p356 = por %p354, %p355
      %p357 = scmp.ne.s32.totalorder %s348, %s349
      %p358 = scmp.eq.s32.totalorder %s39, 0
      %p359 = por %p357, %p358
      %p360 = scmp.ne.s32.totalorder %s348, %s349
      %p361 = scmp.eq.s32.totalorder %s40, 1
      %p362 = por %p360, %p361
      %p364 = scmp.ne.s32.totalorder %s349, %s363
      %p365 = scmp.eq.s32.totalorder %s40, 0
      %p366 = por %p364, %p365
      %s368 = sadd.s32 %s367, 1
      %p371 = scmp.eq.s32.totalorder %s34, 1
      %p372 = scmp.ne.s32.totalorder %s367, %s369
      %p373 = scmp.eq.s32.totalorder %s34, 0
      %p374 = por %p372, %p373
      %p375 = scmp.ne.s32.totalorder %s367, %s369
      %p376 = scmp.eq.s32.totalorder %s39, 1
      %p377 = por %p375, %p376
      %p378 = scmp.ne.s32.totalorder %s369, %s370
      %p379 = scmp.eq.s32.totalorder %s39, 0
      %p380 = por %p378, %p379
      %p381 = scmp.ne.s32.totalorder %s369, %s370
      %p382 = scmp.eq.s32.totalorder %s40, 1
      %p383 = por %p381, %p382
      %p385 = scmp.ne.s32.totalorder %s370, %s384
      %p386 = scmp.eq.s32.totalorder %s40, 0
      %p387 = por %p385, %p386
      %s389 = sadd.s32 %s388, 1
      %p392 = scmp.eq.s32.totalorder %s34, 1
      %p393 = scmp.ne.s32.totalorder %s388, %s390
      %p394 = scmp.eq.s32.totalorder %s34, 0
      %p395 = por %p393, %p394
      %p396 = scmp.ne.s32.totalorder %s388, %s390
      %p397 = scmp.eq.s32.totalorder %s39, 1
      %p398 = por %p396, %p397
      %p399 = scmp.ne.s32.totalorder %s390, %s391
      %p400 = scmp.eq.s32.totalorder %s39, 0
      %p401 = por %p399, %p400
      %p402 = scmp.ne.s32.totalorder %s390, %s391
      %p403 = scmp.eq.s32.totalorder %s40, 1
      %p404 = por %p402, %p403
      %p406 = scmp.ne.s32.totalorder %s391, %s405
      %p407 = scmp.eq.s32.totalorder %s40, 0
      %p408 = por %p406, %p407
      %s410 = sadd.s32 %s409, 1
      %p413 = scmp.eq.s32.totalorder %s34, 1
      %p414 = scmp.ne.s32.totalorder %s409, %s411
      %p415 = scmp.eq.s32.totalorder %s34, 0
      %p416 = por %p414, %p415
      %p417 = scmp.ne.s32.totalorder %s409, %s411
      %p418 = scmp.eq.s32.totalorder %s39, 1
      %p419 = por %p417, %p418
      %p420 = scmp.ne.s32.totalorder %s411, %s412
      %p421 = scmp.eq.s32.totalorder %s39, 0
      %p422 = por %p420, %p421
      %p423 = scmp.ne.s32.totalorder %s411, %s412
      %p424 = scmp.eq.s32.totalorder %s40, 1
      %p425 = por %p423, %p424
      %p427 = scmp.ne.s32.totalorder %s412, %s426
      %p428 = scmp.eq.s32.totalorder %s40, 0
      %p429 = por %p427, %p428
      %s431 = sadd.s32 %s430, 1
      %p434 = scmp.eq.s32.totalorder %s34, 1
      %p435 = scmp.ne.s32.totalorder %s430, %s432
      %p436 = scmp.eq.s32.totalorder %s34, 0
      %p437 = por %p435, %p436
      %p438 = scmp.ne.s32.totalorder %s430, %s432
      %p439 = scmp.eq.s32.totalorder %s39, 1
      %p440 = por %p438, %p439
      %p441 = scmp.ne.s32.totalorder %s432, %s433
      %p442 = scmp.eq.s32.totalorder %s39, 0
      %p443 = por %p441, %p442
      %p444 = scmp.ne.s32.totalorder %s432, %s433
      %p445 = scmp.eq.s32.totalorder %s40, 1
      %p446 = por %p444, %p445
      %p448 = scmp.ne.s32.totalorder %s433, %s447
      %p449 = scmp.eq.s32.totalorder %s40, 0
      %p450 = por %p448, %p449
      %s452 = sadd.s32 %s451, 1
      %p455 = scmp.eq.s32.totalorder %s34, 1
      %p456 = scmp.ne.s32.totalorder %s451, %s453
      %p457 = scmp.eq.s32.totalorder %s34, 0
      %p458 = por %p456, %p457
      %p459 = scmp.ne.s32.totalorder %s451, %s453
      %p460 = scmp.eq.s32.totalorder %s39, 1
      %p461 = por %p459, %p460
      %p462 = scmp.ne.s32.totalorder %s453, %s454
      %p463 = scmp.eq.s32.totalorder %s39, 0
      %p464 = por %p462, %p463
      %p465 = scmp.ne.s32.totalorder %s453, %s454
      %p466 = scmp.eq.s32.totalorder %s40, 1
      %p467 = por %p465, %p466
      %p469 = scmp.ne.s32.totalorder %s454, %s468
      %p470 = scmp.eq.s32.totalorder %s40, 0
      %p471 = por %p469, %p470
      %s473 = sadd.s32 %s472, 1
      %p476 = scmp.eq.s32.totalorder %s34, 1
      %p477 = scmp.ne.s32.totalorder %s472, %s474
      %p478 = scmp.eq.s32.totalorder %s34, 0
      %p479 = por %p477, %p478
      %p480 = scmp.ne.s32.totalorder %s472, %s474
      %p481 = scmp.eq.s32.totalorder %s39, 1
      %p482 = por %p480, %p481
      %p483 = scmp.ne.s32.totalorder %s474, %s475
      %p484 = scmp.eq.s32.totalorder %s39, 0
      %p485 = por %p483, %p484
      %p486 = scmp.ne.s32.totalorder %s474, %s475
      %p487 = scmp.eq.s32.totalorder %s40, 1
      %p488 = por %p486, %p487
      %p490 = scmp.ne.s32.totalorder %s475, %s489
      %p491 = scmp.eq.s32.totalorder %s40, 0
      %p492 = por %p490, %p491
      %s494 = sadd.s32 %s493, 1
      %p497 = scmp.eq.s32.totalorder %s34, 1
      %p498 = scmp.ne.s32.totalorder %s493, %s495
      %p499 = scmp.eq.s32.totalorder %s34, 0
      %p500 = por %p498, %p499
      %p501 = scmp.ne.s32.totalorder %s493, %s495
      %p502 = scmp.eq.s32.totalorder %s39, 1
      %p503 = por %p501, %p502
      %p504 = scmp.ne.s32.totalorder %s495, %s496
      %p505 = scmp.eq.s32.totalorder %s39, 0
      %p506 = por %p504, %p505
      %p507 = scmp.ne.s32.totalorder %s495, %s496
      %p508 = scmp.eq.s32.totalorder %s40, 1
      %p509 = por %p507, %p508
      %p511 = scmp.ne.s32.totalorder %s496, %s510
      %p512 = scmp.eq.s32.totalorder %s40, 0
      %p513 = por %p511, %p512
      %s515 = sadd.s32 %s514, 1
      %p518 = scmp.eq.s32.totalorder %s34, 1
      %p519 = scmp.ne.s32.totalorder %s514, %s516
      %p520 = scmp.eq.s32.totalorder %s34, 0
      %p521 = por %p519, %p520
      %p522 = scmp.ne.s32.totalorder %s514, %s516
      %p523 = scmp.eq.s32.totalorder %s39, 1
      %p524 = por %p522, %p523
      %p525 = scmp.ne.s32.totalorder %s516, %s517
      %p526 = scmp.eq.s32.totalorder %s39, 0
      %p527 = por %p525, %p526
      %p528 = scmp.ne.s32.totalorder %s516, %s517
      %p529 = scmp.eq.s32.totalorder %s40, 1
      %p530 = por %p528, %p529
      %p532 = scmp.ne.s32.totalorder %s517, %s531
      %p533 = scmp.eq.s32.totalorder %s40, 0
      %p534 = por %p532, %p533
      %s536 = sadd.s32 %s535, 1
      %p539 = scmp.eq.s32.totalorder %s34, 1
      %p540 = scmp.ne.s32.totalorder %s535, %s537
      %p541 = scmp.eq.s32.totalorder %s34, 0
      %p542 = por %p540, %p541
      %p543 = scmp.ne.s32.totalorder %s535, %s537
      %p544 = scmp.eq.s32.totalorder %s39, 1
      %p545 = por %p543, %p544
      %p546 = scmp.ne.s32.totalorder %s537, %s538
      %p547 = scmp.eq.s32.totalorder %s39, 0
      %p548 = por %p546, %p547
      %p549 = scmp.ne.s32.totalorder %s537, %s538
      %p550 = scmp.eq.s32.totalorder %s40, 1
      %p551 = por %p549, %p550
      %p553 = scmp.ne.s32.totalorder %s538, %s552
      %p554 = scmp.eq.s32.totalorder %s40, 0
      %p555 = por %p553, %p554
      %s557 = sadd.s32 %s556, 1
      %p560 = scmp.eq.s32.totalorder %s34, 1
      %p561 = scmp.ne.s32.totalorder %s556, %s558
      %p562 = scmp.eq.s32.totalorder %s34, 0
      %p563 = por %p561, %p562
      %p564 = scmp.ne.s32.totalorder %s556, %s558
      %p565 = scmp.eq.s32.totalorder %s39, 1
      %p566 = por %p564, %p565
      %p567 = scmp.ne.s32.totalorder %s558, %s559
      %p568 = scmp.eq.s32.totalorder %s39, 0
      %p569 = por %p567, %p568
      %p570 = scmp.ne.s32.totalorder %s558, %s559
      %p571 = scmp.eq.s32.totalorder %s40, 1
      %p572 = por %p570, %p571
      %p574 = scmp.ne.s32.totalorder %s559, %s573
      %p575 = scmp.eq.s32.totalorder %s40, 0
      %p576 = por %p574, %p575
      %s577 = ssub.s32 %s34, %s41
      %p578 = scmp.eq.s32.totalorder %s577, 0
      %s580 = sadd.s32 %s579, 1
      %s581 = scalar_select %p578, %s579, %s580
      %p584 = pneg %p578
      %p585 = scmp.eq.s32.totalorder %s34, 1
      %p586 = por %p584, %p585
      %p587 = scmp.ne.s32.totalorder %s579, %s582
      %p588 = scmp.eq.s32.totalorder %s34, 0
      %p589 = por %p587, %p588
      %p590 = scmp.ne.s32.totalorder %s579, %s582
      %p591 = scmp.eq.s32.totalorder %s39, 1
      %p592 = por %p590, %p591
      %p593 = scmp.ne.s32.totalorder %s582, %s583
      %p594 = scmp.eq.s32.totalorder %s39, 0
      %p595 = por %p593, %p594
      %p596 = scmp.ne.s32.totalorder %s582, %s583
      %p597 = scmp.eq.s32.totalorder %s40, 1
      %p598 = por %p596, %p597
      %p600 = scmp.ne.s32.totalorder %s583, %s599
      %p601 = scmp.eq.s32.totalorder %s40, 0
      %p602 = por %p600, %p601
      %p603 = scmp.le.s32.totalorder 1, %s34
      %p604 = scmp.lt.s32.totalorder %s34, 3
      %p605 = pnand %p603, %p604
      %p606 = pneg %p605
      // Predicated region
      $region9: #{tpu_custom_call.1} parent=5 // pred_check
        _
      $region10: #{tpu_custom_call.1} parent=5 // pred_check_branch
        %608 = sbr.rel (%p605) target = $region12
      $region11: #{tpu_custom_call.1} parent=5 // pred_region
        %s609 = ssub.s32 %s34, 1
        // Predicated region
        $region13: #{tpu_custom_call.1} parent=11 // pred_check
          %p610 = pneg %p107
        $region14: #{tpu_custom_call.1} parent=11 // pred_check_branch
          %612 = sbr.rel (%p610) target = $region16
        $region15: #{tpu_custom_call.1} parent=11 // pred_region
          _
        $region16: #{tpu_custom_call.1} parent=11 // pred_fallthru
          _
        // Predicated region
        $region17: #{tpu_custom_call.1} parent=11 // pred_check
          %p613 = pneg %p128
        $region18: #{tpu_custom_call.1} parent=11 // pred_check_branch
          %615 = sbr.rel (%p613) target = $region20
        $region19: #{tpu_custom_call.1} parent=11 // pred_region
          _
        $region20: #{tpu_custom_call.1} parent=11 // pred_fallthru
          _
        // Predicated region
        $region21: #{tpu_custom_call.1} parent=11 // pred_check
          %p616 = pneg %p149
        $region22: #{tpu_custom_call.1} parent=11 // pred_check_branch
          %618 = sbr.rel (%p616) target = $region24
        $region23: #{tpu_custom_call.1} parent=11 // pred_region
          _
        $region24: #{tpu_custom_call.1} parent=11 // pred_fallthru
          _
        // Predicated region
        $region25: #{tpu_custom_call.1} parent=11 // pred_check
          %p619 = pneg %p170
        $region26: #{tpu_custom_call.1} parent=11 // pred_check_branch
          %621 = sbr.rel (%p619) target = $region28
        $region27: #{tpu_custom_call.1} parent=11 // pred_region
          _
        $region28: #{tpu_custom_call.1} parent=11 // pred_fallthru
          _
        // Predicated region
        $region29: #{tpu_custom_call.1} parent=11 // pred_check
          %p622 = pneg %p191
        $region30: #{tpu_custom_call.1} parent=11 // pred_check_branch
          %624 = sbr.rel (%p622) target = $region32
        $region31: #{tpu_custom_call.1} parent=11 // pred_region
          _
        $region32: #{tpu_custom_call.1} parent=11 // pred_fallthru
          _
        // Predicated region
        $region33: #{tpu_custom_call.1} parent=11 // pred_check
          %p625 = pneg %p212
        $region34: #{tpu_custom_call.1} parent=11 // pred_check_branch
          %627 = sbr.rel (%p625) target = $region36
        $region35: #{tpu_custom_call.1} parent=11 // pred_region
          _
        $region36: #{tpu_custom_call.1} parent=11 // pred_fallthru
          _
        // Predicated region
        $region37: #{tpu_custom_call.1} parent=11 // pred_check
          %p628 = pneg %p233
        $region38: #{tpu_custom_call.1} parent=11 // pred_check_branch
          %630 = sbr.rel (%p628) target = $region40
        $region39: #{tpu_custom_call.1} parent=11 // pred_region
          _
        $region40: #{tpu_custom_call.1} parent=11 // pred_fallthru
          _
        // Predicated region
        $region41: #{tpu_custom_call.1} parent=11 // pred_check
          %p631 = pneg %p254
        $region42: #{tpu_custom_call.1} parent=11 // pred_check_branch
          %633 = sbr.rel (%p631) target = $region44
        $region43: #{tpu_custom_call.1} parent=11 // pred_region
          _
        $region44: #{tpu_custom_call.1} parent=11 // pred_fallthru
          _
        // Predicated region
        $region45: #{tpu_custom_call.1} parent=11 // pred_check
          %p634 = pneg %p275
        $region46: #{tpu_custom_call.1} parent=11 // pred_check_branch
          %636 = sbr.rel (%p634) target = $region48
        $region47: #{tpu_custom_call.1} parent=11 // pred_region
          _
        $region48: #{tpu_custom_call.1} parent=11 // pred_fallthru
          _
        // Predicated region
        $region49: #{tpu_custom_call.1} parent=11 // pred_check
          %p637 = pneg %p296
        $region50: #{tpu_custom_call.1} parent=11 // pred_check_branch
          %639 = sbr.rel (%p637) target = $region52
        $region51: #{tpu_custom_call.1} parent=11 // pred_region
          _
        $region52: #{tpu_custom_call.1} parent=11 // pred_fallthru
          _
        // Predicated region
        $region53: #{tpu_custom_call.1} parent=11 // pred_check
          %p640 = pneg %p317
        $region54: #{tpu_custom_call.1} parent=11 // pred_check_branch
          %642 = sbr.rel (%p640) target = $region56
        $region55: #{tpu_custom_call.1} parent=11 // pred_region
          _
        $region56: #{tpu_custom_call.1} parent=11 // pred_fallthru
          _
        // Predicated region
        $region57: #{tpu_custom_call.1} parent=11 // pred_check
          %p643 = pneg %p338
        $region58: #{tpu_custom_call.1} parent=11 // pred_check_branch
          %645 = sbr.rel (%p643) target = $region60
        $region59: #{tpu_custom_call.1} parent=11 // pred_region
          _
        $region60: #{tpu_custom_call.1} parent=11 // pred_fallthru
          _
        // Predicated region
        $region61: #{tpu_custom_call.1} parent=11 // pred_check
          %p646 = pneg %p359
        $region62: #{tpu_custom_call.1} parent=11 // pred_check_branch
          %648 = sbr.rel (%p646) target = $region64
        $region63: #{tpu_custom_call.1} parent=11 // pred_region
          _
        $region64: #{tpu_custom_call.1} parent=11 // pred_fallthru
          _
        // Predicated region
        $region65: #{tpu_custom_call.1} parent=11 // pred_check
          %p649 = pneg %p380
        $region66: #{tpu_custom_call.1} parent=11 // pred_check_branch
          %651 = sbr.rel (%p649) target = $region68
        $region67: #{tpu_custom_call.1} parent=11 // pred_region
          _
        $region68: #{tpu_custom_call.1} parent=11 // pred_fallthru
          _
        // Predicated region
        $region69: #{tpu_custom_call.1} parent=11 // pred_check
          %p652 = pneg %p401
        $region70: #{tpu_custom_call.1} parent=11 // pred_check_branch
          %654 = sbr.rel (%p652) target = $region72
        $region71: #{tpu_custom_call.1} parent=11 // pred_region
          _
        $region72: #{tpu_custom_call.1} parent=11 // pred_fallthru
          _
        // Predicated region
        $region73: #{tpu_custom_call.1} parent=11 // pred_check
          %p655 = pneg %p422
        $region74: #{tpu_custom_call.1} parent=11 // pred_check_branch
          %657 = sbr.rel (%p655) target = $region76
        $region75: #{tpu_custom_call.1} parent=11 // pred_region
          _
        $region76: #{tpu_custom_call.1} parent=11 // pred_fallthru
          _
        // Predicated region
        $region77: #{tpu_custom_call.1} parent=11 // pred_check
          %p658 = pneg %p443
        $region78: #{tpu_custom_call.1} parent=11 // pred_check_branch
          %660 = sbr.rel (%p658) target = $region80
        $region79: #{tpu_custom_call.1} parent=11 // pred_region
          _
        $region80: #{tpu_custom_call.1} parent=11 // pred_fallthru
          _
        // Predicated region
        $region81: #{tpu_custom_call.1} parent=11 // pred_check
          %p661 = pneg %p464
        $region82: #{tpu_custom_call.1} parent=11 // pred_check_branch
          %663 = sbr.rel (%p661) target = $region84
        $region83: #{tpu_custom_call.1} parent=11 // pred_region
          _
        $region84: #{tpu_custom_call.1} parent=11 // pred_fallthru
          _
        // Predicated region
        $region85: #{tpu_custom_call.1} parent=11 // pred_check
          %p664 = pneg %p485
        $region86: #{tpu_custom_call.1} parent=11 // pred_check_branch
          %666 = sbr.rel (%p664) target = $region88
        $region87: #{tpu_custom_call.1} parent=11 // pred_region
          _
        $region88: #{tpu_custom_call.1} parent=11 // pred_fallthru
          _
        // Predicated region
        $region89: #{tpu_custom_call.1} parent=11 // pred_check
          %p667 = pneg %p506
        $region90: #{tpu_custom_call.1} parent=11 // pred_check_branch
          %669 = sbr.rel (%p667) target = $region92
        $region91: #{tpu_custom_call.1} parent=11 // pred_region
          _
        $region92: #{tpu_custom_call.1} parent=11 // pred_fallthru
          _
        // Predicated region
        $region93: #{tpu_custom_call.1} parent=11 // pred_check
          %p670 = pneg %p527
        $region94: #{tpu_custom_call.1} parent=11 // pred_check_branch
          %672 = sbr.rel (%p670) target = $region96
        $region95: #{tpu_custom_call.1} parent=11 // pred_region
          _
        $region96: #{tpu_custom_call.1} parent=11 // pred_fallthru
          _
        // Predicated region
        $region97: #{tpu_custom_call.1} parent=11 // pred_check
          %p673 = pneg %p548
        $region98: #{tpu_custom_call.1} parent=11 // pred_check_branch
          %675 = sbr.rel (%p673) target = $region100
        $region99: #{tpu_custom_call.1} parent=11 // pred_region
          _
        $region100: #{tpu_custom_call.1} parent=11 // pred_fallthru
          _
        // Predicated region
        $region101: #{tpu_custom_call.1} parent=11 // pred_check
          %p676 = pneg %p569
        $region102: #{tpu_custom_call.1} parent=11 // pred_check_branch
          %678 = sbr.rel (%p676) target = $region104
        $region103: #{tpu_custom_call.1} parent=11 // pred_region
          _
        $region104: #{tpu_custom_call.1} parent=11 // pred_fallthru
          _
      $region12: #{tpu_custom_call.1} parent=5 // pred_fallthru
        _
      %p679 = scmp.lt.s32.totalorder %s34, 2
      // Predicated region
      $region105: #{tpu_custom_call.1} parent=5 // pred_check
        %p680 = pneg %p679
      $region106: #{tpu_custom_call.1} parent=5 // pred_check_branch
        %682 = sbr.rel (%p680) target = $region108
      $region107: #{tpu_custom_call.1} parent=5 // pred_region
        // Predicated region
        $region109: #{tpu_custom_call.1} parent=107 // pred_check
          %p683 = pneg %p54
        $region110: #{tpu_custom_call.1} parent=107 // pred_check_branch
          %685 = sbr.rel (%p683) target = $region112
        $region111: #{tpu_custom_call.1} parent=107 // pred_region
          %p686 = scmp.lt.s32.totalorder %s34, 1
          %s687 = scalar_select %p686, %s34, 1
          %s688 = smul.addr %s687, 4
          %s689 = smul.addr %s688, 8
          %s690 = scalar_lea.vmem %s0, %s689
        $region112: #{tpu_custom_call.1} parent=107 // pred_fallthru
          _
        // Predicated region
        $region113: #{tpu_custom_call.1} parent=107 // pred_check
          %p691 = pneg %p80
        $region114: #{tpu_custom_call.1} parent=107 // pred_check_branch
          %693 = sbr.rel (%p691) target = $region116
        $region115: #{tpu_custom_call.1} parent=107 // pred_region
          %p694 = scmp.lt.s32.totalorder %s34, 1
          %s695 = scalar_select %p694, %s34, 1
          %s696 = smul.addr %s695, 4
          %s697 = smul.addr %s696, 8
          %s698 = scalar_lea.vmem %s1, %s697
        $region116: #{tpu_custom_call.1} parent=107 // pred_fallthru
          _
      $region108: #{tpu_custom_call.1} parent=5 // pred_fallthru
        _
      %p699 = scmp.le.s32.totalorder 1, %s34
      %p700 = scmp.lt.s32.totalorder %s34, 3
      %p701 = pnand %p699, %p700
      %p702 = pneg %p701
      // Predicated region
      $region117: #{tpu_custom_call.1} parent=5 // pred_check
        _
      $region118: #{tpu_custom_call.1} parent=5 // pred_check_branch
        %704 = sbr.rel (%p701) target = $region120
      $region119: #{tpu_custom_call.1} parent=5 // pred_region
        %s705 = ssub.s32 %s34, 1
        %p706 = scmp.lt.s32.totalorder %s39, 1
        %s707 = scalar_select %p706, %s39, 1
        %s708 = smul.addr %s707, 4
        %s709 = smul.addr %s708, 8
        %s710 = scalar_lea.vmem %s0, %s709
        %p711 = pneg %p60
        %p712 = pneg %p57
        %p713 = scmp.lt.s32.totalorder %s39, 1
        %s714 = scalar_select %p713, %s39, 1
        %s715 = smul.addr %s714, 4
        %s716 = smul.addr %s715, 8
        %s717 = scalar_lea.vmem %s1, %s716
        %p718 = pneg %p86
        %p719 = pneg %p83
        %p720 = pneg %p107
        %p721 = pneg %p104
        %p722 = pneg %p128
        %p723 = pneg %p125
        %p724 = pneg %p149
        %p725 = pneg %p146
        %p726 = pneg %p170
        %p727 = pneg %p167
        %p728 = pneg %p191
        %p729 = pneg %p188
        %p730 = pneg %p212
        %p731 = pneg %p209
        %p732 = pneg %p233
        %p733 = pneg %p230
        %p734 = pneg %p254
        %p735 = pneg %p251
        %p736 = pneg %p275
        %p737 = pneg %p272
        %p738 = pneg %p296
        %p739 = pneg %p293
        %p740 = pneg %p317
        %p741 = pneg %p314
        %p742 = pneg %p338
        %p743 = pneg %p335
        %p744 = pneg %p359
        %p745 = pneg %p356
        %p746 = pneg %p380
        %p747 = pneg %p377
        %p748 = pneg %p401
        %p749 = pneg %p398
        %p750 = pneg %p422
        %p751 = pneg %p419
        %p752 = pneg %p443
        %p753 = pneg %p440
        %p754 = pneg %p464
        %p755 = pneg %p461
        %p756 = pneg %p485
        %p757 = pneg %p482
        %p758 = pneg %p506
        %p759 = pneg %p503
        %p760 = pneg %p527
        %p761 = pneg %p524
        %p762 = pneg %p548
        %p763 = pneg %p545
        %p764 = pneg %p569
        %p765 = pneg %p566
        %p766 = pneg %p595
        %p767 = pneg %p592
        %s768 = sand.u32 %s582, 1
        %s769 = scalar_lea.sflag [#allocation3], %s768
        %s770 = sand.u32 %s582, 1
        %s771 = smul.addr %s770, 64
        %s772 = scalar_lea.vmem [#allocation2], %s771
        %p773 = scmp.lt.s32.totalorder %s39, 1
        %s774 = scalar_select %p773, %s39, 1
        %s775 = smul.addr %s774, 4
        %s776 = smul.addr %s775, 8
        %s777 = scalar_lea.vmem %s0, %s776
        %p778 = scmp.lt.s32.totalorder %s39, 1
        %s779 = scalar_select %p778, %s39, 1
        %s780 = smul.addr %s779, 4
        %s781 = smul.addr %s780, 8
        %s782 = scalar_lea.vmem %s1, %s781
        %v784 = vld [vmem:[%s777] sm:$0xff]
        %v785 = vld [vmem:[%s777 + $0x8] sm:$0xff]
        %v786 = vld [vmem:[%s777 + $0x10] sm:$0xff]
        %v787 = vld [vmem:[%s777 + $0x18] sm:$0xff]
        %v788 = vld [vmem:[%s3] sm:$0xff]
        %v789 = vld [vmem:[%s3 + $0x8] sm:$0xff]
        %v790 = vld [vmem:[%s4] sm:$0xff]
        %v791 = vld [vmem:[%s4 + $0x8] sm:$0xff]
        %v792 = vld [vmem:[%s5] sm:$0xff]
        %v793 = vld [vmem:[%s5 + $0x8] sm:$0xff]
        %v794 = vadd.f32 %v784, %v785
        %795 = vadd.xlane.f32.xlu0 %v794
        %v796 = vpop.xlane.xlu0 %795
        %v797 = vadd.f32 %v786, %v787
        %798 = vadd.xlane.f32.xlu0 %v797
        %v799 = vpop.xlane.xlu0 %798
        %v800 = vmul.f32 %v784, %v784
        %v801 = vmul.f32 %v785, %v785
        %v802 = vmul.f32 %v786, %v786
        %v803 = vmul.f32 %v787, %v787
        %v804 = vadd.f32 %v800, %v801
        %805 = vadd.xlane.f32.xlu0 %v804
        %v806 = vpop.xlane.xlu0 %805
        %v807 = vadd.f32 %v802, %v803
        %808 = vadd.xlane.f32.xlu0 %v807
        %v809 = vpop.xlane.xlu0 %808
        %vm810 = vcmask 7168
        %v811 = vsel %vm810, %v796, %v806
        %v812 = vsel %vm810, %v799, %v809
        %vm813 = vcmask 130048
        %v815 = vsel %vm813, %v792, 0
        %v818 = vsel %vm813, %v793, 0
        %820 = vmatprep.subr.mxu0 0.0
        %821 = vmatpush1.msra.mxu0 %v811
        %822 = vmatprep.subr.mxu0 0.0
        %823 = vmatpush1.msra.mxu0 %v812
        %824 = vmatprep.subr.mxu0 0.0
        %825 = vmatpush1.msra.mxu0 0.0
        %826 = vmatprep.subr.mxu0 0.0
        %827 = vmatpush1.msra.mxu0 0.0
        %828 = vmatprep.subr.mxu0 0.0
        %829 = vmatpush1.msra.mxu0 0.0
        %830 = vmatprep.subr.mxu0 0.0
        %831 = vmatpush1.msra.mxu0 0.0
        %832 = vmatprep.subr.mxu0 0.0
        %833 = vmatpush1.msra.mxu0 0.0
        %834 = vmatprep.subr.mxu0 0.0
        %835 = vmatpush1.msra.mxu0 0.0
        %836 = vmatprep.subr.mxu0 0.0
        %837 = vmatpush1.msra.mxu0 0.0
        %838 = vmatprep.subr.mxu0 0.0
        %839 = vmatpush1.msra.mxu0 0.0
        %840 = vmatprep.subr.mxu0 0.0
        %841 = vmatpush1.msra.mxu0 0.0
        %842 = vmatprep.subr.mxu0 0.0
        %843 = vmatpush1.msra.mxu0 0.0
        %844 = vmatprep.subr.mxu0 0.0
        %845 = vmatpush1.msra.mxu0 0.0
        %846 = vmatprep.subr.mxu0 0.0
        %847 = vmatpush1.msra.mxu0 0.0
        %848 = vmatprep.subr.mxu0 0.0
        %849 = vmatpush1.msra.mxu0 0.0
        %850 = vmatprep.subr.mxu0 0.0
        %851 = vmatpush1.msra.mxu0 0.0
        %852 = vmatprep.subr.mxu0 0.0
        %853 = vmatpush1.msra.mxu0 0.0
        %854 = vmatprep.subr.mxu0 0.0
        %855 = vmatpush1.msra.mxu0 0.0
        %856 = vmatprep.subr.mxu0 0.0
        %857 = vmatpush1.msra.mxu0 0.0
        %858 = vmatprep.subr.mxu0 0.0
        %859 = vmatpush1.msra.mxu0 0.0
        %860 = vmatprep.subr.mxu0 0.0
        %861 = vmatpush1.msra.mxu0 0.0
        %862 = vmatprep.subr.mxu0 0.0
        %863 = vmatpush1.msra.mxu0 0.0
        %864 = vmatprep.subr.mxu0 0.0
        %865 = vmatpush1.msra.mxu0 0.0
        %866 = vmatprep.subr.mxu0 0.0
        %867 = vmatpush1.msra.mxu0 0.0
        %868 = vmatprep.subr.mxu0 0.0
        %869 = vmatpush1.msra.mxu0 0.0
        %870 = vmatprep.subr.mxu0 0.0
        %871 = vmatpush1.msra.mxu0 0.0
        %872 = vmatprep.subr.mxu0 0.0
        %873 = vmatpush1.msra.mxu0 0.0
        %874 = vmatprep.subr.mxu0 0.0
        %875 = vmatpush1.msra.mxu0 0.0
        %876 = vmatprep.subr.mxu0 0.0
        %877 = vmatpush1.msra.mxu0 0.0
        %878 = vmatprep.subr.mxu0 0.0
        %879 = vmatpush1.msra.mxu0 0.0
        %880 = vmatprep.subr.mxu0 0.0
        %881 = vmatpush1.msra.mxu0 0.0
        %882 = vmatprep.subr.mxu0 0.0
        %883 = vmatpush1.msra.mxu0 0.0
        %884 = vmatprep.mubr.f32.mxu0 0.0
        %885 = vmatmul.mubr.f32.gmra.mrb[0].mxu0 %v815
        %v886 = vpop.f32.mrb[0].mxu0
        %v887 = vadd.f32 0.0, %v886
        %v888 = vpop.f32.mrb[0].mxu0
        %889 = vmatprep.mubr.f32.mxu0 0.0
        %890 = vmatmul.mubr.f32.gmra.mrb[0].mxu0 %v818
        %v891 = vpop.f32.mrb[0].mxu0
        %v892 = vadd.f32 0.0, %v891
        %v893 = vpop.f32.mrb[0].mxu0
        %894 = vdwg.mxu0
        %v895 = vmul.f32 %v887, %v887
        %v896 = vmul.f32 %v892, %v892
        %899 = vrot.lane.b32.xlu0 %v895, 1
        %v900 = vpop.permute.xlu0 %899
        %901 = vrot.lane.b32.xlu0 %v896, 1
        %v902 = vpop.permute.xlu0 %901
        %v905 = vsub.f32 %v887, %v900
        %v906 = vsub.f32 %v892, %v902
        %v907 = vadd.f32 %v905, 1e-05
        %v908 = vadd.f32 %v906, 1e-05
        %v909 = vrsqrt.pop %v907
        %v910 = vrsqrt.pop %v908
        %912 = vset.pattern.permute.xlu0 0
        %913 = vperm.xlu0 %912, %v887
        %v914 = vpop.permute.xlu0 %913
        %917 = vset.pattern.permute.xlu0 0
        %918 = vperm.xlu0 %917, %v892
        %v919 = vpop.permute.xlu0 %918
        %v921 = vsub.f32 %v784, %v914
        %v922 = vsub.f32 %v785, %v914
        %v923 = vsub.f32 %v786, %v919
        %v924 = vsub.f32 %v787, %v919
        %927 = vrot.lane.b32.xlu0 %v788, 1
        %v928 = vpop.permute.xlu0 %927
        %929 = vrot.lane.b32.xlu0 %v789, 1
        %v930 = vpop.permute.xlu0 %929
        %v933 = vmul.f32 %v909, %v928
        %v934 = vmul.f32 %v910, %v930
        %936 = vset.pattern.permute.xlu0 1
        %937 = vperm.xlu0 %936, %v933
        %v938 = vpop.permute.xlu0 %937
        %941 = vset.pattern.permute.xlu0 1
        %942 = vperm.xlu0 %941, %v934
        %v943 = vpop.permute.xlu0 %942
        %v945 = vmul.f32 %v921, %v938
        %v946 = vmul.f32 %v922, %v938
        %v947 = vmul.f32 %v923, %v943
        %v948 = vmul.f32 %v924, %v943
        %950 = vset.pattern.permute.xlu0 0
        %951 = vperm.xlu0 %950, %v790
        %v952 = vpop.permute.xlu0 %951
        %955 = vset.pattern.permute.xlu0 0
        %956 = vperm.xlu0 %955, %v791
        %v957 = vpop.permute.xlu0 %956
        %v959 = vadd.f32 %v945, %v952
        %v960 = vadd.f32 %v946, %v952
        %v961 = vadd.f32 %v947, %v957
        %v962 = vadd.f32 %v948, %v957
        %v963 = vmul.f32 %v959, 0.5
        %v964 = vmul.f32 %v960, 0.5
        %v965 = vmul.f32 %v961, 0.5
        %v966 = vmul.f32 %v962, 0.5
        %v967 = vmul.f32 %v959, 0.70710677
        %v968 = vmul.f32 %v960, 0.70710677
        %v969 = vmul.f32 %v961, 0.70710677
        %v970 = vmul.f32 %v962, 0.70710677
        %vm971 = vcmp.ge.f32.partialorder %v967, 0.0
        %vm972 = vcmp.ge.f32.partialorder %v968, 0.0
        %vm973 = vcmp.ge.f32.partialorder %v969, 0.0
        %vm974 = vcmp.ge.f32.partialorder %v970, 0.0
        %v975 = vsel %vm971, 1.0, -1.0
        %v976 = vsel %vm972, 1.0, -1.0
        %v977 = vsel %vm973, 1.0, -1.0
        %v978 = vsel %vm974, 1.0, -1.0
        %v979 = vand.u32 2147483647, %v967
        %v980 = vand.u32 2147483647, %v968
        %v981 = vand.u32 2147483647, %v969
        %v982 = vand.u32 2147483647, %v970
        %v983 = vmul.f32 %v979, 0.3275911
        %v984 = vmul.f32 %v980, 0.3275911
        %v985 = vmul.f32 %v981, 0.3275911
        %v986 = vmul.f32 %v982, 0.3275911
        %v987 = vadd.f32 %v983, 1.0
        %v988 = vadd.f32 %v984, 1.0
        %v989 = vadd.f32 %v985, 1.0
        %v990 = vadd.f32 %v986, 1.0
        %v991 = vrcp.pop %v987
        %v992 = vrcp.pop %v988
        %v993 = vrcp.pop %v989
        %v994 = vrcp.pop %v990
        %v995 = vmul.f32 %v991, 1.0614054
        %v996 = vmul.f32 %v992, 1.0614054
        %v997 = vmul.f32 %v993, 1.0614054
        %v998 = vmul.f32 %v994, 1.0614054
        %v999 = vadd.f32 %v995, -1.4531521
        %v1000 = vadd.f32 %v996, -1.4531521
        %v1001 = vadd.f32 %v997, -1.4531521
        %v1002 = vadd.f32 %v998, -1.4531521
        %v1003 = vmul.f32 %v999, %v991
        %v1004 = vmul.f32 %v1000, %v992
        %v1005 = vmul.f32 %v1001, %v993
        %v1006 = vmul.f32 %v1002, %v994
        %v1007 = vadd.f32 %v1003, 1.4214138
        %v1008 = vadd.f32 %v1004, 1.4214138
        %v1009 = vadd.f32 %v1005, 1.4214138
        %v1010 = vadd.f32 %v1006, 1.4214138
        %v1011 = vmul.f32 %v1007, %v991
        %v1012 = vmul.f32 %v1008, %v992
        %v1013 = vmul.f32 %v1009, %v993
        %v1014 = vmul.f32 %v1010, %v994
        %v1015 = vadd.f32 %v1011, -0.28449672
        %v1016 = vadd.f32 %v1012, -0.28449672
        %v1017 = vadd.f32 %v1013, -0.28449672
        %v1018 = vadd.f32 %v1014, -0.28449672
        %v1019 = vmul.f32 %v1015, %v991
        %v1020 = vmul.f32 %v1016, %v992
        %v1021 = vmul.f32 %v1017, %v993
        %v1022 = vmul.f32 %v1018, %v994
        %v1023 = vadd.f32 %v1019, 0.2548296
        %v1024 = vadd.f32 %v1020, 0.2548296
        %v1025 = vadd.f32 %v1021, 0.2548296
        %v1026 = vadd.f32 %v1022, 0.2548296
        %v1027 = vmul.f32 %v1023, %v991
        %v1028 = vmul.f32 %v1024, %v992
        %v1029 = vmul.f32 %v1025, %v993
        %v1030 = vmul.f32 %v1026, %v994
        %v1031 = vsub.f32 0.0, %v979
        %v1032 = vsub.f32 0.0, %v980
        %v1033 = vsub.f32 0.0, %v981
        %v1034 = vsub.f32 0.0, %v982
        %v1035 = vmul.f32 %v1031, %v979
        %v1036 = vmul.f32 %v1032, %v980
        %v1037 = vmul.f32 %v1033, %v981
        %v1038 = vmul.f32 %v1034, %v982
        %v1039 = vmul.f32 %v1035, 1.442695
        %v1040 = vpow.pop %v1039
        %v1041 = vmul.f32 %v1036, 1.442695
        %v1042 = vpow.pop %v1041
        %v1043 = vmul.f32 %v1037, 1.442695
        %v1044 = vpow.pop %v1043
        %v1045 = vmul.f32 %v1038, 1.442695
        %v1046 = vpow.pop %v1045
        %v1047 = vmul.f32 %v1027, %v1040
        %v1048 = vmul.f32 %v1028, %v1042
        %v1049 = vmul.f32 %v1029, %v1044
        %v1050 = vmul.f32 %v1030, %v1046
        %v1051 = vsub.f32 1.0, %v1047
        %v1052 = vsub.f32 1.0, %v1048
        %v1053 = vsub.f32 1.0, %v1049
        %v1054 = vsub.f32 1.0, %v1050
        %v1055 = vmul.f32 %v975, %v1051
        %v1056 = vmul.f32 %v976, %v1052
        %v1057 = vmul.f32 %v977, %v1053
        %v1058 = vmul.f32 %v978, %v1054
        %v1059 = vadd.f32 %v1055, 1.0
        %v1060 = vadd.f32 %v1056, 1.0
        %v1061 = vadd.f32 %v1057, 1.0
        %v1062 = vadd.f32 %v1058, 1.0
        %v1063 = vmul.f32 %v963, %v1059
        %v1064 = vmul.f32 %v964, %v1060
        %v1065 = vmul.f32 %v965, %v1061
        %v1066 = vmul.f32 %v966, %v1062
        %v1067 = vld [vmem:[%s2] ss:$2 sm:$0x3]
        %v1069 = vlaneseq
        %v1070 = vshrl.u32 %v1069, 7
        %v1071 = vsub.s32 0, %v1070
        %v1072 = vrot.slane %v1067, %v1071
        %v1073 = vlaneseq
        %v1074 = vshrl.u32 %v1073, 7
        %v1075 = vsub.s32 1, %v1074
        %v1076 = vrot.slane %v1067, %v1075
        %v1079 = vmul.f32 %v1063, %v1072
        %v1080 = vmul.f32 %v1064, %v1076
        %v1081 = vmul.f32 %v1065, %v1072
        %v1082 = vmul.f32 %v1066, %v1076
        %s1083 = scalar_lea.vmem %s2, 1
        %v1084 = vld [vmem:[%s1083] ss:$2 sm:$0x3]
        %v1086 = vlaneseq
        %v1087 = vshrl.u32 %v1086, 7
        %v1088 = vsub.s32 0, %v1087
        %v1089 = vrot.slane %v1084, %v1088
        %v1090 = vlaneseq
        %v1091 = vshrl.u32 %v1090, 7
        %v1092 = vsub.s32 1, %v1091
        %v1093 = vrot.slane %v1084, %v1092
        %v1096 = vmul.f32 %v1063, %v1089
        %v1097 = vmul.f32 %v1064, %v1093
        %v1098 = vmul.f32 %v1065, %v1089
        %v1099 = vmul.f32 %v1066, %v1093
        %1104 = vrot.lane.b32.xlu0 %v1096, 17
        %v1105 = vpop.permute.xlu0 %1104
        %1106 = vrot.lane.b32.xlu0 %v1097, 17
        %v1107 = vpop.permute.xlu0 %1106
        %1108 = vrot.lane.b32.xlu0 %v1098, 17
        %v1109 = vpop.permute.xlu0 %1108
        %1110 = vrot.lane.b32.xlu0 %v1099, 17
        %v1111 = vpop.permute.xlu0 %1110
        %vm1112 = vcmask 138240
        %v1113 = vsel %vm1112, %v1105, %v1107
        %v1114 = vsel %vm1112, %v1109, %v1111
        %v1119 = vsel %vm1112, 0.0, %v1105
        %v1120 = vsel %vm1112, 0.0, %v1109
        %v1121 = vpack.c.bf16 %v1120, %v1119
        %v1122 = vpack.c.bf16 %v1114, %v1113
        %v1123 = vld [vmem:[%s6] sm:$0xf]
        %v1124 = vld [vmem:[%s6 + $0x4] sm:$0xf]
        %v1125 = vld [vmem:[%s6 + $0x8] sm:$0xf]
        %v1126 = vld [vmem:[%s6 + $0xc] sm:$0xf]
        %1131 = vrot.lane.b32.xlu0 %v1063, 16
        %v1132 = vpop.permute.xlu0 %1131
        %1133 = vrot.lane.b32.xlu0 %v1064, 16
        %v1134 = vpop.permute.xlu0 %1133
        %1135 = vrot.lane.b32.xlu0 %v1065, 16
        %v1136 = vpop.permute.xlu0 %1135
        %1137 = vrot.lane.b32.xlu0 %v1066, 16
        %v1138 = vpop.permute.xlu0 %1137
        %v1139 = vsel %vm813, %v1132, %v1134
        %v1140 = vsel %vm813, %v1136, %v1138
        %v1145 = vsel %vm813, 0.0, %v1132
        %v1146 = vsel %vm813, 0.0, %v1136
        %v1147 = vpack.c.bf16 %v1146, %v1145
        %v1148 = vpack.c.bf16 %v1140, %v1139
        %s1149 = scalar_lea.vmem %s6, 16
        %v1150 = vld [vmem:[%s1149] sm:$0xf]
        %v1151 = vld [vmem:[%s1149 + $0x4] sm:$0xf]
        %v1152 = vld [vmem:[%s1149 + $0x8] sm:$0xf]
        %v1153 = vld [vmem:[%s1149 + $0xc] sm:$0xf]
        %v1158 = vunpack.c.l.b16 %v1150
        %v1159 = vunpack.c.l.b16 %v1151
        %v1160 = vunpack.c.l.b16 %v1152
        %v1161 = vunpack.c.l.b16 %v1153
        %v1162 = vpack.c.b16 %v1159, %v1158
        %v1163 = vpack.c.b16 %v1161, %v1160
        %v1165 = vsel %vm813, %v1162, 0
        %v1168 = vsel %vm813, %v1163, 0
        %1170 = vmatprep.subr.bf16.mxu0 %v1148
        %1171 = vmatpush1.bf16.msra.mxu0 %v1147
        %1172 = vmatprep.subr.bf16.mxu0 0
        %1173 = vmatpush1.bf16.msra.mxu0 0
        %1174 = vmatprep.subr.bf16.mxu0 0
        %1175 = vmatpush1.bf16.msra.mxu0 0
        %1176 = vmatprep.subr.bf16.mxu0 0
        %1177 = vmatpush1.bf16.msra.mxu0 0
        %1178 = vmatprep.subr.bf16.mxu0 0
        %1179 = vmatpush1.bf16.msra.mxu0 0
        %1180 = vmatprep.subr.bf16.mxu0 0
        %1181 = vmatpush1.bf16.msra.mxu0 0
        %1182 = vmatprep.subr.bf16.mxu0 0
        %1183 = vmatpush1.bf16.msra.mxu0 0
        %1184 = vmatprep.subr.bf16.mxu0 0
        %1185 = vmatpush1.bf16.msra.mxu0 0
        %1186 = vmatprep.subr.bf16.mxu0 0
        %1187 = vmatpush1.bf16.msra.mxu0 0
        %1188 = vmatprep.subr.bf16.mxu0 0
        %1189 = vmatpush1.bf16.msra.mxu0 0
        %1190 = vmatprep.subr.bf16.mxu0 0
        %1191 = vmatpush1.bf16.msra.mxu0 0
        %1192 = vmatprep.subr.bf16.mxu0 0
        %1193 = vmatpush1.bf16.msra.mxu0 0
        %1194 = vmatprep.subr.bf16.mxu0 0
        %1195 = vmatpush1.bf16.msra.mxu0 0
        %1196 = vmatprep.subr.bf16.mxu0 0
        %1197 = vmatpush1.bf16.msra.mxu0 0
        %1198 = vmatprep.subr.bf16.mxu0 0
        %1199 = vmatpush1.bf16.msra.mxu0 0
        %1200 = vmatprep.subr.bf16.mxu0 0
        %1201 = vmatpush1.bf16.msra.mxu0 0
        %1202 = vmatprep.mubr.bf16.mxu0 0
        %1203 = vmatmul.mubr.bf16.gmra.mrb[0].mxu0 %v1165
        %v1204 = vpop.f32.mrb[0].mxu0
        %v1205 = vadd.f32 0.0, %v1204
        %v1206 = vpop.f32.mrb[0].mxu0
        %v1207 = vadd.f32 0.0, %v1206
        %v1208 = vpop.f32.mrb[0].mxu0
        %v1209 = vadd.f32 0.0, %v1208
        %v1210 = vpop.f32.mrb[0].mxu0
        %v1211 = vadd.f32 0.0, %v1210
        %1212 = vmatprep.mubr.bf16.mxu0 0
        %1213 = vmatmul.mubr.bf16.gmra.mrb[0].mxu0 %v1168
        %v1214 = vpop.f32.mrb[0].mxu0
        %v1215 = vadd.f32 0.0, %v1214
        %v1216 = vpop.f32.mrb[0].mxu0
        %v1217 = vadd.f32 0.0, %v1216
        %v1218 = vpop.f32.mrb[0].mxu0
        %v1219 = vadd.f32 0.0, %v1218
        %v1220 = vpop.f32.mrb[0].mxu0
        %v1221 = vadd.f32 0.0, %v1220
        %1222 = vdwg.mxu0
        %v1227 = vunpack.c.l.b16 %v1123
        %v1228 = vunpack.c.l.b16 %v1124
        %v1229 = vunpack.c.l.b16 %v1125
        %v1230 = vunpack.c.l.b16 %v1126
        %v1231 = vpack.c.b16 %v1228, %v1227
        %v1232 = vpack.c.b16 %v1230, %v1229
        %v1234 = vsel %vm813, %v1231, 0
        %v1237 = vsel %vm813, %v1232, 0
        %1239 = vmatprep.subr.bf16.mxu0 %v1122
        %1240 = vmatpush1.bf16.msra.mxu0 %v1121
        %1241 = vmatprep.subr.bf16.mxu0 0
        %1242 = vmatpush1.bf16.msra.mxu0 0
        %1243 = vmatprep.subr.bf16.mxu0 0
        %1244 = vmatpush1.bf16.msra.mxu0 0
        %1245 = vmatprep.subr.bf16.mxu0 0
        %1246 = vmatpush1.bf16.msra.mxu0 0
        %1247 = vmatprep.subr.bf16.mxu0 0
        %1248 = vmatpush1.bf16.msra.mxu0 0
        %1249 = vmatprep.subr.bf16.mxu0 0
        %1250 = vmatpush1.bf16.msra.mxu0 0
        %1251 = vmatprep.subr.bf16.mxu0 0
        %1252 = vmatpush1.bf16.msra.mxu0 0
        %1253 = vmatprep.subr.bf16.mxu0 0
        %1254 = vmatpush1.bf16.msra.mxu0 0
        %1255 = vmatprep.subr.bf16.mxu0 0
        %1256 = vmatpush1.bf16.msra.mxu0 0
        %1257 = vmatprep.subr.bf16.mxu0 0
        %1258 = vmatpush1.bf16.msra.mxu0 0
        %1259 = vmatprep.subr.bf16.mxu0 0
        %1260 = vmatpush1.bf16.msra.mxu0 0
        %1261 = vmatprep.subr.bf16.mxu0 0
        %1262 = vmatpush1.bf16.msra.mxu0 0
        %1263 = vmatprep.subr.bf16.mxu0 0
        %1264 = vmatpush1.bf16.msra.mxu0 0
        %1265 = vmatprep.subr.bf16.mxu0 0
        %1266 = vmatpush1.bf16.msra.mxu0 0
        %1267 = vmatprep.subr.bf16.mxu0 0
        %1268 = vmatpush1.bf16.msra.mxu0 0
        %1269 = vmatprep.subr.bf16.mxu0 0
        %1270 = vmatpush1.bf16.msra.mxu0 0
        %1271 = vmatprep.mubr.bf16.mxu0 0
        %1272 = vmatmul.mubr.bf16.gmra.mrb[0].mxu0 %v1234
        %v1273 = vpop.f32.mrb[0].mxu0
        %v1274 = vadd.f32 %v1205, %v1273
        %v1275 = vpop.f32.mrb[0].mxu0
        %v1276 = vadd.f32 %v1207, %v1275
        %v1277 = vpop.f32.mrb[0].mxu0
        %v1278 = vadd.f32 %v1209, %v1277
        %v1279 = vpop.f32.mrb[0].mxu0
        %v1280 = vadd.f32 %v1211, %v1279
        %1281 = vmatprep.mubr.bf16.mxu0 0
        %1282 = vmatmul.mubr.bf16.gmra.mrb[0].mxu0 %v1237
        %v1283 = vpop.f32.mrb[0].mxu0
        %v1284 = vadd.f32 %v1215, %v1283
        %v1285 = vpop.f32.mrb[0].mxu0
        %v1286 = vadd.f32 %v1217, %v1285
        %v1287 = vpop.f32.mrb[0].mxu0
        %v1288 = vadd.f32 %v1219, %v1287
        %v1289 = vpop.f32.mrb[0].mxu0
        %v1290 = vadd.f32 %v1221, %v1289
        %1291 = vdwg.mxu0
        %1296 = vrot.lane.b32.xlu0 %v1079, 15
        %v1297 = vpop.permute.xlu0 %1296
        %1298 = vrot.lane.b32.xlu0 %v1080, 15
        %v1299 = vpop.permute.xlu0 %1298
        %1300 = vrot.lane.b32.xlu0 %v1081, 15
        %v1301 = vpop.permute.xlu0 %1300
        %1302 = vrot.lane.b32.xlu0 %v1082, 15
        %v1303 = vpop.permute.xlu0 %1302
        %vm1304 = vcmask 121856
        %v1305 = vsel %vm1304, %v1297, %v1299
        %v1306 = vsel %vm1304, %v1301, %v1303
        %v1311 = vsel %vm1304, 0.0, %v1297
        %v1312 = vsel %vm1304, 0.0, %v1301
        %v1313 = vpack.c.bf16 %v1312, %v1311
        %v1314 = vpack.c.bf16 %v1306, %v1305
        %s1315 = scalar_lea.vmem %s6, 32
        %v1316 = vld [vmem:[%s1315] sm:$0xf]
        %v1317 = vld [vmem:[%s1315 + $0x4] sm:$0xf]
        %v1318 = vld [vmem:[%s1315 + $0x8] sm:$0xf]
        %v1319 = vld [vmem:[%s1315 + $0xc] sm:$0xf]
        %v1324 = vunpack.c.l.b16 %v1316
        %v1325 = vunpack.c.l.b16 %v1317
        %v1326 = vunpack.c.l.b16 %v1318
        %v1327 = vunpack.c.l.b16 %v1319
        %v1328 = vpack.c.b16 %v1325, %v1324
        %v1329 = vpack.c.b16 %v1327, %v1326
        %v1331 = vsel %vm813, %v1328, 0
        %v1334 = vsel %vm813, %v1329, 0
        %1336 = vmatprep.subr.bf16.mxu0 %v1314
        %1337 = vmatpush1.bf16.msra.mxu0 %v1313
        %1338 = vmatprep.subr.bf16.mxu0 0
        %1339 = vmatpush1.bf16.msra.mxu0 0
        %1340 = vmatprep.subr.bf16.mxu0 0
        %1341 = vmatpush1.bf16.msra.mxu0 0
        %1342 = vmatprep.subr.bf16.mxu0 0
        %1343 = vmatpush1.bf16.msra.mxu0 0
        %1344 = vmatprep.subr.bf16.mxu0 0
        %1345 = vmatpush1.bf16.msra.mxu0 0
        %1346 = vmatprep.subr.bf16.mxu0 0
        %1347 = vmatpush1.bf16.msra.mxu0 0
        %1348 = vmatprep.subr.bf16.mxu0 0
        %1349 = vmatpush1.bf16.msra.mxu0 0
        %1350 = vmatprep.subr.bf16.mxu0 0
        %1351 = vmatpush1.bf16.msra.mxu0 0
        %1352 = vmatprep.subr.bf16.mxu0 0
        %1353 = vmatpush1.bf16.msra.mxu0 0
        %1354 = vmatprep.subr.bf16.mxu0 0
        %1355 = vmatpush1.bf16.msra.mxu0 0
        %1356 = vmatprep.subr.bf16.mxu0 0
        %1357 = vmatpush1.bf16.msra.mxu0 0
        %1358 = vmatprep.subr.bf16.mxu0 0
        %1359 = vmatpush1.bf16.msra.mxu0 0
        %1360 = vmatprep.subr.bf16.mxu0 0
        %1361 = vmatpush1.bf16.msra.mxu0 0
        %1362 = vmatprep.subr.bf16.mxu0 0
        %1363 = vmatpush1.bf16.msra.mxu0 0
        %1364 = vmatprep.subr.bf16.mxu0 0
        %1365 = vmatpush1.bf16.msra.mxu0 0
        %1366 = vmatprep.subr.bf16.mxu0 0
        %1367 = vmatpush1.bf16.msra.mxu0 0
        %1368 = vmatprep.mubr.bf16.mxu0 0
        %1369 = vmatmul.mubr.bf16.gmra.mrb[0].mxu0 %v1331
        %v1370 = vpop.f32.mrb[0].mxu0
        %v1371 = vadd.f32 0.0, %v1370
        %v1372 = vpop.f32.mrb[0].mxu0
        %v1373 = vadd.f32 0.0, %v1372
        %v1374 = vpop.f32.mrb[0].mxu0
        %v1375 = vadd.f32 0.0, %v1374
        %v1376 = vpop.f32.mrb[0].mxu0
        %v1377 = vadd.f32 0.0, %v1376
        %1378 = vmatprep.mubr.bf16.mxu0 0
        %1379 = vmatmul.mubr.bf16.gmra.mrb[0].mxu0 %v1334
        %v1380 = vpop.f32.mrb[0].mxu0
        %v1381 = vadd.f32 0.0, %v1380
        %v1382 = vpop.f32.mrb[0].mxu0
        %v1383 = vadd.f32 0.0, %v1382
        %v1384 = vpop.f32.mrb[0].mxu0
        %v1385 = vadd.f32 0.0, %v1384
        %v1386 = vpop.f32.mrb[0].mxu0
        %v1387 = vadd.f32 0.0, %v1386
        %1388 = vdwg.mxu0
        %v1389 = vadd.f32 %v1274, %v1371
        %v1390 = vadd.f32 %v1276, %v1373
        %v1391 = vadd.f32 %v1278, %v1375
        %v1392 = vadd.f32 %v1280, %v1377
        %v1393 = vadd.f32 %v1284, %v1381
        %v1394 = vadd.f32 %v1286, %v1383
        %v1395 = vadd.f32 %v1288, %v1385
        %v1396 = vadd.f32 %v1290, %v1387
        %1397 = vrot.lane.b32.xlu0 %v1096, 1
        %v1398 = vpop.permute.xlu0 %1397
        %1399 = vrot.lane.b32.xlu0 %v1097, 1
        %v1400 = vpop.permute.xlu0 %1399
        %1401 = vrot.lane.b32.xlu0 %v1098, 1
        %v1402 = vpop.permute.xlu0 %1401
        %1403 = vrot.lane.b32.xlu0 %v1099, 1
        %v1404 = vpop.permute.xlu0 %1403
        %v1405 = vsel %vm810, %v1398, %v1400
        %v1406 = vsel %vm810, %v1402, %v1404
        %v1411 = vsel %vm810, 0.0, %v1398
        %v1412 = vsel %vm810, 0.0, %v1402
        %v1413 = vpack.c.bf16 %v1412, %v1411
        %v1414 = vpack.c.bf16 %v1406, %v1405
        %s1415 = scalar_lea.vmem %s6, 48
        %v1416 = vld [vmem:[%s1415] sm:$0xf]
        %v1417 = vld [vmem:[%s1415 + $0x4] sm:$0xf]
        %v1418 = vld [vmem:[%s1415 + $0x8] sm:$0xf]
        %v1419 = vld [vmem:[%s1415 + $0xc] sm:$0xf]
        %v1424 = vunpack.c.l.b16 %v1416
        %v1425 = vunpack.c.l.b16 %v1417
        %v1426 = vunpack.c.l.b16 %v1418
        %v1427 = vunpack.c.l.b16 %v1419
        %v1428 = vpack.c.b16 %v1425, %v1424
        %v1429 = vpack.c.b16 %v1427, %v1426
        %v1431 = vsel %vm813, %v1428, 0
        %v1434 = vsel %vm813, %v1429, 0
        %1436 = vmatprep.subr.bf16.mxu0 %v1414
        %1437 = vmatpush1.bf16.msra.mxu0 %v1413
        %1438 = vmatprep.subr.bf16.mxu0 0
        %1439 = vmatpush1.bf16.msra.mxu0 0
        %1440 = vmatprep.subr.bf16.mxu0 0
        %1441 = vmatpush1.bf16.msra.mxu0 0
        %1442 = vmatprep.subr.bf16.mxu0 0
        %1443 = vmatpush1.bf16.msra.mxu0 0
        %1444 = vmatprep.subr.bf16.mxu0 0
        %1445 = vmatpush1.bf16.msra.mxu0 0
        %1446 = vmatprep.subr.bf16.mxu0 0
        %1447 = vmatpush1.bf16.msra.mxu0 0
        %1448 = vmatprep.subr.bf16.mxu0 0
        %1449 = vmatpush1.bf16.msra.mxu0 0
        %1450 = vmatprep.subr.bf16.mxu0 0
        %1451 = vmatpush1.bf16.msra.mxu0 0
        %1452 = vmatprep.subr.bf16.mxu0 0
        %1453 = vmatpush1.bf16.msra.mxu0 0
        %1454 = vmatprep.subr.bf16.mxu0 0
        %1455 = vmatpush1.bf16.msra.mxu0 0
        %1456 = vmatprep.subr.bf16.mxu0 0
        %1457 = vmatpush1.bf16.msra.mxu0 0
        %1458 = vmatprep.subr.bf16.mxu0 0
        %1459 = vmatpush1.bf16.msra.mxu0 0
        %1460 = vmatprep.subr.bf16.mxu0 0
        %1461 = vmatpush1.bf16.msra.mxu0 0
        %1462 = vmatprep.subr.bf16.mxu0 0
        %1463 = vmatpush1.bf16.msra.mxu0 0
        %1464 = vmatprep.subr.bf16.mxu0 0
        %1465 = vmatpush1.bf16.msra.mxu0 0
        %1466 = vmatprep.subr.bf16.mxu0 0
        %1467 = vmatpush1.bf16.msra.mxu0 0
        %1468 = vmatprep.mubr.bf16.mxu0 0
        %1469 = vmatmul.mubr.bf16.gmra.mrb[0].mxu0 %v1431
        %v1470 = vpop.f32.mrb[0].mxu0
        %v1471 = vadd.f32 0.0, %v1470
        %v1472 = vpop.f32.mrb[0].mxu0
        %v1473 = vadd.f32 0.0, %v1472
        %v1474 = vpop.f32.mrb[0].mxu0
        %v1475 = vadd.f32 0.0, %v1474
        %v1476 = vpop.f32.mrb[0].mxu0
        %v1477 = vadd.f32 0.0, %v1476
        %1478 = vmatprep.mubr.bf16.mxu0 0
        %1479 = vmatmul.mubr.bf16.gmra.mrb[0].mxu0 %v1434
        %v1480 = vpop.f32.mrb[0].mxu0
        %v1481 = vadd.f32 0.0, %v1480
        %v1482 = vpop.f32.mrb[0].mxu0
        %v1483 = vadd.f32 0.0, %v1482
        %v1484 = vpop.f32.mrb[0].mxu0
        %v1485 = vadd.f32 0.0, %v1484
        %v1486 = vpop.f32.mrb[0].mxu0
        %v1487 = vadd.f32 0.0, %v1486
        %1488 = vdwg.mxu0
        %v1489 = vadd.f32 %v1389, %v1471
        %v1490 = vadd.f32 %v1390, %v1473
        %v1491 = vadd.f32 %v1391, %v1475
        %v1492 = vadd.f32 %v1392, %v1477
        %v1493 = vadd.f32 %v1393, %v1481
        %v1494 = vadd.f32 %v1394, %v1483
        %v1495 = vadd.f32 %v1395, %v1485
        %v1496 = vadd.f32 %v1396, %v1487
        %v1497 = vpack.c.bf16 %v1065, %v1063
        %v1498 = vpack.c.bf16 %v1066, %v1064
        %s1499 = scalar_lea.vmem %s6, 64
        %v1500 = vld [vmem:[%s1499] sm:$0xf]
        %v1501 = vld [vmem:[%s1499 + $0x4] sm:$0xf]
        %v1502 = vld [vmem:[%s1499 + $0x8] sm:$0xf]
        %v1503 = vld [vmem:[%s1499 + $0xc] sm:$0xf]
        %v1508 = vunpack.c.l.b16 %v1500
        %v1509 = vunpack.c.l.b16 %v1501
        %v1510 = vunpack.c.l.b16 %v1502
        %v1511 = vunpack.c.l.b16 %v1503
        %v1512 = vpack.c.b16 %v1509, %v1508
        %v1513 = vpack.c.b16 %v1511, %v1510
        %v1515 = vsel %vm813, %v1512, 0
        %v1518 = vsel %vm813, %v1513, 0
        %1520 = vmatprep.subr.bf16.mxu0 %v1498
        %1521 = vmatpush1.bf16.msra.mxu0 %v1497
        %1522 = vmatprep.subr.bf16.mxu0 0
        %1523 = vmatpush1.bf16.msra.mxu0 0
        %1524 = vmatprep.subr.bf16.mxu0 0
        %1525 = vmatpush1.bf16.msra.mxu0 0
        %1526 = vmatprep.subr.bf16.mxu0 0
        %1527 = vmatpush1.bf16.msra.mxu0 0
        %1528 = vmatprep.subr.bf16.mxu0 0
        %1529 = vmatpush1.bf16.msra.mxu0 0
        %1530 = vmatprep.subr.bf16.mxu0 0
        %1531 = vmatpush1.bf16.msra.mxu0 0
        %1532 = vmatprep.subr.bf16.mxu0 0
        %1533 = vmatpush1.bf16.msra.mxu0 0
        %1534 = vmatprep.subr.bf16.mxu0 0
        %1535 = vmatpush1.bf16.msra.mxu0 0
        %1536 = vmatprep.subr.bf16.mxu0 0
        %1537 = vmatpush1.bf16.msra.mxu0 0
        %1538 = vmatprep.subr.bf16.mxu0 0
        %1539 = vmatpush1.bf16.msra.mxu0 0
        %1540 = vmatprep.subr.bf16.mxu0 0
        %1541 = vmatpush1.bf16.msra.mxu0 0
        %1542 = vmatprep.subr.bf16.mxu0 0
        %1543 = vmatpush1.bf16.msra.mxu0 0
        %1544 = vmatprep.subr.bf16.mxu0 0
        %1545 = vmatpush1.bf16.msra.mxu0 0
        %1546 = vmatprep.subr.bf16.mxu0 0
        %1547 = vmatpush1.bf16.msra.mxu0 0
        %1548 = vmatprep.subr.bf16.mxu0 0
        %1549 = vmatpush1.bf16.msra.mxu0 0
        %1550 = vmatprep.subr.bf16.mxu0 0
        %1551 = vmatpush1.bf16.msra.mxu0 0
        %1552 = vmatprep.mubr.bf16.mxu0 0
        %1553 = vmatmul.mubr.bf16.gmra.mrb[0].mxu0 %v1515
        %v1554 = vpop.f32.mrb[0].mxu0
        %v1555 = vadd.f32 0.0, %v1554
        %v1556 = vpop.f32.mrb[0].mxu0
        %v1557 = vadd.f32 0.0, %v1556
        %v1558 = vpop.f32.mrb[0].mxu0
        %v1559 = vadd.f32 0.0, %v1558
        %v1560 = vpop.f32.mrb[0].mxu0
        %v1561 = vadd.f32 0.0, %v1560
        %1562 = vmatprep.mubr.bf16.mxu0 0
        %1563 = vmatmul.mubr.bf16.gmra.mrb[0].mxu0 %v1518
        %v1564 = vpop.f32.mrb[0].mxu0
        %v1565 = vadd.f32 0.0, %v1564
        %v1566 = vpop.f32.mrb[0].mxu0
        %v1567 = vadd.f32 0.0, %v1566
        %v1568 = vpop.f32.mrb[0].mxu0
        %v1569 = vadd.f32 0.0, %v1568
        %v1570 = vpop.f32.mrb[0].mxu0
        %v1571 = vadd.f32 0.0, %v1570
        %1572 = vdwg.mxu0
        %v1573 = vadd.f32 %v1489, %v1555
        %v1574 = vadd.f32 %v1490, %v1557
        %v1575 = vadd.f32 %v1491, %v1559
        %v1576 = vadd.f32 %v1492, %v1561
        %v1577 = vadd.f32 %v1493, %v1565
        %v1578 = vadd.f32 %v1494, %v1567
        %v1579 = vadd.f32 %v1495, %v1569
        %v1580 = vadd.f32 %v1496, %v1571
        %1581 = vrot.lane.b32.xlu0 %v1079, 127
        %v1582 = vpop.permute.xlu0 %1581
        %1583 = vrot.lane.b32.xlu0 %v1080, 127
        %v1584 = vpop.permute.xlu0 %1583
        %1585 = vrot.lane.b32.xlu0 %v1081, 127
        %v1586 = vpop.permute.xlu0 %1585
        %1587 = vrot.lane.b32.xlu0 %v1082, 127
        %v1588 = vpop.permute.xlu0 %1587
        %vm1589 = vcmask 1039360
        %v1590 = vsel %vm1589, %v1582, %v1584
        %v1591 = vsel %vm1589, %v1586, %v1588
        %v1596 = vsel %vm1589, %v1584, 0.0
        %v1597 = vsel %vm1589, %v1588, 0.0
        %v1598 = vpack.c.bf16 %v1591, %v1590
        %v1599 = vpack.c.bf16 %v1597, %v1596
        %s1600 = scalar_lea.vmem %s6, 80
        %v1601 = vld [vmem:[%s1600] sm:$0xf]
        %v1602 = vld [vmem:[%s1600 + $0x4] sm:$0xf]
        %v1603 = vld [vmem:[%s1600 + $0x8] sm:$0xf]
        %v1604 = vld [vmem:[%s1600 + $0xc] sm:$0xf]
        %v1609 = vunpack.c.l.b16 %v1601
        %v1610 = vunpack.c.l.b16 %v1602
        %v1611 = vunpack.c.l.b16 %v1603
        %v1612 = vunpack.c.l.b16 %v1604
        %v1613 = vpack.c.b16 %v1610, %v1609
        %v1614 = vpack.c.b16 %v1612, %v1611
        %v1616 = vsel %vm813, %v1613, 0
        %v1619 = vsel %vm813, %v1614, 0
        %1621 = vmatprep.subr.bf16.mxu0 %v1599
        %1622 = vmatpush1.bf16.msra.mxu0 %v1598
        %1623 = vmatprep.subr.bf16.mxu0 0
        %1624 = vmatpush1.bf16.msra.mxu0 0
        %1625 = vmatprep.subr.bf16.mxu0 0
        %1626 = vmatpush1.bf16.msra.mxu0 0
        %1627 = vmatprep.subr.bf16.mxu0 0
        %1628 = vmatpush1.bf16.msra.mxu0 0
        %1629 = vmatprep.subr.bf16.mxu0 0
        %1630 = vmatpush1.bf16.msra.mxu0 0
        %1631 = vmatprep.subr.bf16.mxu0 0
        %1632 = vmatpush1.bf16.msra.mxu0 0
        %1633 = vmatprep.subr.bf16.mxu0 0
        %1634 = vmatpush1.bf16.msra.mxu0 0
        %1635 = vmatprep.subr.bf16.mxu0 0
        %1636 = vmatpush1.bf16.msra.mxu0 0
        %1637 = vmatprep.subr.bf16.mxu0 0
        %1638 = vmatpush1.bf16.msra.mxu0 0
        %1639 = vmatprep.subr.bf16.mxu0 0
        %1640 = vmatpush1.bf16.msra.mxu0 0
        %1641 = vmatprep.subr.bf16.mxu0 0
        %1642 = vmatpush1.bf16.msra.mxu0 0
        %1643 = vmatprep.subr.bf16.mxu0 0
        %1644 = vmatpush1.bf16.msra.mxu0 0
        %1645 = vmatprep.subr.bf16.mxu0 0
        %1646 = vmatpush1.bf16.msra.mxu0 0
        %1647 = vmatprep.subr.bf16.mxu0 0
        %1648 = vmatpush1.bf16.msra.mxu0 0
        %1649 = vmatprep.subr.bf16.mxu0 0
        %1650 = vmatpush1.bf16.msra.mxu0 0
        %1651 = vmatprep.subr.bf16.mxu0 0
        %1652 = vmatpush1.bf16.msra.mxu0 0
        %1653 = vmatprep.mubr.bf16.mxu0 0
        %1654 = vmatmul.mubr.bf16.gmra.mrb[0].mxu0 %v1616
        %v1655 = vpop.f32.mrb[0].mxu0
        %v1656 = vadd.f32 0.0, %v1655
        %v1657 = vpop.f32.mrb[0].mxu0
        %v1658 = vadd.f32 0.0, %v1657
        %v1659 = vpop.f32.mrb[0].mxu0
        %v1660 = vadd.f32 0.0, %v1659
        %v1661 = vpop.f32.mrb[0].mxu0
        %v1662 = vadd.f32 0.0, %v1661
        %1663 = vmatprep.mubr.bf16.mxu0 0
        %1664 = vmatmul.mubr.bf16.gmra.mrb[0].mxu0 %v1619
        %v1665 = vpop.f32.mrb[0].mxu0
        %v1666 = vadd.f32 0.0, %v1665
        %v1667 = vpop.f32.mrb[0].mxu0
        %v1668 = vadd.f32 0.0, %v1667
        %v1669 = vpop.f32.mrb[0].mxu0
        %v1670 = vadd.f32 0.0, %v1669
        %v1671 = vpop.f32.mrb[0].mxu0
        %v1672 = vadd.f32 0.0, %v1671
        %1673 = vdwg.mxu0
        %v1674 = vadd.f32 %v1573, %v1656
        %v1675 = vadd.f32 %v1574, %v1658
        %v1676 = vadd.f32 %v1575, %v1660
        %v1677 = vadd.f32 %v1576, %v1662
        %v1678 = vadd.f32 %v1577, %v1666
        %v1679 = vadd.f32 %v1578, %v1668
        %v1680 = vadd.f32 %v1579, %v1670
        %v1681 = vadd.f32 %v1580, %v1672
        %1682 = vrot.lane.b32.xlu0 %v1096, 113
        %v1683 = vpop.permute.xlu0 %1682
        %1684 = vrot.lane.b32.xlu0 %v1097, 113
        %v1685 = vpop.permute.xlu0 %1684
        %1686 = vrot.lane.b32.xlu0 %v1098, 113
        %v1687 = vpop.permute.xlu0 %1686
        %1688 = vrot.lane.b32.xlu0 %v1099, 113
        %v1689 = vpop.permute.xlu0 %1688
        %vm1690 = vcmask 924672
        %v1691 = vsel %vm1690, %v1683, %v1685
        %v1692 = vsel %vm1690, %v1687, %v1689
        %v1697 = vsel %vm1690, %v1685, 0.0
        %v1698 = vsel %vm1690, %v1689, 0.0
        %v1699 = vpack.c.bf16 %v1692, %v1691
        %v1700 = vpack.c.bf16 %v1698, %v1697
        %s1701 = scalar_lea.vmem %s6, 96
        %v1702 = vld [vmem:[%s1701] sm:$0xf]
        %v1703 = vld [vmem:[%s1701 + $0x4] sm:$0xf]
        %v1704 = vld [vmem:[%s1701 + $0x8] sm:$0xf]
        %v1705 = vld [vmem:[%s1701 + $0xc] sm:$0xf]
        %v1710 = vunpack.c.l.b16 %v1702
        %v1711 = vunpack.c.l.b16 %v1703
        %v1712 = vunpack.c.l.b16 %v1704
        %v1713 = vunpack.c.l.b16 %v1705
        %v1714 = vpack.c.b16 %v1711, %v1710
        %v1715 = vpack.c.b16 %v1713, %v1712
        %v1717 = vsel %vm813, %v1714, 0
        %v1720 = vsel %vm813, %v1715, 0
        %1722 = vmatprep.subr.bf16.mxu0 %v1700
        %1723 = vmatpush1.bf16.msra.mxu0 %v1699
        %1724 = vmatprep.subr.bf16.mxu0 0
        %1725 = vmatpush1.bf16.msra.mxu0 0
        %1726 = vmatprep.subr.bf16.mxu0 0
        %1727 = vmatpush1.bf16.msra.mxu0 0
        %1728 = vmatprep.subr.bf16.mxu0 0
        %1729 = vmatpush1.bf16.msra.mxu0 0
        %1730 = vmatprep.subr.bf16.mxu0 0
        %1731 = vmatpush1.bf16.msra.mxu0 0
        %1732 = vmatprep.subr.bf16.mxu0 0
        %1733 = vmatpush1.bf16.msra.mxu0 0
        %1734 = vmatprep.subr.bf16.mxu0 0
        %1735 = vmatpush1.bf16.msra.mxu0 0
        %1736 = vmatprep.subr.bf16.mxu0 0
        %1737 = vmatpush1.bf16.msra.mxu0 0
        %1738 = vmatprep.subr.bf16.mxu0 0
        %1739 = vmatpush1.bf16.msra.mxu0 0
        %1740 = vmatprep.subr.bf16.mxu0 0
        %1741 = vmatpush1.bf16.msra.mxu0 0
        %1742 = vmatprep.subr.bf16.mxu0 0
        %1743 = vmatpush1.bf16.msra.mxu0 0
        %1744 = vmatprep.subr.bf16.mxu0 0
        %1745 = vmatpush1.bf16.msra.mxu0 0
        %1746 = vmatprep.subr.bf16.mxu0 0
        %1747 = vmatpush1.bf16.msra.mxu0 0
        %1748 = vmatprep.subr.bf16.mxu0 0
        %1749 = vmatpush1.bf16.msra.mxu0 0
        %1750 = vmatprep.subr.bf16.mxu0 0
        %1751 = vmatpush1.bf16.msra.mxu0 0
        %1752 = vmatprep.subr.bf16.mxu0 0
        %1753 = vmatpush1.bf16.msra.mxu0 0
        %1754 = vmatprep.mubr.bf16.mxu0 0
        %1755 = vmatmul.mubr.bf16.gmra.mrb[0].mxu0 %v1717
        %v1756 = vpop.f32.mrb[0].mxu0
        %v1757 = vadd.f32 0.0, %v1756
        %v1758 = vpop.f32.mrb[0].mxu0
        %v1759 = vadd.f32 0.0, %v1758
        %v1760 = vpop.f32.mrb[0].mxu0
        %v1761 = vadd.f32 0.0, %v1760
        %v1762 = vpop.f32.mrb[0].mxu0
        %v1763 = vadd.f32 0.0, %v1762
        %1764 = vmatprep.mubr.bf16.mxu0 0
        %1765 = vmatmul.mubr.bf16.gmra.mrb[0].mxu0 %v1720
        %v1766 = vpop.f32.mrb[0].mxu0
        %v1767 = vadd.f32 0.0, %v1766
        %v1768 = vpop.f32.mrb[0].mxu0
        %v1769 = vadd.f32 0.0, %v1768
        %v1770 = vpop.f32.mrb[0].mxu0
        %v1771 = vadd.f32 0.0, %v1770
        %v1772 = vpop.f32.mrb[0].mxu0
        %v1773 = vadd.f32 0.0, %v1772
        %1774 = vdwg.mxu0
        %v1775 = vadd.f32 %v1674, %v1757
        %v1776 = vadd.f32 %v1675, %v1759
        %v1777 = vadd.f32 %v1676, %v1761
        %v1778 = vadd.f32 %v1677, %v1763
        %v1779 = vadd.f32 %v1678, %v1767
        %v1780 = vadd.f32 %v1679, %v1769
        %v1781 = vadd.f32 %v1680, %v1771
        %v1782 = vadd.f32 %v1681, %v1773
        %1783 = vrot.lane.b32.xlu0 %v1063, 112
        %v1784 = vpop.permute.xlu0 %1783
        %1785 = vrot.lane.b32.xlu0 %v1064, 112
        %v1786 = vpop.permute.xlu0 %1785
        %1787 = vrot.lane.b32.xlu0 %v1065, 112
        %v1788 = vpop.permute.xlu0 %1787
        %1789 = vrot.lane.b32.xlu0 %v1066, 112
        %v1790 = vpop.permute.xlu0 %1789
        %vm1791 = vcmask 916480
        %v1792 = vsel %vm1791, %v1784, %v1786
        %v1793 = vsel %vm1791, %v1788, %v1790
        %v1798 = vsel %vm1791, %v1786, 0.0
        %v1799 = vsel %vm1791, %v1790, 0.0
        %v1800 = vpack.c.bf16 %v1793, %v1792
        %v1801 = vpack.c.bf16 %v1799, %v1798
        %s1802 = scalar_lea.vmem %s6, 112
        %v1803 = vld [vmem:[%s1802] sm:$0xf]
        %v1804 = vld [vmem:[%s1802 + $0x4] sm:$0xf]
        %v1805 = vld [vmem:[%s1802 + $0x8] sm:$0xf]
        %v1806 = vld [vmem:[%s1802 + $0xc] sm:$0xf]
        %v1811 = vunpack.c.l.b16 %v1803
        %v1812 = vunpack.c.l.b16 %v1804
        %v1813 = vunpack.c.l.b16 %v1805
        %v1814 = vunpack.c.l.b16 %v1806
        %v1815 = vpack.c.b16 %v1812, %v1811
        %v1816 = vpack.c.b16 %v1814, %v1813
        %v1818 = vsel %vm813, %v1815, 0
        %v1821 = vsel %vm813, %v1816, 0
        %1823 = vmatprep.subr.bf16.mxu0 %v1801
        %1824 = vmatpush1.bf16.msra.mxu0 %v1800
        %1825 = vmatprep.subr.bf16.mxu0 0
        %1826 = vmatpush1.bf16.msra.mxu0 0
        %1827 = vmatprep.subr.bf16.mxu0 0
        %1828 = vmatpush1.bf16.msra.mxu0 0
        %1829 = vmatprep.subr.bf16.mxu0 0
        %1830 = vmatpush1.bf16.msra.mxu0 0
        %1831 = vmatprep.subr.bf16.mxu0 0
        %1832 = vmatpush1.bf16.msra.mxu0 0
        %1833 = vmatprep.subr.bf16.mxu0 0
        %1834 = vmatpush1.bf16.msra.mxu0 0
        %1835 = vmatprep.subr.bf16.mxu0 0
        %1836 = vmatpush1.bf16.msra.mxu0 0
        %1837 = vmatprep.subr.bf16.mxu0 0
        %1838 = vmatpush1.bf16.msra.mxu0 0
        %1839 = vmatprep.subr.bf16.mxu0 0
        %1840 = vmatpush1.bf16.msra.mxu0 0
        %1841 = vmatprep.subr.bf16.mxu0 0
        %1842 = vmatpush1.bf16.msra.mxu0 0
        %1843 = vmatprep.subr.bf16.mxu0 0
        %1844 = vmatpush1.bf16.msra.mxu0 0
        %1845 = vmatprep.subr.bf16.mxu0 0
        %1846 = vmatpush1.bf16.msra.mxu0 0
        %1847 = vmatprep.subr.bf16.mxu0 0
        %1848 = vmatpush1.bf16.msra.mxu0 0
        %1849 = vmatprep.subr.bf16.mxu0 0
        %1850 = vmatpush1.bf16.msra.mxu0 0
        %1851 = vmatprep.subr.bf16.mxu0 0
        %1852 = vmatpush1.bf16.msra.mxu0 0
        %1853 = vmatprep.subr.bf16.mxu0 0
        %1854 = vmatpush1.bf16.msra.mxu0 0
        %1855 = vmatprep.mubr.bf16.mxu0 0
        %1856 = vmatmul.mubr.bf16.gmra.mrb[0].mxu0 %v1818
        %v1857 = vpop.f32.mrb[0].mxu0
        %v1858 = vadd.f32 0.0, %v1857
        %v1859 = vpop.f32.mrb[0].mxu0
        %v1860 = vadd.f32 0.0, %v1859
        %v1861 = vpop.f32.mrb[0].mxu0
        %v1862 = vadd.f32 0.0, %v1861
        %v1863 = vpop.f32.mrb[0].mxu0
        %v1864 = vadd.f32 0.0, %v1863
        %1865 = vmatprep.mubr.bf16.mxu0 0
        %1866 = vmatmul.mubr.bf16.gmra.mrb[0].mxu0 %v1821
        %v1867 = vpop.f32.mrb[0].mxu0
        %v1868 = vadd.f32 0.0, %v1867
        %v1869 = vpop.f32.mrb[0].mxu0
        %v1870 = vadd.f32 0.0, %v1869
        %v1871 = vpop.f32.mrb[0].mxu0
        %v1872 = vadd.f32 0.0, %v1871
        %v1873 = vpop.f32.mrb[0].mxu0
        %v1874 = vadd.f32 0.0, %v1873
        %1875 = vdwg.mxu0
        %v1876 = vadd.f32 %v1775, %v1858
        %v1877 = vadd.f32 %v1776, %v1860
        %v1878 = vadd.f32 %v1777, %v1862
        %v1879 = vadd.f32 %v1778, %v1864
        %v1880 = vadd.f32 %v1779, %v1868
        %v1881 = vadd.f32 %v1780, %v1870
        %v1882 = vadd.f32 %v1781, %v1872
        %v1883 = vadd.f32 %v1782, %v1874
        %1884 = vrot.lane.b32.xlu0 %v1079, 111
        %v1885 = vpop.permute.xlu0 %1884
        %1886 = vrot.lane.b32.xlu0 %v1080, 111
        %v1887 = vpop.permute.xlu0 %1886
        %1888 = vrot.lane.b32.xlu0 %v1081, 111
        %v1889 = vpop.permute.xlu0 %1888
        %1890 = vrot.lane.b32.xlu0 %v1082, 111
        %v1891 = vpop.permute.xlu0 %1890
        %vm1892 = vcmask 908288
        %v1893 = vsel %vm1892, %v1885, %v1887
        %v1894 = vsel %vm1892, %v1889, %v1891
        %v1899 = vsel %vm1892, %v1887, 0.0
        %v1900 = vsel %vm1892, %v1891, 0.0
        %v1901 = vpack.c.bf16 %v1894, %v1893
        %v1902 = vpack.c.bf16 %v1900, %v1899
        %s1903 = scalar_lea.vmem %s6, 128
        %v1904 = vld [vmem:[%s1903] sm:$0xf]
        %v1905 = vld [vmem:[%s1903 + $0x4] sm:$0xf]
        %v1906 = vld [vmem:[%s1903 + $0x8] sm:$0xf]
        %v1907 = vld [vmem:[%s1903 + $0xc] sm:$0xf]
        %v1912 = vunpack.c.l.b16 %v1904
        %v1913 = vunpack.c.l.b16 %v1905
        %v1914 = vunpack.c.l.b16 %v1906
        %v1915 = vunpack.c.l.b16 %v1907
        %v1916 = vpack.c.b16 %v1913, %v1912
        %v1917 = vpack.c.b16 %v1915, %v1914
        %v1919 = vsel %vm813, %v1916, 0
        %v1922 = vsel %vm813, %v1917, 0
        %1924 = vmatprep.subr.bf16.mxu0 %v1902
        %1925 = vmatpush1.bf16.msra.mxu0 %v1901
        %1926 = vmatprep.subr.bf16.mxu0 0
        %1927 = vmatpush1.bf16.msra.mxu0 0
        %1928 = vmatprep.subr.bf16.mxu0 0
        %1929 = vmatpush1.bf16.msra.mxu0 0
        %1930 = vmatprep.subr.bf16.mxu0 0
        %1931 = vmatpush1.bf16.msra.mxu0 0
        %1932 = vmatprep.subr.bf16.mxu0 0
        %1933 = vmatpush1.bf16.msra.mxu0 0
        %1934 = vmatprep.subr.bf16.mxu0 0
        %1935 = vmatpush1.bf16.msra.mxu0 0
        %1936 = vmatprep.subr.bf16.mxu0 0
        %1937 = vmatpush1.bf16.msra.mxu0 0
        %1938 = vmatprep.subr.bf16.mxu0 0
        %1939 = vmatpush1.bf16.msra.mxu0 0
        %1940 = vmatprep.subr.bf16.mxu0 0
        %1941 = vmatpush1.bf16.msra.mxu0 0
        %1942 = vmatprep.subr.bf16.mxu0 0
        %1943 = vmatpush1.bf16.msra.mxu0 0
        %1944 = vmatprep.subr.bf16.mxu0 0
        %1945 = vmatpush1.bf16.msra.mxu0 0
        %1946 = vmatprep.subr.bf16.mxu0 0
        %1947 = vmatpush1.bf16.msra.mxu0 0
        %1948 = vmatprep.subr.bf16.mxu0 0
        %1949 = vmatpush1.bf16.msra.mxu0 0
        %1950 = vmatprep.subr.bf16.mxu0 0
        %1951 = vmatpush1.bf16.msra.mxu0 0
        %1952 = vmatprep.subr.bf16.mxu0 0
        %1953 = vmatpush1.bf16.msra.mxu0 0
        %1954 = vmatprep.subr.bf16.mxu0 0
        %1955 = vmatpush1.bf16.msra.mxu0 0
        %1956 = vmatprep.mubr.bf16.mxu0 0
        %1957 = vmatmul.mubr.bf16.gmra.mrb[0].mxu0 %v1919
        %v1958 = vpop.f32.mrb[0].mxu0
        %v1959 = vadd.f32 0.0, %v1958
        %v1960 = vpop.f32.mrb[0].mxu0
        %v1961 = vadd.f32 0.0, %v1960
        %v1962 = vpop.f32.mrb[0].mxu0
        %v1963 = vadd.f32 0.0, %v1962
        %v1964 = vpop.f32.mrb[0].mxu0
        %v1965 = vadd.f32 0.0, %v1964
        %1966 = vmatprep.mubr.bf16.mxu0 0
        %1967 = vmatmul.mubr.bf16.gmra.mrb[0].mxu0 %v1922
        %v1968 = vpop.f32.mrb[0].mxu0
        %v1969 = vadd.f32 0.0, %v1968
        %v1970 = vpop.f32.mrb[0].mxu0
        %v1971 = vadd.f32 0.0, %v1970
        %v1972 = vpop.f32.mrb[0].mxu0
        %v1973 = vadd.f32 0.0, %v1972
        %v1974 = vpop.f32.mrb[0].mxu0
        %v1975 = vadd.f32 0.0, %v1974
        %1976 = vdwg.mxu0
        %v1977 = vadd.f32 %v1876, %v1959
        %v1978 = vadd.f32 %v1877, %v1961
        %v1979 = vadd.f32 %v1878, %v1963
        %v1980 = vadd.f32 %v1879, %v1965
        %v1981 = vadd.f32 %v1880, %v1969
        %v1982 = vadd.f32 %v1881, %v1971
        %v1983 = vadd.f32 %v1882, %v1973
        %v1984 = vadd.f32 %v1883, %v1975
        %v1985 = vld [vmem:[%s782] sm:$0xff]
        %v1986 = vld [vmem:[%s782 + $0x8] sm:$0xff]
        %v1987 = vld [vmem:[%s782 + $0x10] sm:$0xff]
        %v1988 = vld [vmem:[%s782 + $0x18] sm:$0xff]
        %1990 = vset.pattern.permute.xlu0 0
        %1991 = vperm.xlu0 %1990, %v1985
        %v1992 = vpop.permute.xlu0 %1991
        %1995 = vset.pattern.permute.xlu0 0
        %1996 = vperm.xlu0 %1995, %v1986
        %v1997 = vpop.permute.xlu0 %1996
        %2000 = vset.pattern.permute.xlu0 0
        %2001 = vperm.xlu0 %2000, %v1987
        %v2002 = vpop.permute.xlu0 %2001
        %2005 = vset.pattern.permute.xlu0 0
        %2006 = vperm.xlu0 %2005, %v1988
        %v2007 = vpop.permute.xlu0 %2006
        %v2009 = vadd.f32 %v1977, %v1992
        %v2010 = vadd.f32 %v1978, %v1992
        %v2011 = vadd.f32 %v1979, %v1997
        %v2012 = vadd.f32 %v1980, %v1997
        %v2013 = vadd.f32 %v1981, %v2002
        %v2014 = vadd.f32 %v1982, %v2002
        %v2015 = vadd.f32 %v1983, %v2007
        %v2016 = vadd.f32 %v1984, %v2007
        %v2017 = vld [vmem:[%s7] sm:$0xff]
        %v2018 = vld [vmem:[%s7 + $0x8] sm:$0xff]
        %v2019 = vld [vmem:[%s7 + $0x10] sm:$0xff]
        %v2020 = vld [vmem:[%s7 + $0x18] sm:$0xff]
        %v2021 = vld [vmem:[%s8] sm:$0xff]
        %v2022 = vld [vmem:[%s8 + $0x8] sm:$0xff]
        %v2023 = vld [vmem:[%s8 + $0x10] sm:$0xff]
        %v2024 = vld [vmem:[%s8 + $0x18] sm:$0xff]
        %v2025 = vld [vmem:[%s9] sm:$0xff]
        %v2026 = vld [vmem:[%s9 + $0x8] sm:$0xff]
        %v2027 = vld [vmem:[%s9 + $0x10] sm:$0xff]
        %v2028 = vld [vmem:[%s9 + $0x18] sm:$0xff]
        %v2029 = vadd.f32 %v2009, %v2010
        %2030 = vadd.xlane.f32.xlu0 %v2029
        %v2031 = vpop.xlane.xlu0 %2030
        %v2032 = vadd.f32 %v2011, %v2012
        %2033 = vadd.xlane.f32.xlu0 %v2032
        %v2034 = vpop.xlane.xlu0 %2033
        %v2035 = vadd.f32 %v2013, %v2014
        %2036 = vadd.xlane.f32.xlu0 %v2035
        %v2037 = vpop.xlane.xlu0 %2036
        %v2038 = vadd.f32 %v2015, %v2016
        %2039 = vadd.xlane.f32.xlu0 %v2038
        %v2040 = vpop.xlane.xlu0 %2039
        %v2041 = vmul.f32 %v2009, %v2009
        %v2042 = vmul.f32 %v2010, %v2010
        %v2043 = vmul.f32 %v2011, %v2011
        %v2044 = vmul.f32 %v2012, %v2012
        %v2045 = vmul.f32 %v2013, %v2013
        %v2046 = vmul.f32 %v2014, %v2014
        %v2047 = vmul.f32 %v2015, %v2015
        %v2048 = vmul.f32 %v2016, %v2016
        %v2049 = vadd.f32 %v2041, %v2042
        %2050 = vadd.xlane.f32.xlu0 %v2049
        %v2051 = vpop.xlane.xlu0 %2050
        %v2052 = vadd.f32 %v2043, %v2044
        %2053 = vadd.xlane.f32.xlu0 %v2052
        %v2054 = vpop.xlane.xlu0 %2053
        %v2055 = vadd.f32 %v2045, %v2046
        %2056 = vadd.xlane.f32.xlu0 %v2055
        %v2057 = vpop.xlane.xlu0 %2056
        %v2058 = vadd.f32 %v2047, %v2048
        %2059 = vadd.xlane.f32.xlu0 %v2058
        %v2060 = vpop.xlane.xlu0 %2059
        %v2061 = vsel %vm810, %v2031, %v2051
        %v2062 = vsel %vm810, %v2034, %v2054
        %v2063 = vsel %vm810, %v2037, %v2057
        %v2064 = vsel %vm810, %v2040, %v2060
        %vm2065 = vcmask 261120
        %v2067 = vsel %vm2065, %v2025, 0
        %v2070 = vsel %vm2065, %v2026, 0
        %v2073 = vsel %vm2065, %v2027, 0
        %v2076 = vsel %vm2065, %v2028, 0
        %2078 = vmatprep.subr.mxu0 0.0
        %2079 = vmatpush1.msra.mxu0 %v2061
        %2080 = vmatprep.subr.mxu0 0.0
        %2081 = vmatpush1.msra.mxu0 %v2062
        %2082 = vmatprep.subr.mxu0 0.0
        %2083 = vmatpush1.msra.mxu0 %v2063
        %2084 = vmatprep.subr.mxu0 0.0
        %2085 = vmatpush1.msra.mxu0 %v2064
        %2086 = vmatprep.subr.mxu0 0.0
        %2087 = vmatpush1.msra.mxu0 0.0
        %2088 = vmatprep.subr.mxu0 0.0
        %2089 = vmatpush1.msra.mxu0 0.0
        %2090 = vmatprep.subr.mxu0 0.0
        %2091 = vmatpush1.msra.mxu0 0.0
        %2092 = vmatprep.subr.mxu0 0.0
        %2093 = vmatpush1.msra.mxu0 0.0
        %2094 = vmatprep.subr.mxu0 0.0
        %2095 = vmatpush1.msra.mxu0 0.0
        %2096 = vmatprep.subr.mxu0 0.0
        %2097 = vmatpush1.msra.mxu0 0.0
        %2098 = vmatprep.subr.mxu0 0.0
        %2099 = vmatpush1.msra.mxu0 0.0
        %2100 = vmatprep.subr.mxu0 0.0
        %2101 = vmatpush1.msra.mxu0 0.0
        %2102 = vmatprep.subr.mxu0 0.0
        %2103 = vmatpush1.msra.mxu0 0.0
        %2104 = vmatprep.subr.mxu0 0.0
        %2105 = vmatpush1.msra.mxu0 0.0
        %2106 = vmatprep.subr.mxu0 0.0
        %2107 = vmatpush1.msra.mxu0 0.0
        %2108 = vmatprep.subr.mxu0 0.0
        %2109 = vmatpush1.msra.mxu0 0.0
        %2110 = vmatprep.subr.mxu0 0.0
        %2111 = vmatpush1.msra.mxu0 0.0
        %2112 = vmatprep.subr.mxu0 0.0
        %2113 = vmatpush1.msra.mxu0 0.0
        %2114 = vmatprep.subr.mxu0 0.0
        %2115 = vmatpush1.msra.mxu0 0.0
        %2116 = vmatprep.subr.mxu0 0.0
        %2117 = vmatpush1.msra.mxu0 0.0
        %2118 = vmatprep.subr.mxu0 0.0
        %2119 = vmatpush1.msra.mxu0 0.0
        %2120 = vmatprep.subr.mxu0 0.0
        %2121 = vmatpush1.msra.mxu0 0.0
        %2122 = vmatprep.subr.mxu0 0.0
        %2123 = vmatpush1.msra.mxu0 0.0
        %2124 = vmatprep.subr.mxu0 0.0
        %2125 = vmatpush1.msra.mxu0 0.0
        %2126 = vmatprep.subr.mxu0 0.0
        %2127 = vmatpush1.msra.mxu0 0.0
        %2128 = vmatprep.subr.mxu0 0.0
        %2129 = vmatpush1.msra.mxu0 0.0
        %2130 = vmatprep.subr.mxu0 0.0
        %2131 = vmatpush1.msra.mxu0 0.0
        %2132 = vmatprep.subr.mxu0 0.0
        %2133 = vmatpush1.msra.mxu0 0.0
        %2134 = vmatprep.subr.mxu0 0.0
        %2135 = vmatpush1.msra.mxu0 0.0
        %2136 = vmatprep.subr.mxu0 0.0
        %2137 = vmatpush1.msra.mxu0 0.0
        %2138 = vmatprep.subr.mxu0 0.0
        %2139 = vmatpush1.msra.mxu0 0.0
        %2140 = vmatprep.subr.mxu0 0.0
        %2141 = vmatpush1.msra.mxu0 0.0
        %2142 = vmatprep.mubr.f32.mxu0 0.0
        %2143 = vmatmul.mubr.f32.gmra.mrb[0].mxu0 %v2067
        %v2144 = vpop.f32.mrb[0].mxu0
        %v2145 = vadd.f32 0.0, %v2144
        %v2146 = vpop.f32.mrb[0].mxu0
        %2147 = vmatprep.mubr.f32.mxu0 0.0
        %2148 = vmatmul.mubr.f32.gmra.mrb[0].mxu0 %v2070
        %v2149 = vpop.f32.mrb[0].mxu0
        %v2150 = vadd.f32 0.0, %v2149
        %v2151 = vpop.f32.mrb[0].mxu0
        %2152 = vmatprep.mubr.f32.mxu0 0.0
        %2153 = vmatmul.mubr.f32.gmra.mrb[0].mxu0 %v2073
        %v2154 = vpop.f32.mrb[0].mxu0
        %v2155 = vadd.f32 0.0, %v2154
        %v2156 = vpop.f32.mrb[0].mxu0
        %2157 = vmatprep.mubr.f32.mxu0 0.0
        %2158 = vmatmul.mubr.f32.gmra.mrb[0].mxu0 %v2076
        %v2159 = vpop.f32.mrb[0].mxu0
        %v2160 = vadd.f32 0.0, %v2159
        %v2161 = vpop.f32.mrb[0].mxu0
        %2162 = vdwg.mxu0
        %v2163 = vmul.f32 %v2145, %v2145
        %v2164 = vmul.f32 %v2150, %v2150
        %v2165 = vmul.f32 %v2155, %v2155
        %v2166 = vmul.f32 %v2160, %v2160
        %2171 = vrot.lane.b32.xlu0 %v2163, 1
        %v2172 = vpop.permute.xlu0 %2171
        %2173 = vrot.lane.b32.xlu0 %v2164, 1
        %v2174 = vpop.permute.xlu0 %2173
        %2175 = vrot.lane.b32.xlu0 %v2165, 1
        %v2176 = vpop.permute.xlu0 %2175
        %2177 = vrot.lane.b32.xlu0 %v2166, 1
        %v2178 = vpop.permute.xlu0 %2177
        %v2183 = vsub.f32 %v2145, %v2172
        %v2184 = vsub.f32 %v2150, %v2174
        %v2185 = vsub.f32 %v2155, %v2176
        %v2186 = vsub.f32 %v2160, %v2178
        %v2187 = vadd.f32 %v2183, 1e-05
        %v2188 = vadd.f32 %v2184, 1e-05
        %v2189 = vadd.f32 %v2185, 1e-05
        %v2190 = vadd.f32 %v2186, 1e-05
        %v2191 = vrsqrt.pop %v2187
        %v2192 = vrsqrt.pop %v2188
        %v2193 = vrsqrt.pop %v2189
        %v2194 = vrsqrt.pop %v2190
        %2196 = vset.pattern.permute.xlu0 0
        %2197 = vperm.xlu0 %2196, %v2145
        %v2198 = vpop.permute.xlu0 %2197
        %2201 = vset.pattern.permute.xlu0 0
        %2202 = vperm.xlu0 %2201, %v2150
        %v2203 = vpop.permute.xlu0 %2202
        %2206 = vset.pattern.permute.xlu0 0
        %2207 = vperm.xlu0 %2206, %v2155
        %v2208 = vpop.permute.xlu0 %2207
        %2211 = vset.pattern.permute.xlu0 0
        %2212 = vperm.xlu0 %2211, %v2160
        %v2213 = vpop.permute.xlu0 %2212
        %v2215 = vsub.f32 %v2009, %v2198
        %v2216 = vsub.f32 %v2010, %v2198
        %v2217 = vsub.f32 %v2011, %v2203
        %v2218 = vsub.f32 %v2012, %v2203
        %v2219 = vsub.f32 %v2013, %v2208
        %v2220 = vsub.f32 %v2014, %v2208
        %v2221 = vsub.f32 %v2015, %v2213
        %v2222 = vsub.f32 %v2016, %v2213
        %2227 = vrot.lane.b32.xlu0 %v2017, 1
        %v2228 = vpop.permute.xlu0 %2227
        %2229 = vrot.lane.b32.xlu0 %v2018, 1
        %v2230 = vpop.permute.xlu0 %2229
        %2231 = vrot.lane.b32.xlu0 %v2019, 1
        %v2232 = vpop.permute.xlu0 %2231
        %2233 = vrot.lane.b32.xlu0 %v2020, 1
        %v2234 = vpop.permute.xlu0 %2233
        %v2239 = vmul.f32 %v2191, %v2228
        %v2240 = vmul.f32 %v2192, %v2230
        %v2241 = vmul.f32 %v2193, %v2232
        %v2242 = vmul.f32 %v2194, %v2234
        %2244 = vset.pattern.permute.xlu0 1
        %2245 = vperm.xlu0 %2244, %v2239
        %v2246 = vpop.permute.xlu0 %2245
        %2249 = vset.pattern.permute.xlu0 1
        %2250 = vperm.xlu0 %2249, %v2240
        %v2251 = vpop.permute.xlu0 %2250
        %2254 = vset.pattern.permute.xlu0 1
        %2255 = vperm.xlu0 %2254, %v2241
        %v2256 = vpop.permute.xlu0 %2255
        %2259 = vset.pattern.permute.xlu0 1
        %2260 = vperm.xlu0 %2259, %v2242
        %v2261 = vpop.permute.xlu0 %2260
        %v2263 = vmul.f32 %v2215, %v2246
        %v2264 = vmul.f32 %v2216, %v2246
        %v2265 = vmul.f32 %v2217, %v2251
        %v2266 = vmul.f32 %v2218, %v2251
        %v2267 = vmul.f32 %v2219, %v2256
        %v2268 = vmul.f32 %v2220, %v2256
        %v2269 = vmul.f32 %v2221, %v2261
        %v2270 = vmul.f32 %v2222, %v2261
        %2272 = vset.pattern.permute.xlu0 0
        %2273 = vperm.xlu0 %2272, %v2021
        %v2274 = vpop.permute.xlu0 %2273
        %2277 = vset.pattern.permute.xlu0 0
        %2278 = vperm.xlu0 %2277, %v2022
        %v2279 = vpop.permute.xlu0 %2278
        %2282 = vset.pattern.permute.xlu0 0
        %2283 = vperm.xlu0 %2282, %v2023
        %v2284 = vpop.permute.xlu0 %2283
        %2287 = vset.pattern.permute.xlu0 0
        %2288 = vperm.xlu0 %2287, %v2024
        %v2289 = vpop.permute.xlu0 %2288
        %v2291 = vadd.f32 %v2263, %v2274
        %v2292 = vadd.f32 %v2264, %v2274
        %v2293 = vadd.f32 %v2265, %v2279
        %v2294 = vadd.f32 %v2266, %v2279
        %v2295 = vadd.f32 %v2267, %v2284
        %v2296 = vadd.f32 %v2268, %v2284
        %v2297 = vadd.f32 %v2269, %v2289
        %v2298 = vadd.f32 %v2270, %v2289
        %v2299 = vmul.f32 %v2291, 0.5
        %v2300 = vmul.f32 %v2292, 0.5
        %v2301 = vmul.f32 %v2293, 0.5
        %v2302 = vmul.f32 %v2294, 0.5
        %v2303 = vmul.f32 %v2295, 0.5
        %v2304 = vmul.f32 %v2296, 0.5
        %v2305 = vmul.f32 %v2297, 0.5
        %v2306 = vmul.f32 %v2298, 0.5
        %v2307 = vmul.f32 %v2291, 0.70710677
        %v2308 = vmul.f32 %v2292, 0.70710677
        %v2309 = vmul.f32 %v2293, 0.70710677
        %v2310 = vmul.f32 %v2294, 0.70710677
        %v2311 = vmul.f32 %v2295, 0.70710677
        %v2312 = vmul.f32 %v2296, 0.70710677
        %v2313 = vmul.f32 %v2297, 0.70710677
        %v2314 = vmul.f32 %v2298, 0.70710677
        %vm2315 = vcmp.ge.f32.partialorder %v2307, 0.0
        %vm2316 = vcmp.ge.f32.partialorder %v2308, 0.0
        %vm2317 = vcmp.ge.f32.partialorder %v2309, 0.0
        %vm2318 = vcmp.ge.f32.partialorder %v2310, 0.0
        %vm2319 = vcmp.ge.f32.partialorder %v2311, 0.0
        %vm2320 = vcmp.ge.f32.partialorder %v2312, 0.0
        %vm2321 = vcmp.ge.f32.partialorder %v2313, 0.0
        %vm2322 = vcmp.ge.f32.partialorder %v2314, 0.0
        %v2323 = vsel %vm2315, 1.0, -1.0
        %v2324 = vsel %vm2316, 1.0, -1.0
        %v2325 = vsel %vm2317, 1.0, -1.0
        %v2326 = vsel %vm2318, 1.0, -1.0
        %v2327 = vsel %vm2319, 1.0, -1.0
        %v2328 = vsel %vm2320, 1.0, -1.0
        %v2329 = vsel %vm2321, 1.0, -1.0
        %v2330 = vsel %vm2322, 1.0, -1.0
        %v2331 = vand.u32 2147483647, %v2307
        %v2332 = vand.u32 2147483647, %v2308
        %v2333 = vand.u32 2147483647, %v2309
        %v2334 = vand.u32 2147483647, %v2310
        %v2335 = vand.u32 2147483647, %v2311
        %v2336 = vand.u32 2147483647, %v2312
        %v2337 = vand.u32 2147483647, %v2313
        %v2338 = vand.u32 2147483647, %v2314
        %v2339 = vmul.f32 %v2331, 0.3275911
        %v2340 = vmul.f32 %v2332, 0.3275911
        %v2341 = vmul.f32 %v2333, 0.3275911
        %v2342 = vmul.f32 %v2334, 0.3275911
        %v2343 = vmul.f32 %v2335, 0.3275911
        %v2344 = vmul.f32 %v2336, 0.3275911
        %v2345 = vmul.f32 %v2337, 0.3275911
        %v2346 = vmul.f32 %v2338, 0.3275911
        %v2347 = vadd.f32 %v2339, 1.0
        %v2348 = vadd.f32 %v2340, 1.0
        %v2349 = vadd.f32 %v2341, 1.0
        %v2350 = vadd.f32 %v2342, 1.0
        %v2351 = vadd.f32 %v2343, 1.0
        %v2352 = vadd.f32 %v2344, 1.0
        %v2353 = vadd.f32 %v2345, 1.0
        %v2354 = vadd.f32 %v2346, 1.0
        %v2355 = vrcp.pop %v2347
        %v2356 = vrcp.pop %v2348
        %v2357 = vrcp.pop %v2349
        %v2358 = vrcp.pop %v2350
        %v2359 = vrcp.pop %v2351
        %v2360 = vrcp.pop %v2352
        %v2361 = vrcp.pop %v2353
        %v2362 = vrcp.pop %v2354
        %v2363 = vmul.f32 %v2355, 1.0614054
        %v2364 = vmul.f32 %v2356, 1.0614054
        %v2365 = vmul.f32 %v2357, 1.0614054
        %v2366 = vmul.f32 %v2358, 1.0614054
        %v2367 = vmul.f32 %v2359, 1.0614054
        %v2368 = vmul.f32 %v2360, 1.0614054
        %v2369 = vmul.f32 %v2361, 1.0614054
        %v2370 = vmul.f32 %v2362, 1.0614054
        %v2371 = vadd.f32 %v2363, -1.4531521
        %v2372 = vadd.f32 %v2364, -1.4531521
        %v2373 = vadd.f32 %v2365, -1.4531521
        %v2374 = vadd.f32 %v2366, -1.4531521
        %v2375 = vadd.f32 %v2367, -1.4531521
        %v2376 = vadd.f32 %v2368, -1.4531521
        %v2377 = vadd.f32 %v2369, -1.4531521
        %v2378 = vadd.f32 %v2370, -1.4531521
        %v2379 = vmul.f32 %v2371, %v2355
        %v2380 = vmul.f32 %v2372, %v2356
        %v2381 = vmul.f32 %v2373, %v2357
        %v2382 = vmul.f32 %v2374, %v2358
        %v2383 = vmul.f32 %v2375, %v2359
        %v2384 = vmul.f32 %v2376, %v2360
        %v2385 = vmul.f32 %v2377, %v2361
        %v2386 = vmul.f32 %v2378, %v2362
        %v2387 = vadd.f32 %v2379, 1.4214138
        %v2388 = vadd.f32 %v2380, 1.4214138
        %v2389 = vadd.f32 %v2381, 1.4214138
        %v2390 = vadd.f32 %v2382, 1.4214138
        %v2391 = vadd.f32 %v2383, 1.4214138
        %v2392 = vadd.f32 %v2384, 1.4214138
        %v2393 = vadd.f32 %v2385, 1.4214138
        %v2394 = vadd.f32 %v2386, 1.4214138
        %v2395 = vmul.f32 %v2387, %v2355
        %v2396 = vmul.f32 %v2388, %v2356
        %v2397 = vmul.f32 %v2389, %v2357
        %v2398 = vmul.f32 %v2390, %v2358
        %v2399 = vmul.f32 %v2391, %v2359
        %v2400 = vmul.f32 %v2392, %v2360
        %v2401 = vmul.f32 %v2393, %v2361
        %v2402 = vmul.f32 %v2394, %v2362
        %v2403 = vadd.f32 %v2395, -0.28449672
        %v2404 = vadd.f32 %v2396, -0.28449672
        %v2405 = vadd.f32 %v2397, -0.28449672
        %v2406 = vadd.f32 %v2398, -0.28449672
        %v2407 = vadd.f32 %v2399, -0.28449672
        %v2408 = vadd.f32 %v2400, -0.28449672
        %v2409 = vadd.f32 %v2401, -0.28449672
        %v2410 = vadd.f32 %v2402, -0.28449672
        %v2411 = vmul.f32 %v2403, %v2355
        %v2412 = vmul.f32 %v2404, %v2356
        %v2413 = vmul.f32 %v2405, %v2357
        %v2414 = vmul.f32 %v2406, %v2358
        %v2415 = vmul.f32 %v2407, %v2359
        %v2416 = vmul.f32 %v2408, %v2360
        %v2417 = vmul.f32 %v2409, %v2361
        %v2418 = vmul.f32 %v2410, %v2362
        %v2419 = vadd.f32 %v2411, 0.2548296
        %v2420 = vadd.f32 %v2412, 0.2548296
        %v2421 = vadd.f32 %v2413, 0.2548296
        %v2422 = vadd.f32 %v2414, 0.2548296
        %v2423 = vadd.f32 %v2415, 0.2548296
        %v2424 = vadd.f32 %v2416, 0.2548296
        %v2425 = vadd.f32 %v2417, 0.2548296
        %v2426 = vadd.f32 %v2418, 0.2548296
        %v2427 = vmul.f32 %v2419, %v2355
        %v2428 = vmul.f32 %v2420, %v2356
        %v2429 = vmul.f32 %v2421, %v2357
        %v2430 = vmul.f32 %v2422, %v2358
        %v2431 = vmul.f32 %v2423, %v2359
        %v2432 = vmul.f32 %v2424, %v2360
        %v2433 = vmul.f32 %v2425, %v2361
        %v2434 = vmul.f32 %v2426, %v2362
        %v2435 = vsub.f32 0.0, %v2331
        %v2436 = vsub.f32 0.0, %v2332
        %v2437 = vsub.f32 0.0, %v2333
        %v2438 = vsub.f32 0.0, %v2334
        %v2439 = vsub.f32 0.0, %v2335
        %v2440 = vsub.f32 0.0, %v2336
        %v2441 = vsub.f32 0.0, %v2337
        %v2442 = vsub.f32 0.0, %v2338
        %v2443 = vmul.f32 %v2435, %v2331
        %v2444 = vmul.f32 %v2436, %v2332
        %v2445 = vmul.f32 %v2437, %v2333
        %v2446 = vmul.f32 %v2438, %v2334
        %v2447 = vmul.f32 %v2439, %v2335
        %v2448 = vmul.f32 %v2440, %v2336
        %v2449 = vmul.f32 %v2441, %v2337
        %v2450 = vmul.f32 %v2442, %v2338
        %v2451 = vmul.f32 %v2443, 1.442695
        %v2452 = vpow.pop %v2451
        %v2453 = vmul.f32 %v2444, 1.442695
        %v2454 = vpow.pop %v2453
        %v2455 = vmul.f32 %v2445, 1.442695
        %v2456 = vpow.pop %v2455
        %v2457 = vmul.f32 %v2446, 1.442695
        %v2458 = vpow.pop %v2457
        %v2459 = vmul.f32 %v2447, 1.442695
        %v2460 = vpow.pop %v2459
        %v2461 = vmul.f32 %v2448, 1.442695
        %v2462 = vpow.pop %v2461
        %v2463 = vmul.f32 %v2449, 1.442695
        %v2464 = vpow.pop %v2463
        %v2465 = vmul.f32 %v2450, 1.442695
        %v2466 = vpow.pop %v2465
        %v2467 = vmul.f32 %v2427, %v2452
        %v2468 = vmul.f32 %v2428, %v2454
        %v2469 = vmul.f32 %v2429, %v2456
        %v2470 = vmul.f32 %v2430, %v2458
        %v2471 = vmul.f32 %v2431, %v2460
        %v2472 = vmul.f32 %v2432, %v2462
        %v2473 = vmul.f32 %v2433, %v2464
        %v2474 = vmul.f32 %v2434, %v2466
        %v2475 = vsub.f32 1.0, %v2467
        %v2476 = vsub.f32 1.0, %v2468
        %v2477 = vsub.f32 1.0, %v2469
        %v2478 = vsub.f32 1.0, %v2470
        %v2479 = vsub.f32 1.0, %v2471
        %v2480 = vsub.f32 1.0, %v2472
        %v2481 = vsub.f32 1.0, %v2473
        %v2482 = vsub.f32 1.0, %v2474
        %v2483 = vmul.f32 %v2323, %v2475
        %v2484 = vmul.f32 %v2324, %v2476
        %v2485 = vmul.f32 %v2325, %v2477
        %v2486 = vmul.f32 %v2326, %v2478
        %v2487 = vmul.f32 %v2327, %v2479
        %v2488 = vmul.f32 %v2328, %v2480
        %v2489 = vmul.f32 %v2329, %v2481
        %v2490 = vmul.f32 %v2330, %v2482
        %v2491 = vadd.f32 %v2483, 1.0
        %v2492 = vadd.f32 %v2484, 1.0
        %v2493 = vadd.f32 %v2485, 1.0
        %v2494 = vadd.f32 %v2486, 1.0
        %v2495 = vadd.f32 %v2487, 1.0
        %v2496 = vadd.f32 %v2488, 1.0
        %v2497 = vadd.f32 %v2489, 1.0
        %v2498 = vadd.f32 %v2490, 1.0
        %v2499 = vmul.f32 %v2299, %v2491
        %v2500 = vmul.f32 %v2300, %v2492
        %v2501 = vmul.f32 %v2301, %v2493
        %v2502 = vmul.f32 %v2302, %v2494
        %v2503 = vmul.f32 %v2303, %v2495
        %v2504 = vmul.f32 %v2304, %v2496
        %v2505 = vmul.f32 %v2305, %v2497
        %v2506 = vmul.f32 %v2306, %v2498
        %v2507 = vmul.f32 %v2499, %v1072
        %v2508 = vmul.f32 %v2500, %v1076
        %v2509 = vmul.f32 %v2501, %v1072
        %v2510 = vmul.f32 %v2502, %v1076
        %v2511 = vmul.f32 %v2503, %v1072
        %v2512 = vmul.f32 %v2504, %v1076
        %v2513 = vmul.f32 %v2505, %v1072
        %v2514 = vmul.f32 %v2506, %v1076
        %v2515 = vmul.f32 %v2499, %v1089
        %v2516 = vmul.f32 %v2500, %v1093
        %v2517 = vmul.f32 %v2501, %v1089
        %v2518 = vmul.f32 %v2502, %v1093
        %v2519 = vmul.f32 %v2503, %v1089
        %v2520 = vmul.f32 %v2504, %v1093
        %v2521 = vmul.f32 %v2505, %v1089
        %v2522 = vmul.f32 %v2506, %v1093
        %2531 = vrot.lane.b32.xlu0 %v2515, 17
        %v2532 = vpop.permute.xlu0 %2531
        %2533 = vrot.lane.b32.xlu0 %v2516, 17
        %v2534 = vpop.permute.xlu0 %2533
        %2535 = vrot.lane.b32.xlu0 %v2517, 17
        %v2536 = vpop.permute.xlu0 %2535
        %2537 = vrot.lane.b32.xlu0 %v2518, 17
        %v2538 = vpop.permute.xlu0 %2537
        %2539 = vrot.lane.b32.xlu0 %v2519, 17
        %v2540 = vpop.permute.xlu0 %2539
        %2541 = vrot.lane.b32.xlu0 %v2520, 17
        %v2542 = vpop.permute.xlu0 %2541
        %2543 = vrot.lane.b32.xlu0 %v2521, 17
        %v2544 = vpop.permute.xlu0 %2543
        %2545 = vrot.lane.b32.xlu0 %v2522, 17
        %v2546 = vpop.permute.xlu0 %2545
        %v2547 = vsel %vm1112, %v2532, %v2534
        %v2548 = vsel %vm1112, %v2536, %v2538
        %v2549 = vsel %vm1112, %v2540, %v2542
        %v2550 = vsel %vm1112, %v2544, %v2546
        %v2559 = vsel %vm1112, 0.0, %v2532
        %v2560 = vsel %vm1112, 0.0, %v2536
        %v2561 = vsel %vm1112, 0.0, %v2540
        %v2562 = vsel %vm1112, 0.0, %v2544
        %v2563 = vpack.c.bf16 %v2560, %v2559
        %v2564 = vpack.c.bf16 %v2548, %v2547
        %v2565 = vpack.c.bf16 %v2562, %v2561
        %v2566 = vpack.c.bf16 %v2550, %v2549
        %v2567 = vld [vmem:[%s10] sm:$0xf]
        %v2568 = vld [vmem:[%s10 + $0x4] sm:$0xf]
        %v2569 = vld [vmem:[%s10 + $0x8] sm:$0xf]
        %v2570 = vld [vmem:[%s10 + $0xc] sm:$0xf]
        %2579 = vrot.lane.b32.xlu0 %v2499, 16
        %v2580 = vpop.permute.xlu0 %2579
        %2581 = vrot.lane.b32.xlu0 %v2500, 16
        %v2582 = vpop.permute.xlu0 %2581
        %2583 = vrot.lane.b32.xlu0 %v2501, 16
        %v2584 = vpop.permute.xlu0 %2583
        %2585 = vrot.lane.b32.xlu0 %v2502, 16
        %v2586 = vpop.permute.xlu0 %2585
        %2587 = vrot.lane.b32.xlu0 %v2503, 16
        %v2588 = vpop.permute.xlu0 %2587
        %2589 = vrot.lane.b32.xlu0 %v2504, 16
        %v2590 = vpop.permute.xlu0 %2589
        %2591 = vrot.lane.b32.xlu0 %v2505, 16
        %v2592 = vpop.permute.xlu0 %2591
        %2593 = vrot.lane.b32.xlu0 %v2506, 16
        %v2594 = vpop.permute.xlu0 %2593
        %v2595 = vsel %vm813, %v2580, %v2582
        %v2596 = vsel %vm813, %v2584, %v2586
        %v2597 = vsel %vm813, %v2588, %v2590
        %v2598 = vsel %vm813, %v2592, %v2594
        %v2607 = vsel %vm813, 0.0, %v2580
        %v2608 = vsel %vm813, 0.0, %v2584
        %v2609 = vsel %vm813, 0.0, %v2588
        %v2610 = vsel %vm813, 0.0, %v2592
        %v2611 = vpack.c.bf16 %v2608, %v2607
        %v2612 = vpack.c.bf16 %v2596, %v2595
        %v2613 = vpack.c.bf16 %v2610, %v2609
        %v2614 = vpack.c.bf16 %v2598, %v2597
        %s2615 = scalar_lea.vmem %s10, 16
        %v2616 = vld [vmem:[%s2615] sm:$0xf]
        %v2617 = vld [vmem:[%s2615 + $0x4] sm:$0xf]
        %v2618 = vld [vmem:[%s2615 + $0x8] sm:$0xf]
        %v2619 = vld [vmem:[%s2615 + $0xc] sm:$0xf]
        %v2624 = vunpack.c.l.b16 %v2616
        %v2625 = vunpack.c.l.b16 %v2617
        %v2626 = vunpack.c.l.b16 %v2618
        %v2627 = vunpack.c.l.b16 %v2619
        %v2628 = vpack.c.b16 %v2625, %v2624
        %v2629 = vpack.c.b16 %v2627, %v2626
        %v2631 = vsel %vm2065, %v2628, 0
        %v2634 = vsel %vm2065, %v2629, 0
        %2636 = vmatprep.subr.bf16.mxu0 %v2612
        %2637 = vmatpush1.bf16.msra.mxu0 %v2611
        %2638 = vmatprep.subr.bf16.mxu0 %v2614
        %2639 = vmatpush1.bf16.msra.mxu0 %v2613
        %2640 = vmatprep.subr.bf16.mxu0 0
        %2641 = vmatpush1.bf16.msra.mxu0 0
        %2642 = vmatprep.subr.bf16.mxu0 0
        %2643 = vmatpush1.bf16.msra.mxu0 0
        %2644 = vmatprep.subr.bf16.mxu0 0
        %2645 = vmatpush1.bf16.msra.mxu0 0
        %2646 = vmatprep.subr.bf16.mxu0 0
        %2647 = vmatpush1.bf16.msra.mxu0 0
        %2648 = vmatprep.subr.bf16.mxu0 0
        %2649 = vmatpush1.bf16.msra.mxu0 0
        %2650 = vmatprep.subr.bf16.mxu0 0
        %2651 = vmatpush1.bf16.msra.mxu0 0
        %2652 = vmatprep.subr.bf16.mxu0 0
        %2653 = vmatpush1.bf16.msra.mxu0 0
        %2654 = vmatprep.subr.bf16.mxu0 0
        %2655 = vmatpush1.bf16.msra.mxu0 0
        %2656 = vmatprep.subr.bf16.mxu0 0
        %2657 = vmatpush1.bf16.msra.mxu0 0
        %2658 = vmatprep.subr.bf16.mxu0 0
        %2659 = vmatpush1.bf16.msra.mxu0 0
        %2660 = vmatprep.subr.bf16.mxu0 0
        %2661 = vmatpush1.bf16.msra.mxu0 0
        %2662 = vmatprep.subr.bf16.mxu0 0
        %2663 = vmatpush1.bf16.msra.mxu0 0
        %2664 = vmatprep.subr.bf16.mxu0 0
        %2665 = vmatpush1.bf16.msra.mxu0 0
        %2666 = vmatprep.subr.bf16.mxu0 0
        %2667 = vmatpush1.bf16.msra.mxu0 0
        %2668 = vmatprep.mubr.bf16.mxu0 0
        %2669 = vmatmul.mubr.bf16.gmra.mrb[0].mxu0 %v2631
        %v2670 = vpop.f32.mrb[0].mxu0
        %v2671 = vadd.f32 0.0, %v2670
        %v2672 = vpop.f32.mrb[0].mxu0
        %v2673 = vadd.f32 0.0, %v2672
        %v2674 = vpop.f32.mrb[0].mxu0
        %v2675 = vadd.f32 0.0, %v2674
        %v2676 = vpop.f32.mrb[0].mxu0
        %v2677 = vadd.f32 0.0, %v2676
        %2678 = vmatprep.mubr.bf16.mxu0 0
        %2679 = vmatmul.mubr.bf16.gmra.mrb[0].mxu0 %v2634
        %v2680 = vpop.f32.mrb[0].mxu0
        %v2681 = vadd.f32 0.0, %v2680
        %v2682 = vpop.f32.mrb[0].mxu0
        %v2683 = vadd.f32 0.0, %v2682
        %v2684 = vpop.f32.mrb[0].mxu0
        %v2685 = vadd.f32 0.0, %v2684
        %v2686 = vpop.f32.mrb[0].mxu0
        %v2687 = vadd.f32 0.0, %v2686
        %2688 = vdwg.mxu0
        %v2693 = vunpack.c.l.b16 %v2567
        %v2694 = vunpack.c.l.b16 %v2568
        %v2695 = vunpack.c.l.b16 %v2569
        %v2696 = vunpack.c.l.b16 %v2570
        %v2697 = vpack.c.b16 %v2694, %v2693
        %v2698 = vpack.c.b16 %v2696, %v2695
        %v2700 = vsel %vm2065, %v2697, 0
        %v2703 = vsel %vm2065, %v2698, 0
        %2705 = vmatprep.subr.bf16.mxu0 %v2564
        %2706 = vmatpush1.bf16.msra.mxu0 %v2563
        %2707 = vmatprep.subr.bf16.mxu0 %v2566
        %2708 = vmatpush1.bf16.msra.mxu0 %v2565
        %2709 = vmatprep.subr.bf16.mxu0 0
        %2710 = vmatpush1.bf16.msra.mxu0 0
        %2711 = vmatprep.subr.bf16.mxu0 0
        %2712 = vmatpush1.bf16.msra.mxu0 0
        %2713 = vmatprep.subr.bf16.mxu0 0
        %2714 = vmatpush1.bf16.msra.mxu0 0
        %2715 = vmatprep.subr.bf16.mxu0 0
        %2716 = vmatpush1.bf16.msra.mxu0 0
        %2717 = vmatprep.subr.bf16.mxu0 0
        %2718 = vmatpush1.bf16.msra.mxu0 0
        %2719 = vmatprep.subr.bf16.mxu0 0
        %2720 = vmatpush1.bf16.msra.mxu0 0
        %2721 = vmatprep.subr.bf16.mxu0 0
        %2722 = vmatpush1.bf16.msra.mxu0 0
        %2723 = vmatprep.subr.bf16.mxu0 0
        %2724 = vmatpush1.bf16.msra.mxu0 0
        %2725 = vmatprep.subr.bf16.mxu0 0
        %2726 = vmatpush1.bf16.msra.mxu0 0
        %2727 = vmatprep.subr.bf16.mxu0 0
        %2728 = vmatpush1.bf16.msra.mxu0 0
        %2729 = vmatprep.subr.bf16.mxu0 0
        %2730 = vmatpush1.bf16.msra.mxu0 0
        %2731 = vmatprep.subr.bf16.mxu0 0
        %2732 = vmatpush1.bf16.msra.mxu0 0
        %2733 = vmatprep.subr.bf16.mxu0 0
        %2734 = vmatpush1.bf16.msra.mxu0 0
        %2735 = vmatprep.subr.bf16.mxu0 0
        %2736 = vmatpush1.bf16.msra.mxu0 0
        %2737 = vmatprep.mubr.bf16.mxu0 0
        %2738 = vmatmul.mubr.bf16.gmra.mrb[0].mxu0 %v2700
        %v2739 = vpop.f32.mrb[0].mxu0
        %v2740 = vadd.f32 %v2671, %v2739
        %v2741 = vpop.f32.mrb[0].mxu0
        %v2742 = vadd.f32 %v2673, %v2741
        %v2743 = vpop.f32.mrb[0].mxu0
        %v2744 = vadd.f32 %v2675, %v2743
        %v2745 = vpop.f32.mrb[0].mxu0
        %v2746 = vadd.f32 %v2677, %v2745
        %2747 = vmatprep.mubr.bf16.mxu0 0
        %2748 = vmatmul.mubr.bf16.gmra.mrb[0].mxu0 %v2703
        %v2749 = vpop.f32.mrb[0].mxu0
        %v2750 = vadd.f32 %v2681, %v2749
        %v2751 = vpop.f32.mrb[0].mxu0
        %v2752 = vadd.f32 %v2683, %v2751
        %v2753 = vpop.f32.mrb[0].mxu0
        %v2754 = vadd.f32 %v2685, %v2753
        %v2755 = vpop.f32.mrb[0].mxu0
        %v2756 = vadd.f32 %v2687, %v2755
        %2757 = vdwg.mxu0
        %2766 = vrot.lane.b32.xlu0 %v2507, 15
        %v2767 = vpop.permute.xlu0 %2766
        %2768 = vrot.lane.b32.xlu0 %v2508, 15
        %v2769 = vpop.permute.xlu0 %2768
        %2770 = vrot.lane.b32.xlu0 %v2509, 15
        %v2771 = vpop.permute.xlu0 %2770
        %2772 = vrot.lane.b32.xlu0 %v2510, 15
        %v2773 = vpop.permute.xlu0 %2772
        %2774 = vrot.lane.b32.xlu0 %v2511, 15
        %v2775 = vpop.permute.xlu0 %2774
        %2776 = vrot.lane.b32.xlu0 %v2512, 15
        %v2777 = vpop.permute.xlu0 %2776
        %2778 = vrot.lane.b32.xlu0 %v2513, 15
        %v2779 = vpop.permute.xlu0 %2778
        %2780 = vrot.lane.b32.xlu0 %v2514, 15
        %v2781 = vpop.permute.xlu0 %2780
        %v2782 = vsel %vm1304, %v2767, %v2769
        %v2783 = vsel %vm1304, %v2771, %v2773
        %v2784 = vsel %vm1304, %v2775, %v2777
        %v2785 = vsel %vm1304, %v2779, %v2781
        %v2794 = vsel %vm1304, 0.0, %v2767
        %v2795 = vsel %vm1304, 0.0, %v2771
        %v2796 = vsel %vm1304, 0.0, %v2775
        %v2797 = vsel %vm1304, 0.0, %v2779
        %v2798 = vpack.c.bf16 %v2795, %v2794
        %v2799 = vpack.c.bf16 %v2783, %v2782
        %v2800 = vpack.c.bf16 %v2797, %v2796
        %v2801 = vpack.c.bf16 %v2785, %v2784
        %s2802 = scalar_lea.vmem %s10, 32
        %v2803 = vld [vmem:[%s2802] sm:$0xf]
        %v2804 = vld [vmem:[%s2802 + $0x4] sm:$0xf]
        %v2805 = vld [vmem:[%s2802 + $0x8] sm:$0xf]
        %v2806 = vld [vmem:[%s2802 + $0xc] sm:$0xf]
        %v2811 = vunpack.c.l.b16 %v2803
        %v2812 = vunpack.c.l.b16 %v2804
        %v2813 = vunpack.c.l.b16 %v2805
        %v2814 = vunpack.c.l.b16 %v2806
        %v2815 = vpack.c.b16 %v2812, %v2811
        %v2816 = vpack.c.b16 %v2814, %v2813
        %v2818 = vsel %vm2065, %v2815, 0
        %v2821 = vsel %vm2065, %v2816, 0
        %2823 = vmatprep.subr.bf16.mxu0 %v2799
        %2824 = vmatpush1.bf16.msra.mxu0 %v2798
        %2825 = vmatprep.subr.bf16.mxu0 %v2801
        %2826 = vmatpush1.bf16.msra.mxu0 %v2800
        %2827 = vmatprep.subr.bf16.mxu0 0
        %2828 = vmatpush1.bf16.msra.mxu0 0
        %2829 = vmatprep.subr.bf16.mxu0 0
        %2830 = vmatpush1.bf16.msra.mxu0 0
        %2831 = vmatprep.subr.bf16.mxu0 0
        %2832 = vmatpush1.bf16.msra.mxu0 0
        %2833 = vmatprep.subr.bf16.mxu0 0
        %2834 = vmatpush1.bf16.msra.mxu0 0
        %2835 = vmatprep.subr.bf16.mxu0 0
        %2836 = vmatpush1.bf16.msra.mxu0 0
        %2837 = vmatprep.subr.bf16.mxu0 0
        %2838 = vmatpush1.bf16.msra.mxu0 0
        %2839 = vmatprep.subr.bf16.mxu0 0
        %2840 = vmatpush1.bf16.msra.mxu0 0
        %2841 = vmatprep.subr.bf16.mxu0 0
        %2842 = vmatpush1.bf16.msra.mxu0 0
        %2843 = vmatprep.subr.bf16.mxu0 0
        %2844 = vmatpush1.bf16.msra.mxu0 0
        %2845 = vmatprep.subr.bf16.mxu0 0
        %2846 = vmatpush1.bf16.msra.mxu0 0
        %2847 = vmatprep.subr.bf16.mxu0 0
        %2848 = vmatpush1.bf16.msra.mxu0 0
        %2849 = vmatprep.subr.bf16.mxu0 0
        %2850 = vmatpush1.bf16.msra.mxu0 0
        %2851 = vmatprep.subr.bf16.mxu0 0
        %2852 = vmatpush1.bf16.msra.mxu0 0
        %2853 = vmatprep.subr.bf16.mxu0 0
        %2854 = vmatpush1.bf16.msra.mxu0 0
        %2855 = vmatprep.mubr.bf16.mxu0 0
        %2856 = vmatmul.mubr.bf16.gmra.mrb[0].mxu0 %v2818
        %v2857 = vpop.f32.mrb[0].mxu0
        %v2858 = vadd.f32 0.0, %v2857
        %v2859 = vpop.f32.mrb[0].mxu0
        %v2860 = vadd.f32 0.0, %v2859
        %v2861 = vpop.f32.mrb[0].mxu0
        %v2862 = vadd.f32 0.0, %v2861
        %v2863 = vpop.f32.mrb[0].mxu0
        %v2864 = vadd.f32 0.0, %v2863
        %2865 = vmatprep.mubr.bf16.mxu0 0
        %2866 = vmatmul.mubr.bf16.gmra.mrb[0].mxu0 %v2821
        %v2867 = vpop.f32.mrb[0].mxu0
        %v2868 = vadd.f32 0.0, %v2867
        %v2869 = vpop.f32.mrb[0].mxu0
        %v2870 = vadd.f32 0.0, %v2869
        %v2871 = vpop.f32.mrb[0].mxu0
        %v2872 = vadd.f32 0.0, %v2871
        %v2873 = vpop.f32.mrb[0].mxu0
        %v2874 = vadd.f32 0.0, %v2873
        %2875 = vdwg.mxu0
        %v2876 = vadd.f32 %v2740, %v2858
        %v2877 = vadd.f32 %v2742, %v2860
        %v2878 = vadd.f32 %v2744, %v2862
        %v2879 = vadd.f32 %v2746, %v2864
        %v2880 = vadd.f32 %v2750, %v2868
        %v2881 = vadd.f32 %v2752, %v2870
        %v2882 = vadd.f32 %v2754, %v2872
        %v2883 = vadd.f32 %v2756, %v2874
        %2884 = vrot.lane.b32.xlu0 %v2515, 1
        %v2885 = vpop.permute.xlu0 %2884
        %2886 = vrot.lane.b32.xlu0 %v2516, 1
        %v2887 = vpop.permute.xlu0 %2886
        %2888 = vrot.lane.b32.xlu0 %v2517, 1
        %v2889 = vpop.permute.xlu0 %2888
        %2890 = vrot.lane.b32.xlu0 %v2518, 1
        %v2891 = vpop.permute.xlu0 %2890
        %2892 = vrot.lane.b32.xlu0 %v2519, 1
        %v2893 = vpop.permute.xlu0 %2892
        %2894 = vrot.lane.b32.xlu0 %v2520, 1
        %v2895 = vpop.permute.xlu0 %2894
        %2896 = vrot.lane.b32.xlu0 %v2521, 1
        %v2897 = vpop.permute.xlu0 %2896
        %2898 = vrot.lane.b32.xlu0 %v2522, 1
        %v2899 = vpop.permute.xlu0 %2898
        %v2900 = vsel %vm810, %v2885, %v2887
        %v2901 = vsel %vm810, %v2889, %v2891
        %v2902 = vsel %vm810, %v2893, %v2895
        %v2903 = vsel %vm810, %v2897, %v2899
        %v2912 = vsel %vm810, 0.0, %v2885
        %v2913 = vsel %vm810, 0.0, %v2889
        %v2914 = vsel %vm810, 0.0, %v2893
        %v2915 = vsel %vm810, 0.0, %v2897
        %v2916 = vpack.c.bf16 %v2913, %v2912
        %v2917 = vpack.c.bf16 %v2901, %v2900
        %v2918 = vpack.c.bf16 %v2915, %v2914
        %v2919 = vpack.c.bf16 %v2903, %v2902
        %s2920 = scalar_lea.vmem %s10, 48
        %v2921 = vld [vmem:[%s2920] sm:$0xf]
        %v2922 = vld [vmem:[%s2920 + $0x4] sm:$0xf]
        %v2923 = vld [vmem:[%s2920 + $0x8] sm:$0xf]
        %v2924 = vld [vmem:[%s2920 + $0xc] sm:$0xf]
        %v2929 = vunpack.c.l.b16 %v2921
        %v2930 = vunpack.c.l.b16 %v2922
        %v2931 = vunpack.c.l.b16 %v2923
        %v2932 = vunpack.c.l.b16 %v2924
        %v2933 = vpack.c.b16 %v2930, %v2929
        %v2934 = vpack.c.b16 %v2932, %v2931
        %v2936 = vsel %vm2065, %v2933, 0
        %v2939 = vsel %vm2065, %v2934, 0
        %2941 = vmatprep.subr.bf16.mxu0 %v2917
        %2942 = vmatpush1.bf16.msra.mxu0 %v2916
        %2943 = vmatprep.subr.bf16.mxu0 %v2919
        %2944 = vmatpush1.bf16.msra.mxu0 %v2918
        %2945 = vmatprep.subr.bf16.mxu0 0
        %2946 = vmatpush1.bf16.msra.mxu0 0
        %2947 = vmatprep.subr.bf16.mxu0 0
        %2948 = vmatpush1.bf16.msra.mxu0 0
        %2949 = vmatprep.subr.bf16.mxu0 0
        %2950 = vmatpush1.bf16.msra.mxu0 0
        %2951 = vmatprep.subr.bf16.mxu0 0
        %2952 = vmatpush1.bf16.msra.mxu0 0
        %2953 = vmatprep.subr.bf16.mxu0 0
        %2954 = vmatpush1.bf16.msra.mxu0 0
        %2955 = vmatprep.subr.bf16.mxu0 0
        %2956 = vmatpush1.bf16.msra.mxu0 0
        %2957 = vmatprep.subr.bf16.mxu0 0
        %2958 = vmatpush1.bf16.msra.mxu0 0
        %2959 = vmatprep.subr.bf16.mxu0 0
        %2960 = vmatpush1.bf16.msra.mxu0 0
        %2961 = vmatprep.subr.bf16.mxu0 0
        %2962 = vmatpush1.bf16.msra.mxu0 0
        %2963 = vmatprep.subr.bf16.mxu0 0
        %2964 = vmatpush1.bf16.msra.mxu0 0
        %2965 = vmatprep.subr.bf16.mxu0 0
        %2966 = vmatpush1.bf16.msra.mxu0 0
        %2967 = vmatprep.subr.bf16.mxu0 0
        %2968 = vmatpush1.bf16.msra.mxu0 0
        %2969 = vmatprep.subr.bf16.mxu0 0
        %2970 = vmatpush1.bf16.msra.mxu0 0
        %2971 = vmatprep.subr.bf16.mxu0 0
        %2972 = vmatpush1.bf16.msra.mxu0 0
        %2973 = vmatprep.mubr.bf16.mxu0 0
        %2974 = vmatmul.mubr.bf16.gmra.mrb[0].mxu0 %v2936
        %v2975 = vpop.f32.mrb[0].mxu0
        %v2976 = vadd.f32 0.0, %v2975
        %v2977 = vpop.f32.mrb[0].mxu0
        %v2978 = vadd.f32 0.0, %v2977
        %v2979 = vpop.f32.mrb[0].mxu0
        %v2980 = vadd.f32 0.0, %v2979
        %v2981 = vpop.f32.mrb[0].mxu0
        %v2982 = vadd.f32 0.0, %v2981
        %2983 = vmatprep.mubr.bf16.mxu0 0
        %2984 = vmatmul.mubr.bf16.gmra.mrb[0].mxu0 %v2939
        %v2985 = vpop.f32.mrb[0].mxu0
        %v2986 = vadd.f32 0.0, %v2985
        %v2987 = vpop.f32.mrb[0].mxu0
        %v2988 = vadd.f32 0.0, %v2987
        %v2989 = vpop.f32.mrb[0].mxu0
        %v2990 = vadd.f32 0.0, %v2989
        %v2991 = vpop.f32.mrb[0].mxu0
        %v2992 = vadd.f32 0.0, %v2991
        %2993 = vdwg.mxu0
        %v2994 = vadd.f32 %v2876, %v2976
        %v2995 = vadd.f32 %v2877, %v2978
        %v2996 = vadd.f32 %v2878, %v2980
        %v2997 = vadd.f32 %v2879, %v2982
        %v2998 = vadd.f32 %v2880, %v2986
        %v2999 = vadd.f32 %v2881, %v2988
        %v3000 = vadd.f32 %v2882, %v2990
        %v3001 = vadd.f32 %v2883, %v2992
        %v3002 = vpack.c.bf16 %v2501, %v2499
        %v3003 = vpack.c.bf16 %v2502, %v2500
        %v3004 = vpack.c.bf16 %v2505, %v2503
        %v3005 = vpack.c.bf16 %v2506, %v2504
        %s3006 = scalar_lea.vmem %s10, 64
        %v3007 = vld [vmem:[%s3006] sm:$0xf]
        %v3008 = vld [vmem:[%s3006 + $0x4] sm:$0xf]
        %v3009 = vld [vmem:[%s3006 + $0x8] sm:$0xf]
        %v3010 = vld [vmem:[%s3006 + $0xc] sm:$0xf]
        %v3015 = vunpack.c.l.b16 %v3007
        %v3016 = vunpack.c.l.b16 %v3008
        %v3017 = vunpack.c.l.b16 %v3009
        %v3018 = vunpack.c.l.b16 %v3010
        %v3019 = vpack.c.b16 %v3016, %v3015
        %v3020 = vpack.c.b16 %v3018, %v3017
        %v3022 = vsel %vm2065, %v3019, 0
        %v3025 = vsel %vm2065, %v3020, 0
        %3027 = vmatprep.subr.bf16.mxu0 %v3003
        %3028 = vmatpush1.bf16.msra.mxu0 %v3002
        %3029 = vmatprep.subr.bf16.mxu0 %v3005
        %3030 = vmatpush1.bf16.msra.mxu0 %v3004
        %3031 = vmatprep.subr.bf16.mxu0 0
        %3032 = vmatpush1.bf16.msra.mxu0 0
        %3033 = vmatprep.subr.bf16.mxu0 0
        %3034 = vmatpush1.bf16.msra.mxu0 0
        %3035 = vmatprep.subr.bf16.mxu0 0
        %3036 = vmatpush1.bf16.msra.mxu0 0
        %3037 = vmatprep.subr.bf16.mxu0 0
        %3038 = vmatpush1.bf16.msra.mxu0 0
        %3039 = vmatprep.subr.bf16.mxu0 0
        %3040 = vmatpush1.bf16.msra.mxu0 0
        %3041 = vmatprep.subr.bf16.mxu0 0
        %3042 = vmatpush1.bf16.msra.mxu0 0
        %3043 = vmatprep.subr.bf16.mxu0 0
        %3044 = vmatpush1.bf16.msra.mxu0 0
        %3045 = vmatprep.subr.bf16.mxu0 0
        %3046 = vmatpush1.bf16.msra.mxu0 0
        %3047 = vmatprep.subr.bf16.mxu0 0
        %3048 = vmatpush1.bf16.msra.mxu0 0
        %3049 = vmatprep.subr.bf16.mxu0 0
        %3050 = vmatpush1.bf16.msra.mxu0 0
        %3051 = vmatprep.subr.bf16.mxu0 0
        %3052 = vmatpush1.bf16.msra.mxu0 0
        %3053 = vmatprep.subr.bf16.mxu0 0
        %3054 = vmatpush1.bf16.msra.mxu0 0
        %3055 = vmatprep.subr.bf16.mxu0 0
        %3056 = vmatpush1.bf16.msra.mxu0 0
        %3057 = vmatprep.subr.bf16.mxu0 0
        %3058 = vmatpush1.bf16.msra.mxu0 0
        %3059 = vmatprep.mubr.bf16.mxu0 0
        %3060 = vmatmul.mubr.bf16.gmra.mrb[0].mxu0 %v3022
        %v3061 = vpop.f32.mrb[0].mxu0
        %v3062 = vadd.f32 0.0, %v3061
        %v3063 = vpop.f32.mrb[0].mxu0
        %v3064 = vadd.f32 0.0, %v3063
        %v3065 = vpop.f32.mrb[0].mxu0
        %v3066 = vadd.f32 0.0, %v3065
        %v3067 = vpop.f32.mrb[0].mxu0
        %v3068 = vadd.f32 0.0, %v3067
        %3069 = vmatprep.mubr.bf16.mxu0 0
        %3070 = vmatmul.mubr.bf16.gmra.mrb[0].mxu0 %v3025
        %v3071 = vpop.f32.mrb[0].mxu0
        %v3072 = vadd.f32 0.0, %v3071
        %v3073 = vpop.f32.mrb[0].mxu0
        %v3074 = vadd.f32 0.0, %v3073
        %v3075 = vpop.f32.mrb[0].mxu0
        %v3076 = vadd.f32 0.0, %v3075
        %v3077 = vpop.f32.mrb[0].mxu0
        %v3078 = vadd.f32 0.0, %v3077
        %3079 = vdwg.mxu0
        %v3080 = vadd.f32 %v2994, %v3062
        %v3081 = vadd.f32 %v2995, %v3064
        %v3082 = vadd.f32 %v2996, %v3066
        %v3083 = vadd.f32 %v2997, %v3068
        %v3084 = vadd.f32 %v2998, %v3072
        %v3085 = vadd.f32 %v2999, %v3074
        %v3086 = vadd.f32 %v3000, %v3076
        %v3087 = vadd.f32 %v3001, %v3078
        %3088 = vrot.lane.b32.xlu0 %v2507, 127
        %v3089 = vpop.permute.xlu0 %3088
        %3090 = vrot.lane.b32.xlu0 %v2508, 127
        %v3091 = vpop.permute.xlu0 %3090
        %3092 = vrot.lane.b32.xlu0 %v2509, 127
        %v3093 = vpop.permute.xlu0 %3092
        %3094 = vrot.lane.b32.xlu0 %v2510, 127
        %v3095 = vpop.permute.xlu0 %3094
        %3096 = vrot.lane.b32.xlu0 %v2511, 127
        %v3097 = vpop.permute.xlu0 %3096
        %3098 = vrot.lane.b32.xlu0 %v2512, 127
        %v3099 = vpop.permute.xlu0 %3098
        %3100 = vrot.lane.b32.xlu0 %v2513, 127
        %v3101 = vpop.permute.xlu0 %3100
        %3102 = vrot.lane.b32.xlu0 %v2514, 127
        %v3103 = vpop.permute.xlu0 %3102
        %v3104 = vsel %vm1589, %v3089, %v3091
        %v3105 = vsel %vm1589, %v3093, %v3095
        %v3106 = vsel %vm1589, %v3097, %v3099
        %v3107 = vsel %vm1589, %v3101, %v3103
        %v3116 = vsel %vm1589, %v3091, 0.0
        %v3117 = vsel %vm1589, %v3095, 0.0
        %v3118 = vsel %vm1589, %v3099, 0.0
        %v3119 = vsel %vm1589, %v3103, 0.0
        %v3120 = vpack.c.bf16 %v3105, %v3104
        %v3121 = vpack.c.bf16 %v3117, %v3116
        %v3122 = vpack.c.bf16 %v3107, %v3106
        %v3123 = vpack.c.bf16 %v3119, %v3118
        %s3124 = scalar_lea.vmem %s10, 80
        %v3125 = vld [vmem:[%s3124] sm:$0xf]
        %v3126 = vld [vmem:[%s3124 + $0x4] sm:$0xf]
        %v3127 = vld [vmem:[%s3124 + $0x8] sm:$0xf]
        %v3128 = vld [vmem:[%s3124 + $0xc] sm:$0xf]
        %v3133 = vunpack.c.l.b16 %v3125
        %v3134 = vunpack.c.l.b16 %v3126
        %v3135 = vunpack.c.l.b16 %v3127
        %v3136 = vunpack.c.l.b16 %v3128
        %v3137 = vpack.c.b16 %v3134, %v3133
        %v3138 = vpack.c.b16 %v3136, %v3135
        %v3140 = vsel %vm2065, %v3137, 0
        %v3143 = vsel %vm2065, %v3138, 0
        %3145 = vmatprep.subr.bf16.mxu0 %v3121
        %3146 = vmatpush1.bf16.msra.mxu0 %v3120
        %3147 = vmatprep.subr.bf16.mxu0 %v3123
        %3148 = vmatpush1.bf16.msra.mxu0 %v3122
        %3149 = vmatprep.subr.bf16.mxu0 0
        %3150 = vmatpush1.bf16.msra.mxu0 0
        %3151 = vmatprep.subr.bf16.mxu0 0
        %3152 = vmatpush1.bf16.msra.mxu0 0
        %3153 = vmatprep.subr.bf16.mxu0 0
        %3154 = vmatpush1.bf16.msra.mxu0 0
        %3155 = vmatprep.subr.bf16.mxu0 0
        %3156 = vmatpush1.bf16.msra.mxu0 0
        %3157 = vmatprep.subr.bf16.mxu0 0
        %3158 = vmatpush1.bf16.msra.mxu0 0
        %3159 = vmatprep.subr.bf16.mxu0 0
        %3160 = vmatpush1.bf16.msra.mxu0 0
        %3161 = vmatprep.subr.bf16.mxu0 0
        %3162 = vmatpush1.bf16.msra.mxu0 0
        %3163 = vmatprep.subr.bf16.mxu0 0
        %3164 = vmatpush1.bf16.msra.mxu0 0
        %3165 = vmatprep.subr.bf16.mxu0 0
        %3166 = vmatpush1.bf16.msra.mxu0 0
        %3167 = vmatprep.subr.bf16.mxu0 0
        %3168 = vmatpush1.bf16.msra.mxu0 0
        %3169 = vmatprep.subr.bf16.mxu0 0
        %3170 = vmatpush1.bf16.msra.mxu0 0
        %3171 = vmatprep.subr.bf16.mxu0 0
        %3172 = vmatpush1.bf16.msra.mxu0 0
        %3173 = vmatprep.subr.bf16.mxu0 0
        %3174 = vmatpush1.bf16.msra.mxu0 0
        %3175 = vmatprep.subr.bf16.mxu0 0
        %3176 = vmatpush1.bf16.msra.mxu0 0
        %3177 = vmatprep.mubr.bf16.mxu0 0
        %3178 = vmatmul.mubr.bf16.gmra.mrb[0].mxu0 %v3140
        %v3179 = vpop.f32.mrb[0].mxu0
        %v3180 = vadd.f32 0.0, %v3179
        %v3181 = vpop.f32.mrb[0].mxu0
        %v3182 = vadd.f32 0.0, %v3181
        %v3183 = vpop.f32.mrb[0].mxu0
        %v3184 = vadd.f32 0.0, %v3183
        %v3185 = vpop.f32.mrb[0].mxu0
        %v3186 = vadd.f32 0.0, %v3185
        %3187 = vmatprep.mubr.bf16.mxu0 0
        %3188 = vmatmul.mubr.bf16.gmra.mrb[0].mxu0 %v3143
        %v3189 = vpop.f32.mrb[0].mxu0
        %v3190 = vadd.f32 0.0, %v3189
        %v3191 = vpop.f32.mrb[0].mxu0
        %v3192 = vadd.f32 0.0, %v3191
        %v3193 = vpop.f32.mrb[0].mxu0
        %v3194 = vadd.f32 0.0, %v3193
        %v3195 = vpop.f32.mrb[0].mxu0
        %v3196 = vadd.f32 0.0, %v3195
        %3197 = vdwg.mxu0
        %v3198 = vadd.f32 %v3080, %v3180
        %v3199 = vadd.f32 %v3081, %v3182
        %v3200 = vadd.f32 %v3082, %v3184
        %v3201 = vadd.f32 %v3083, %v3186
        %v3202 = vadd.f32 %v3084, %v3190
        %v3203 = vadd.f32 %v3085, %v3192
        %v3204 = vadd.f32 %v3086, %v3194
        %v3205 = vadd.f32 %v3087, %v3196
        %3206 = vrot.lane.b32.xlu0 %v2515, 113
        %v3207 = vpop.permute.xlu0 %3206
        %3208 = vrot.lane.b32.xlu0 %v2516, 113
        %v3209 = vpop.permute.xlu0 %3208
        %3210 = vrot.lane.b32.xlu0 %v2517, 113
        %v3211 = vpop.permute.xlu0 %3210
        %3212 = vrot.lane.b32.xlu0 %v2518, 113
        %v3213 = vpop.permute.xlu0 %3212
        %3214 = vrot.lane.b32.xlu0 %v2519, 113
        %v3215 = vpop.permute.xlu0 %3214
        %3216 = vrot.lane.b32.xlu0 %v2520, 113
        %v3217 = vpop.permute.xlu0 %3216
        %3218 = vrot.lane.b32.xlu0 %v2521, 113
        %v3219 = vpop.permute.xlu0 %3218
        %3220 = vrot.lane.b32.xlu0 %v2522, 113
        %v3221 = vpop.permute.xlu0 %3220
        %v3222 = vsel %vm1690, %v3207, %v3209
        %v3223 = vsel %vm1690, %v3211, %v3213
        %v3224 = vsel %vm1690, %v3215, %v3217
        %v3225 = vsel %vm1690, %v3219, %v3221
        %v3234 = vsel %vm1690, %v3209, 0.0
        %v3235 = vsel %vm1690, %v3213, 0.0
        %v3236 = vsel %vm1690, %v3217, 0.0
        %v3237 = vsel %vm1690, %v3221, 0.0
        %v3238 = vpack.c.bf16 %v3223, %v3222
        %v3239 = vpack.c.bf16 %v3235, %v3234
        %v3240 = vpack.c.bf16 %v3225, %v3224
        %v3241 = vpack.c.bf16 %v3237, %v3236
        %s3242 = scalar_lea.vmem %s10, 96
        %v3243 = vld [vmem:[%s3242] sm:$0xf]
        %v3244 = vld [vmem:[%s3242 + $0x4] sm:$0xf]
        %v3245 = vld [vmem:[%s3242 + $0x8] sm:$0xf]
        %v3246 = vld [vmem:[%s3242 + $0xc] sm:$0xf]
        %v3251 = vunpack.c.l.b16 %v3243
        %v3252 = vunpack.c.l.b16 %v3244
        %v3253 = vunpack.c.l.b16 %v3245
        %v3254 = vunpack.c.l.b16 %v3246
        %v3255 = vpack.c.b16 %v3252, %v3251
        %v3256 = vpack.c.b16 %v3254, %v3253
        %v3258 = vsel %vm2065, %v3255, 0
        %v3261 = vsel %vm2065, %v3256, 0
        %3263 = vmatprep.subr.bf16.mxu0 %v3239
        %3264 = vmatpush1.bf16.msra.mxu0 %v3238
        %3265 = vmatprep.subr.bf16.mxu0 %v3241
        %3266 = vmatpush1.bf16.msra.mxu0 %v3240
        %3267 = vmatprep.subr.bf16.mxu0 0
        %3268 = vmatpush1.bf16.msra.mxu0 0
        %3269 = vmatprep.subr.bf16.mxu0 0
        %3270 = vmatpush1.bf16.msra.mxu0 0
        %3271 = vmatprep.subr.bf16.mxu0 0
        %3272 = vmatpush1.bf16.msra.mxu0 0
        %3273 = vmatprep.subr.bf16.mxu0 0
        %3274 = vmatpush1.bf16.msra.mxu0 0
        %3275 = vmatprep.subr.bf16.mxu0 0
        %3276 = vmatpush1.bf16.msra.mxu0 0
        %3277 = vmatprep.subr.bf16.mxu0 0
        %3278 = vmatpush1.bf16.msra.mxu0 0
        %3279 = vmatprep.subr.bf16.mxu0 0
        %3280 = vmatpush1.bf16.msra.mxu0 0
        %3281 = vmatprep.subr.bf16.mxu0 0
        %3282 = vmatpush1.bf16.msra.mxu0 0
        %3283 = vmatprep.subr.bf16.mxu0 0
        %3284 = vmatpush1.bf16.msra.mxu0 0
        %3285 = vmatprep.subr.bf16.mxu0 0
        %3286 = vmatpush1.bf16.msra.mxu0 0
        %3287 = vmatprep.subr.bf16.mxu0 0
        %3288 = vmatpush1.bf16.msra.mxu0 0
        %3289 = vmatprep.subr.bf16.mxu0 0
        %3290 = vmatpush1.bf16.msra.mxu0 0
        %3291 = vmatprep.subr.bf16.mxu0 0
        %3292 = vmatpush1.bf16.msra.mxu0 0
        %3293 = vmatprep.subr.bf16.mxu0 0
        %3294 = vmatpush1.bf16.msra.mxu0 0
        %3295 = vmatprep.mubr.bf16.mxu0 0
        %3296 = vmatmul.mubr.bf16.gmra.mrb[0].mxu0 %v3258
        %v3297 = vpop.f32.mrb[0].mxu0
        %v3298 = vadd.f32 0.0, %v3297
        %v3299 = vpop.f32.mrb[0].mxu0
        %v3300 = vadd.f32 0.0, %v3299
        %v3301 = vpop.f32.mrb[0].mxu0
        %v3302 = vadd.f32 0.0, %v3301
        %v3303 = vpop.f32.mrb[0].mxu0
        %v3304 = vadd.f32 0.0, %v3303
        %3305 = vmatprep.mubr.bf16.mxu0 0
        %3306 = vmatmul.mubr.bf16.gmra.mrb[0].mxu0 %v3261
        %v3307 = vpop.f32.mrb[0].mxu0
        %v3308 = vadd.f32 0.0, %v3307
        %v3309 = vpop.f32.mrb[0].mxu0
        %v3310 = vadd.f32 0.0, %v3309
        %v3311 = vpop.f32.mrb[0].mxu0
        %v3312 = vadd.f32 0.0, %v3311
        %v3313 = vpop.f32.mrb[0].mxu0
        %v3314 = vadd.f32 0.0, %v3313
        %3315 = vdwg.mxu0
        %v3316 = vadd.f32 %v3198, %v3298
        %v3317 = vadd.f32 %v3199, %v3300
        %v3318 = vadd.f32 %v3200, %v3302
        %v3319 = vadd.f32 %v3201, %v3304
        %v3320 = vadd.f32 %v3202, %v3308
        %v3321 = vadd.f32 %v3203, %v3310
        %v3322 = vadd.f32 %v3204, %v3312
        %v3323 = vadd.f32 %v3205, %v3314
        %3324 = vrot.lane.b32.xlu0 %v2499, 112
        %v3325 = vpop.permute.xlu0 %3324
        %3326 = vrot.lane.b32.xlu0 %v2500, 112
        %v3327 = vpop.permute.xlu0 %3326
        %3328 = vrot.lane.b32.xlu0 %v2501, 112
        %v3329 = vpop.permute.xlu0 %3328
        %3330 = vrot.lane.b32.xlu0 %v2502, 112
        %v3331 = vpop.permute.xlu0 %3330
        %3332 = vrot.lane.b32.xlu0 %v2503, 112
        %v3333 = vpop.permute.xlu0 %3332
        %3334 = vrot.lane.b32.xlu0 %v2504, 112
        %v3335 = vpop.permute.xlu0 %3334
        %3336 = vrot.lane.b32.xlu0 %v2505, 112
        %v3337 = vpop.permute.xlu0 %3336
        %3338 = vrot.lane.b32.xlu0 %v2506, 112
        %v3339 = vpop.permute.xlu0 %3338
        %v3340 = vsel %vm1791, %v3325, %v3327
        %v3341 = vsel %vm1791, %v3329, %v3331
        %v3342 = vsel %vm1791, %v3333, %v3335
        %v3343 = vsel %vm1791, %v3337, %v3339
        %v3352 = vsel %vm1791, %v3327, 0.0
        %v3353 = vsel %vm1791, %v3331, 0.0
        %v3354 = vsel %vm1791, %v3335, 0.0
        %v3355 = vsel %vm1791, %v3339, 0.0
        %v3356 = vpack.c.bf16 %v3341, %v3340
        %v3357 = vpack.c.bf16 %v3353, %v3352
        %v3358 = vpack.c.bf16 %v3343, %v3342
        %v3359 = vpack.c.bf16 %v3355, %v3354
        %s3360 = scalar_lea.vmem %s10, 112
        %v3361 = vld [vmem:[%s3360] sm:$0xf]
        %v3362 = vld [vmem:[%s3360 + $0x4] sm:$0xf]
        %v3363 = vld [vmem:[%s3360 + $0x8] sm:$0xf]
        %v3364 = vld [vmem:[%s3360 + $0xc] sm:$0xf]
        %v3369 = vunpack.c.l.b16 %v3361
        %v3370 = vunpack.c.l.b16 %v3362
        %v3371 = vunpack.c.l.b16 %v3363
        %v3372 = vunpack.c.l.b16 %v3364
        %v3373 = vpack.c.b16 %v3370, %v3369
        %v3374 = vpack.c.b16 %v3372, %v3371
        %v3376 = vsel %vm2065, %v3373, 0
        %v3379 = vsel %vm2065, %v3374, 0
        %3381 = vmatprep.subr.bf16.mxu0 %v3357
        %3382 = vmatpush1.bf16.msra.mxu0 %v3356
        %3383 = vmatprep.subr.bf16.mxu0 %v3359
        %3384 = vmatpush1.bf16.msra.mxu0 %v3358
        %3385 = vmatprep.subr.bf16.mxu0 0
        %3386 = vmatpush1.bf16.msra.mxu0 0
        %3387 = vmatprep.subr.bf16.mxu0 0
        %3388 = vmatpush1.bf16.msra.mxu0 0
        %3389 = vmatprep.subr.bf16.mxu0 0
        %3390 = vmatpush1.bf16.msra.mxu0 0
        %3391 = vmatprep.subr.bf16.mxu0 0
        %3392 = vmatpush1.bf16.msra.mxu0 0
        %3393 = vmatprep.subr.bf16.mxu0 0
        %3394 = vmatpush1.bf16.msra.mxu0 0
        %3395 = vmatprep.subr.bf16.mxu0 0
        %3396 = vmatpush1.bf16.msra.mxu0 0
        %3397 = vmatprep.subr.bf16.mxu0 0
        %3398 = vmatpush1.bf16.msra.mxu0 0
        %3399 = vmatprep.subr.bf16.mxu0 0
        %3400 = vmatpush1.bf16.msra.mxu0 0
        %3401 = vmatprep.subr.bf16.mxu0 0
        %3402 = vmatpush1.bf16.msra.mxu0 0
        %3403 = vmatprep.subr.bf16.mxu0 0
        %3404 = vmatpush1.bf16.msra.mxu0 0
        %3405 = vmatprep.subr.bf16.mxu0 0
        %3406 = vmatpush1.bf16.msra.mxu0 0
        %3407 = vmatprep.subr.bf16.mxu0 0
        %3408 = vmatpush1.bf16.msra.mxu0 0
        %3409 = vmatprep.subr.bf16.mxu0 0
        %3410 = vmatpush1.bf16.msra.mxu0 0
        %3411 = vmatprep.subr.bf16.mxu0 0
        %3412 = vmatpush1.bf16.msra.mxu0 0
        %3413 = vmatprep.mubr.bf16.mxu0 0
        %3414 = vmatmul.mubr.bf16.gmra.mrb[0].mxu0 %v3376
        %v3415 = vpop.f32.mrb[0].mxu0
        %v3416 = vadd.f32 0.0, %v3415
        %v3417 = vpop.f32.mrb[0].mxu0
        %v3418 = vadd.f32 0.0, %v3417
        %v3419 = vpop.f32.mrb[0].mxu0
        %v3420 = vadd.f32 0.0, %v3419
        %v3421 = vpop.f32.mrb[0].mxu0
        %v3422 = vadd.f32 0.0, %v3421
        %3423 = vmatprep.mubr.bf16.mxu0 0
        %3424 = vmatmul.mubr.bf16.gmra.mrb[0].mxu0 %v3379
        %v3425 = vpop.f32.mrb[0].mxu0
        %v3426 = vadd.f32 0.0, %v3425
        %v3427 = vpop.f32.mrb[0].mxu0
        %v3428 = vadd.f32 0.0, %v3427
        %v3429 = vpop.f32.mrb[0].mxu0
        %v3430 = vadd.f32 0.0, %v3429
        %v3431 = vpop.f32.mrb[0].mxu0
        %v3432 = vadd.f32 0.0, %v3431
        %3433 = vdwg.mxu0
        %v3434 = vadd.f32 %v3316, %v3416
        %v3435 = vadd.f32 %v3317, %v3418
        %v3436 = vadd.f32 %v3318, %v3420
        %v3437 = vadd.f32 %v3319, %v3422
        %v3438 = vadd.f32 %v3320, %v3426
        %v3439 = vadd.f32 %v3321, %v3428
        %v3440 = vadd.f32 %v3322, %v3430
        %v3441 = vadd.f32 %v3323, %v3432
        %3442 = vrot.lane.b32.xlu0 %v2507, 111
        %v3443 = vpop.permute.xlu0 %3442
        %3444 = vrot.lane.b32.xlu0 %v2508, 111
        %v3445 = vpop.permute.xlu0 %3444
        %3446 = vrot.lane.b32.xlu0 %v2509, 111
        %v3447 = vpop.permute.xlu0 %3446
        %3448 = vrot.lane.b32.xlu0 %v2510, 111
        %v3449 = vpop.permute.xlu0 %3448
        %3450 = vrot.lane.b32.xlu0 %v2511, 111
        %v3451 = vpop.permute.xlu0 %3450
        %3452 = vrot.lane.b32.xlu0 %v2512, 111
        %v3453 = vpop.permute.xlu0 %3452
        %3454 = vrot.lane.b32.xlu0 %v2513, 111
        %v3455 = vpop.permute.xlu0 %3454
        %3456 = vrot.lane.b32.xlu0 %v2514, 111
        %v3457 = vpop.permute.xlu0 %3456
        %v3458 = vsel %vm1892, %v3443, %v3445
        %v3459 = vsel %vm1892, %v3447, %v3449
        %v3460 = vsel %vm1892, %v3451, %v3453
        %v3461 = vsel %vm1892, %v3455, %v3457
        %v3470 = vsel %vm1892, %v3445, 0.0
        %v3471 = vsel %vm1892, %v3449, 0.0
        %v3472 = vsel %vm1892, %v3453, 0.0
        %v3473 = vsel %vm1892, %v3457, 0.0
        %v3474 = vpack.c.bf16 %v3459, %v3458
        %v3475 = vpack.c.bf16 %v3471, %v3470
        %v3476 = vpack.c.bf16 %v3461, %v3460
        %v3477 = vpack.c.bf16 %v3473, %v3472
        %s3478 = scalar_lea.vmem %s10, 128
        %v3479 = vld [vmem:[%s3478] sm:$0xf]
        %v3480 = vld [vmem:[%s3478 + $0x4] sm:$0xf]
        %v3481 = vld [vmem:[%s3478 + $0x8] sm:$0xf]
        %v3482 = vld [vmem:[%s3478 + $0xc] sm:$0xf]
        %v3487 = vunpack.c.l.b16 %v3479
        %v3488 = vunpack.c.l.b16 %v3480
        %v3489 = vunpack.c.l.b16 %v3481
        %v3490 = vunpack.c.l.b16 %v3482
        %v3491 = vpack.c.b16 %v3488, %v3487
        %v3492 = vpack.c.b16 %v3490, %v3489
        %v3494 = vsel %vm2065, %v3491, 0
        %v3497 = vsel %vm2065, %v3492, 0
        %3499 = vmatprep.subr.bf16.mxu0 %v3475
        %3500 = vmatpush1.bf16.msra.mxu0 %v3474
        %3501 = vmatprep.subr.bf16.mxu0 %v3477
        %3502 = vmatpush1.bf16.msra.mxu0 %v3476
        %3503 = vmatprep.subr.bf16.mxu0 0
        %3504 = vmatpush1.bf16.msra.mxu0 0
        %3505 = vmatprep.subr.bf16.mxu0 0
        %3506 = vmatpush1.bf16.msra.mxu0 0
        %3507 = vmatprep.subr.bf16.mxu0 0
        %3508 = vmatpush1.bf16.msra.mxu0 0
        %3509 = vmatprep.subr.bf16.mxu0 0
        %3510 = vmatpush1.bf16.msra.mxu0 0
        %3511 = vmatprep.subr.bf16.mxu0 0
        %3512 = vmatpush1.bf16.msra.mxu0 0
        %3513 = vmatprep.subr.bf16.mxu0 0
        %3514 = vmatpush1.bf16.msra.mxu0 0
        %3515 = vmatprep.subr.bf16.mxu0 0
        %3516 = vmatpush1.bf16.msra.mxu0 0
        %3517 = vmatprep.subr.bf16.mxu0 0
        %3518 = vmatpush1.bf16.msra.mxu0 0
        %3519 = vmatprep.subr.bf16.mxu0 0
        %3520 = vmatpush1.bf16.msra.mxu0 0
        %3521 = vmatprep.subr.bf16.mxu0 0
        %3522 = vmatpush1.bf16.msra.mxu0 0
        %3523 = vmatprep.subr.bf16.mxu0 0
        %3524 = vmatpush1.bf16.msra.mxu0 0
        %3525 = vmatprep.subr.bf16.mxu0 0
        %3526 = vmatpush1.bf16.msra.mxu0 0
        %3527 = vmatprep.subr.bf16.mxu0 0
        %3528 = vmatpush1.bf16.msra.mxu0 0
        %3529 = vmatprep.subr.bf16.mxu0 0
        %3530 = vmatpush1.bf16.msra.mxu0 0
        %3531 = vmatprep.mubr.bf16.mxu0 0
        %3532 = vmatmul.mubr.bf16.gmra.mrb[0].mxu0 %v3494
        %v3533 = vpop.f32.mrb[0].mxu0
        %v3534 = vadd.f32 0.0, %v3533
        %v3535 = vpop.f32.mrb[0].mxu0
        %v3536 = vadd.f32 0.0, %v3535
        %v3537 = vpop.f32.mrb[0].mxu0
        %v3538 = vadd.f32 0.0, %v3537
        %v3539 = vpop.f32.mrb[0].mxu0
        %v3540 = vadd.f32 0.0, %v3539
        %3541 = vmatprep.mubr.bf16.mxu0 0
        %3542 = vmatmul.mubr.bf16.gmra.mrb[0].mxu0 %v3497
        %v3543 = vpop.f32.mrb[0].mxu0
        %v3544 = vadd.f32 0.0, %v3543
        %v3545 = vpop.f32.mrb[0].mxu0
        %v3546 = vadd.f32 0.0, %v3545
        %v3547 = vpop.f32.mrb[0].mxu0
        %v3548 = vadd.f32 0.0, %v3547
        %v3549 = vpop.f32.mrb[0].mxu0
        %v3550 = vadd.f32 0.0, %v3549
        %3551 = vdwg.mxu0
        %v3552 = vadd.f32 %v3434, %v3534
        %v3553 = vadd.f32 %v3435, %v3536
        %v3554 = vadd.f32 %v3436, %v3538
        %v3555 = vadd.f32 %v3437, %v3540
        %v3556 = vadd.f32 %v3438, %v3544
        %v3557 = vadd.f32 %v3439, %v3546
        %v3558 = vadd.f32 %v3440, %v3548
        %v3559 = vadd.f32 %v3441, %v3550
        %v3560 = vld [vmem:[%s11] sm:$0xff]
        %v3561 = vld [vmem:[%s11 + $0x8] sm:$0xff]
        %v3562 = vld [vmem:[%s11 + $0x10] sm:$0xff]
        %v3563 = vld [vmem:[%s11 + $0x18] sm:$0xff]
        %3565 = vset.pattern.permute.xlu0 0
        %3566 = vperm.xlu0 %3565, %v3560
        %v3567 = vpop.permute.xlu0 %3566
        %3570 = vset.pattern.permute.xlu0 0
        %3571 = vperm.xlu0 %3570, %v3561
        %v3572 = vpop.permute.xlu0 %3571
        %3575 = vset.pattern.permute.xlu0 0
        %3576 = vperm.xlu0 %3575, %v3562
        %v3577 = vpop.permute.xlu0 %3576
        %3580 = vset.pattern.permute.xlu0 0
        %3581 = vperm.xlu0 %3580, %v3563
        %v3582 = vpop.permute.xlu0 %3581
        %v3584 = vadd.f32 %v3552, %v3567
        %v3585 = vadd.f32 %v3553, %v3567
        %v3586 = vadd.f32 %v3554, %v3572
        %v3587 = vadd.f32 %v3555, %v3572
        %v3588 = vadd.f32 %v3556, %v3577
        %v3589 = vadd.f32 %v3557, %v3577
        %v3590 = vadd.f32 %v3558, %v3582
        %v3591 = vadd.f32 %v3559, %v3582
        %v3592 = vld [vmem:[%s12] sm:$0xf]
        %v3593 = vld [vmem:[%s12 + $0x4] sm:$0xf]
        %v3594 = vld [vmem:[%s12 + $0x8] sm:$0xf]
        %v3595 = vld [vmem:[%s12 + $0xc] sm:$0xf]
        %v3596 = vpack.c.bf16 %v786, %v784
        %v3597 = vpack.c.bf16 %v787, %v785
        %v3602 = vunpack.c.l.b16 %v3592
        %v3603 = vunpack.c.l.b16 %v3593
        %v3604 = vunpack.c.l.b16 %v3594
        %v3605 = vunpack.c.l.b16 %v3595
        %v3606 = vpack.c.b16 %v3603, %v3602
        %v3607 = vpack.c.b16 %v3605, %v3604
        %v3609 = vsel %vm813, %v3606, 0
        %v3612 = vsel %vm813, %v3607, 0
        %3614 = vmatprep.subr.bf16.mxu0 %v3597
        %3615 = vmatpush1.bf16.msra.mxu0 %v3596
        %3616 = vmatprep.subr.bf16.mxu0 0
        %3617 = vmatpush1.bf16.msra.mxu0 0
        %3618 = vmatprep.subr.bf16.mxu0 0
        %3619 = vmatpush1.bf16.msra.mxu0 0
        %3620 = vmatprep.subr.bf16.mxu0 0
        %3621 = vmatpush1.bf16.msra.mxu0 0
        %3622 = vmatprep.subr.bf16.mxu0 0
        %3623 = vmatpush1.bf16.msra.mxu0 0
        %3624 = vmatprep.subr.bf16.mxu0 0
        %3625 = vmatpush1.bf16.msra.mxu0 0
        %3626 = vmatprep.subr.bf16.mxu0 0
        %3627 = vmatpush1.bf16.msra.mxu0 0
        %3628 = vmatprep.subr.bf16.mxu0 0
        %3629 = vmatpush1.bf16.msra.mxu0 0
        %3630 = vmatprep.subr.bf16.mxu0 0
        %3631 = vmatpush1.bf16.msra.mxu0 0
        %3632 = vmatprep.subr.bf16.mxu0 0
        %3633 = vmatpush1.bf16.msra.mxu0 0
        %3634 = vmatprep.subr.bf16.mxu0 0
        %3635 = vmatpush1.bf16.msra.mxu0 0
        %3636 = vmatprep.subr.bf16.mxu0 0
        %3637 = vmatpush1.bf16.msra.mxu0 0
        %3638 = vmatprep.subr.bf16.mxu0 0
        %3639 = vmatpush1.bf16.msra.mxu0 0
        %3640 = vmatprep.subr.bf16.mxu0 0
        %3641 = vmatpush1.bf16.msra.mxu0 0
        %3642 = vmatprep.subr.bf16.mxu0 0
        %3643 = vmatpush1.bf16.msra.mxu0 0
        %3644 = vmatprep.subr.bf16.mxu0 0
        %3645 = vmatpush1.bf16.msra.mxu0 0
        %3646 = vmatprep.mubr.bf16.mxu0 0
        %3647 = vmatmul.mubr.bf16.gmra.mrb[0].mxu0 %v3609
        %v3648 = vpop.f32.mrb[0].mxu0
        %v3649 = vadd.f32 0.0, %v3648
        %v3650 = vpop.f32.mrb[0].mxu0
        %v3651 = vadd.f32 0.0, %v3650
        %v3652 = vpop.f32.mrb[0].mxu0
        %v3653 = vadd.f32 0.0, %v3652
        %v3654 = vpop.f32.mrb[0].mxu0
        %v3655 = vadd.f32 0.0, %v3654
        %3656 = vmatprep.mubr.bf16.mxu0 0
        %3657 = vmatmul.mubr.bf16.gmra.mrb[0].mxu0 %v3612
        %v3658 = vpop.f32.mrb[0].mxu0
        %v3659 = vadd.f32 0.0, %v3658
        %v3660 = vpop.f32.mrb[0].mxu0
        %v3661 = vadd.f32 0.0, %v3660
        %v3662 = vpop.f32.mrb[0].mxu0
        %v3663 = vadd.f32 0.0, %v3662
        %v3664 = vpop.f32.mrb[0].mxu0
        %v3665 = vadd.f32 0.0, %v3664
        %3666 = vdwg.mxu0
        %v3667 = vadd.f32 %v3584, %v3649
        %v3668 = vadd.f32 %v3585, %v3651
        %v3669 = vadd.f32 %v3586, %v3653
        %v3670 = vadd.f32 %v3587, %v3655
        %v3671 = vadd.f32 %v3588, %v3659
        %v3672 = vadd.f32 %v3589, %v3661
        %v3673 = vadd.f32 %v3590, %v3663
        %v3674 = vadd.f32 %v3591, %v3665
        %v3675 = vld [vmem:[%s13] sm:$0xff]
        %v3676 = vld [vmem:[%s13 + $0x8] sm:$0xff]
        %v3677 = vld [vmem:[%s13 + $0x10] sm:$0xff]
        %v3678 = vld [vmem:[%s13 + $0x18] sm:$0xff]
        %3680 = vset.pattern.permute.xlu0 0
        %3681 = vperm.xlu0 %3680, %v3675
        %v3682 = vpop.permute.xlu0 %3681
        %3685 = vset.pattern.permute.xlu0 0
        %3686 = vperm.xlu0 %3685, %v3676
        %v3687 = vpop.permute.xlu0 %3686
        %3690 = vset.pattern.permute.xlu0 0
        %3691 = vperm.xlu0 %3690, %v3677
        %v3692 = vpop.permute.xlu0 %3691
        %3695 = vset.pattern.permute.xlu0 0
        %3696 = vperm.xlu0 %3695, %v3678
        %v3697 = vpop.permute.xlu0 %3696
        %v3699 = vadd.f32 %v3667, %v3682
        %v3700 = vadd.f32 %v3668, %v3682
        %v3701 = vadd.f32 %v3669, %v3687
        %v3702 = vadd.f32 %v3670, %v3687
        %v3703 = vadd.f32 %v3671, %v3692
        %v3704 = vadd.f32 %v3672, %v3692
        %v3705 = vadd.f32 %v3673, %v3697
        %v3706 = vadd.f32 %v3674, %v3697
        %v3707 = vld [vmem:[%s14] sm:$0xff]
        %v3708 = vld [vmem:[%s14 + $0x8] sm:$0xff]
        %v3709 = vld [vmem:[%s14 + $0x10] sm:$0xff]
        %v3710 = vld [vmem:[%s14 + $0x18] sm:$0xff]
        %v3711 = vld [vmem:[%s15] sm:$0xff]
        %v3712 = vld [vmem:[%s15 + $0x8] sm:$0xff]
        %v3713 = vld [vmem:[%s15 + $0x10] sm:$0xff]
        %v3714 = vld [vmem:[%s15 + $0x18] sm:$0xff]
        %v3715 = vld [vmem:[%s16] sm:$0xff]
        %v3716 = vld [vmem:[%s16 + $0x8] sm:$0xff]
        %v3717 = vld [vmem:[%s16 + $0x10] sm:$0xff]
        %v3718 = vld [vmem:[%s16 + $0x18] sm:$0xff]
        %v3719 = vadd.f32 %v3699, %v3700
        %3720 = vadd.xlane.f32.xlu0 %v3719
        %v3721 = vpop.xlane.xlu0 %3720
        %v3722 = vadd.f32 %v3701, %v3702
        %3723 = vadd.xlane.f32.xlu0 %v3722
        %v3724 = vpop.xlane.xlu0 %3723
        %v3725 = vadd.f32 %v3703, %v3704
        %3726 = vadd.xlane.f32.xlu0 %v3725
        %v3727 = vpop.xlane.xlu0 %3726
        %v3728 = vadd.f32 %v3705, %v3706
        %3729 = vadd.xlane.f32.xlu0 %v3728
        %v3730 = vpop.xlane.xlu0 %3729
        %v3731 = vmul.f32 %v3699, %v3699
        %v3732 = vmul.f32 %v3700, %v3700
        %v3733 = vmul.f32 %v3701, %v3701
        %v3734 = vmul.f32 %v3702, %v3702
        %v3735 = vmul.f32 %v3703, %v3703
        %v3736 = vmul.f32 %v3704, %v3704
        %v3737 = vmul.f32 %v3705, %v3705
        %v3738 = vmul.f32 %v3706, %v3706
        %v3739 = vadd.f32 %v3731, %v3732
        %3740 = vadd.xlane.f32.xlu0 %v3739
        %v3741 = vpop.xlane.xlu0 %3740
        %v3742 = vadd.f32 %v3733, %v3734
        %3743 = vadd.xlane.f32.xlu0 %v3742
        %v3744 = vpop.xlane.xlu0 %3743
        %v3745 = vadd.f32 %v3735, %v3736
        %3746 = vadd.xlane.f32.xlu0 %v3745
        %v3747 = vpop.xlane.xlu0 %3746
        %v3748 = vadd.f32 %v3737, %v3738
        %3749 = vadd.xlane.f32.xlu0 %v3748
        %v3750 = vpop.xlane.xlu0 %3749
        %v3751 = vsel %vm810, %v3721, %v3741
        %v3752 = vsel %vm810, %v3724, %v3744
        %v3753 = vsel %vm810, %v3727, %v3747
        %v3754 = vsel %vm810, %v3730, %v3750
        %v3756 = vsel %vm2065, %v3715, 0
        %v3759 = vsel %vm2065, %v3716, 0
        %v3762 = vsel %vm2065, %v3717, 0
        %v3765 = vsel %vm2065, %v3718, 0
        %3767 = vmatprep.subr.mxu0 0.0
        %3768 = vmatpush1.msra.mxu0 %v3751
        %3769 = vmatprep.subr.mxu0 0.0
        %3770 = vmatpush1.msra.mxu0 %v3752
        %3771 = vmatprep.subr.mxu0 0.0
        %3772 = vmatpush1.msra.mxu0 %v3753
        %3773 = vmatprep.subr.mxu0 0.0
        %3774 = vmatpush1.msra.mxu0 %v3754
        %3775 = vmatprep.subr.mxu0 0.0
        %3776 = vmatpush1.msra.mxu0 0.0
        %3777 = vmatprep.subr.mxu0 0.0
        %3778 = vmatpush1.msra.mxu0 0.0
        %3779 = vmatprep.subr.mxu0 0.0
        %3780 = vmatpush1.msra.mxu0 0.0
        %3781 = vmatprep.subr.mxu0 0.0
        %3782 = vmatpush1.msra.mxu0 0.0
        %3783 = vmatprep.subr.mxu0 0.0
        %3784 = vmatpush1.msra.mxu0 0.0
        %3785 = vmatprep.subr.mxu0 0.0
        %3786 = vmatpush1.msra.mxu0 0.0
        %3787 = vmatprep.subr.mxu0 0.0
        %3788 = vmatpush1.msra.mxu0 0.0
        %3789 = vmatprep.subr.mxu0 0.0
        %3790 = vmatpush1.msra.mxu0 0.0
        %3791 = vmatprep.subr.mxu0 0.0
        %3792 = vmatpush1.msra.mxu0 0.0
        %3793 = vmatprep.subr.mxu0 0.0
        %3794 = vmatpush1.msra.mxu0 0.0
        %3795 = vmatprep.subr.mxu0 0.0
        %3796 = vmatpush1.msra.mxu0 0.0
        %3797 = vmatprep.subr.mxu0 0.0
        %3798 = vmatpush1.msra.mxu0 0.0
        %3799 = vmatprep.subr.mxu0 0.0
        %3800 = vmatpush1.msra.mxu0 0.0
        %3801 = vmatprep.subr.mxu0 0.0
        %3802 = vmatpush1.msra.mxu0 0.0
        %3803 = vmatprep.subr.mxu0 0.0
        %3804 = vmatpush1.msra.mxu0 0.0
        %3805 = vmatprep.subr.mxu0 0.0
        %3806 = vmatpush1.msra.mxu0 0.0
        %3807 = vmatprep.subr.mxu0 0.0
        %3808 = vmatpush1.msra.mxu0 0.0
        %3809 = vmatprep.subr.mxu0 0.0
        %3810 = vmatpush1.msra.mxu0 0.0
        %3811 = vmatprep.subr.mxu0 0.0
        %3812 = vmatpush1.msra.mxu0 0.0
        %3813 = vmatprep.subr.mxu0 0.0
        %3814 = vmatpush1.msra.mxu0 0.0
        %3815 = vmatprep.subr.mxu0 0.0
        %3816 = vmatpush1.msra.mxu0 0.0
        %3817 = vmatprep.subr.mxu0 0.0
        %3818 = vmatpush1.msra.mxu0 0.0
        %3819 = vmatprep.subr.mxu0 0.0
        %3820 = vmatpush1.msra.mxu0 0.0
        %3821 = vmatprep.subr.mxu0 0.0
        %3822 = vmatpush1.msra.mxu0 0.0
        %3823 = vmatprep.subr.mxu0 0.0
        %3824 = vmatpush1.msra.mxu0 0.0
        %3825 = vmatprep.subr.mxu0 0.0
        %3826 = vmatpush1.msra.mxu0 0.0
        %3827 = vmatprep.subr.mxu0 0.0
        %3828 = vmatpush1.msra.mxu0 0.0
        %3829 = vmatprep.subr.mxu0 0.0
        %3830 = vmatpush1.msra.mxu0 0.0
        %3831 = vmatprep.mubr.f32.mxu0 0.0
        %3832 = vmatmul.mubr.f32.gmra.mrb[0].mxu0 %v3756
        %v3833 = vpop.f32.mrb[0].mxu0
        %v3834 = vadd.f32 0.0, %v3833
        %v3835 = vpop.f32.mrb[0].mxu0
        %3836 = vmatprep.mubr.f32.mxu0 0.0
        %3837 = vmatmul.mubr.f32.gmra.mrb[0].mxu0 %v3759
        %v3838 = vpop.f32.mrb[0].mxu0
        %v3839 = vadd.f32 0.0, %v3838
        %v3840 = vpop.f32.mrb[0].mxu0
        %3841 = vmatprep.mubr.f32.mxu0 0.0
        %3842 = vmatmul.mubr.f32.gmra.mrb[0].mxu0 %v3762
        %v3843 = vpop.f32.mrb[0].mxu0
        %v3844 = vadd.f32 0.0, %v3843
        %v3845 = vpop.f32.mrb[0].mxu0
        %3846 = vmatprep.mubr.f32.mxu0 0.0
        %3847 = vmatmul.mubr.f32.gmra.mrb[0].mxu0 %v3765
        %v3848 = vpop.f32.mrb[0].mxu0
        %v3849 = vadd.f32 0.0, %v3848
        %v3850 = vpop.f32.mrb[0].mxu0
        %3851 = vdwg.mxu0
        %v3852 = vmul.f32 %v3834, %v3834
        %v3853 = vmul.f32 %v3839, %v3839
        %v3854 = vmul.f32 %v3844, %v3844
        %v3855 = vmul.f32 %v3849, %v3849
        %3860 = vrot.lane.b32.xlu0 %v3852, 1
        %v3861 = vpop.permute.xlu0 %3860
        %3862 = vrot.lane.b32.xlu0 %v3853, 1
        %v3863 = vpop.permute.xlu0 %3862
        %3864 = vrot.lane.b32.xlu0 %v3854, 1
        %v3865 = vpop.permute.xlu0 %3864
        %3866 = vrot.lane.b32.xlu0 %v3855, 1
        %v3867 = vpop.permute.xlu0 %3866
        %v3872 = vsub.f32 %v3834, %v3861
        %v3873 = vsub.f32 %v3839, %v3863
        %v3874 = vsub.f32 %v3844, %v3865
        %v3875 = vsub.f32 %v3849, %v3867
        %v3876 = vadd.f32 %v3872, 1e-05
        %v3877 = vadd.f32 %v3873, 1e-05
        %v3878 = vadd.f32 %v3874, 1e-05
        %v3879 = vadd.f32 %v3875, 1e-05
        %v3880 = vrsqrt.pop %v3876
        %v3881 = vrsqrt.pop %v3877
        %v3882 = vrsqrt.pop %v3878
        %v3883 = vrsqrt.pop %v3879
        %3885 = vset.pattern.permute.xlu0 0
        %3886 = vperm.xlu0 %3885, %v3834
        %v3887 = vpop.permute.xlu0 %3886
        %3890 = vset.pattern.permute.xlu0 0
        %3891 = vperm.xlu0 %3890, %v3839
        %v3892 = vpop.permute.xlu0 %3891
        %3895 = vset.pattern.permute.xlu0 0
        %3896 = vperm.xlu0 %3895, %v3844
        %v3897 = vpop.permute.xlu0 %3896
        %3900 = vset.pattern.permute.xlu0 0
        %3901 = vperm.xlu0 %3900, %v3849
        %v3902 = vpop.permute.xlu0 %3901
        %v3904 = vsub.f32 %v3699, %v3887
        %v3905 = vsub.f32 %v3700, %v3887
        %v3906 = vsub.f32 %v3701, %v3892
        %v3907 = vsub.f32 %v3702, %v3892
        %v3908 = vsub.f32 %v3703, %v3897
        %v3909 = vsub.f32 %v3704, %v3897
        %v3910 = vsub.f32 %v3705, %v3902
        %v3911 = vsub.f32 %v3706, %v3902
        %3916 = vrot.lane.b32.xlu0 %v3707, 1
        %v3917 = vpop.permute.xlu0 %3916
        %3918 = vrot.lane.b32.xlu0 %v3708, 1
        %v3919 = vpop.permute.xlu0 %3918
        %3920 = vrot.lane.b32.xlu0 %v3709, 1
        %v3921 = vpop.permute.xlu0 %3920
        %3922 = vrot.lane.b32.xlu0 %v3710, 1
        %v3923 = vpop.permute.xlu0 %3922
        %v3928 = vmul.f32 %v3880, %v3917
        %v3929 = vmul.f32 %v3881, %v3919
        %v3930 = vmul.f32 %v3882, %v3921
        %v3931 = vmul.f32 %v3883, %v3923
        %3933 = vset.pattern.permute.xlu0 1
        %3934 = vperm.xlu0 %3933, %v3928
        %v3935 = vpop.permute.xlu0 %3934
        %3938 = vset.pattern.permute.xlu0 1
        %3939 = vperm.xlu0 %3938, %v3929
        %v3940 = vpop.permute.xlu0 %3939
        %3943 = vset.pattern.permute.xlu0 1
        %3944 = vperm.xlu0 %3943, %v3930
        %v3945 = vpop.permute.xlu0 %3944
        %3948 = vset.pattern.permute.xlu0 1
        %3949 = vperm.xlu0 %3948, %v3931
        %v3950 = vpop.permute.xlu0 %3949
        %v3952 = vmul.f32 %v3904, %v3935
        %v3953 = vmul.f32 %v3905, %v3935
        %v3954 = vmul.f32 %v3906, %v3940
        %v3955 = vmul.f32 %v3907, %v3940
        %v3956 = vmul.f32 %v3908, %v3945
        %v3957 = vmul.f32 %v3909, %v3945
        %v3958 = vmul.f32 %v3910, %v3950
        %v3959 = vmul.f32 %v3911, %v3950
        %3961 = vset.pattern.permute.xlu0 0
        %3962 = vperm.xlu0 %3961, %v3711
        %v3963 = vpop.permute.xlu0 %3962
        %3966 = vset.pattern.permute.xlu0 0
        %3967 = vperm.xlu0 %3966, %v3712
        %v3968 = vpop.permute.xlu0 %3967
        %3971 = vset.pattern.permute.xlu0 0
        %3972 = vperm.xlu0 %3971, %v3713
        %v3973 = vpop.permute.xlu0 %3972
        %3976 = vset.pattern.permute.xlu0 0
        %3977 = vperm.xlu0 %3976, %v3714
        %v3978 = vpop.permute.xlu0 %3977
        %v3980 = vadd.f32 %v3952, %v3963
        %v3981 = vadd.f32 %v3953, %v3963
        %v3982 = vadd.f32 %v3954, %v3968
        %v3983 = vadd.f32 %v3955, %v3968
        %v3984 = vadd.f32 %v3956, %v3973
        %v3985 = vadd.f32 %v3957, %v3973
        %v3986 = vadd.f32 %v3958, %v3978
        %v3987 = vadd.f32 %v3959, %v3978
        %v3988 = vpack.c.bf16 %v3982, %v3980
        %v3989 = vpack.c.bf16 %v3983, %v3981
        %v3990 = vpack.c.bf16 %v3986, %v3984
        %v3991 = vpack.c.bf16 %v3987, %v3985
        %3992 = vxpose.xlu0.b32.start [1/16] %v3980, 128
        %3993 = vxpose.xlu0.b32.cont [2/16] %v3982, 128
        %3994 = vxpose.xlu0.b32.cont [3/16] %v3984, 128
        %3995 = vxpose.xlu0.b32.cont [4/16] %v3986, 128
        %3996 = vxpose.xlu0.b32.cont [5/16] 0.0, 128
        %3997 = vxpose.xlu0.b32.cont [6/16] 0.0, 128
        %3998 = vxpose.xlu0.b32.cont [7/16] 0.0, 128
        %3999 = vxpose.xlu0.b32.cont [8/16] 0.0, 128
        %4000 = vxpose.xlu0.b32.cont [9/16] 0.0, 128
        %4001 = vxpose.xlu0.b32.cont [10/16] 0.0, 128
        %4002 = vxpose.xlu0.b32.cont [11/16] 0.0, 128
        %4003 = vxpose.xlu0.b32.cont [12/16] 0.0, 128
        %4004 = vxpose.xlu0.b32.cont [13/16] 0.0, 128
        %4005 = vxpose.xlu0.b32.cont [14/16] 0.0, 128
        %4006 = vxpose.xlu0.b32.cont [15/16] 0.0, 128
        %4007 = vxpose.xlu0.b32.end [16/16] 0.0, 128
        %v4008 = vpop.trf.xlu0
        %v4009 = vpop.trf.xlu0
        %v4010 = vpop.trf.xlu0
        %v4011 = vpop.trf.xlu0
        %v4012 = vpop.trf.xlu0
        %v4013 = vpop.trf.xlu0
        %v4014 = vpop.trf.xlu0
        %v4015 = vpop.trf.xlu0
        %v4016 = vpop.trf.xlu0
        %v4017 = vpop.trf.xlu0
        %v4018 = vpop.trf.xlu0
        %v4019 = vpop.trf.xlu0
        %v4020 = vpop.trf.xlu0
        %v4021 = vpop.trf.xlu0
        %v4022 = vpop.trf.xlu0
        %v4023 = vpop.trf.xlu0
        %4024 = vxpose.xlu0.b32.start [1/16] %v3981, 128
        %4025 = vxpose.xlu0.b32.cont [2/16] %v3983, 128
        %4026 = vxpose.xlu0.b32.cont [3/16] %v3985, 128
        %4027 = vxpose.xlu0.b32.cont [4/16] %v3987, 128
        %4028 = vxpose.xlu0.b32.cont [5/16] 0.0, 128
        %4029 = vxpose.xlu0.b32.cont [6/16] 0.0, 128
        %4030 = vxpose.xlu0.b32.cont [7/16] 0.0, 128
        %4031 = vxpose.xlu0.b32.cont [8/16] 0.0, 128
        %4032 = vxpose.xlu0.b32.cont [9/16] 0.0, 128
        %4033 = vxpose.xlu0.b32.cont [10/16] 0.0, 128
        %4034 = vxpose.xlu0.b32.cont [11/16] 0.0, 128
        %4035 = vxpose.xlu0.b32.cont [12/16] 0.0, 128
        %4036 = vxpose.xlu0.b32.cont [13/16] 0.0, 128
        %4037 = vxpose.xlu0.b32.cont [14/16] 0.0, 128
        %4038 = vxpose.xlu0.b32.cont [15/16] 0.0, 128
        %4039 = vxpose.xlu0.b32.end [16/16] 0.0, 128
        %v4040 = vpop.trf.xlu0
        %v4041 = vpop.trf.xlu0
        %v4042 = vpop.trf.xlu0
        %v4043 = vpop.trf.xlu0
        %v4044 = vpop.trf.xlu0
        %v4045 = vpop.trf.xlu0
        %v4046 = vpop.trf.xlu0
        %v4047 = vpop.trf.xlu0
        %v4048 = vpop.trf.xlu0
        %v4049 = vpop.trf.xlu0
        %v4050 = vpop.trf.xlu0
        %v4051 = vpop.trf.xlu0
        %v4052 = vpop.trf.xlu0
        %v4053 = vpop.trf.xlu0
        %v4054 = vpop.trf.xlu0
        %v4055 = vpop.trf.xlu0
        %v4056 = vpack.c.bf16 %v4009, %v4008
        %v4057 = vpack.c.bf16 %v4011, %v4010
        %v4058 = vpack.c.bf16 %v4013, %v4012
        %v4059 = vpack.c.bf16 %v4015, %v4014
        %v4060 = vpack.c.bf16 %v4017, %v4016
        %v4061 = vpack.c.bf16 %v4019, %v4018
        %v4062 = vpack.c.bf16 %v4021, %v4020
        %v4063 = vpack.c.bf16 %v4023, %v4022
        %v4064 = vpack.c.bf16 %v4041, %v4040
        %v4065 = vpack.c.bf16 %v4043, %v4042
        %v4066 = vpack.c.bf16 %v4045, %v4044
        %v4067 = vpack.c.bf16 %v4047, %v4046
        %v4068 = vpack.c.bf16 %v4049, %v4048
        %v4069 = vpack.c.bf16 %v4051, %v4050
        %v4070 = vpack.c.bf16 %v4053, %v4052
        %v4071 = vpack.c.bf16 %v4055, %v4054
        %v4072 = vld [vmem:[%s17] sm:$0xf]
        %v4073 = vld [vmem:[%s17 + $0x4] sm:$0xf]
        %v4074 = vld [vmem:[%s17 + $0x8] sm:$0xf]
        %v4075 = vld [vmem:[%s17 + $0xc] sm:$0xf]
        %v4076 = vld [vmem:[%s17 + $0x10] sm:$0xf]
        %v4077 = vld [vmem:[%s17 + $0x14] sm:$0xf]
        %v4078 = vld [vmem:[%s17 + $0x18] sm:$0xf]
        %v4079 = vld [vmem:[%s17 + $0x1c] sm:$0xf]
        %v4080 = vld [vmem:[%s17 + $0x20] sm:$0xf]
        %v4081 = vld [vmem:[%s17 + $0x24] sm:$0xf]
        %v4082 = vld [vmem:[%s17 + $0x28] sm:$0xf]
        %v4083 = vld [vmem:[%s17 + $0x2c] sm:$0xf]
        %v4084 = vld [vmem:[%s17 + $0x30] sm:$0xf]
        %v4085 = vld [vmem:[%s17 + $0x34] sm:$0xf]
        %v4086 = vld [vmem:[%s17 + $0x38] sm:$0xf]
        %v4087 = vld [vmem:[%s17 + $0x3c] sm:$0xf]
        %v4088 = vld [vmem:[%s18] sm:$0xff]
        %v4089 = vld [vmem:[%s18 + $0x8] sm:$0xff]
        %v4090 = vld [vmem:[%s18 + $0x10] sm:$0xff]
        %v4091 = vld [vmem:[%s18 + $0x18] sm:$0xff]
        %v4092 = vld [vmem:[%s18 + $0x20] sm:$0xff]
        %v4093 = vld [vmem:[%s18 + $0x28] sm:$0xff]
        %v4094 = vld [vmem:[%s18 + $0x30] sm:$0xff]
        %v4095 = vld [vmem:[%s18 + $0x38] sm:$0xff]
        %v4096 = vld [vmem:[%s18 + $0x40] sm:$0xff]
        %v4097 = vld [vmem:[%s18 + $0x48] sm:$0xff]
        %v4098 = vld [vmem:[%s18 + $0x50] sm:$0xff]
        %v4099 = vld [vmem:[%s18 + $0x58] sm:$0xff]
        %v4100 = vld [vmem:[%s18 + $0x60] sm:$0xff]
        %v4101 = vld [vmem:[%s18 + $0x68] sm:$0xff]
        %v4102 = vld [vmem:[%s18 + $0x70] sm:$0xff]
        %v4103 = vld [vmem:[%s18 + $0x78] sm:$0xff]
        %4105 = vset.pattern.permute.xlu0 0
        %4106 = vperm.xlu0 %4105, %v4088
        %v4107 = vpop.permute.xlu0 %4106
        %4110 = vset.pattern.permute.xlu0 0
        %4111 = vperm.xlu0 %4110, %v4089
        %v4112 = vpop.permute.xlu0 %4111
        %4115 = vset.pattern.permute.xlu0 0
        %4116 = vperm.xlu0 %4115, %v4090
        %v4117 = vpop.permute.xlu0 %4116
        %4120 = vset.pattern.permute.xlu0 0
        %4121 = vperm.xlu0 %4120, %v4091
        %v4122 = vpop.permute.xlu0 %4121
        %4125 = vset.pattern.permute.xlu0 0
        %4126 = vperm.xlu0 %4125, %v4092
        %v4127 = vpop.permute.xlu0 %4126
        %4130 = vset.pattern.permute.xlu0 0
        %4131 = vperm.xlu0 %4130, %v4093
        %v4132 = vpop.permute.xlu0 %4131
        %4135 = vset.pattern.permute.xlu0 0
        %4136 = vperm.xlu0 %4135, %v4094
        %v4137 = vpop.permute.xlu0 %4136
        %4140 = vset.pattern.permute.xlu0 0
        %4141 = vperm.xlu0 %4140, %v4095
        %v4142 = vpop.permute.xlu0 %4141
        %4145 = vset.pattern.permute.xlu0 0
        %4146 = vperm.xlu0 %4145, %v4096
        %v4147 = vpop.permute.xlu0 %4146
        %4150 = vset.pattern.permute.xlu0 0
        %4151 = vperm.xlu0 %4150, %v4097
        %v4152 = vpop.permute.xlu0 %4151
        %4155 = vset.pattern.permute.xlu0 0
        %4156 = vperm.xlu0 %4155, %v4098
        %v4157 = vpop.permute.xlu0 %4156
        %4160 = vset.pattern.permute.xlu0 0
        %4161 = vperm.xlu0 %4160, %v4099
        %v4162 = vpop.permute.xlu0 %4161
        %4165 = vset.pattern.permute.xlu0 0
        %4166 = vperm.xlu0 %4165, %v4100
        %v4167 = vpop.permute.xlu0 %4166
        %4170 = vset.pattern.permute.xlu0 0
        %4171 = vperm.xlu0 %4170, %v4101
        %v4172 = vpop.permute.xlu0 %4171
        %4175 = vset.pattern.permute.xlu0 0
        %4176 = vperm.xlu0 %4175, %v4102
        %v4177 = vpop.permute.xlu0 %4176
        %4180 = vset.pattern.permute.xlu0 0
        %4181 = vperm.xlu0 %4180, %v4103
        %v4182 = vpop.permute.xlu0 %4181
        %v4200 = vunpack.c.l.b16 %v4072
        %v4201 = vunpack.c.l.b16 %v4073
        %v4202 = vunpack.c.l.b16 %v4074
        %v4203 = vunpack.c.l.b16 %v4075
        %v4204 = vunpack.c.l.b16 %v4076
        %v4205 = vunpack.c.l.b16 %v4077
        %v4206 = vunpack.c.l.b16 %v4078
        %v4207 = vunpack.c.l.b16 %v4079
        %v4208 = vunpack.c.l.b16 %v4080
        %v4209 = vunpack.c.l.b16 %v4081
        %v4210 = vunpack.c.l.b16 %v4082
        %v4211 = vunpack.c.l.b16 %v4083
        %v4212 = vunpack.c.l.b16 %v4084
        %v4213 = vunpack.c.l.b16 %v4085
        %v4214 = vunpack.c.l.b16 %v4086
        %v4215 = vunpack.c.l.b16 %v4087
        %v4216 = vpack.c.b16 %v4201, %v4200
        %v4217 = vpack.c.b16 %v4203, %v4202
        %v4218 = vpack.c.b16 %v4205, %v4204
        %v4219 = vpack.c.b16 %v4207, %v4206
        %v4220 = vpack.c.b16 %v4209, %v4208
        %v4221 = vpack.c.b16 %v4211, %v4210
        %v4222 = vpack.c.b16 %v4213, %v4212
        %v4223 = vpack.c.b16 %v4215, %v4214
        %v4225 = vsel %vm2065, %v4216, 0
        %v4228 = vsel %vm2065, %v4217, 0
        %v4231 = vsel %vm2065, %v4218, 0
        %v4234 = vsel %vm2065, %v4219, 0
        %v4237 = vsel %vm2065, %v4220, 0
        %v4240 = vsel %vm2065, %v4221, 0
        %v4243 = vsel %vm2065, %v4222, 0
        %v4246 = vsel %vm2065, %v4223, 0
        %4248 = vmatprep.subr.bf16.mxu0 %v3989
        %4249 = vmatpush1.bf16.msra.mxu0 %v3988
        %4250 = vmatprep.subr.bf16.mxu0 %v3991
        %4251 = vmatpush1.bf16.msra.mxu0 %v3990
        %4252 = vmatprep.subr.bf16.mxu0 0
        %4253 = vmatpush1.bf16.msra.mxu0 0
        %4254 = vmatprep.subr.bf16.mxu0 0
        %4255 = vmatpush1.bf16.msra.mxu0 0
        %4256 = vmatprep.subr.bf16.mxu0 0
        %4257 = vmatpush1.bf16.msra.mxu0 0
        %4258 = vmatprep.subr.bf16.mxu0 0
        %4259 = vmatpush1.bf16.msra.mxu0 0
        %4260 = vmatprep.subr.bf16.mxu0 0
        %4261 = vmatpush1.bf16.msra.mxu0 0
        %4262 = vmatprep.subr.bf16.mxu0 0
        %4263 = vmatpush1.bf16.msra.mxu0 0
        %4264 = vmatprep.subr.bf16.mxu0 0
        %4265 = vmatpush1.bf16.msra.mxu0 0
        %4266 = vmatprep.subr.bf16.mxu0 0
        %4267 = vmatpush1.bf16.msra.mxu0 0
        %4268 = vmatprep.subr.bf16.mxu0 0
        %4269 = vmatpush1.bf16.msra.mxu0 0
        %4270 = vmatprep.subr.bf16.mxu0 0
        %4271 = vmatpush1.bf16.msra.mxu0 0
        %4272 = vmatprep.subr.bf16.mxu0 0
        %4273 = vmatpush1.bf16.msra.mxu0 0
        %4274 = vmatprep.subr.bf16.mxu0 0
        %4275 = vmatpush1.bf16.msra.mxu0 0
        %4276 = vmatprep.subr.bf16.mxu0 0
        %4277 = vmatpush1.bf16.msra.mxu0 0
        %4278 = vmatprep.subr.bf16.mxu0 0
        %4279 = vmatpush1.bf16.msra.mxu0 0
        %4280 = vmatprep.mubr.bf16.mxu0 0
        %4281 = vmatmul.mubr.bf16.gmra.mrb[0].mxu0 %v4225
        %v4282 = vpop.f32.mrb[0].mxu0
        %v4283 = vadd.f32 %v4107, %v4282
        %v4284 = vpop.f32.mrb[0].mxu0
        %v4285 = vadd.f32 %v4107, %v4284
        %v4286 = vpop.f32.mrb[0].mxu0
        %v4287 = vadd.f32 %v4112, %v4286
        %v4288 = vpop.f32.mrb[0].mxu0
        %v4289 = vadd.f32 %v4112, %v4288
        %4290 = vmatprep.mubr.bf16.mxu0 0
        %4291 = vmatmul.mubr.bf16.gmra.mrb[0].mxu0 %v4228
        %v4292 = vpop.f32.mrb[0].mxu0
        %v4293 = vadd.f32 %v4117, %v4292
        %v4294 = vpop.f32.mrb[0].mxu0
        %v4295 = vadd.f32 %v4117, %v4294
        %v4296 = vpop.f32.mrb[0].mxu0
        %v4297 = vadd.f32 %v4122, %v4296
        %v4298 = vpop.f32.mrb[0].mxu0
        %v4299 = vadd.f32 %v4122, %v4298
        %4300 = vmatprep.mubr.bf16.mxu0 0
        %4301 = vmatmul.mubr.bf16.gmra.mrb[0].mxu0 %v4231
        %v4302 = vpop.f32.mrb[0].mxu0
        %v4303 = vadd.f32 %v4127, %v4302
        %v4304 = vpop.f32.mrb[0].mxu0
        %v4305 = vadd.f32 %v4127, %v4304
        %v4306 = vpop.f32.mrb[0].mxu0
        %v4307 = vadd.f32 %v4132, %v4306
        %v4308 = vpop.f32.mrb[0].mxu0
        %v4309 = vadd.f32 %v4132, %v4308
        %4310 = vmatprep.mubr.bf16.mxu0 0
        %4311 = vmatmul.mubr.bf16.gmra.mrb[0].mxu0 %v4234
        %v4312 = vpop.f32.mrb[0].mxu0
        %v4313 = vadd.f32 %v4137, %v4312
        %v4314 = vpop.f32.mrb[0].mxu0
        %v4315 = vadd.f32 %v4137, %v4314
        %v4316 = vpop.f32.mrb[0].mxu0
        %v4317 = vadd.f32 %v4142, %v4316
        %v4318 = vpop.f32.mrb[0].mxu0
        %v4319 = vadd.f32 %v4142, %v4318
        %4320 = vmatprep.mubr.bf16.mxu0 0
        %4321 = vmatmul.mubr.bf16.gmra.mrb[0].mxu0 %v4237
        %v4322 = vpop.f32.mrb[0].mxu0
        %v4323 = vadd.f32 %v4147, %v4322
        %v4324 = vpop.f32.mrb[0].mxu0
        %v4325 = vadd.f32 %v4147, %v4324
        %v4326 = vpop.f32.mrb[0].mxu0
        %v4327 = vadd.f32 %v4152, %v4326
        %v4328 = vpop.f32.mrb[0].mxu0
        %v4329 = vadd.f32 %v4152, %v4328
        %4330 = vmatprep.mubr.bf16.mxu0 0
        %4331 = vmatmul.mubr.bf16.gmra.mrb[0].mxu0 %v4240
        %v4332 = vpop.f32.mrb[0].mxu0
        %v4333 = vadd.f32 %v4157, %v4332
        %v4334 = vpop.f32.mrb[0].mxu0
        %v4335 = vadd.f32 %v4157, %v4334
        %v4336 = vpop.f32.mrb[0].mxu0
        %v4337 = vadd.f32 %v4162, %v4336
        %v4338 = vpop.f32.mrb[0].mxu0
        %v4339 = vadd.f32 %v4162, %v4338
        %4340 = vmatprep.mubr.bf16.mxu0 0
        %4341 = vmatmul.mubr.bf16.gmra.mrb[0].mxu0 %v4243
        %v4342 = vpop.f32.mrb[0].mxu0
        %v4343 = vadd.f32 %v4167, %v4342
        %v4344 = vpop.f32.mrb[0].mxu0
        %v4345 = vadd.f32 %v4167, %v4344
        %v4346 = vpop.f32.mrb[0].mxu0
        %v4347 = vadd.f32 %v4172, %v4346
        %v4348 = vpop.f32.mrb[0].mxu0
        %v4349 = vadd.f32 %v4172, %v4348
        %4350 = vmatprep.mubr.bf16.mxu0 0
        %4351 = vmatmul.mubr.bf16.gmra.mrb[0].mxu0 %v4246
        %v4352 = vpop.f32.mrb[0].mxu0
        %v4353 = vadd.f32 %v4177, %v4352
        %v4354 = vpop.f32.mrb[0].mxu0
        %v4355 = vadd.f32 %v4177, %v4354
        %v4356 = vpop.f32.mrb[0].mxu0
        %v4357 = vadd.f32 %v4182, %v4356
        %v4358 = vpop.f32.mrb[0].mxu0
        %v4359 = vadd.f32 %v4182, %v4358
        %4360 = vdwg.mxu0
        %v4361 = vpack.c.bf16 %v4287, %v4283
        %v4362 = vpack.c.bf16 %v4289, %v4285
        %v4363 = vpack.c.bf16 %v4297, %v4293
        %v4364 = vpack.c.bf16 %v4299, %v4295
        %v4365 = vpack.c.bf16 %v4307, %v4303
        %v4366 = vpack.c.bf16 %v4309, %v4305
        %v4367 = vpack.c.bf16 %v4317, %v4313
        %v4368 = vpack.c.bf16 %v4319, %v4315
        %v4369 = vpack.c.bf16 %v4327, %v4323
        %v4370 = vpack.c.bf16 %v4329, %v4325
        %v4371 = vpack.c.bf16 %v4337, %v4333
        %v4372 = vpack.c.bf16 %v4339, %v4335
        %v4373 = vpack.c.bf16 %v4347, %v4343
        %v4374 = vpack.c.bf16 %v4349, %v4345
        %v4375 = vpack.c.bf16 %v4357, %v4353
        %v4376 = vpack.c.bf16 %v4359, %v4355
        %v4377 = vld [vmem:[%s19] sm:$0xf]
        %v4378 = vld [vmem:[%s19 + $0x4] sm:$0xf]
        %v4379 = vld [vmem:[%s19 + $0x8] sm:$0xf]
        %v4380 = vld [vmem:[%s19 + $0xc] sm:$0xf]
        %v4381 = vld [vmem:[%s20] sm:$0x1]
        %v4383 = vlaneseq
        %v4384 = vshrl.u32 %v4383, 7
        %v4385 = vsub.s32 0, %v4384
        %v4386 = vrot.slane %v4381, %v4385
        %v4392 = vunpack.c.l.b16 %v4377
        %v4393 = vunpack.c.l.b16 %v4378
        %v4394 = vunpack.c.l.b16 %v4379
        %v4395 = vunpack.c.l.b16 %v4380
        %v4396 = vpack.c.b16 %v4393, %v4392
        %v4397 = vpack.c.b16 %v4395, %v4394
        %v4401 = vsel %vm2065, %v4056, 0
        %v4404 = vsel %vm2065, %v4057, 0
        %v4407 = vsel %vm2065, %v4058, 0
        %v4410 = vsel %vm2065, %v4059, 0
        %v4413 = vsel %vm2065, %v4060, 0
        %v4416 = vsel %vm2065, %v4061, 0
        %v4419 = vsel %vm2065, %v4062, 0
        %v4422 = vsel %vm2065, %v4063, 0
        %v4425 = vsel %vm2065, %v4064, 0
        %v4428 = vsel %vm2065, %v4065, 0
        %v4431 = vsel %vm2065, %v4066, 0
        %v4434 = vsel %vm2065, %v4067, 0
        %v4437 = vsel %vm2065, %v4068, 0
        %v4440 = vsel %vm2065, %v4069, 0
        %v4443 = vsel %vm2065, %v4070, 0
        %v4446 = vsel %vm2065, %v4071, 0
        %4448 = vmatprep.subr.bf16.mxu0 0
        %4449 = vmatpush1.bf16.msra.mxu0 %v4396
        %4450 = vmatprep.subr.bf16.mxu0 0
        %4451 = vmatpush1.bf16.msra.mxu0 %v4397
        %4452 = vmatprep.subr.bf16.mxu0 0
        %4453 = vmatpush1.bf16.msra.mxu0 0
        %4454 = vmatprep.subr.bf16.mxu0 0
        %4455 = vmatpush1.bf16.msra.mxu0 0
        %4456 = vmatprep.subr.bf16.mxu0 0
        %4457 = vmatpush1.bf16.msra.mxu0 0
        %4458 = vmatprep.subr.bf16.mxu0 0
        %4459 = vmatpush1.bf16.msra.mxu0 0
        %4460 = vmatprep.subr.bf16.mxu0 0
        %4461 = vmatpush1.bf16.msra.mxu0 0
        %4462 = vmatprep.subr.bf16.mxu0 0
        %4463 = vmatpush1.bf16.msra.mxu0 0
        %4464 = vmatprep.subr.bf16.mxu0 0
        %4465 = vmatpush1.bf16.msra.mxu0 0
        %4466 = vmatprep.subr.bf16.mxu0 0
        %4467 = vmatpush1.bf16.msra.mxu0 0
        %4468 = vmatprep.subr.bf16.mxu0 0
        %4469 = vmatpush1.bf16.msra.mxu0 0
        %4470 = vmatprep.subr.bf16.mxu0 0
        %4471 = vmatpush1.bf16.msra.mxu0 0
        %4472 = vmatprep.subr.bf16.mxu0 0
        %4473 = vmatpush1.bf16.msra.mxu0 0
        %4474 = vmatprep.subr.bf16.mxu0 0
        %4475 = vmatpush1.bf16.msra.mxu0 0
        %4476 = vmatprep.subr.bf16.mxu0 0
        %4477 = vmatpush1.bf16.msra.mxu0 0
        %4478 = vmatprep.subr.bf16.mxu0 0
        %4479 = vmatpush1.bf16.msra.mxu0 0
        %4480 = vmatprep.mubr.bf16.mxu0 0
        %4481 = vmatmul.mubr.bf16.gmra.mrb[0].mxu0 %v4401
        %v4482 = vpop.f32.mrb[0].mxu0
        %v4483 = vadd.f32 %v4386, %v4482
        %v4484 = vpop.f32.mrb[0].mxu0
        %v4485 = vpop.f32.mrb[0].mxu0
        %v4486 = vadd.f32 %v4386, %v4485
        %v4487 = vpop.f32.mrb[0].mxu0
        %4488 = vmatprep.mubr.bf16.mxu0 0
        %4489 = vmatmul.mubr.bf16.gmra.mrb[0].mxu0 %v4404
        %v4490 = vpop.f32.mrb[0].mxu0
        %v4491 = vadd.f32 %v4386, %v4490
        %v4492 = vpop.f32.mrb[0].mxu0
        %v4493 = vpop.f32.mrb[0].mxu0
        %v4494 = vadd.f32 %v4386, %v4493
        %v4495 = vpop.f32.mrb[0].mxu0
        %4496 = vmatprep.mubr.bf16.mxu0 0
        %4497 = vmatmul.mubr.bf16.gmra.mrb[0].mxu0 %v4407
        %v4498 = vpop.f32.mrb[0].mxu0
        %v4499 = vadd.f32 %v4386, %v4498
        %v4500 = vpop.f32.mrb[0].mxu0
        %v4501 = vpop.f32.mrb[0].mxu0
        %v4502 = vadd.f32 %v4386, %v4501
        %v4503 = vpop.f32.mrb[0].mxu0
        %4504 = vmatprep.mubr.bf16.mxu0 0
        %4505 = vmatmul.mubr.bf16.gmra.mrb[0].mxu0 %v4410
        %v4506 = vpop.f32.mrb[0].mxu0
        %v4507 = vadd.f32 %v4386, %v4506
        %v4508 = vpop.f32.mrb[0].mxu0
        %v4509 = vpop.f32.mrb[0].mxu0
        %v4510 = vadd.f32 %v4386, %v4509
        %v4511 = vpop.f32.mrb[0].mxu0
        %4512 = vmatprep.mubr.bf16.mxu0 0
        %4513 = vmatmul.mubr.bf16.gmra.mrb[0].mxu0 %v4413
        %v4514 = vpop.f32.mrb[0].mxu0
        %v4515 = vadd.f32 %v4386, %v4514
        %v4516 = vpop.f32.mrb[0].mxu0
        %v4517 = vpop.f32.mrb[0].mxu0
        %v4518 = vadd.f32 %v4386, %v4517
        %v4519 = vpop.f32.mrb[0].mxu0
        %4520 = vmatprep.mubr.bf16.mxu0 0
        %4521 = vmatmul.mubr.bf16.gmra.mrb[0].mxu0 %v4416
        %v4522 = vpop.f32.mrb[0].mxu0
        %v4523 = vadd.f32 %v4386, %v4522
        %v4524 = vpop.f32.mrb[0].mxu0
        %v4525 = vpop.f32.mrb[0].mxu0
        %v4526 = vadd.f32 %v4386, %v4525
        %v4527 = vpop.f32.mrb[0].mxu0
        %4528 = vmatprep.mubr.bf16.mxu0 0
        %4529 = vmatmul.mubr.bf16.gmra.mrb[0].mxu0 %v4419
        %v4530 = vpop.f32.mrb[0].mxu0
        %v4531 = vadd.f32 %v4386, %v4530
        %v4532 = vpop.f32.mrb[0].mxu0
        %v4533 = vpop.f32.mrb[0].mxu0
        %v4534 = vadd.f32 %v4386, %v4533
        %v4535 = vpop.f32.mrb[0].mxu0
        %4536 = vmatprep.mubr.bf16.mxu0 0
        %4537 = vmatmul.mubr.bf16.gmra.mrb[0].mxu0 %v4422
        %v4538 = vpop.f32.mrb[0].mxu0
        %v4539 = vadd.f32 %v4386, %v4538
        %v4540 = vpop.f32.mrb[0].mxu0
        %v4541 = vpop.f32.mrb[0].mxu0
        %v4542 = vadd.f32 %v4386, %v4541
        %v4543 = vpop.f32.mrb[0].mxu0
        %4544 = vmatprep.mubr.bf16.mxu0 0
        %4545 = vmatmul.mubr.bf16.gmra.mrb[0].mxu0 %v4425
        %v4546 = vpop.f32.mrb[0].mxu0
        %v4547 = vadd.f32 %v4386, %v4546
        %v4548 = vpop.f32.mrb[0].mxu0
        %v4549 = vpop.f32.mrb[0].mxu0
        %v4550 = vadd.f32 %v4386, %v4549
        %v4551 = vpop.f32.mrb[0].mxu0
        %4552 = vmatprep.mubr.bf16.mxu0 0
        %4553 = vmatmul.mubr.bf16.gmra.mrb[0].mxu0 %v4428
        %v4554 = vpop.f32.mrb[0].mxu0
        %v4555 = vadd.f32 %v4386, %v4554
        %v4556 = vpop.f32.mrb[0].mxu0
        %v4557 = vpop.f32.mrb[0].mxu0
        %v4558 = vadd.f32 %v4386, %v4557
        %v4559 = vpop.f32.mrb[0].mxu0
        %4560 = vmatprep.mubr.bf16.mxu0 0
        %4561 = vmatmul.mubr.bf16.gmra.mrb[0].mxu0 %v4431
        %v4562 = vpop.f32.mrb[0].mxu0
        %v4563 = vadd.f32 %v4386, %v4562
        %v4564 = vpop.f32.mrb[0].mxu0
        %v4565 = vpop.f32.mrb[0].mxu0
        %v4566 = vadd.f32 %v4386, %v4565
        %v4567 = vpop.f32.mrb[0].mxu0
        %4568 = vmatprep.mubr.bf16.mxu0 0
        %4569 = vmatmul.mubr.bf16.gmra.mrb[0].mxu0 %v4434
        %v4570 = vpop.f32.mrb[0].mxu0
        %v4571 = vadd.f32 %v4386, %v4570
        %v4572 = vpop.f32.mrb[0].mxu0
        %v4573 = vpop.f32.mrb[0].mxu0
        %v4574 = vadd.f32 %v4386, %v4573
        %v4575 = vpop.f32.mrb[0].mxu0
        %4576 = vmatprep.mubr.bf16.mxu0 0
        %4577 = vmatmul.mubr.bf16.gmra.mrb[0].mxu0 %v4437
        %v4578 = vpop.f32.mrb[0].mxu0
        %v4579 = vadd.f32 %v4386, %v4578
        %v4580 = vpop.f32.mrb[0].mxu0
        %v4581 = vpop.f32.mrb[0].mxu0
        %v4582 = vadd.f32 %v4386, %v4581
        %v4583 = vpop.f32.mrb[0].mxu0
        %4584 = vmatprep.mubr.bf16.mxu0 0
        %4585 = vmatmul.mubr.bf16.gmra.mrb[0].mxu0 %v4440
        %v4586 = vpop.f32.mrb[0].mxu0
        %v4587 = vadd.f32 %v4386, %v4586
        %v4588 = vpop.f32.mrb[0].mxu0
        %v4589 = vpop.f32.mrb[0].mxu0
        %v4590 = vadd.f32 %v4386, %v4589
        %v4591 = vpop.f32.mrb[0].mxu0
        %4592 = vmatprep.mubr.bf16.mxu0 0
        %4593 = vmatmul.mubr.bf16.gmra.mrb[0].mxu0 %v4443
        %v4594 = vpop.f32.mrb[0].mxu0
        %v4595 = vadd.f32 %v4386, %v4594
        %v4596 = vpop.f32.mrb[0].mxu0
        %v4597 = vpop.f32.mrb[0].mxu0
        %v4598 = vadd.f32 %v4386, %v4597
        %v4599 = vpop.f32.mrb[0].mxu0
        %4600 = vmatprep.mubr.bf16.mxu0 0
        %4601 = vmatmul.mubr.bf16.gmra.mrb[0].mxu0 %v4446
        %v4602 = vpop.f32.mrb[0].mxu0
        %v4603 = vadd.f32 %v4386, %v4602
        %v4604 = vpop.f32.mrb[0].mxu0
        %v4605 = vpop.f32.mrb[0].mxu0
        %v4606 = vadd.f32 %v4386, %v4605
        %v4607 = vpop.f32.mrb[0].mxu0
        %4608 = vdwg.mxu0
        %v4609 = vpack.c.bf16 %v4486, %v4483
        %v4610 = vpack.c.bf16 %v4494, %v4491
        %v4611 = vpack.c.bf16 %v4502, %v4499
        %v4612 = vpack.c.bf16 %v4510, %v4507
        %v4613 = vpack.c.bf16 %v4518, %v4515
        %v4614 = vpack.c.bf16 %v4526, %v4523
        %v4615 = vpack.c.bf16 %v4534, %v4531
        %v4616 = vpack.c.bf16 %v4542, %v4539
        %v4617 = vpack.c.bf16 %v4550, %v4547
        %v4618 = vpack.c.bf16 %v4558, %v4555
        %v4619 = vpack.c.bf16 %v4566, %v4563
        %v4620 = vpack.c.bf16 %v4574, %v4571
        %v4621 = vpack.c.bf16 %v4582, %v4579
        %v4622 = vpack.c.bf16 %v4590, %v4587
        %v4623 = vpack.c.bf16 %v4598, %v4595
        %v4624 = vpack.c.bf16 %v4606, %v4603
        %v4625 = vld [vmem:[%s21] sm:$0xf]
        %v4626 = vld [vmem:[%s21 + $0x4] sm:$0xf]
        %v4627 = vld [vmem:[%s21 + $0x8] sm:$0xf]
        %v4628 = vld [vmem:[%s21 + $0xc] sm:$0xf]
        %v4629 = vld [vmem:[%s22] sm:$0x1]
        %v4631 = vlaneseq
        %v4632 = vshrl.u32 %v4631, 7
        %v4633 = vsub.s32 0, %v4632
        %v4634 = vrot.slane %v4629, %v4633
        %v4640 = vunpack.c.l.b16 %v4625
        %v4641 = vunpack.c.l.b16 %v4626
        %v4642 = vunpack.c.l.b16 %v4627
        %v4643 = vunpack.c.l.b16 %v4628
        %v4644 = vpack.c.b16 %v4641, %v4640
        %v4645 = vpack.c.b16 %v4643, %v4642
        %4648 = vmatprep.subr.bf16.mxu0 0
        %4649 = vmatpush1.bf16.msra.mxu0 %v4644
        %4650 = vmatprep.subr.bf16.mxu0 0
        %4651 = vmatpush1.bf16.msra.mxu0 %v4645
        %4652 = vmatprep.subr.bf16.mxu0 0
        %4653 = vmatpush1.bf16.msra.mxu0 0
        %4654 = vmatprep.subr.bf16.mxu0 0
        %4655 = vmatpush1.bf16.msra.mxu0 0
        %4656 = vmatprep.subr.bf16.mxu0 0
        %4657 = vmatpush1.bf16.msra.mxu0 0
        %4658 = vmatprep.subr.bf16.mxu0 0
        %4659 = vmatpush1.bf16.msra.mxu0 0
        %4660 = vmatprep.subr.bf16.mxu0 0
        %4661 = vmatpush1.bf16.msra.mxu0 0
        %4662 = vmatprep.subr.bf16.mxu0 0
        %4663 = vmatpush1.bf16.msra.mxu0 0
        %4664 = vmatprep.subr.bf16.mxu0 0
        %4665 = vmatpush1.bf16.msra.mxu0 0
        %4666 = vmatprep.subr.bf16.mxu0 0
        %4667 = vmatpush1.bf16.msra.mxu0 0
        %4668 = vmatprep.subr.bf16.mxu0 0
        %4669 = vmatpush1.bf16.msra.mxu0 0
        %4670 = vmatprep.subr.bf16.mxu0 0
        %4671 = vmatpush1.bf16.msra.mxu0 0
        %4672 = vmatprep.subr.bf16.mxu0 0
        %4673 = vmatpush1.bf16.msra.mxu0 0
        %4674 = vmatprep.subr.bf16.mxu0 0
        %4675 = vmatpush1.bf16.msra.mxu0 0
        %4676 = vmatprep.subr.bf16.mxu0 0
        %4677 = vmatpush1.bf16.msra.mxu0 0
        %4678 = vmatprep.subr.bf16.mxu0 0
        %4679 = vmatpush1.bf16.msra.mxu0 0
        %4680 = vmatprep.mubr.bf16.mxu0 0
        %4681 = vmatmul.mubr.bf16.gmra.mrb[0].mxu0 %v4401
        %v4682 = vpop.f32.mrb[0].mxu0
        %v4683 = vadd.f32 %v4634, %v4682
        %v4684 = vpop.f32.mrb[0].mxu0
        %v4685 = vpop.f32.mrb[0].mxu0
        %v4686 = vadd.f32 %v4634, %v4685
        %v4687 = vpop.f32.mrb[0].mxu0
        %4688 = vmatprep.mubr.bf16.mxu0 0
        %4689 = vmatmul.mubr.bf16.gmra.mrb[0].mxu0 %v4404
        %v4690 = vpop.f32.mrb[0].mxu0
        %v4691 = vadd.f32 %v4634, %v4690
        %v4692 = vpop.f32.mrb[0].mxu0
        %v4693 = vpop.f32.mrb[0].mxu0
        %v4694 = vadd.f32 %v4634, %v4693
        %v4695 = vpop.f32.mrb[0].mxu0
        %4696 = vmatprep.mubr.bf16.mxu0 0
        %4697 = vmatmul.mubr.bf16.gmra.mrb[0].mxu0 %v4407
        %v4698 = vpop.f32.mrb[0].mxu0
        %v4699 = vadd.f32 %v4634, %v4698
        %v4700 = vpop.f32.mrb[0].mxu0
        %v4701 = vpop.f32.mrb[0].mxu0
        %v4702 = vadd.f32 %v4634, %v4701
        %v4703 = vpop.f32.mrb[0].mxu0
        %4704 = vmatprep.mubr.bf16.mxu0 0
        %4705 = vmatmul.mubr.bf16.gmra.mrb[0].mxu0 %v4410
        %v4706 = vpop.f32.mrb[0].mxu0
        %v4707 = vadd.f32 %v4634, %v4706
        %v4708 = vpop.f32.mrb[0].mxu0
        %v4709 = vpop.f32.mrb[0].mxu0
        %v4710 = vadd.f32 %v4634, %v4709
        %v4711 = vpop.f32.mrb[0].mxu0
        %4712 = vmatprep.mubr.bf16.mxu0 0
        %4713 = vmatmul.mubr.bf16.gmra.mrb[0].mxu0 %v4413
        %v4714 = vpop.f32.mrb[0].mxu0
        %v4715 = vadd.f32 %v4634, %v4714
        %v4716 = vpop.f32.mrb[0].mxu0
        %v4717 = vpop.f32.mrb[0].mxu0
        %v4718 = vadd.f32 %v4634, %v4717
        %v4719 = vpop.f32.mrb[0].mxu0
        %4720 = vmatprep.mubr.bf16.mxu0 0
        %4721 = vmatmul.mubr.bf16.gmra.mrb[0].mxu0 %v4416
        %v4722 = vpop.f32.mrb[0].mxu0
        %v4723 = vadd.f32 %v4634, %v4722
        %v4724 = vpop.f32.mrb[0].mxu0
        %v4725 = vpop.f32.mrb[0].mxu0
        %v4726 = vadd.f32 %v4634, %v4725
        %v4727 = vpop.f32.mrb[0].mxu0
        %4728 = vmatprep.mubr.bf16.mxu0 0
        %4729 = vmatmul.mubr.bf16.gmra.mrb[0].mxu0 %v4419
        %v4730 = vpop.f32.mrb[0].mxu0
        %v4731 = vadd.f32 %v4634, %v4730
        %v4732 = vpop.f32.mrb[0].mxu0
        %v4733 = vpop.f32.mrb[0].mxu0
        %v4734 = vadd.f32 %v4634, %v4733
        %v4735 = vpop.f32.mrb[0].mxu0
        %4736 = vmatprep.mubr.bf16.mxu0 0
        %4737 = vmatmul.mubr.bf16.gmra.mrb[0].mxu0 %v4422
        %v4738 = vpop.f32.mrb[0].mxu0
        %v4739 = vadd.f32 %v4634, %v4738
        %v4740 = vpop.f32.mrb[0].mxu0
        %v4741 = vpop.f32.mrb[0].mxu0
        %v4742 = vadd.f32 %v4634, %v4741
        %v4743 = vpop.f32.mrb[0].mxu0
        %4744 = vmatprep.mubr.bf16.mxu0 0
        %4745 = vmatmul.mubr.bf16.gmra.mrb[0].mxu0 %v4425
        %v4746 = vpop.f32.mrb[0].mxu0
        %v4747 = vadd.f32 %v4634, %v4746
        %v4748 = vpop.f32.mrb[0].mxu0
        %v4749 = vpop.f32.mrb[0].mxu0
        %v4750 = vadd.f32 %v4634, %v4749
        %v4751 = vpop.f32.mrb[0].mxu0
        %4752 = vmatprep.mubr.bf16.mxu0 0
        %4753 = vmatmul.mubr.bf16.gmra.mrb[0].mxu0 %v4428
        %v4754 = vpop.f32.mrb[0].mxu0
        %v4755 = vadd.f32 %v4634, %v4754
        %v4756 = vpop.f32.mrb[0].mxu0
        %v4757 = vpop.f32.mrb[0].mxu0
        %v4758 = vadd.f32 %v4634, %v4757
        %v4759 = vpop.f32.mrb[0].mxu0
        %4760 = vmatprep.mubr.bf16.mxu0 0
        %4761 = vmatmul.mubr.bf16.gmra.mrb[0].mxu0 %v4431
        %v4762 = vpop.f32.mrb[0].mxu0
        %v4763 = vadd.f32 %v4634, %v4762
        %v4764 = vpop.f32.mrb[0].mxu0
        %v4765 = vpop.f32.mrb[0].mxu0
        %v4766 = vadd.f32 %v4634, %v4765
        %v4767 = vpop.f32.mrb[0].mxu0
        %4768 = vmatprep.mubr.bf16.mxu0 0
        %4769 = vmatmul.mubr.bf16.gmra.mrb[0].mxu0 %v4434
        %v4770 = vpop.f32.mrb[0].mxu0
        %v4771 = vadd.f32 %v4634, %v4770
        %v4772 = vpop.f32.mrb[0].mxu0
        %v4773 = vpop.f32.mrb[0].mxu0
        %v4774 = vadd.f32 %v4634, %v4773
        %v4775 = vpop.f32.mrb[0].mxu0
        %4776 = vmatprep.mubr.bf16.mxu0 0
        %4777 = vmatmul.mubr.bf16.gmra.mrb[0].mxu0 %v4437
        %v4778 = vpop.f32.mrb[0].mxu0
        %v4779 = vadd.f32 %v4634, %v4778
        %v4780 = vpop.f32.mrb[0].mxu0
        %v4781 = vpop.f32.mrb[0].mxu0
        %v4782 = vadd.f32 %v4634, %v4781
        %v4783 = vpop.f32.mrb[0].mxu0
        %4784 = vmatprep.mubr.bf16.mxu0 0
        %4785 = vmatmul.mubr.bf16.gmra.mrb[0].mxu0 %v4440
        %v4786 = vpop.f32.mrb[0].mxu0
        %v4787 = vadd.f32 %v4634, %v4786
        %v4788 = vpop.f32.mrb[0].mxu0
        %v4789 = vpop.f32.mrb[0].mxu0
        %v4790 = vadd.f32 %v4634, %v4789
        %v4791 = vpop.f32.mrb[0].mxu0
        %4792 = vmatprep.mubr.bf16.mxu0 0
        %4793 = vmatmul.mubr.bf16.gmra.mrb[0].mxu0 %v4443
        %v4794 = vpop.f32.mrb[0].mxu0
        %v4795 = vadd.f32 %v4634, %v4794
        %v4796 = vpop.f32.mrb[0].mxu0
        %v4797 = vpop.f32.mrb[0].mxu0
        %v4798 = vadd.f32 %v4634, %v4797
        %v4799 = vpop.f32.mrb[0].mxu0
        %4800 = vmatprep.mubr.bf16.mxu0 0
        %4801 = vmatmul.mubr.bf16.gmra.mrb[0].mxu0 %v4446
        %v4802 = vpop.f32.mrb[0].mxu0
        %v4803 = vadd.f32 %v4634, %v4802
        %v4804 = vpop.f32.mrb[0].mxu0
        %v4805 = vpop.f32.mrb[0].mxu0
        %v4806 = vadd.f32 %v4634, %v4805
        %v4807 = vpop.f32.mrb[0].mxu0
        %4808 = vdwg.mxu0
        %v4809 = vpack.c.bf16 %v4686, %v4683
        %v4810 = vpack.c.bf16 %v4694, %v4691
        %v4811 = vpack.c.bf16 %v4702, %v4699
        %v4812 = vpack.c.bf16 %v4710, %v4707
        %v4813 = vpack.c.bf16 %v4718, %v4715
        %v4814 = vpack.c.bf16 %v4726, %v4723
        %v4815 = vpack.c.bf16 %v4734, %v4731
        %v4816 = vpack.c.bf16 %v4742, %v4739
        %v4817 = vpack.c.bf16 %v4750, %v4747
        %v4818 = vpack.c.bf16 %v4758, %v4755
        %v4819 = vpack.c.bf16 %v4766, %v4763
        %v4820 = vpack.c.bf16 %v4774, %v4771
        %v4821 = vpack.c.bf16 %v4782, %v4779
        %v4822 = vpack.c.bf16 %v4790, %v4787
        %v4823 = vpack.c.bf16 %v4798, %v4795
        %v4824 = vpack.c.bf16 %v4806, %v4803
        %v4826 = vsel %vm2065, %v4609, 0
        %v4829 = vsel %vm2065, %v4610, 0
        %v4832 = vsel %vm2065, %v4611, 0
        %v4835 = vsel %vm2065, %v4612, 0
        %v4838 = vsel %vm2065, %v4613, 0
        %v4841 = vsel %vm2065, %v4614, 0
        %v4844 = vsel %vm2065, %v4615, 0
        %v4847 = vsel %vm2065, %v4616, 0
        %4849 = vmatprep.subr.bf16.mxu0 %v4362
        %4850 = vmatpush1.bf16.msra.mxu0 %v4361
        %4851 = vmatprep.subr.bf16.mxu0 %v4364
        %4852 = vmatpush1.bf16.msra.mxu0 %v4363
        %4853 = vmatprep.subr.bf16.mxu0 0
        %4854 = vmatpush1.bf16.msra.mxu0 0
        %4855 = vmatprep.subr.bf16.mxu0 0
        %4856 = vmatpush1.bf16.msra.mxu0 0
        %4857 = vmatprep.subr.bf16.mxu0 0
        %4858 = vmatpush1.bf16.msra.mxu0 0
        %4859 = vmatprep.subr.bf16.mxu0 0
        %4860 = vmatpush1.bf16.msra.mxu0 0
        %4861 = vmatprep.subr.bf16.mxu0 0
        %4862 = vmatpush1.bf16.msra.mxu0 0
        %4863 = vmatprep.subr.bf16.mxu0 0
        %4864 = vmatpush1.bf16.msra.mxu0 0
        %4865 = vmatprep.subr.bf16.mxu0 0
        %4866 = vmatpush1.bf16.msra.mxu0 0
        %4867 = vmatprep.subr.bf16.mxu0 0
        %4868 = vmatpush1.bf16.msra.mxu0 0
        %4869 = vmatprep.subr.bf16.mxu0 0
        %4870 = vmatpush1.bf16.msra.mxu0 0
        %4871 = vmatprep.subr.bf16.mxu0 0
        %4872 = vmatpush1.bf16.msra.mxu0 0
        %4873 = vmatprep.subr.bf16.mxu0 0
        %4874 = vmatpush1.bf16.msra.mxu0 0
        %4875 = vmatprep.subr.bf16.mxu0 0
        %4876 = vmatpush1.bf16.msra.mxu0 0
        %4877 = vmatprep.subr.bf16.mxu0 0
        %4878 = vmatpush1.bf16.msra.mxu0 0
        %4879 = vmatprep.subr.bf16.mxu0 0
        %4880 = vmatpush1.bf16.msra.mxu0 0
        %4881 = vmatprep.mubr.bf16.mxu0 0
        %4882 = vmatmul.mubr.bf16.gmra.mrb[0].mxu0 %v4826
        %v4883 = vpop.f32.mrb[0].mxu0
        %v4884 = vadd.f32 0.0, %v4883
        %v4885 = vpop.f32.mrb[0].mxu0
        %v4886 = vadd.f32 0.0, %v4885
        %v4887 = vpop.f32.mrb[0].mxu0
        %v4888 = vadd.f32 0.0, %v4887
        %v4889 = vpop.f32.mrb[0].mxu0
        %v4890 = vadd.f32 0.0, %v4889
        %4891 = vmatprep.mubr.bf16.mxu0 0
        %4892 = vmatmul.mubr.bf16.gmra.mrb[0].mxu0 %v4829
        %v4893 = vpop.f32.mrb[0].mxu0
        %v4894 = vadd.f32 0.0, %v4893
        %v4895 = vpop.f32.mrb[0].mxu0
        %v4896 = vadd.f32 0.0, %v4895
        %v4897 = vpop.f32.mrb[0].mxu0
        %v4898 = vadd.f32 0.0, %v4897
        %v4899 = vpop.f32.mrb[0].mxu0
        %v4900 = vadd.f32 0.0, %v4899
        %4901 = vmatprep.mubr.bf16.mxu0 0
        %4902 = vmatmul.mubr.bf16.gmra.mrb[0].mxu0 %v4832
        %v4903 = vpop.f32.mrb[0].mxu0
        %v4904 = vadd.f32 0.0, %v4903
        %v4905 = vpop.f32.mrb[0].mxu0
        %v4906 = vadd.f32 0.0, %v4905
        %v4907 = vpop.f32.mrb[0].mxu0
        %v4908 = vadd.f32 0.0, %v4907
        %v4909 = vpop.f32.mrb[0].mxu0
        %v4910 = vadd.f32 0.0, %v4909
        %4911 = vmatprep.mubr.bf16.mxu0 0
        %4912 = vmatmul.mubr.bf16.gmra.mrb[0].mxu0 %v4835
        %v4913 = vpop.f32.mrb[0].mxu0
        %v4914 = vadd.f32 0.0, %v4913
        %v4915 = vpop.f32.mrb[0].mxu0
        %v4916 = vadd.f32 0.0, %v4915
        %v4917 = vpop.f32.mrb[0].mxu0
        %v4918 = vadd.f32 0.0, %v4917
        %v4919 = vpop.f32.mrb[0].mxu0
        %v4920 = vadd.f32 0.0, %v4919
        %4921 = vmatprep.mubr.bf16.mxu0 0
        %4922 = vmatmul.mubr.bf16.gmra.mrb[0].mxu0 %v4838
        %v4923 = vpop.f32.mrb[0].mxu0
        %v4924 = vadd.f32 0.0, %v4923
        %v4925 = vpop.f32.mrb[0].mxu0
        %v4926 = vadd.f32 0.0, %v4925
        %v4927 = vpop.f32.mrb[0].mxu0
        %v4928 = vadd.f32 0.0, %v4927
        %v4929 = vpop.f32.mrb[0].mxu0
        %v4930 = vadd.f32 0.0, %v4929
        %4931 = vmatprep.mubr.bf16.mxu0 0
        %4932 = vmatmul.mubr.bf16.gmra.mrb[0].mxu0 %v4841
        %v4933 = vpop.f32.mrb[0].mxu0
        %v4934 = vadd.f32 0.0, %v4933
        %v4935 = vpop.f32.mrb[0].mxu0
        %v4936 = vadd.f32 0.0, %v4935
        %v4937 = vpop.f32.mrb[0].mxu0
        %v4938 = vadd.f32 0.0, %v4937
        %v4939 = vpop.f32.mrb[0].mxu0
        %v4940 = vadd.f32 0.0, %v4939
        %4941 = vmatprep.mubr.bf16.mxu0 0
        %4942 = vmatmul.mubr.bf16.gmra.mrb[0].mxu0 %v4844
        %v4943 = vpop.f32.mrb[0].mxu0
        %v4944 = vadd.f32 0.0, %v4943
        %v4945 = vpop.f32.mrb[0].mxu0
        %v4946 = vadd.f32 0.0, %v4945
        %v4947 = vpop.f32.mrb[0].mxu0
        %v4948 = vadd.f32 0.0, %v4947
        %v4949 = vpop.f32.mrb[0].mxu0
        %v4950 = vadd.f32 0.0, %v4949
        %4951 = vmatprep.mubr.bf16.mxu0 0
        %4952 = vmatmul.mubr.bf16.gmra.mrb[0].mxu0 %v4847
        %v4953 = vpop.f32.mrb[0].mxu0
        %v4954 = vadd.f32 0.0, %v4953
        %v4955 = vpop.f32.mrb[0].mxu0
        %v4956 = vadd.f32 0.0, %v4955
        %v4957 = vpop.f32.mrb[0].mxu0
        %v4958 = vadd.f32 0.0, %v4957
        %v4959 = vpop.f32.mrb[0].mxu0
        %v4960 = vadd.f32 0.0, %v4959
        %4961 = vdwg.mxu0
        %v4962 = vmax.f32 %v4884, %v4886
        %4963 = vmax.xlane.f32.xlu0 %v4962
        %v4964 = vpop.xlane.xlu0 %4963
        %v4965 = vmax.f32 %v4888, %v4890
        %4966 = vmax.xlane.f32.xlu0 %v4965
        %v4967 = vpop.xlane.xlu0 %4966
        %v4968 = vmax.f32 %v4894, %v4896
        %4969 = vmax.xlane.f32.xlu0 %v4968
        %v4970 = vpop.xlane.xlu0 %4969
        %v4971 = vmax.f32 %v4898, %v4900
        %4972 = vmax.xlane.f32.xlu0 %v4971
        %v4973 = vpop.xlane.xlu0 %4972
        %v4974 = vmax.f32 %v4904, %v4906
        %4975 = vmax.xlane.f32.xlu0 %v4974
        %v4976 = vpop.xlane.xlu0 %4975
        %v4977 = vmax.f32 %v4908, %v4910
        %4978 = vmax.xlane.f32.xlu0 %v4977
        %v4979 = vpop.xlane.xlu0 %4978
        %v4980 = vmax.f32 %v4914, %v4916
        %4981 = vmax.xlane.f32.xlu0 %v4980
        %v4982 = vpop.xlane.xlu0 %4981
        %v4983 = vmax.f32 %v4918, %v4920
        %4984 = vmax.xlane.f32.xlu0 %v4983
        %v4985 = vpop.xlane.xlu0 %4984
        %v4986 = vmax.f32 %v4924, %v4926
        %4987 = vmax.xlane.f32.xlu0 %v4986
        %v4988 = vpop.xlane.xlu0 %4987
        %v4989 = vmax.f32 %v4928, %v4930
        %4990 = vmax.xlane.f32.xlu0 %v4989
        %v4991 = vpop.xlane.xlu0 %4990
        %v4992 = vmax.f32 %v4934, %v4936
        %4993 = vmax.xlane.f32.xlu0 %v4992
        %v4994 = vpop.xlane.xlu0 %4993
        %v4995 = vmax.f32 %v4938, %v4940
        %4996 = vmax.xlane.f32.xlu0 %v4995
        %v4997 = vpop.xlane.xlu0 %4996
        %v4998 = vmax.f32 %v4944, %v4946
        %4999 = vmax.xlane.f32.xlu0 %v4998
        %v5000 = vpop.xlane.xlu0 %4999
        %v5001 = vmax.f32 %v4948, %v4950
        %5002 = vmax.xlane.f32.xlu0 %v5001
        %v5003 = vpop.xlane.xlu0 %5002
        %v5004 = vmax.f32 %v4954, %v4956
        %5005 = vmax.xlane.f32.xlu0 %v5004
        %v5006 = vpop.xlane.xlu0 %5005
        %v5007 = vmax.f32 %v4958, %v4960
        %5008 = vmax.xlane.f32.xlu0 %v5007
        %v5009 = vpop.xlane.xlu0 %5008
        %v5010 = vsub.f32 %v4884, %v4964
        %v5011 = vsub.f32 %v4886, %v4964
        %v5012 = vsub.f32 %v4888, %v4967
        %v5013 = vsub.f32 %v4890, %v4967
        %v5014 = vsub.f32 %v4894, %v4970
        %v5015 = vsub.f32 %v4896, %v4970
        %v5016 = vsub.f32 %v4898, %v4973
        %v5017 = vsub.f32 %v4900, %v4973
        %v5018 = vsub.f32 %v4904, %v4976
        %v5019 = vsub.f32 %v4906, %v4976
        %v5020 = vsub.f32 %v4908, %v4979
        %v5021 = vsub.f32 %v4910, %v4979
        %v5022 = vsub.f32 %v4914, %v4982
        %v5023 = vsub.f32 %v4916, %v4982
        %v5024 = vsub.f32 %v4918, %v4985
        %v5025 = vsub.f32 %v4920, %v4985
        %v5026 = vsub.f32 %v4924, %v4988
        %v5027 = vsub.f32 %v4926, %v4988
        %v5028 = vsub.f32 %v4928, %v4991
        %v5029 = vsub.f32 %v4930, %v4991
        %v5030 = vsub.f32 %v4934, %v4994
        %v5031 = vsub.f32 %v4936, %v4994
        %v5032 = vsub.f32 %v4938, %v4997
        %v5033 = vsub.f32 %v4940, %v4997
        %v5034 = vsub.f32 %v4944, %v5000
        %v5035 = vsub.f32 %v4946, %v5000
        %v5036 = vsub.f32 %v4948, %v5003
        %v5037 = vsub.f32 %v4950, %v5003
        %v5038 = vsub.f32 %v4954, %v5006
        %v5039 = vsub.f32 %v4956, %v5006
        %v5040 = vsub.f32 %v4958, %v5009
        %v5041 = vsub.f32 %v4960, %v5009
        %v5042 = vmul.f32 %v5010, 1.442695
        %v5043 = vpow.pop %v5042
        %v5044 = vmul.f32 %v5011, 1.442695
        %v5045 = vpow.pop %v5044
        %v5046 = vmul.f32 %v5012, 1.442695
        %v5047 = vpow.pop %v5046
        %v5048 = vmul.f32 %v5013, 1.442695
        %v5049 = vpow.pop %v5048
        %v5050 = vmul.f32 %v5014, 1.442695
        %v5051 = vpow.pop %v5050
        %v5052 = vmul.f32 %v5015, 1.442695
        %v5053 = vpow.pop %v5052
        %v5054 = vmul.f32 %v5016, 1.442695
        %v5055 = vpow.pop %v5054
        %v5056 = vmul.f32 %v5017, 1.442695
        %v5057 = vpow.pop %v5056
        %v5058 = vmul.f32 %v5018, 1.442695
        %v5059 = vpow.pop %v5058
        %v5060 = vmul.f32 %v5019, 1.442695
        %v5061 = vpow.pop %v5060
        %v5062 = vmul.f32 %v5020, 1.442695
        %v5063 = vpow.pop %v5062
        %v5064 = vmul.f32 %v5021, 1.442695
        %v5065 = vpow.pop %v5064
        %v5066 = vmul.f32 %v5022, 1.442695
        %v5067 = vpow.pop %v5066
        %v5068 = vmul.f32 %v5023, 1.442695
        %v5069 = vpow.pop %v5068
        %v5070 = vmul.f32 %v5024, 1.442695
        %v5071 = vpow.pop %v5070
        %v5072 = vmul.f32 %v5025, 1.442695
        %v5073 = vpow.pop %v5072
        %v5074 = vmul.f32 %v5026, 1.442695
        %v5075 = vpow.pop %v5074
        %v5076 = vmul.f32 %v5027, 1.442695
        %v5077 = vpow.pop %v5076
        %v5078 = vmul.f32 %v5028, 1.442695
        %v5079 = vpow.pop %v5078
        %v5080 = vmul.f32 %v5029, 1.442695
        %v5081 = vpow.pop %v5080
        %v5082 = vmul.f32 %v5030, 1.442695
        %v5083 = vpow.pop %v5082
        %v5084 = vmul.f32 %v5031, 1.442695
        %v5085 = vpow.pop %v5084
        %v5086 = vmul.f32 %v5032, 1.442695
        %v5087 = vpow.pop %v5086
        %v5088 = vmul.f32 %v5033, 1.442695
        %v5089 = vpow.pop %v5088
        %v5090 = vmul.f32 %v5034, 1.442695
        %v5091 = vpow.pop %v5090
        %v5092 = vmul.f32 %v5035, 1.442695
        %v5093 = vpow.pop %v5092
        %v5094 = vmul.f32 %v5036, 1.442695
        %v5095 = vpow.pop %v5094
        %v5096 = vmul.f32 %v5037, 1.442695
        %v5097 = vpow.pop %v5096
        %v5098 = vmul.f32 %v5038, 1.442695
        %v5099 = vpow.pop %v5098
        %v5100 = vmul.f32 %v5039, 1.442695
        %v5101 = vpow.pop %v5100
        %v5102 = vmul.f32 %v5040, 1.442695
        %v5103 = vpow.pop %v5102
        %v5104 = vmul.f32 %v5041, 1.442695
        %v5105 = vpow.pop %v5104
        %v5106 = vadd.f32 %v5043, %v5045
        %5107 = vadd.xlane.f32.xlu0 %v5106
        %v5108 = vpop.xlane.xlu0 %5107
        %v5109 = vadd.f32 %v5047, %v5049
        %5110 = vadd.xlane.f32.xlu0 %v5109
        %v5111 = vpop.xlane.xlu0 %5110
        %v5112 = vadd.f32 %v5051, %v5053
        %5113 = vadd.xlane.f32.xlu0 %v5112
        %v5114 = vpop.xlane.xlu0 %5113
        %v5115 = vadd.f32 %v5055, %v5057
        %5116 = vadd.xlane.f32.xlu0 %v5115
        %v5117 = vpop.xlane.xlu0 %5116
        %v5118 = vadd.f32 %v5059, %v5061
        %5119 = vadd.xlane.f32.xlu0 %v5118
        %v5120 = vpop.xlane.xlu0 %5119
        %v5121 = vadd.f32 %v5063, %v5065
        %5122 = vadd.xlane.f32.xlu0 %v5121
        %v5123 = vpop.xlane.xlu0 %5122
        %v5124 = vadd.f32 %v5067, %v5069
        %5125 = vadd.xlane.f32.xlu0 %v5124
        %v5126 = vpop.xlane.xlu0 %5125
        %v5127 = vadd.f32 %v5071, %v5073
        %5128 = vadd.xlane.f32.xlu0 %v5127
        %v5129 = vpop.xlane.xlu0 %5128
        %v5130 = vadd.f32 %v5075, %v5077
        %5131 = vadd.xlane.f32.xlu0 %v5130
        %v5132 = vpop.xlane.xlu0 %5131
        %v5133 = vadd.f32 %v5079, %v5081
        %5134 = vadd.xlane.f32.xlu0 %v5133
        %v5135 = vpop.xlane.xlu0 %5134
        %v5136 = vadd.f32 %v5083, %v5085
        %5137 = vadd.xlane.f32.xlu0 %v5136
        %v5138 = vpop.xlane.xlu0 %5137
        %v5139 = vadd.f32 %v5087, %v5089
        %5140 = vadd.xlane.f32.xlu0 %v5139
        %v5141 = vpop.xlane.xlu0 %5140
        %v5142 = vadd.f32 %v5091, %v5093
        %5143 = vadd.xlane.f32.xlu0 %v5142
        %v5144 = vpop.xlane.xlu0 %5143
        %v5145 = vadd.f32 %v5095, %v5097
        %5146 = vadd.xlane.f32.xlu0 %v5145
        %v5147 = vpop.xlane.xlu0 %5146
        %v5148 = vadd.f32 %v5099, %v5101
        %5149 = vadd.xlane.f32.xlu0 %v5148
        %v5150 = vpop.xlane.xlu0 %5149
        %v5151 = vadd.f32 %v5103, %v5105
        %5152 = vadd.xlane.f32.xlu0 %v5151
        %v5153 = vpop.xlane.xlu0 %5152
        %v5154 = vrcp.pop %v5108
        %v5155 = vrcp.pop %v5111
        %v5156 = vrcp.pop %v5114
        %v5157 = vrcp.pop %v5117
        %v5158 = vrcp.pop %v5120
        %v5159 = vrcp.pop %v5123
        %v5160 = vrcp.pop %v5126
        %v5161 = vrcp.pop %v5129
        %v5162 = vrcp.pop %v5132
        %v5163 = vrcp.pop %v5135
        %v5164 = vrcp.pop %v5138
        %v5165 = vrcp.pop %v5141
        %v5166 = vrcp.pop %v5144
        %v5167 = vrcp.pop %v5147
        %v5168 = vrcp.pop %v5150
        %v5169 = vrcp.pop %v5153
        %v5170 = vmul.f32 %v5043, %v5154
        %v5171 = vmul.f32 %v5045, %v5154
        %v5172 = vmul.f32 %v5047, %v5155
        %v5173 = vmul.f32 %v5049, %v5155
        %v5174 = vmul.f32 %v5051, %v5156
        %v5175 = vmul.f32 %v5053, %v5156
        %v5176 = vmul.f32 %v5055, %v5157
        %v5177 = vmul.f32 %v5057, %v5157
        %v5178 = vmul.f32 %v5059, %v5158
        %v5179 = vmul.f32 %v5061, %v5158
        %v5180 = vmul.f32 %v5063, %v5159
        %v5181 = vmul.f32 %v5065, %v5159
        %v5182 = vmul.f32 %v5067, %v5160
        %v5183 = vmul.f32 %v5069, %v5160
        %v5184 = vmul.f32 %v5071, %v5161
        %v5185 = vmul.f32 %v5073, %v5161
        %v5186 = vmul.f32 %v5075, %v5162
        %v5187 = vmul.f32 %v5077, %v5162
        %v5188 = vmul.f32 %v5079, %v5163
        %v5189 = vmul.f32 %v5081, %v5163
        %v5190 = vmul.f32 %v5083, %v5164
        %v5191 = vmul.f32 %v5085, %v5164
        %v5192 = vmul.f32 %v5087, %v5165
        %v5193 = vmul.f32 %v5089, %v5165
        %v5194 = vmul.f32 %v5091, %v5166
        %v5195 = vmul.f32 %v5093, %v5166
        %v5196 = vmul.f32 %v5095, %v5167
        %v5197 = vmul.f32 %v5097, %v5167
        %v5198 = vmul.f32 %v5099, %v5168
        %v5199 = vmul.f32 %v5101, %v5168
        %v5200 = vmul.f32 %v5103, %v5169
        %v5201 = vmul.f32 %v5105, %v5169
        %v5202 = vpack.c.bf16 %v5172, %v5170
        %v5203 = vpack.c.bf16 %v5173, %v5171
        %v5204 = vpack.c.bf16 %v5176, %v5174
        %v5205 = vpack.c.bf16 %v5177, %v5175
        %v5206 = vpack.c.bf16 %v5180, %v5178
        %v5207 = vpack.c.bf16 %v5181, %v5179
        %v5208 = vpack.c.bf16 %v5184, %v5182
        %v5209 = vpack.c.bf16 %v5185, %v5183
        %v5210 = vpack.c.bf16 %v5188, %v5186
        %v5211 = vpack.c.bf16 %v5189, %v5187
        %v5212 = vpack.c.bf16 %v5192, %v5190
        %v5213 = vpack.c.bf16 %v5193, %v5191
        %v5214 = vpack.c.bf16 %v5196, %v5194
        %v5215 = vpack.c.bf16 %v5197, %v5195
        %v5216 = vpack.c.bf16 %v5200, %v5198
        %v5217 = vpack.c.bf16 %v5201, %v5199
        %5218 = vmatprep.subr.bf16.mxu0 0
        %5219 = vmatpush1.bf16.msra.mxu0 %v4809
        %5220 = vmatprep.subr.bf16.mxu0 0
        %5221 = vmatpush1.bf16.msra.mxu0 %v4810
        %5222 = vmatprep.subr.bf16.mxu0 0
        %5223 = vmatpush1.bf16.msra.mxu0 %v4811
        %5224 = vmatprep.subr.bf16.mxu0 0
        %5225 = vmatpush1.bf16.msra.mxu0 %v4812
        %5226 = vmatprep.subr.bf16.mxu0 0
        %5227 = vmatpush1.bf16.msra.mxu0 %v4813
        %5228 = vmatprep.subr.bf16.mxu0 0
        %5229 = vmatpush1.bf16.msra.mxu0 %v4814
        %5230 = vmatprep.subr.bf16.mxu0 0
        %5231 = vmatpush1.bf16.msra.mxu0 %v4815
        %5232 = vmatprep.subr.bf16.mxu0 0
        %5233 = vmatpush1.bf16.msra.mxu0 %v4816
        %5234 = vmatprep.subr.bf16.mxu0 0
        %5235 = vmatpush1.bf16.msra.mxu0 %v4817
        %5236 = vmatprep.subr.bf16.mxu0 0
        %5237 = vmatpush1.bf16.msra.mxu0 %v4818
        %5238 = vmatprep.subr.bf16.mxu0 0
        %5239 = vmatpush1.bf16.msra.mxu0 %v4819
        %5240 = vmatprep.subr.bf16.mxu0 0
        %5241 = vmatpush1.bf16.msra.mxu0 %v4820
        %5242 = vmatprep.subr.bf16.mxu0 0
        %5243 = vmatpush1.bf16.msra.mxu0 %v4821
        %5244 = vmatprep.subr.bf16.mxu0 0
        %5245 = vmatpush1.bf16.msra.mxu0 %v4822
        %5246 = vmatprep.subr.bf16.mxu0 0
        %5247 = vmatpush1.bf16.msra.mxu0 %v4823
        %5248 = vmatprep.subr.bf16.mxu0 0
        %5249 = vmatpush1.bf16.msra.mxu0 %v4824
        %5250 = vmatprep.mubr.bf16.mxu0 %v5203
        %5251 = vmatmul.mubr.bf16.gmra.mrb[0].mxu0 %v5202
        %v5252 = vpop.f32.mrb[0].mxu0
        %v5253 = vadd.f32 0.0, %v5252
        %v5254 = vpop.f32.mrb[0].mxu0
        %v5255 = vpop.f32.mrb[0].mxu0
        %v5256 = vadd.f32 0.0, %v5255
        %v5257 = vpop.f32.mrb[0].mxu0
        %5258 = vmatprep.mubr.bf16.mxu0 %v5205
        %5259 = vmatmul.mubr.bf16.gmra.mrb[0].mxu0 %v5204
        %v5260 = vpop.f32.mrb[0].mxu0
        %v5261 = vadd.f32 0.0, %v5260
        %v5262 = vpop.f32.mrb[0].mxu0
        %v5263 = vpop.f32.mrb[0].mxu0
        %v5264 = vadd.f32 0.0, %v5263
        %v5265 = vpop.f32.mrb[0].mxu0
        %5266 = vmatprep.mubr.bf16.mxu0 %v5207
        %5267 = vmatmul.mubr.bf16.gmra.mrb[0].mxu0 %v5206
        %v5268 = vpop.f32.mrb[0].mxu0
        %v5269 = vadd.f32 0.0, %v5268
        %v5270 = vpop.f32.mrb[0].mxu0
        %v5271 = vpop.f32.mrb[0].mxu0
        %v5272 = vadd.f32 0.0, %v5271
        %v5273 = vpop.f32.mrb[0].mxu0
        %5274 = vmatprep.mubr.bf16.mxu0 %v5209
        %5275 = vmatmul.mubr.bf16.gmra.mrb[0].mxu0 %v5208
        %v5276 = vpop.f32.mrb[0].mxu0
        %v5277 = vadd.f32 0.0, %v5276
        %v5278 = vpop.f32.mrb[0].mxu0
        %v5279 = vpop.f32.mrb[0].mxu0
        %v5280 = vadd.f32 0.0, %v5279
        %v5281 = vpop.f32.mrb[0].mxu0
        %5282 = vmatprep.mubr.bf16.mxu0 %v5211
        %5283 = vmatmul.mubr.bf16.gmra.mrb[0].mxu0 %v5210
        %v5284 = vpop.f32.mrb[0].mxu0
        %v5285 = vadd.f32 0.0, %v5284
        %v5286 = vpop.f32.mrb[0].mxu0
        %v5287 = vpop.f32.mrb[0].mxu0
        %v5288 = vadd.f32 0.0, %v5287
        %v5289 = vpop.f32.mrb[0].mxu0
        %5290 = vmatprep.mubr.bf16.mxu0 %v5213
        %5291 = vmatmul.mubr.bf16.gmra.mrb[0].mxu0 %v5212
        %v5292 = vpop.f32.mrb[0].mxu0
        %v5293 = vadd.f32 0.0, %v5292
        %v5294 = vpop.f32.mrb[0].mxu0
        %v5295 = vpop.f32.mrb[0].mxu0
        %v5296 = vadd.f32 0.0, %v5295
        %v5297 = vpop.f32.mrb[0].mxu0
        %5298 = vmatprep.mubr.bf16.mxu0 %v5215
        %5299 = vmatmul.mubr.bf16.gmra.mrb[0].mxu0 %v5214
        %v5300 = vpop.f32.mrb[0].mxu0
        %v5301 = vadd.f32 0.0, %v5300
        %v5302 = vpop.f32.mrb[0].mxu0
        %v5303 = vpop.f32.mrb[0].mxu0
        %v5304 = vadd.f32 0.0, %v5303
        %v5305 = vpop.f32.mrb[0].mxu0
        %5306 = vmatprep.mubr.bf16.mxu0 %v5217
        %5307 = vmatmul.mubr.bf16.gmra.mrb[0].mxu0 %v5216
        %v5308 = vpop.f32.mrb[0].mxu0
        %v5309 = vadd.f32 0.0, %v5308
        %v5310 = vpop.f32.mrb[0].mxu0
        %v5311 = vpop.f32.mrb[0].mxu0
        %v5312 = vadd.f32 0.0, %v5311
        %v5313 = vpop.f32.mrb[0].mxu0
        %5314 = vdwg.mxu0
        %v5315 = vpack.c.bf16 %v5256, %v5253
        %v5316 = vpack.c.bf16 %v5264, %v5261
        %v5317 = vpack.c.bf16 %v5272, %v5269
        %v5318 = vpack.c.bf16 %v5280, %v5277
        %v5319 = vpack.c.bf16 %v5288, %v5285
        %v5320 = vpack.c.bf16 %v5296, %v5293
        %v5321 = vpack.c.bf16 %v5304, %v5301
        %v5322 = vpack.c.bf16 %v5312, %v5309
        %v5323 = vld [vmem:[%s23] sm:$0xf]
        %v5324 = vld [vmem:[%s23 + $0x4] sm:$0xf]
        %v5325 = vld [vmem:[%s23 + $0x8] sm:$0xf]
        %v5326 = vld [vmem:[%s23 + $0xc] sm:$0xf]
        %5335 = vrot.lane.b32.xlu0 %v4609, 96
        %v5336 = vpop.permute.xlu0 %5335
        %5337 = vrot.lane.b32.xlu0 %v4610, 96
        %v5338 = vpop.permute.xlu0 %5337
        %5339 = vrot.lane.b32.xlu0 %v4611, 96
        %v5340 = vpop.permute.xlu0 %5339
        %5341 = vrot.lane.b32.xlu0 %v4612, 96
        %v5342 = vpop.permute.xlu0 %5341
        %5343 = vrot.lane.b32.xlu0 %v4613, 96
        %v5344 = vpop.permute.xlu0 %5343
        %5345 = vrot.lane.b32.xlu0 %v4614, 96
        %v5346 = vpop.permute.xlu0 %5345
        %5347 = vrot.lane.b32.xlu0 %v4615, 96
        %v5348 = vpop.permute.xlu0 %5347
        %5349 = vrot.lane.b32.xlu0 %v4616, 96
        %v5350 = vpop.permute.xlu0 %5349
        %v5352 = vsel %vm2065, %v5336, 0
        %v5355 = vsel %vm2065, %v5338, 0
        %v5358 = vsel %vm2065, %v5340, 0
        %v5361 = vsel %vm2065, %v5342, 0
        %v5364 = vsel %vm2065, %v5344, 0
        %v5367 = vsel %vm2065, %v5346, 0
        %v5370 = vsel %vm2065, %v5348, 0
        %v5373 = vsel %vm2065, %v5350, 0
        %5375 = vmatprep.subr.bf16.mxu0 %v4366
        %5376 = vmatpush1.bf16.msra.mxu0 %v4365
        %5377 = vmatprep.subr.bf16.mxu0 %v4368
        %5378 = vmatpush1.bf16.msra.mxu0 %v4367
        %5379 = vmatprep.subr.bf16.mxu0 0
        %5380 = vmatpush1.bf16.msra.mxu0 0
        %5381 = vmatprep.subr.bf16.mxu0 0
        %5382 = vmatpush1.bf16.msra.mxu0 0
        %5383 = vmatprep.subr.bf16.mxu0 0
        %5384 = vmatpush1.bf16.msra.mxu0 0
        %5385 = vmatprep.subr.bf16.mxu0 0
        %5386 = vmatpush1.bf16.msra.mxu0 0
        %5387 = vmatprep.subr.bf16.mxu0 0
        %5388 = vmatpush1.bf16.msra.mxu0 0
        %5389 = vmatprep.subr.bf16.mxu0 0
        %5390 = vmatpush1.bf16.msra.mxu0 0
        %5391 = vmatprep.subr.bf16.mxu0 0
        %5392 = vmatpush1.bf16.msra.mxu0 0
        %5393 = vmatprep.subr.bf16.mxu0 0
        %5394 = vmatpush1.bf16.msra.mxu0 0
        %5395 = vmatprep.subr.bf16.mxu0 0
        %5396 = vmatpush1.bf16.msra.mxu0 0
        %5397 = vmatprep.subr.bf16.mxu0 0
        %5398 = vmatpush1.bf16.msra.mxu0 0
        %5399 = vmatprep.subr.bf16.mxu0 0
        %5400 = vmatpush1.bf16.msra.mxu0 0
        %5401 = vmatprep.subr.bf16.mxu0 0
        %5402 = vmatpush1.bf16.msra.mxu0 0
        %5403 = vmatprep.subr.bf16.mxu0 0
        %5404 = vmatpush1.bf16.msra.mxu0 0
        %5405 = vmatprep.subr.bf16.mxu0 0
        %5406 = vmatpush1.bf16.msra.mxu0 0
        %5407 = vmatprep.mubr.bf16.mxu0 0
        %5408 = vmatmul.mubr.bf16.gmra.mrb[0].mxu0 %v5352
        %v5409 = vpop.f32.mrb[0].mxu0
        %v5410 = vadd.f32 0.0, %v5409
        %v5411 = vpop.f32.mrb[0].mxu0
        %v5412 = vadd.f32 0.0, %v5411
        %v5413 = vpop.f32.mrb[0].mxu0
        %v5414 = vadd.f32 0.0, %v5413
        %v5415 = vpop.f32.mrb[0].mxu0
        %v5416 = vadd.f32 0.0, %v5415
        %5417 = vmatprep.mubr.bf16.mxu0 0
        %5418 = vmatmul.mubr.bf16.gmra.mrb[0].mxu0 %v5355
        %v5419 = vpop.f32.mrb[0].mxu0
        %v5420 = vadd.f32 0.0, %v5419
        %v5421 = vpop.f32.mrb[0].mxu0
        %v5422 = vadd.f32 0.0, %v5421
        %v5423 = vpop.f32.mrb[0].mxu0
        %v5424 = vadd.f32 0.0, %v5423
        %v5425 = vpop.f32.mrb[0].mxu0
        %v5426 = vadd.f32 0.0, %v5425
        %5427 = vmatprep.mubr.bf16.mxu0 0
        %5428 = vmatmul.mubr.bf16.gmra.mrb[0].mxu0 %v5358
        %v5429 = vpop.f32.mrb[0].mxu0
        %v5430 = vadd.f32 0.0, %v5429
        %v5431 = vpop.f32.mrb[0].mxu0
        %v5432 = vadd.f32 0.0, %v5431
        %v5433 = vpop.f32.mrb[0].mxu0
        %v5434 = vadd.f32 0.0, %v5433
        %v5435 = vpop.f32.mrb[0].mxu0
        %v5436 = vadd.f32 0.0, %v5435
        %5437 = vmatprep.mubr.bf16.mxu0 0
        %5438 = vmatmul.mubr.bf16.gmra.mrb[0].mxu0 %v5361
        %v5439 = vpop.f32.mrb[0].mxu0
        %v5440 = vadd.f32 0.0, %v5439
        %v5441 = vpop.f32.mrb[0].mxu0
        %v5442 = vadd.f32 0.0, %v5441
        %v5443 = vpop.f32.mrb[0].mxu0
        %v5444 = vadd.f32 0.0, %v5443
        %v5445 = vpop.f32.mrb[0].mxu0
        %v5446 = vadd.f32 0.0, %v5445
        %5447 = vmatprep.mubr.bf16.mxu0 0
        %5448 = vmatmul.mubr.bf16.gmra.mrb[0].mxu0 %v5364
        %v5449 = vpop.f32.mrb[0].mxu0
        %v5450 = vadd.f32 0.0, %v5449
        %v5451 = vpop.f32.mrb[0].mxu0
        %v5452 = vadd.f32 0.0, %v5451
        %v5453 = vpop.f32.mrb[0].mxu0
        %v5454 = vadd.f32 0.0, %v5453
        %v5455 = vpop.f32.mrb[0].mxu0
        %v5456 = vadd.f32 0.0, %v5455
        %5457 = vmatprep.mubr.bf16.mxu0 0
        %5458 = vmatmul.mubr.bf16.gmra.mrb[0].mxu0 %v5367
        %v5459 = vpop.f32.mrb[0].mxu0
        %v5460 = vadd.f32 0.0, %v5459
        %v5461 = vpop.f32.mrb[0].mxu0
        %v5462 = vadd.f32 0.0, %v5461
        %v5463 = vpop.f32.mrb[0].mxu0
        %v5464 = vadd.f32 0.0, %v5463
        %v5465 = vpop.f32.mrb[0].mxu0
        %v5466 = vadd.f32 0.0, %v5465
        %5467 = vmatprep.mubr.bf16.mxu0 0
        %5468 = vmatmul.mubr.bf16.gmra.mrb[0].mxu0 %v5370
        %v5469 = vpop.f32.mrb[0].mxu0
        %v5470 = vadd.f32 0.0, %v5469
        %v5471 = vpop.f32.mrb[0].mxu0
        %v5472 = vadd.f32 0.0, %v5471
        %v5473 = vpop.f32.mrb[0].mxu0
        %v5474 = vadd.f32 0.0, %v5473
        %v5475 = vpop.f32.mrb[0].mxu0
        %v5476 = vadd.f32 0.0, %v5475
        %5477 = vmatprep.mubr.bf16.mxu0 0
        %5478 = vmatmul.mubr.bf16.gmra.mrb[0].mxu0 %v5373
        %v5479 = vpop.f32.mrb[0].mxu0
        %v5480 = vadd.f32 0.0, %v5479
        %v5481 = vpop.f32.mrb[0].mxu0
        %v5482 = vadd.f32 0.0, %v5481
        %v5483 = vpop.f32.mrb[0].mxu0
        %v5484 = vadd.f32 0.0, %v5483
        %v5485 = vpop.f32.mrb[0].mxu0
        %v5486 = vadd.f32 0.0, %v5485
        %5487 = vdwg.mxu0
        %v5488 = vmax.f32 %v5410, %v5412
        %5489 = vmax.xlane.f32.xlu0 %v5488
        %v5490 = vpop.xlane.xlu0 %5489
        %v5491 = vmax.f32 %v5414, %v5416
        %5492 = vmax.xlane.f32.xlu0 %v5491
        %v5493 = vpop.xlane.xlu0 %5492
        %v5494 = vmax.f32 %v5420, %v5422
        %5495 = vmax.xlane.f32.xlu0 %v5494
        %v5496 = vpop.xlane.xlu0 %5495
        %v5497 = vmax.f32 %v5424, %v5426
        %5498 = vmax.xlane.f32.xlu0 %v5497
        %v5499 = vpop.xlane.xlu0 %5498
        %v5500 = vmax.f32 %v5430, %v5432
        %5501 = vmax.xlane.f32.xlu0 %v5500
        %v5502 = vpop.xlane.xlu0 %5501
        %v5503 = vmax.f32 %v5434, %v5436
        %5504 = vmax.xlane.f32.xlu0 %v5503
        %v5505 = vpop.xlane.xlu0 %5504
        %v5506 = vmax.f32 %v5440, %v5442
        %5507 = vmax.xlane.f32.xlu0 %v5506
        %v5508 = vpop.xlane.xlu0 %5507
        %v5509 = vmax.f32 %v5444, %v5446
        %5510 = vmax.xlane.f32.xlu0 %v5509
        %v5511 = vpop.xlane.xlu0 %5510
        %v5512 = vmax.f32 %v5450, %v5452
        %5513 = vmax.xlane.f32.xlu0 %v5512
        %v5514 = vpop.xlane.xlu0 %5513
        %v5515 = vmax.f32 %v5454, %v5456
        %5516 = vmax.xlane.f32.xlu0 %v5515
        %v5517 = vpop.xlane.xlu0 %5516
        %v5518 = vmax.f32 %v5460, %v5462
        %5519 = vmax.xlane.f32.xlu0 %v5518
        %v5520 = vpop.xlane.xlu0 %5519
        %v5521 = vmax.f32 %v5464, %v5466
        %5522 = vmax.xlane.f32.xlu0 %v5521
        %v5523 = vpop.xlane.xlu0 %5522
        %v5524 = vmax.f32 %v5470, %v5472
        %5525 = vmax.xlane.f32.xlu0 %v5524
        %v5526 = vpop.xlane.xlu0 %5525
        %v5527 = vmax.f32 %v5474, %v5476
        %5528 = vmax.xlane.f32.xlu0 %v5527
        %v5529 = vpop.xlane.xlu0 %5528
        %v5530 = vmax.f32 %v5480, %v5482
        %5531 = vmax.xlane.f32.xlu0 %v5530
        %v5532 = vpop.xlane.xlu0 %5531
        %v5533 = vmax.f32 %v5484, %v5486
        %5534 = vmax.xlane.f32.xlu0 %v5533
        %v5535 = vpop.xlane.xlu0 %5534
        %v5536 = vsub.f32 %v5410, %v5490
        %v5537 = vsub.f32 %v5412, %v5490
        %v5538 = vsub.f32 %v5414, %v5493
        %v5539 = vsub.f32 %v5416, %v5493
        %v5540 = vsub.f32 %v5420, %v5496
        %v5541 = vsub.f32 %v5422, %v5496
        %v5542 = vsub.f32 %v5424, %v5499
        %v5543 = vsub.f32 %v5426, %v5499
        %v5544 = vsub.f32 %v5430, %v5502
        %v5545 = vsub.f32 %v5432, %v5502
        %v5546 = vsub.f32 %v5434, %v5505
        %v5547 = vsub.f32 %v5436, %v5505
        %v5548 = vsub.f32 %v5440, %v5508
        %v5549 = vsub.f32 %v5442, %v5508
        %v5550 = vsub.f32 %v5444, %v5511
        %v5551 = vsub.f32 %v5446, %v5511
        %v5552 = vsub.f32 %v5450, %v5514
        %v5553 = vsub.f32 %v5452, %v5514
        %v5554 = vsub.f32 %v5454, %v5517
        %v5555 = vsub.f32 %v5456, %v5517
        %v5556 = vsub.f32 %v5460, %v5520
        %v5557 = vsub.f32 %v5462, %v5520
        %v5558 = vsub.f32 %v5464, %v5523
        %v5559 = vsub.f32 %v5466, %v5523
        %v5560 = vsub.f32 %v5470, %v5526
        %v5561 = vsub.f32 %v5472, %v5526
        %v5562 = vsub.f32 %v5474, %v5529
        %v5563 = vsub.f32 %v5476, %v5529
        %v5564 = vsub.f32 %v5480, %v5532
        %v5565 = vsub.f32 %v5482, %v5532
        %v5566 = vsub.f32 %v5484, %v5535
        %v5567 = vsub.f32 %v5486, %v5535
        %v5568 = vmul.f32 %v5536, 1.442695
        %v5569 = vpow.pop %v5568
        %v5570 = vmul.f32 %v5537, 1.442695
        %v5571 = vpow.pop %v5570
        %v5572 = vmul.f32 %v5538, 1.442695
        %v5573 = vpow.pop %v5572
        %v5574 = vmul.f32 %v5539, 1.442695
        %v5575 = vpow.pop %v5574
        %v5576 = vmul.f32 %v5540, 1.442695
        %v5577 = vpow.pop %v5576
        %v5578 = vmul.f32 %v5541, 1.442695
        %v5579 = vpow.pop %v5578
        %v5580 = vmul.f32 %v5542, 1.442695
        %v5581 = vpow.pop %v5580
        %v5582 = vmul.f32 %v5543, 1.442695
        %v5583 = vpow.pop %v5582
        %v5584 = vmul.f32 %v5544, 1.442695
        %v5585 = vpow.pop %v5584
        %v5586 = vmul.f32 %v5545, 1.442695
        %v5587 = vpow.pop %v5586
        %v5588 = vmul.f32 %v5546, 1.442695
        %v5589 = vpow.pop %v5588
        %v5590 = vmul.f32 %v5547, 1.442695
        %v5591 = vpow.pop %v5590
        %v5592 = vmul.f32 %v5548, 1.442695
        %v5593 = vpow.pop %v5592
        %v5594 = vmul.f32 %v5549, 1.442695
        %v5595 = vpow.pop %v5594
        %v5596 = vmul.f32 %v5550, 1.442695
        %v5597 = vpow.pop %v5596
        %v5598 = vmul.f32 %v5551, 1.442695
        %v5599 = vpow.pop %v5598
        %v5600 = vmul.f32 %v5552, 1.442695
        %v5601 = vpow.pop %v5600
        %v5602 = vmul.f32 %v5553, 1.442695
        %v5603 = vpow.pop %v5602
        %v5604 = vmul.f32 %v5554, 1.442695
        %v5605 = vpow.pop %v5604
        %v5606 = vmul.f32 %v5555, 1.442695
        %v5607 = vpow.pop %v5606
        %v5608 = vmul.f32 %v5556, 1.442695
        %v5609 = vpow.pop %v5608
        %v5610 = vmul.f32 %v5557, 1.442695
        %v5611 = vpow.pop %v5610
        %v5612 = vmul.f32 %v5558, 1.442695
        %v5613 = vpow.pop %v5612
        %v5614 = vmul.f32 %v5559, 1.442695
        %v5615 = vpow.pop %v5614
        %v5616 = vmul.f32 %v5560, 1.442695
        %v5617 = vpow.pop %v5616
        %v5618 = vmul.f32 %v5561, 1.442695
        %v5619 = vpow.pop %v5618
        %v5620 = vmul.f32 %v5562, 1.442695
        %v5621 = vpow.pop %v5620
        %v5622 = vmul.f32 %v5563, 1.442695
        %v5623 = vpow.pop %v5622
        %v5624 = vmul.f32 %v5564, 1.442695
        %v5625 = vpow.pop %v5624
        %v5626 = vmul.f32 %v5565, 1.442695
        %v5627 = vpow.pop %v5626
        %v5628 = vmul.f32 %v5566, 1.442695
        %v5629 = vpow.pop %v5628
        %v5630 = vmul.f32 %v5567, 1.442695
        %v5631 = vpow.pop %v5630
        %v5632 = vadd.f32 %v5569, %v5571
        %5633 = vadd.xlane.f32.xlu0 %v5632
        %v5634 = vpop.xlane.xlu0 %5633
        %v5635 = vadd.f32 %v5573, %v5575
        %5636 = vadd.xlane.f32.xlu0 %v5635
        %v5637 = vpop.xlane.xlu0 %5636
        %v5638 = vadd.f32 %v5577, %v5579
        %5639 = vadd.xlane.f32.xlu0 %v5638
        %v5640 = vpop.xlane.xlu0 %5639
        %v5641 = vadd.f32 %v5581, %v5583
        %5642 = vadd.xlane.f32.xlu0 %v5641
        %v5643 = vpop.xlane.xlu0 %5642
        %v5644 = vadd.f32 %v5585, %v5587
        %5645 = vadd.xlane.f32.xlu0 %v5644
        %v5646 = vpop.xlane.xlu0 %5645
        %v5647 = vadd.f32 %v5589, %v5591
        %5648 = vadd.xlane.f32.xlu0 %v5647
        %v5649 = vpop.xlane.xlu0 %5648
        %v5650 = vadd.f32 %v5593, %v5595
        %5651 = vadd.xlane.f32.xlu0 %v5650
        %v5652 = vpop.xlane.xlu0 %5651
        %v5653 = vadd.f32 %v5597, %v5599
        %5654 = vadd.xlane.f32.xlu0 %v5653
        %v5655 = vpop.xlane.xlu0 %5654
        %v5656 = vadd.f32 %v5601, %v5603
        %5657 = vadd.xlane.f32.xlu0 %v5656
        %v5658 = vpop.xlane.xlu0 %5657
        %v5659 = vadd.f32 %v5605, %v5607
        %5660 = vadd.xlane.f32.xlu0 %v5659
        %v5661 = vpop.xlane.xlu0 %5660
        %v5662 = vadd.f32 %v5609, %v5611
        %5663 = vadd.xlane.f32.xlu0 %v5662
        %v5664 = vpop.xlane.xlu0 %5663
        %v5665 = vadd.f32 %v5613, %v5615
        %5666 = vadd.xlane.f32.xlu0 %v5665
        %v5667 = vpop.xlane.xlu0 %5666
        %v5668 = vadd.f32 %v5617, %v5619
        %5669 = vadd.xlane.f32.xlu0 %v5668
        %v5670 = vpop.xlane.xlu0 %5669
        %v5671 = vadd.f32 %v5621, %v5623
        %5672 = vadd.xlane.f32.xlu0 %v5671
        %v5673 = vpop.xlane.xlu0 %5672
        %v5674 = vadd.f32 %v5625, %v5627
        %5675 = vadd.xlane.f32.xlu0 %v5674
        %v5676 = vpop.xlane.xlu0 %5675
        %v5677 = vadd.f32 %v5629, %v5631
        %5678 = vadd.xlane.f32.xlu0 %v5677
        %v5679 = vpop.xlane.xlu0 %5678
        %v5680 = vrcp.pop %v5634
        %v5681 = vrcp.pop %v5637
        %v5682 = vrcp.pop %v5640
        %v5683 = vrcp.pop %v5643
        %v5684 = vrcp.pop %v5646
        %v5685 = vrcp.pop %v5649
        %v5686 = vrcp.pop %v5652
        %v5687 = vrcp.pop %v5655
        %v5688 = vrcp.pop %v5658
        %v5689 = vrcp.pop %v5661
        %v5690 = vrcp.pop %v5664
        %v5691 = vrcp.pop %v5667
        %v5692 = vrcp.pop %v5670
        %v5693 = vrcp.pop %v5673
        %v5694 = vrcp.pop %v5676
        %v5695 = vrcp.pop %v5679
        %v5696 = vmul.f32 %v5569, %v5680
        %v5697 = vmul.f32 %v5571, %v5680
        %v5698 = vmul.f32 %v5573, %v5681
        %v5699 = vmul.f32 %v5575, %v5681
        %v5700 = vmul.f32 %v5577, %v5682
        %v5701 = vmul.f32 %v5579, %v5682
        %v5702 = vmul.f32 %v5581, %v5683
        %v5703 = vmul.f32 %v5583, %v5683
        %v5704 = vmul.f32 %v5585, %v5684
        %v5705 = vmul.f32 %v5587, %v5684
        %v5706 = vmul.f32 %v5589, %v5685
        %v5707 = vmul.f32 %v5591, %v5685
        %v5708 = vmul.f32 %v5593, %v5686
        %v5709 = vmul.f32 %v5595, %v5686
        %v5710 = vmul.f32 %v5597, %v5687
        %v5711 = vmul.f32 %v5599, %v5687
        %v5712 = vmul.f32 %v5601, %v5688
        %v5713 = vmul.f32 %v5603, %v5688
        %v5714 = vmul.f32 %v5605, %v5689
        %v5715 = vmul.f32 %v5607, %v5689
        %v5716 = vmul.f32 %v5609, %v5690
        %v5717 = vmul.f32 %v5611, %v5690
        %v5718 = vmul.f32 %v5613, %v5691
        %v5719 = vmul.f32 %v5615, %v5691
        %v5720 = vmul.f32 %v5617, %v5692
        %v5721 = vmul.f32 %v5619, %v5692
        %v5722 = vmul.f32 %v5621, %v5693
        %v5723 = vmul.f32 %v5623, %v5693
        %v5724 = vmul.f32 %v5625, %v5694
        %v5725 = vmul.f32 %v5627, %v5694
        %v5726 = vmul.f32 %v5629, %v5695
        %v5727 = vmul.f32 %v5631, %v5695
        %v5728 = vpack.c.bf16 %v5698, %v5696
        %v5729 = vpack.c.bf16 %v5699, %v5697
        %v5730 = vpack.c.bf16 %v5702, %v5700
        %v5731 = vpack.c.bf16 %v5703, %v5701
        %v5732 = vpack.c.bf16 %v5706, %v5704
        %v5733 = vpack.c.bf16 %v5707, %v5705
        %v5734 = vpack.c.bf16 %v5710, %v5708
        %v5735 = vpack.c.bf16 %v5711, %v5709
        %v5736 = vpack.c.bf16 %v5714, %v5712
        %v5737 = vpack.c.bf16 %v5715, %v5713
        %v5738 = vpack.c.bf16 %v5718, %v5716
        %v5739 = vpack.c.bf16 %v5719, %v5717
        %v5740 = vpack.c.bf16 %v5722, %v5720
        %v5741 = vpack.c.bf16 %v5723, %v5721
        %v5742 = vpack.c.bf16 %v5726, %v5724
        %v5743 = vpack.c.bf16 %v5727, %v5725
        %5760 = vrot.lane.b32.xlu0 %v4809, 96
        %v5761 = vpop.permute.xlu0 %5760
        %5762 = vrot.lane.b32.xlu0 %v4810, 96
        %v5763 = vpop.permute.xlu0 %5762
        %5764 = vrot.lane.b32.xlu0 %v4811, 96
        %v5765 = vpop.permute.xlu0 %5764
        %5766 = vrot.lane.b32.xlu0 %v4812, 96
        %v5767 = vpop.permute.xlu0 %5766
        %5768 = vrot.lane.b32.xlu0 %v4813, 96
        %v5769 = vpop.permute.xlu0 %5768
        %5770 = vrot.lane.b32.xlu0 %v4814, 96
        %v5771 = vpop.permute.xlu0 %5770
        %5772 = vrot.lane.b32.xlu0 %v4815, 96
        %v5773 = vpop.permute.xlu0 %5772
        %5774 = vrot.lane.b32.xlu0 %v4816, 96
        %v5775 = vpop.permute.xlu0 %5774
        %5776 = vrot.lane.b32.xlu0 %v4817, 96
        %v5777 = vpop.permute.xlu0 %5776
        %5778 = vrot.lane.b32.xlu0 %v4818, 96
        %v5779 = vpop.permute.xlu0 %5778
        %5780 = vrot.lane.b32.xlu0 %v4819, 96
        %v5781 = vpop.permute.xlu0 %5780
        %5782 = vrot.lane.b32.xlu0 %v4820, 96
        %v5783 = vpop.permute.xlu0 %5782
        %5784 = vrot.lane.b32.xlu0 %v4821, 96
        %v5785 = vpop.permute.xlu0 %5784
        %5786 = vrot.lane.b32.xlu0 %v4822, 96
        %v5787 = vpop.permute.xlu0 %5786
        %5788 = vrot.lane.b32.xlu0 %v4823, 96
        %v5789 = vpop.permute.xlu0 %5788
        %5790 = vrot.lane.b32.xlu0 %v4824, 96
        %v5791 = vpop.permute.xlu0 %5790
        %5808 = vmatprep.subr.bf16.mxu0 0
        %5809 = vmatpush1.bf16.msra.mxu0 %v5761
        %5810 = vmatprep.subr.bf16.mxu0 0
        %5811 = vmatpush1.bf16.msra.mxu0 %v5763
        %5812 = vmatprep.subr.bf16.mxu0 0
        %5813 = vmatpush1.bf16.msra.mxu0 %v5765
        %5814 = vmatprep.subr.bf16.mxu0 0
        %5815 = vmatpush1.bf16.msra.mxu0 %v5767
        %5816 = vmatprep.subr.bf16.mxu0 0
        %5817 = vmatpush1.bf16.msra.mxu0 %v5769
        %5818 = vmatprep.subr.bf16.mxu0 0
        %5819 = vmatpush1.bf16.msra.mxu0 %v5771
        %5820 = vmatprep.subr.bf16.mxu0 0
        %5821 = vmatpush1.bf16.msra.mxu0 %v5773
        %5822 = vmatprep.subr.bf16.mxu0 0
        %5823 = vmatpush1.bf16.msra.mxu0 %v5775
        %5824 = vmatprep.subr.bf16.mxu0 0
        %5825 = vmatpush1.bf16.msra.mxu0 %v5777
        %5826 = vmatprep.subr.bf16.mxu0 0
        %5827 = vmatpush1.bf16.msra.mxu0 %v5779
        %5828 = vmatprep.subr.bf16.mxu0 0
        %5829 = vmatpush1.bf16.msra.mxu0 %v5781
        %5830 = vmatprep.subr.bf16.mxu0 0
        %5831 = vmatpush1.bf16.msra.mxu0 %v5783
        %5832 = vmatprep.subr.bf16.mxu0 0
        %5833 = vmatpush1.bf16.msra.mxu0 %v5785
        %5834 = vmatprep.subr.bf16.mxu0 0
        %5835 = vmatpush1.bf16.msra.mxu0 %v5787
        %5836 = vmatprep.subr.bf16.mxu0 0
        %5837 = vmatpush1.bf16.msra.mxu0 %v5789
        %5838 = vmatprep.subr.bf16.mxu0 0
        %5839 = vmatpush1.bf16.msra.mxu0 %v5791
        %5840 = vmatprep.mubr.bf16.mxu0 %v5729
        %5841 = vmatmul.mubr.bf16.gmra.mrb[0].mxu0 %v5728
        %v5842 = vpop.f32.mrb[0].mxu0
        %v5843 = vadd.f32 0.0, %v5842
        %v5844 = vpop.f32.mrb[0].mxu0
        %v5845 = vpop.f32.mrb[0].mxu0
        %v5846 = vadd.f32 0.0, %v5845
        %v5847 = vpop.f32.mrb[0].mxu0
        %5848 = vmatprep.mubr.bf16.mxu0 %v5731
        %5849 = vmatmul.mubr.bf16.gmra.mrb[0].mxu0 %v5730
        %v5850 = vpop.f32.mrb[0].mxu0
        %v5851 = vadd.f32 0.0, %v5850
        %v5852 = vpop.f32.mrb[0].mxu0
        %v5853 = vpop.f32.mrb[0].mxu0
        %v5854 = vadd.f32 0.0, %v5853
        %v5855 = vpop.f32.mrb[0].mxu0
        %5856 = vmatprep.mubr.bf16.mxu0 %v5733
        %5857 = vmatmul.mubr.bf16.gmra.mrb[0].mxu0 %v5732
        %v5858 = vpop.f32.mrb[0].mxu0
        %v5859 = vadd.f32 0.0, %v5858
        %v5860 = vpop.f32.mrb[0].mxu0
        %v5861 = vpop.f32.mrb[0].mxu0
        %v5862 = vadd.f32 0.0, %v5861
        %v5863 = vpop.f32.mrb[0].mxu0
        %5864 = vmatprep.mubr.bf16.mxu0 %v5735
        %5865 = vmatmul.mubr.bf16.gmra.mrb[0].mxu0 %v5734
        %v5866 = vpop.f32.mrb[0].mxu0
        %v5867 = vadd.f32 0.0, %v5866
        %v5868 = vpop.f32.mrb[0].mxu0
        %v5869 = vpop.f32.mrb[0].mxu0
        %v5870 = vadd.f32 0.0, %v5869
        %v5871 = vpop.f32.mrb[0].mxu0
        %5872 = vmatprep.mubr.bf16.mxu0 %v5737
        %5873 = vmatmul.mubr.bf16.gmra.mrb[0].mxu0 %v5736
        %v5874 = vpop.f32.mrb[0].mxu0
        %v5875 = vadd.f32 0.0, %v5874
        %v5876 = vpop.f32.mrb[0].mxu0
        %v5877 = vpop.f32.mrb[0].mxu0
        %v5878 = vadd.f32 0.0, %v5877
        %v5879 = vpop.f32.mrb[0].mxu0
        %5880 = vmatprep.mubr.bf16.mxu0 %v5739
        %5881 = vmatmul.mubr.bf16.gmra.mrb[0].mxu0 %v5738
        %v5882 = vpop.f32.mrb[0].mxu0
        %v5883 = vadd.f32 0.0, %v5882
        %v5884 = vpop.f32.mrb[0].mxu0
        %v5885 = vpop.f32.mrb[0].mxu0
        %v5886 = vadd.f32 0.0, %v5885
        %v5887 = vpop.f32.mrb[0].mxu0
        %5888 = vmatprep.mubr.bf16.mxu0 %v5741
        %5889 = vmatmul.mubr.bf16.gmra.mrb[0].mxu0 %v5740
        %v5890 = vpop.f32.mrb[0].mxu0
        %v5891 = vadd.f32 0.0, %v5890
        %v5892 = vpop.f32.mrb[0].mxu0
        %v5893 = vpop.f32.mrb[0].mxu0
        %v5894 = vadd.f32 0.0, %v5893
        %v5895 = vpop.f32.mrb[0].mxu0
        %5896 = vmatprep.mubr.bf16.mxu0 %v5743
        %5897 = vmatmul.mubr.bf16.gmra.mrb[0].mxu0 %v5742
        %v5898 = vpop.f32.mrb[0].mxu0
        %v5899 = vadd.f32 0.0, %v5898
        %v5900 = vpop.f32.mrb[0].mxu0
        %v5901 = vpop.f32.mrb[0].mxu0
        %v5902 = vadd.f32 0.0, %v5901
        %v5903 = vpop.f32.mrb[0].mxu0
        %5904 = vdwg.mxu0
        %v5905 = vpack.c.bf16 %v5846, %v5843
        %v5906 = vpack.c.bf16 %v5854, %v5851
        %v5907 = vpack.c.bf16 %v5862, %v5859
        %v5908 = vpack.c.bf16 %v5870, %v5867
        %v5909 = vpack.c.bf16 %v5878, %v5875
        %v5910 = vpack.c.bf16 %v5886, %v5883
        %v5911 = vpack.c.bf16 %v5894, %v5891
        %v5912 = vpack.c.bf16 %v5902, %v5899
        %v5913 = vld [vmem:[%s23 + $0x10] sm:$0xf]
        %v5914 = vld [vmem:[%s23 + $0x14] sm:$0xf]
        %v5915 = vld [vmem:[%s23 + $0x18] sm:$0xf]
        %v5916 = vld [vmem:[%s23 + $0x1c] sm:$0xf]
        %v5921 = vunpack.c.l.b16 %v5913
        %v5922 = vunpack.c.l.b16 %v5914
        %v5923 = vunpack.c.l.b16 %v5915
        %v5924 = vunpack.c.l.b16 %v5916
        %v5925 = vpack.c.b16 %v5922, %v5921
        %v5926 = vpack.c.b16 %v5924, %v5923
        %v5930 = vsel %vm2065, %v5905, 0
        %v5933 = vsel %vm2065, %v5906, 0
        %v5936 = vsel %vm2065, %v5907, 0
        %v5939 = vsel %vm2065, %v5908, 0
        %v5942 = vsel %vm2065, %v5909, 0
        %v5945 = vsel %vm2065, %v5910, 0
        %v5948 = vsel %vm2065, %v5911, 0
        %v5951 = vsel %vm2065, %v5912, 0
        %5953 = vmatprep.subr.bf16.mxu0 0
        %5954 = vmatpush1.bf16.msra.mxu0 %v5925
        %5955 = vmatprep.subr.bf16.mxu0 0
        %5956 = vmatpush1.bf16.msra.mxu0 %v5926
        %5957 = vmatprep.subr.bf16.mxu0 0
        %5958 = vmatpush1.bf16.msra.mxu0 0
        %5959 = vmatprep.subr.bf16.mxu0 0
        %5960 = vmatpush1.bf16.msra.mxu0 0
        %5961 = vmatprep.subr.bf16.mxu0 0
        %5962 = vmatpush1.bf16.msra.mxu0 0
        %5963 = vmatprep.subr.bf16.mxu0 0
        %5964 = vmatpush1.bf16.msra.mxu0 0
        %5965 = vmatprep.subr.bf16.mxu0 0
        %5966 = vmatpush1.bf16.msra.mxu0 0
        %5967 = vmatprep.subr.bf16.mxu0 0
        %5968 = vmatpush1.bf16.msra.mxu0 0
        %5969 = vmatprep.subr.bf16.mxu0 0
        %5970 = vmatpush1.bf16.msra.mxu0 0
        %5971 = vmatprep.subr.bf16.mxu0 0
        %5972 = vmatpush1.bf16.msra.mxu0 0
        %5973 = vmatprep.subr.bf16.mxu0 0
        %5974 = vmatpush1.bf16.msra.mxu0 0
        %5975 = vmatprep.subr.bf16.mxu0 0
        %5976 = vmatpush1.bf16.msra.mxu0 0
        %5977 = vmatprep.subr.bf16.mxu0 0
        %5978 = vmatpush1.bf16.msra.mxu0 0
        %5979 = vmatprep.subr.bf16.mxu0 0
        %5980 = vmatpush1.bf16.msra.mxu0 0
        %5981 = vmatprep.subr.bf16.mxu0 0
        %5982 = vmatpush1.bf16.msra.mxu0 0
        %5983 = vmatprep.subr.bf16.mxu0 0
        %5984 = vmatpush1.bf16.msra.mxu0 0
        %5985 = vmatprep.mubr.bf16.mxu0 0
        %5986 = vmatmul.mubr.bf16.gmra.mrb[0].mxu0 %v5930
        %v5987 = vpop.f32.mrb[0].mxu0
        %v5988 = vadd.f32 0.0, %v5987
        %v5989 = vpop.f32.mrb[0].mxu0
        %v5990 = vpop.f32.mrb[0].mxu0
        %v5991 = vadd.f32 0.0, %v5990
        %v5992 = vpop.f32.mrb[0].mxu0
        %5993 = vmatprep.mubr.bf16.mxu0 0
        %5994 = vmatmul.mubr.bf16.gmra.mrb[0].mxu0 %v5933
        %v5995 = vpop.f32.mrb[0].mxu0
        %v5996 = vadd.f32 0.0, %v5995
        %v5997 = vpop.f32.mrb[0].mxu0
        %v5998 = vpop.f32.mrb[0].mxu0
        %v5999 = vadd.f32 0.0, %v5998
        %v6000 = vpop.f32.mrb[0].mxu0
        %6001 = vmatprep.mubr.bf16.mxu0 0
        %6002 = vmatmul.mubr.bf16.gmra.mrb[0].mxu0 %v5936
        %v6003 = vpop.f32.mrb[0].mxu0
        %v6004 = vadd.f32 0.0, %v6003
        %v6005 = vpop.f32.mrb[0].mxu0
        %v6006 = vpop.f32.mrb[0].mxu0
        %v6007 = vadd.f32 0.0, %v6006
        %v6008 = vpop.f32.mrb[0].mxu0
        %6009 = vmatprep.mubr.bf16.mxu0 0
        %6010 = vmatmul.mubr.bf16.gmra.mrb[0].mxu0 %v5939
        %v6011 = vpop.f32.mrb[0].mxu0
        %v6012 = vadd.f32 0.0, %v6011
        %v6013 = vpop.f32.mrb[0].mxu0
        %v6014 = vpop.f32.mrb[0].mxu0
        %v6015 = vadd.f32 0.0, %v6014
        %v6016 = vpop.f32.mrb[0].mxu0
        %6017 = vmatprep.mubr.bf16.mxu0 0
        %6018 = vmatmul.mubr.bf16.gmra.mrb[0].mxu0 %v5942
        %v6019 = vpop.f32.mrb[0].mxu0
        %v6020 = vadd.f32 0.0, %v6019
        %v6021 = vpop.f32.mrb[0].mxu0
        %v6022 = vpop.f32.mrb[0].mxu0
        %v6023 = vadd.f32 0.0, %v6022
        %v6024 = vpop.f32.mrb[0].mxu0
        %6025 = vmatprep.mubr.bf16.mxu0 0
        %6026 = vmatmul.mubr.bf16.gmra.mrb[0].mxu0 %v5945
        %v6027 = vpop.f32.mrb[0].mxu0
        %v6028 = vadd.f32 0.0, %v6027
        %v6029 = vpop.f32.mrb[0].mxu0
        %v6030 = vpop.f32.mrb[0].mxu0
        %v6031 = vadd.f32 0.0, %v6030
        %v6032 = vpop.f32.mrb[0].mxu0
        %6033 = vmatprep.mubr.bf16.mxu0 0
        %6034 = vmatmul.mubr.bf16.gmra.mrb[0].mxu0 %v5948
        %v6035 = vpop.f32.mrb[0].mxu0
        %v6036 = vadd.f32 0.0, %v6035
        %v6037 = vpop.f32.mrb[0].mxu0
        %v6038 = vpop.f32.mrb[0].mxu0
        %v6039 = vadd.f32 0.0, %v6038
        %v6040 = vpop.f32.mrb[0].mxu0
        %6041 = vmatprep.mubr.bf16.mxu0 0
        %6042 = vmatmul.mubr.bf16.gmra.mrb[0].mxu0 %v5951
        %v6043 = vpop.f32.mrb[0].mxu0
        %v6044 = vadd.f32 0.0, %v6043
        %v6045 = vpop.f32.mrb[0].mxu0
        %v6046 = vpop.f32.mrb[0].mxu0
        %v6047 = vadd.f32 0.0, %v6046
        %v6048 = vpop.f32.mrb[0].mxu0
        %6049 = vdwg.mxu0
        %v6054 = vunpack.c.l.b16 %v5323
        %v6055 = vunpack.c.l.b16 %v5324
        %v6056 = vunpack.c.l.b16 %v5325
        %v6057 = vunpack.c.l.b16 %v5326
        %v6058 = vpack.c.b16 %v6055, %v6054
        %v6059 = vpack.c.b16 %v6057, %v6056
        %v6063 = vsel %vm2065, %v5315, 0
        %v6066 = vsel %vm2065, %v5316, 0
        %v6069 = vsel %vm2065, %v5317, 0
        %v6072 = vsel %vm2065, %v5318, 0
        %v6075 = vsel %vm2065, %v5319, 0
        %v6078 = vsel %vm2065, %v5320, 0
        %v6081 = vsel %vm2065, %v5321, 0
        %v6084 = vsel %vm2065, %v5322, 0
        %6086 = vmatprep.subr.bf16.mxu0 0
        %6087 = vmatpush1.bf16.msra.mxu0 %v6058
        %6088 = vmatprep.subr.bf16.mxu0 0
        %6089 = vmatpush1.bf16.msra.mxu0 %v6059
        %6090 = vmatprep.subr.bf16.mxu0 0
        %6091 = vmatpush1.bf16.msra.mxu0 0
        %6092 = vmatprep.subr.bf16.mxu0 0
        %6093 = vmatpush1.bf16.msra.mxu0 0
        %6094 = vmatprep.subr.bf16.mxu0 0
        %6095 = vmatpush1.bf16.msra.mxu0 0
        %6096 = vmatprep.subr.bf16.mxu0 0
        %6097 = vmatpush1.bf16.msra.mxu0 0
        %6098 = vmatprep.subr.bf16.mxu0 0
        %6099 = vmatpush1.bf16.msra.mxu0 0
        %6100 = vmatprep.subr.bf16.mxu0 0
        %6101 = vmatpush1.bf16.msra.mxu0 0
        %6102 = vmatprep.subr.bf16.mxu0 0
        %6103 = vmatpush1.bf16.msra.mxu0 0
        %6104 = vmatprep.subr.bf16.mxu0 0
        %6105 = vmatpush1.bf16.msra.mxu0 0
        %6106 = vmatprep.subr.bf16.mxu0 0
        %6107 = vmatpush1.bf16.msra.mxu0 0
        %6108 = vmatprep.subr.bf16.mxu0 0
        %6109 = vmatpush1.bf16.msra.mxu0 0
        %6110 = vmatprep.subr.bf16.mxu0 0
        %6111 = vmatpush1.bf16.msra.mxu0 0
        %6112 = vmatprep.subr.bf16.mxu0 0
        %6113 = vmatpush1.bf16.msra.mxu0 0
        %6114 = vmatprep.subr.bf16.mxu0 0
        %6115 = vmatpush1.bf16.msra.mxu0 0
        %6116 = vmatprep.subr.bf16.mxu0 0
        %6117 = vmatpush1.bf16.msra.mxu0 0
        %6118 = vmatprep.mubr.bf16.mxu0 0
        %6119 = vmatmul.mubr.bf16.gmra.mrb[0].mxu0 %v6063
        %v6120 = vpop.f32.mrb[0].mxu0
        %v6121 = vadd.f32 %v5988, %v6120
        %v6122 = vpop.f32.mrb[0].mxu0
        %v6123 = vpop.f32.mrb[0].mxu0
        %v6124 = vadd.f32 %v5991, %v6123
        %v6125 = vpop.f32.mrb[0].mxu0
        %6126 = vmatprep.mubr.bf16.mxu0 0
        %6127 = vmatmul.mubr.bf16.gmra.mrb[0].mxu0 %v6066
        %v6128 = vpop.f32.mrb[0].mxu0
        %v6129 = vadd.f32 %v5996, %v6128
        %v6130 = vpop.f32.mrb[0].mxu0
        %v6131 = vpop.f32.mrb[0].mxu0
        %v6132 = vadd.f32 %v5999, %v6131
        %v6133 = vpop.f32.mrb[0].mxu0
        %6134 = vmatprep.mubr.bf16.mxu0 0
        %6135 = vmatmul.mubr.bf16.gmra.mrb[0].mxu0 %v6069
        %v6136 = vpop.f32.mrb[0].mxu0
        %v6137 = vadd.f32 %v6004, %v6136
        %v6138 = vpop.f32.mrb[0].mxu0
        %v6139 = vpop.f32.mrb[0].mxu0
        %v6140 = vadd.f32 %v6007, %v6139
        %v6141 = vpop.f32.mrb[0].mxu0
        %6142 = vmatprep.mubr.bf16.mxu0 0
        %6143 = vmatmul.mubr.bf16.gmra.mrb[0].mxu0 %v6072
        %v6144 = vpop.f32.mrb[0].mxu0
        %v6145 = vadd.f32 %v6012, %v6144
        %v6146 = vpop.f32.mrb[0].mxu0
        %v6147 = vpop.f32.mrb[0].mxu0
        %v6148 = vadd.f32 %v6015, %v6147
        %v6149 = vpop.f32.mrb[0].mxu0
        %6150 = vmatprep.mubr.bf16.mxu0 0
        %6151 = vmatmul.mubr.bf16.gmra.mrb[0].mxu0 %v6075
        %v6152 = vpop.f32.mrb[0].mxu0
        %v6153 = vadd.f32 %v6020, %v6152
        %v6154 = vpop.f32.mrb[0].mxu0
        %v6155 = vpop.f32.mrb[0].mxu0
        %v6156 = vadd.f32 %v6023, %v6155
        %v6157 = vpop.f32.mrb[0].mxu0
        %6158 = vmatprep.mubr.bf16.mxu0 0
        %6159 = vmatmul.mubr.bf16.gmra.mrb[0].mxu0 %v6078
        %v6160 = vpop.f32.mrb[0].mxu0
        %v6161 = vadd.f32 %v6028, %v6160
        %v6162 = vpop.f32.mrb[0].mxu0
        %v6163 = vpop.f32.mrb[0].mxu0
        %v6164 = vadd.f32 %v6031, %v6163
        %v6165 = vpop.f32.mrb[0].mxu0
        %6166 = vmatprep.mubr.bf16.mxu0 0
        %6167 = vmatmul.mubr.bf16.gmra.mrb[0].mxu0 %v6081
        %v6168 = vpop.f32.mrb[0].mxu0
        %v6169 = vadd.f32 %v6036, %v6168
        %v6170 = vpop.f32.mrb[0].mxu0
        %v6171 = vpop.f32.mrb[0].mxu0
        %v6172 = vadd.f32 %v6039, %v6171
        %v6173 = vpop.f32.mrb[0].mxu0
        %6174 = vmatprep.mubr.bf16.mxu0 0
        %6175 = vmatmul.mubr.bf16.gmra.mrb[0].mxu0 %v6084
        %v6176 = vpop.f32.mrb[0].mxu0
        %v6177 = vadd.f32 %v6044, %v6176
        %v6178 = vpop.f32.mrb[0].mxu0
        %v6179 = vpop.f32.mrb[0].mxu0
        %v6180 = vadd.f32 %v6047, %v6179
        %v6181 = vpop.f32.mrb[0].mxu0
        %6182 = vdwg.mxu0
        %6183 = vrot.lane.b32.xlu0 %v4609, 64
        %v6184 = vpop.permute.xlu0 %6183
        %6185 = vrot.lane.b32.xlu0 %v4610, 64
        %v6186 = vpop.permute.xlu0 %6185
        %6187 = vrot.lane.b32.xlu0 %v4611, 64
        %v6188 = vpop.permute.xlu0 %6187
        %6189 = vrot.lane.b32.xlu0 %v4612, 64
        %v6190 = vpop.permute.xlu0 %6189
        %6191 = vrot.lane.b32.xlu0 %v4613, 64
        %v6192 = vpop.permute.xlu0 %6191
        %6193 = vrot.lane.b32.xlu0 %v4614, 64
        %v6194 = vpop.permute.xlu0 %6193
        %6195 = vrot.lane.b32.xlu0 %v4615, 64
        %v6196 = vpop.permute.xlu0 %6195
        %6197 = vrot.lane.b32.xlu0 %v4616, 64
        %v6198 = vpop.permute.xlu0 %6197
        %v6200 = vsel %vm2065, %v6184, 0
        %v6203 = vsel %vm2065, %v6186, 0
        %v6206 = vsel %vm2065, %v6188, 0
        %v6209 = vsel %vm2065, %v6190, 0
        %v6212 = vsel %vm2065, %v6192, 0
        %v6215 = vsel %vm2065, %v6194, 0
        %v6218 = vsel %vm2065, %v6196, 0
        %v6221 = vsel %vm2065, %v6198, 0
        %6223 = vmatprep.subr.bf16.mxu0 %v4370
        %6224 = vmatpush1.bf16.msra.mxu0 %v4369
        %6225 = vmatprep.subr.bf16.mxu0 %v4372
        %6226 = vmatpush1.bf16.msra.mxu0 %v4371
        %6227 = vmatprep.subr.bf16.mxu0 0
        %6228 = vmatpush1.bf16.msra.mxu0 0
        %6229 = vmatprep.subr.bf16.mxu0 0
        %6230 = vmatpush1.bf16.msra.mxu0 0
        %6231 = vmatprep.subr.bf16.mxu0 0
        %6232 = vmatpush1.bf16.msra.mxu0 0
        %6233 = vmatprep.subr.bf16.mxu0 0
        %6234 = vmatpush1.bf16.msra.mxu0 0
        %6235 = vmatprep.subr.bf16.mxu0 0
        %6236 = vmatpush1.bf16.msra.mxu0 0
        %6237 = vmatprep.subr.bf16.mxu0 0
        %6238 = vmatpush1.bf16.msra.mxu0 0
        %6239 = vmatprep.subr.bf16.mxu0 0
        %6240 = vmatpush1.bf16.msra.mxu0 0
        %6241 = vmatprep.subr.bf16.mxu0 0
        %6242 = vmatpush1.bf16.msra.mxu0 0
        %6243 = vmatprep.subr.bf16.mxu0 0
        %6244 = vmatpush1.bf16.msra.mxu0 0
        %6245 = vmatprep.subr.bf16.mxu0 0
        %6246 = vmatpush1.bf16.msra.mxu0 0
        %6247 = vmatprep.subr.bf16.mxu0 0
        %6248 = vmatpush1.bf16.msra.mxu0 0
        %6249 = vmatprep.subr.bf16.mxu0 0
        %6250 = vmatpush1.bf16.msra.mxu0 0
        %6251 = vmatprep.subr.bf16.mxu0 0
        %6252 = vmatpush1.bf16.msra.mxu0 0
        %6253 = vmatprep.subr.bf16.mxu0 0
        %6254 = vmatpush1.bf16.msra.mxu0 0
        %6255 = vmatprep.mubr.bf16.mxu0 0
        %6256 = vmatmul.mubr.bf16.gmra.mrb[0].mxu0 %v6200
        %v6257 = vpop.f32.mrb[0].mxu0
        %v6258 = vadd.f32 0.0, %v6257
        %v6259 = vpop.f32.mrb[0].mxu0
        %v6260 = vadd.f32 0.0, %v6259
        %v6261 = vpop.f32.mrb[0].mxu0
        %v6262 = vadd.f32 0.0, %v6261
        %v6263 = vpop.f32.mrb[0].mxu0
        %v6264 = vadd.f32 0.0, %v6263
        %6265 = vmatprep.mubr.bf16.mxu0 0
        %6266 = vmatmul.mubr.bf16.gmra.mrb[0].mxu0 %v6203
        %v6267 = vpop.f32.mrb[0].mxu0
        %v6268 = vadd.f32 0.0, %v6267
        %v6269 = vpop.f32.mrb[0].mxu0
        %v6270 = vadd.f32 0.0, %v6269
        %v6271 = vpop.f32.mrb[0].mxu0
        %v6272 = vadd.f32 0.0, %v6271
        %v6273 = vpop.f32.mrb[0].mxu0
        %v6274 = vadd.f32 0.0, %v6273
        %6275 = vmatprep.mubr.bf16.mxu0 0
        %6276 = vmatmul.mubr.bf16.gmra.mrb[0].mxu0 %v6206
        %v6277 = vpop.f32.mrb[0].mxu0
        %v6278 = vadd.f32 0.0, %v6277
        %v6279 = vpop.f32.mrb[0].mxu0
        %v6280 = vadd.f32 0.0, %v6279
        %v6281 = vpop.f32.mrb[0].mxu0
        %v6282 = vadd.f32 0.0, %v6281
        %v6283 = vpop.f32.mrb[0].mxu0
        %v6284 = vadd.f32 0.0, %v6283
        %6285 = vmatprep.mubr.bf16.mxu0 0
        %6286 = vmatmul.mubr.bf16.gmra.mrb[0].mxu0 %v6209
        %v6287 = vpop.f32.mrb[0].mxu0
        %v6288 = vadd.f32 0.0, %v6287
        %v6289 = vpop.f32.mrb[0].mxu0
        %v6290 = vadd.f32 0.0, %v6289
        %v6291 = vpop.f32.mrb[0].mxu0
        %v6292 = vadd.f32 0.0, %v6291
        %v6293 = vpop.f32.mrb[0].mxu0
        %v6294 = vadd.f32 0.0, %v6293
        %6295 = vmatprep.mubr.bf16.mxu0 0
        %6296 = vmatmul.mubr.bf16.gmra.mrb[0].mxu0 %v6212
        %v6297 = vpop.f32.mrb[0].mxu0
        %v6298 = vadd.f32 0.0, %v6297
        %v6299 = vpop.f32.mrb[0].mxu0
        %v6300 = vadd.f32 0.0, %v6299
        %v6301 = vpop.f32.mrb[0].mxu0
        %v6302 = vadd.f32 0.0, %v6301
        %v6303 = vpop.f32.mrb[0].mxu0
        %v6304 = vadd.f32 0.0, %v6303
        %6305 = vmatprep.mubr.bf16.mxu0 0
        %6306 = vmatmul.mubr.bf16.gmra.mrb[0].mxu0 %v6215
        %v6307 = vpop.f32.mrb[0].mxu0
        %v6308 = vadd.f32 0.0, %v6307
        %v6309 = vpop.f32.mrb[0].mxu0
        %v6310 = vadd.f32 0.0, %v6309
        %v6311 = vpop.f32.mrb[0].mxu0
        %v6312 = vadd.f32 0.0, %v6311
        %v6313 = vpop.f32.mrb[0].mxu0
        %v6314 = vadd.f32 0.0, %v6313
        %6315 = vmatprep.mubr.bf16.mxu0 0
        %6316 = vmatmul.mubr.bf16.gmra.mrb[0].mxu0 %v6218
        %v6317 = vpop.f32.mrb[0].mxu0
        %v6318 = vadd.f32 0.0, %v6317
        %v6319 = vpop.f32.mrb[0].mxu0
        %v6320 = vadd.f32 0.0, %v6319
        %v6321 = vpop.f32.mrb[0].mxu0
        %v6322 = vadd.f32 0.0, %v6321
        %v6323 = vpop.f32.mrb[0].mxu0
        %v6324 = vadd.f32 0.0, %v6323
        %6325 = vmatprep.mubr.bf16.mxu0 0
        %6326 = vmatmul.mubr.bf16.gmra.mrb[0].mxu0 %v6221
        %v6327 = vpop.f32.mrb[0].mxu0
        %v6328 = vadd.f32 0.0, %v6327
        %v6329 = vpop.f32.mrb[0].mxu0
        %v6330 = vadd.f32 0.0, %v6329
        %v6331 = vpop.f32.mrb[0].mxu0
        %v6332 = vadd.f32 0.0, %v6331
        %v6333 = vpop.f32.mrb[0].mxu0
        %v6334 = vadd.f32 0.0, %v6333
        %6335 = vdwg.mxu0
        %v6336 = vmax.f32 %v6258, %v6260
        %6337 = vmax.xlane.f32.xlu0 %v6336
        %v6338 = vpop.xlane.xlu0 %6337
        %v6339 = vmax.f32 %v6262, %v6264
        %6340 = vmax.xlane.f32.xlu0 %v6339
        %v6341 = vpop.xlane.xlu0 %6340
        %v6342 = vmax.f32 %v6268, %v6270
        %6343 = vmax.xlane.f32.xlu0 %v6342
        %v6344 = vpop.xlane.xlu0 %6343
        %v6345 = vmax.f32 %v6272, %v6274
        %6346 = vmax.xlane.f32.xlu0 %v6345
        %v6347 = vpop.xlane.xlu0 %6346
        %v6348 = vmax.f32 %v6278, %v6280
        %6349 = vmax.xlane.f32.xlu0 %v6348
        %v6350 = vpop.xlane.xlu0 %6349
        %v6351 = vmax.f32 %v6282, %v6284
        %6352 = vmax.xlane.f32.xlu0 %v6351
        %v6353 = vpop.xlane.xlu0 %6352
        %v6354 = vmax.f32 %v6288, %v6290
        %6355 = vmax.xlane.f32.xlu0 %v6354
        %v6356 = vpop.xlane.xlu0 %6355
        %v6357 = vmax.f32 %v6292, %v6294
        %6358 = vmax.xlane.f32.xlu0 %v6357
        %v6359 = vpop.xlane.xlu0 %6358
        %v6360 = vmax.f32 %v6298, %v6300
        %6361 = vmax.xlane.f32.xlu0 %v6360
        %v6362 = vpop.xlane.xlu0 %6361
        %v6363 = vmax.f32 %v6302, %v6304
        %6364 = vmax.xlane.f32.xlu0 %v6363
        %v6365 = vpop.xlane.xlu0 %6364
        %v6366 = vmax.f32 %v6308, %v6310
        %6367 = vmax.xlane.f32.xlu0 %v6366
        %v6368 = vpop.xlane.xlu0 %6367
        %v6369 = vmax.f32 %v6312, %v6314
        %6370 = vmax.xlane.f32.xlu0 %v6369
        %v6371 = vpop.xlane.xlu0 %6370
        %v6372 = vmax.f32 %v6318, %v6320
        %6373 = vmax.xlane.f32.xlu0 %v6372
        %v6374 = vpop.xlane.xlu0 %6373
        %v6375 = vmax.f32 %v6322, %v6324
        %6376 = vmax.xlane.f32.xlu0 %v6375
        %v6377 = vpop.xlane.xlu0 %6376
        %v6378 = vmax.f32 %v6328, %v6330
        %6379 = vmax.xlane.f32.xlu0 %v6378
        %v6380 = vpop.xlane.xlu0 %6379
        %v6381 = vmax.f32 %v6332, %v6334
        %6382 = vmax.xlane.f32.xlu0 %v6381
        %v6383 = vpop.xlane.xlu0 %6382
        %v6384 = vsub.f32 %v6258, %v6338
        %v6385 = vsub.f32 %v6260, %v6338
        %v6386 = vsub.f32 %v6262, %v6341
        %v6387 = vsub.f32 %v6264, %v6341
        %v6388 = vsub.f32 %v6268, %v6344
        %v6389 = vsub.f32 %v6270, %v6344
        %v6390 = vsub.f32 %v6272, %v6347
        %v6391 = vsub.f32 %v6274, %v6347
        %v6392 = vsub.f32 %v6278, %v6350
        %v6393 = vsub.f32 %v6280, %v6350
        %v6394 = vsub.f32 %v6282, %v6353
        %v6395 = vsub.f32 %v6284, %v6353
        %v6396 = vsub.f32 %v6288, %v6356
        %v6397 = vsub.f32 %v6290, %v6356
        %v6398 = vsub.f32 %v6292, %v6359
        %v6399 = vsub.f32 %v6294, %v6359
        %v6400 = vsub.f32 %v6298, %v6362
        %v6401 = vsub.f32 %v6300, %v6362
        %v6402 = vsub.f32 %v6302, %v6365
        %v6403 = vsub.f32 %v6304, %v6365
        %v6404 = vsub.f32 %v6308, %v6368
        %v6405 = vsub.f32 %v6310, %v6368
        %v6406 = vsub.f32 %v6312, %v6371
        %v6407 = vsub.f32 %v6314, %v6371
        %v6408 = vsub.f32 %v6318, %v6374
        %v6409 = vsub.f32 %v6320, %v6374
        %v6410 = vsub.f32 %v6322, %v6377
        %v6411 = vsub.f32 %v6324, %v6377
        %v6412 = vsub.f32 %v6328, %v6380
        %v6413 = vsub.f32 %v6330, %v6380
        %v6414 = vsub.f32 %v6332, %v6383
        %v6415 = vsub.f32 %v6334, %v6383
        %v6416 = vmul.f32 %v6384, 1.442695
        %v6417 = vpow.pop %v6416
        %v6418 = vmul.f32 %v6385, 1.442695
        %v6419 = vpow.pop %v6418
        %v6420 = vmul.f32 %v6386, 1.442695
        %v6421 = vpow.pop %v6420
        %v6422 = vmul.f32 %v6387, 1.442695
        %v6423 = vpow.pop %v6422
        %v6424 = vmul.f32 %v6388, 1.442695
        %v6425 = vpow.pop %v6424
        %v6426 = vmul.f32 %v6389, 1.442695
        %v6427 = vpow.pop %v6426
        %v6428 = vmul.f32 %v6390, 1.442695
        %v6429 = vpow.pop %v6428
        %v6430 = vmul.f32 %v6391, 1.442695
        %v6431 = vpow.pop %v6430
        %v6432 = vmul.f32 %v6392, 1.442695
        %v6433 = vpow.pop %v6432
        %v6434 = vmul.f32 %v6393, 1.442695
        %v6435 = vpow.pop %v6434
        %v6436 = vmul.f32 %v6394, 1.442695
        %v6437 = vpow.pop %v6436
        %v6438 = vmul.f32 %v6395, 1.442695
        %v6439 = vpow.pop %v6438
        %v6440 = vmul.f32 %v6396, 1.442695
        %v6441 = vpow.pop %v6440
        %v6442 = vmul.f32 %v6397, 1.442695
        %v6443 = vpow.pop %v6442
        %v6444 = vmul.f32 %v6398, 1.442695
        %v6445 = vpow.pop %v6444
        %v6446 = vmul.f32 %v6399, 1.442695
        %v6447 = vpow.pop %v6446
        %v6448 = vmul.f32 %v6400, 1.442695
        %v6449 = vpow.pop %v6448
        %v6450 = vmul.f32 %v6401, 1.442695
        %v6451 = vpow.pop %v6450
        %v6452 = vmul.f32 %v6402, 1.442695
        %v6453 = vpow.pop %v6452
        %v6454 = vmul.f32 %v6403, 1.442695
        %v6455 = vpow.pop %v6454
        %v6456 = vmul.f32 %v6404, 1.442695
        %v6457 = vpow.pop %v6456
        %v6458 = vmul.f32 %v6405, 1.442695
        %v6459 = vpow.pop %v6458
        %v6460 = vmul.f32 %v6406, 1.442695
        %v6461 = vpow.pop %v6460
        %v6462 = vmul.f32 %v6407, 1.442695
        %v6463 = vpow.pop %v6462
        %v6464 = vmul.f32 %v6408, 1.442695
        %v6465 = vpow.pop %v6464
        %v6466 = vmul.f32 %v6409, 1.442695
        %v6467 = vpow.pop %v6466
        %v6468 = vmul.f32 %v6410, 1.442695
        %v6469 = vpow.pop %v6468
        %v6470 = vmul.f32 %v6411, 1.442695
        %v6471 = vpow.pop %v6470
        %v6472 = vmul.f32 %v6412, 1.442695
        %v6473 = vpow.pop %v6472
        %v6474 = vmul.f32 %v6413, 1.442695
        %v6475 = vpow.pop %v6474
        %v6476 = vmul.f32 %v6414, 1.442695
        %v6477 = vpow.pop %v6476
        %v6478 = vmul.f32 %v6415, 1.442695
        %v6479 = vpow.pop %v6478
        %v6480 = vadd.f32 %v6417, %v6419
        %6481 = vadd.xlane.f32.xlu0 %v6480
        %v6482 = vpop.xlane.xlu0 %6481
        %v6483 = vadd.f32 %v6421, %v6423
        %6484 = vadd.xlane.f32.xlu0 %v6483
        %v6485 = vpop.xlane.xlu0 %6484
        %v6486 = vadd.f32 %v6425, %v6427
        %6487 = vadd.xlane.f32.xlu0 %v6486
        %v6488 = vpop.xlane.xlu0 %6487
        %v6489 = vadd.f32 %v6429, %v6431
        %6490 = vadd.xlane.f32.xlu0 %v6489
        %v6491 = vpop.xlane.xlu0 %6490
        %v6492 = vadd.f32 %v6433, %v6435
        %6493 = vadd.xlane.f32.xlu0 %v6492
        %v6494 = vpop.xlane.xlu0 %6493
        %v6495 = vadd.f32 %v6437, %v6439
        %6496 = vadd.xlane.f32.xlu0 %v6495
        %v6497 = vpop.xlane.xlu0 %6496
        %v6498 = vadd.f32 %v6441, %v6443
        %6499 = vadd.xlane.f32.xlu0 %v6498
        %v6500 = vpop.xlane.xlu0 %6499
        %v6501 = vadd.f32 %v6445, %v6447
        %6502 = vadd.xlane.f32.xlu0 %v6501
        %v6503 = vpop.xlane.xlu0 %6502
        %v6504 = vadd.f32 %v6449, %v6451
        %6505 = vadd.xlane.f32.xlu0 %v6504
        %v6506 = vpop.xlane.xlu0 %6505
        %v6507 = vadd.f32 %v6453, %v6455
        %6508 = vadd.xlane.f32.xlu0 %v6507
        %v6509 = vpop.xlane.xlu0 %6508
        %v6510 = vadd.f32 %v6457, %v6459
        %6511 = vadd.xlane.f32.xlu0 %v6510
        %v6512 = vpop.xlane.xlu0 %6511
        %v6513 = vadd.f32 %v6461, %v6463
        %6514 = vadd.xlane.f32.xlu0 %v6513
        %v6515 = vpop.xlane.xlu0 %6514
        %v6516 = vadd.f32 %v6465, %v6467
        %6517 = vadd.xlane.f32.xlu0 %v6516
        %v6518 = vpop.xlane.xlu0 %6517
        %v6519 = vadd.f32 %v6469, %v6471
        %6520 = vadd.xlane.f32.xlu0 %v6519
        %v6521 = vpop.xlane.xlu0 %6520
        %v6522 = vadd.f32 %v6473, %v6475
        %6523 = vadd.xlane.f32.xlu0 %v6522
        %v6524 = vpop.xlane.xlu0 %6523
        %v6525 = vadd.f32 %v6477, %v6479
        %6526 = vadd.xlane.f32.xlu0 %v6525
        %v6527 = vpop.xlane.xlu0 %6526
        %v6528 = vrcp.pop %v6482
        %v6529 = vrcp.pop %v6485
        %v6530 = vrcp.pop %v6488
        %v6531 = vrcp.pop %v6491
        %v6532 = vrcp.pop %v6494
        %v6533 = vrcp.pop %v6497
        %v6534 = vrcp.pop %v6500
        %v6535 = vrcp.pop %v6503
        %v6536 = vrcp.pop %v6506
        %v6537 = vrcp.pop %v6509
        %v6538 = vrcp.pop %v6512
        %v6539 = vrcp.pop %v6515
        %v6540 = vrcp.pop %v6518
        %v6541 = vrcp.pop %v6521
        %v6542 = vrcp.pop %v6524
        %v6543 = vrcp.pop %v6527
        %v6544 = vmul.f32 %v6417, %v6528
        %v6545 = vmul.f32 %v6419, %v6528
        %v6546 = vmul.f32 %v6421, %v6529
        %v6547 = vmul.f32 %v6423, %v6529
        %v6548 = vmul.f32 %v6425, %v6530
        %v6549 = vmul.f32 %v6427, %v6530
        %v6550 = vmul.f32 %v6429, %v6531
        %v6551 = vmul.f32 %v6431, %v6531
        %v6552 = vmul.f32 %v6433, %v6532
        %v6553 = vmul.f32 %v6435, %v6532
        %v6554 = vmul.f32 %v6437, %v6533
        %v6555 = vmul.f32 %v6439, %v6533
        %v6556 = vmul.f32 %v6441, %v6534
        %v6557 = vmul.f32 %v6443, %v6534
        %v6558 = vmul.f32 %v6445, %v6535
        %v6559 = vmul.f32 %v6447, %v6535
        %v6560 = vmul.f32 %v6449, %v6536
        %v6561 = vmul.f32 %v6451, %v6536
        %v6562 = vmul.f32 %v6453, %v6537
        %v6563 = vmul.f32 %v6455, %v6537
        %v6564 = vmul.f32 %v6457, %v6538
        %v6565 = vmul.f32 %v6459, %v6538
        %v6566 = vmul.f32 %v6461, %v6539
        %v6567 = vmul.f32 %v6463, %v6539
        %v6568 = vmul.f32 %v6465, %v6540
        %v6569 = vmul.f32 %v6467, %v6540
        %v6570 = vmul.f32 %v6469, %v6541
        %v6571 = vmul.f32 %v6471, %v6541
        %v6572 = vmul.f32 %v6473, %v6542
        %v6573 = vmul.f32 %v6475, %v6542
        %v6574 = vmul.f32 %v6477, %v6543
        %v6575 = vmul.f32 %v6479, %v6543
        %v6576 = vpack.c.bf16 %v6546, %v6544
        %v6577 = vpack.c.bf16 %v6547, %v6545
        %v6578 = vpack.c.bf16 %v6550, %v6548
        %v6579 = vpack.c.bf16 %v6551, %v6549
        %v6580 = vpack.c.bf16 %v6554, %v6552
        %v6581 = vpack.c.bf16 %v6555, %v6553
        %v6582 = vpack.c.bf16 %v6558, %v6556
        %v6583 = vpack.c.bf16 %v6559, %v6557
        %v6584 = vpack.c.bf16 %v6562, %v6560
        %v6585 = vpack.c.bf16 %v6563, %v6561
        %v6586 = vpack.c.bf16 %v6566, %v6564
        %v6587 = vpack.c.bf16 %v6567, %v6565
        %v6588 = vpack.c.bf16 %v6570, %v6568
        %v6589 = vpack.c.bf16 %v6571, %v6569
        %v6590 = vpack.c.bf16 %v6574, %v6572
        %v6591 = vpack.c.bf16 %v6575, %v6573
        %6592 = vrot.lane.b32.xlu0 %v4809, 64
        %v6593 = vpop.permute.xlu0 %6592
        %6594 = vrot.lane.b32.xlu0 %v4810, 64
        %v6595 = vpop.permute.xlu0 %6594
        %6596 = vrot.lane.b32.xlu0 %v4811, 64
        %v6597 = vpop.permute.xlu0 %6596
        %6598 = vrot.lane.b32.xlu0 %v4812, 64
        %v6599 = vpop.permute.xlu0 %6598
        %6600 = vrot.lane.b32.xlu0 %v4813, 64
        %v6601 = vpop.permute.xlu0 %6600
        %6602 = vrot.lane.b32.xlu0 %v4814, 64
        %v6603 = vpop.permute.xlu0 %6602
        %6604 = vrot.lane.b32.xlu0 %v4815, 64
        %v6605 = vpop.permute.xlu0 %6604
        %6606 = vrot.lane.b32.xlu0 %v4816, 64
        %v6607 = vpop.permute.xlu0 %6606
        %6608 = vrot.lane.b32.xlu0 %v4817, 64
        %v6609 = vpop.permute.xlu0 %6608
        %6610 = vrot.lane.b32.xlu0 %v4818, 64
        %v6611 = vpop.permute.xlu0 %6610
        %6612 = vrot.lane.b32.xlu0 %v4819, 64
        %v6613 = vpop.permute.xlu0 %6612
        %6614 = vrot.lane.b32.xlu0 %v4820, 64
        %v6615 = vpop.permute.xlu0 %6614
        %6616 = vrot.lane.b32.xlu0 %v4821, 64
        %v6617 = vpop.permute.xlu0 %6616
        %6618 = vrot.lane.b32.xlu0 %v4822, 64
        %v6619 = vpop.permute.xlu0 %6618
        %6620 = vrot.lane.b32.xlu0 %v4823, 64
        %v6621 = vpop.permute.xlu0 %6620
        %6622 = vrot.lane.b32.xlu0 %v4824, 64
        %v6623 = vpop.permute.xlu0 %6622
        %6640 = vmatprep.subr.bf16.mxu0 0
        %6641 = vmatpush1.bf16.msra.mxu0 %v6593
        %6642 = vmatprep.subr.bf16.mxu0 0
        %6643 = vmatpush1.bf16.msra.mxu0 %v6595
        %6644 = vmatprep.subr.bf16.mxu0 0
        %6645 = vmatpush1.bf16.msra.mxu0 %v6597
        %6646 = vmatprep.subr.bf16.mxu0 0
        %6647 = vmatpush1.bf16.msra.mxu0 %v6599
        %6648 = vmatprep.subr.bf16.mxu0 0
        %6649 = vmatpush1.bf16.msra.mxu0 %v6601
        %6650 = vmatprep.subr.bf16.mxu0 0
        %6651 = vmatpush1.bf16.msra.mxu0 %v6603
        %6652 = vmatprep.subr.bf16.mxu0 0
        %6653 = vmatpush1.bf16.msra.mxu0 %v6605
        %6654 = vmatprep.subr.bf16.mxu0 0
        %6655 = vmatpush1.bf16.msra.mxu0 %v6607
        %6656 = vmatprep.subr.bf16.mxu0 0
        %6657 = vmatpush1.bf16.msra.mxu0 %v6609
        %6658 = vmatprep.subr.bf16.mxu0 0
        %6659 = vmatpush1.bf16.msra.mxu0 %v6611
        %6660 = vmatprep.subr.bf16.mxu0 0
        %6661 = vmatpush1.bf16.msra.mxu0 %v6613
        %6662 = vmatprep.subr.bf16.mxu0 0
        %6663 = vmatpush1.bf16.msra.mxu0 %v6615
        %6664 = vmatprep.subr.bf16.mxu0 0
        %6665 = vmatpush1.bf16.msra.mxu0 %v6617
        %6666 = vmatprep.subr.bf16.mxu0 0
        %6667 = vmatpush1.bf16.msra.mxu0 %v6619
        %6668 = vmatprep.subr.bf16.mxu0 0
        %6669 = vmatpush1.bf16.msra.mxu0 %v6621
        %6670 = vmatprep.subr.bf16.mxu0 0
        %6671 = vmatpush1.bf16.msra.mxu0 %v6623
        %6672 = vmatprep.mubr.bf16.mxu0 %v6577
        %6673 = vmatmul.mubr.bf16.gmra.mrb[0].mxu0 %v6576
        %v6674 = vpop.f32.mrb[0].mxu0
        %v6675 = vadd.f32 0.0, %v6674
        %v6676 = vpop.f32.mrb[0].mxu0
        %v6677 = vpop.f32.mrb[0].mxu0
        %v6678 = vadd.f32 0.0, %v6677
        %v6679 = vpop.f32.mrb[0].mxu0
        %6680 = vmatprep.mubr.bf16.mxu0 %v6579
        %6681 = vmatmul.mubr.bf16.gmra.mrb[0].mxu0 %v6578
        %v6682 = vpop.f32.mrb[0].mxu0
        %v6683 = vadd.f32 0.0, %v6682
        %v6684 = vpop.f32.mrb[0].mxu0
        %v6685 = vpop.f32.mrb[0].mxu0
        %v6686 = vadd.f32 0.0, %v6685
        %v6687 = vpop.f32.mrb[0].mxu0
        %6688 = vmatprep.mubr.bf16.mxu0 %v6581
        %6689 = vmatmul.mubr.bf16.gmra.mrb[0].mxu0 %v6580
        %v6690 = vpop.f32.mrb[0].mxu0
        %v6691 = vadd.f32 0.0, %v6690
        %v6692 = vpop.f32.mrb[0].mxu0
        %v6693 = vpop.f32.mrb[0].mxu0
        %v6694 = vadd.f32 0.0, %v6693
        %v6695 = vpop.f32.mrb[0].mxu0
        %6696 = vmatprep.mubr.bf16.mxu0 %v6583
        %6697 = vmatmul.mubr.bf16.gmra.mrb[0].mxu0 %v6582
        %v6698 = vpop.f32.mrb[0].mxu0
        %v6699 = vadd.f32 0.0, %v6698
        %v6700 = vpop.f32.mrb[0].mxu0
        %v6701 = vpop.f32.mrb[0].mxu0
        %v6702 = vadd.f32 0.0, %v6701
        %v6703 = vpop.f32.mrb[0].mxu0
        %6704 = vmatprep.mubr.bf16.mxu0 %v6585
        %6705 = vmatmul.mubr.bf16.gmra.mrb[0].mxu0 %v6584
        %v6706 = vpop.f32.mrb[0].mxu0
        %v6707 = vadd.f32 0.0, %v6706
        %v6708 = vpop.f32.mrb[0].mxu0
        %v6709 = vpop.f32.mrb[0].mxu0
        %v6710 = vadd.f32 0.0, %v6709
        %v6711 = vpop.f32.mrb[0].mxu0
        %6712 = vmatprep.mubr.bf16.mxu0 %v6587
        %6713 = vmatmul.mubr.bf16.gmra.mrb[0].mxu0 %v6586
        %v6714 = vpop.f32.mrb[0].mxu0
        %v6715 = vadd.f32 0.0, %v6714
        %v6716 = vpop.f32.mrb[0].mxu0
        %v6717 = vpop.f32.mrb[0].mxu0
        %v6718 = vadd.f32 0.0, %v6717
        %v6719 = vpop.f32.mrb[0].mxu0
        %6720 = vmatprep.mubr.bf16.mxu0 %v6589
        %6721 = vmatmul.mubr.bf16.gmra.mrb[0].mxu0 %v6588
        %v6722 = vpop.f32.mrb[0].mxu0
        %v6723 = vadd.f32 0.0, %v6722
        %v6724 = vpop.f32.mrb[0].mxu0
        %v6725 = vpop.f32.mrb[0].mxu0
        %v6726 = vadd.f32 0.0, %v6725
        %v6727 = vpop.f32.mrb[0].mxu0
        %6728 = vmatprep.mubr.bf16.mxu0 %v6591
        %6729 = vmatmul.mubr.bf16.gmra.mrb[0].mxu0 %v6590
        %v6730 = vpop.f32.mrb[0].mxu0
        %v6731 = vadd.f32 0.0, %v6730
        %v6732 = vpop.f32.mrb[0].mxu0
        %v6733 = vpop.f32.mrb[0].mxu0
        %v6734 = vadd.f32 0.0, %v6733
        %v6735 = vpop.f32.mrb[0].mxu0
        %6736 = vdwg.mxu0
        %v6737 = vpack.c.bf16 %v6678, %v6675
        %v6738 = vpack.c.bf16 %v6686, %v6683
        %v6739 = vpack.c.bf16 %v6694, %v6691
        %v6740 = vpack.c.bf16 %v6702, %v6699
        %v6741 = vpack.c.bf16 %v6710, %v6707
        %v6742 = vpack.c.bf16 %v6718, %v6715
        %v6743 = vpack.c.bf16 %v6726, %v6723
        %v6744 = vpack.c.bf16 %v6734, %v6731
        %v6745 = vld [vmem:[%s23 + $0x20] sm:$0xf]
        %v6746 = vld [vmem:[%s23 + $0x24] sm:$0xf]
        %v6747 = vld [vmem:[%s23 + $0x28] sm:$0xf]
        %v6748 = vld [vmem:[%s23 + $0x2c] sm:$0xf]
        %v6753 = vunpack.c.l.b16 %v6745
        %v6754 = vunpack.c.l.b16 %v6746
        %v6755 = vunpack.c.l.b16 %v6747
        %v6756 = vunpack.c.l.b16 %v6748
        %v6757 = vpack.c.b16 %v6754, %v6753
        %v6758 = vpack.c.b16 %v6756, %v6755
        %v6762 = vsel %vm2065, %v6737, 0
        %v6765 = vsel %vm2065, %v6738, 0
        %v6768 = vsel %vm2065, %v6739, 0
        %v6771 = vsel %vm2065, %v6740, 0
        %v6774 = vsel %vm2065, %v6741, 0
        %v6777 = vsel %vm2065, %v6742, 0
        %v6780 = vsel %vm2065, %v6743, 0
        %v6783 = vsel %vm2065, %v6744, 0
        %6785 = vmatprep.subr.bf16.mxu0 0
        %6786 = vmatpush1.bf16.msra.mxu0 %v6757
        %6787 = vmatprep.subr.bf16.mxu0 0
        %6788 = vmatpush1.bf16.msra.mxu0 %v6758
        %6789 = vmatprep.subr.bf16.mxu0 0
        %6790 = vmatpush1.bf16.msra.mxu0 0
        %6791 = vmatprep.subr.bf16.mxu0 0
        %6792 = vmatpush1.bf16.msra.mxu0 0
        %6793 = vmatprep.subr.bf16.mxu0 0
        %6794 = vmatpush1.bf16.msra.mxu0 0
        %6795 = vmatprep.subr.bf16.mxu0 0
        %6796 = vmatpush1.bf16.msra.mxu0 0
        %6797 = vmatprep.subr.bf16.mxu0 0
        %6798 = vmatpush1.bf16.msra.mxu0 0
        %6799 = vmatprep.subr.bf16.mxu0 0
        %6800 = vmatpush1.bf16.msra.mxu0 0
        %6801 = vmatprep.subr.bf16.mxu0 0
        %6802 = vmatpush1.bf16.msra.mxu0 0
        %6803 = vmatprep.subr.bf16.mxu0 0
        %6804 = vmatpush1.bf16.msra.mxu0 0
        %6805 = vmatprep.subr.bf16.mxu0 0
        %6806 = vmatpush1.bf16.msra.mxu0 0
        %6807 = vmatprep.subr.bf16.mxu0 0
        %6808 = vmatpush1.bf16.msra.mxu0 0
        %6809 = vmatprep.subr.bf16.mxu0 0
        %6810 = vmatpush1.bf16.msra.mxu0 0
        %6811 = vmatprep.subr.bf16.mxu0 0
        %6812 = vmatpush1.bf16.msra.mxu0 0
        %6813 = vmatprep.subr.bf16.mxu0 0
        %6814 = vmatpush1.bf16.msra.mxu0 0
        %6815 = vmatprep.subr.bf16.mxu0 0
        %6816 = vmatpush1.bf16.msra.mxu0 0
        %6817 = vmatprep.mubr.bf16.mxu0 0
        %6818 = vmatmul.mubr.bf16.gmra.mrb[0].mxu0 %v6762
        %v6819 = vpop.f32.mrb[0].mxu0
        %v6820 = vadd.f32 0.0, %v6819
        %v6821 = vpop.f32.mrb[0].mxu0
        %v6822 = vpop.f32.mrb[0].mxu0
        %v6823 = vadd.f32 0.0, %v6822
        %v6824 = vpop.f32.mrb[0].mxu0
        %6825 = vmatprep.mubr.bf16.mxu0 0
        %6826 = vmatmul.mubr.bf16.gmra.mrb[0].mxu0 %v6765
        %v6827 = vpop.f32.mrb[0].mxu0
        %v6828 = vadd.f32 0.0, %v6827
        %v6829 = vpop.f32.mrb[0].mxu0
        %v6830 = vpop.f32.mrb[0].mxu0
        %v6831 = vadd.f32 0.0, %v6830
        %v6832 = vpop.f32.mrb[0].mxu0
        %6833 = vmatprep.mubr.bf16.mxu0 0
        %6834 = vmatmul.mubr.bf16.gmra.mrb[0].mxu0 %v6768
        %v6835 = vpop.f32.mrb[0].mxu0
        %v6836 = vadd.f32 0.0, %v6835
        %v6837 = vpop.f32.mrb[0].mxu0
        %v6838 = vpop.f32.mrb[0].mxu0
        %v6839 = vadd.f32 0.0, %v6838
        %v6840 = vpop.f32.mrb[0].mxu0
        %6841 = vmatprep.mubr.bf16.mxu0 0
        %6842 = vmatmul.mubr.bf16.gmra.mrb[0].mxu0 %v6771
        %v6843 = vpop.f32.mrb[0].mxu0
        %v6844 = vadd.f32 0.0, %v6843
        %v6845 = vpop.f32.mrb[0].mxu0
        %v6846 = vpop.f32.mrb[0].mxu0
        %v6847 = vadd.f32 0.0, %v6846
        %v6848 = vpop.f32.mrb[0].mxu0
        %6849 = vmatprep.mubr.bf16.mxu0 0
        %6850 = vmatmul.mubr.bf16.gmra.mrb[0].mxu0 %v6774
        %v6851 = vpop.f32.mrb[0].mxu0
        %v6852 = vadd.f32 0.0, %v6851
        %v6853 = vpop.f32.mrb[0].mxu0
        %v6854 = vpop.f32.mrb[0].mxu0
        %v6855 = vadd.f32 0.0, %v6854
        %v6856 = vpop.f32.mrb[0].mxu0
        %6857 = vmatprep.mubr.bf16.mxu0 0
        %6858 = vmatmul.mubr.bf16.gmra.mrb[0].mxu0 %v6777
        %v6859 = vpop.f32.mrb[0].mxu0
        %v6860 = vadd.f32 0.0, %v6859
        %v6861 = vpop.f32.mrb[0].mxu0
        %v6862 = vpop.f32.mrb[0].mxu0
        %v6863 = vadd.f32 0.0, %v6862
        %v6864 = vpop.f32.mrb[0].mxu0
        %6865 = vmatprep.mubr.bf16.mxu0 0
        %6866 = vmatmul.mubr.bf16.gmra.mrb[0].mxu0 %v6780
        %v6867 = vpop.f32.mrb[0].mxu0
        %v6868 = vadd.f32 0.0, %v6867
        %v6869 = vpop.f32.mrb[0].mxu0
        %v6870 = vpop.f32.mrb[0].mxu0
        %v6871 = vadd.f32 0.0, %v6870
        %v6872 = vpop.f32.mrb[0].mxu0
        %6873 = vmatprep.mubr.bf16.mxu0 0
        %6874 = vmatmul.mubr.bf16.gmra.mrb[0].mxu0 %v6783
        %v6875 = vpop.f32.mrb[0].mxu0
        %v6876 = vadd.f32 0.0, %v6875
        %v6877 = vpop.f32.mrb[0].mxu0
        %v6878 = vpop.f32.mrb[0].mxu0
        %v6879 = vadd.f32 0.0, %v6878
        %v6880 = vpop.f32.mrb[0].mxu0
        %6881 = vdwg.mxu0
        %v6882 = vadd.f32 %v6121, %v6820
        %v6883 = vadd.f32 %v6124, %v6823
        %v6884 = vadd.f32 %v6129, %v6828
        %v6885 = vadd.f32 %v6132, %v6831
        %v6886 = vadd.f32 %v6137, %v6836
        %v6887 = vadd.f32 %v6140, %v6839
        %v6888 = vadd.f32 %v6145, %v6844
        %v6889 = vadd.f32 %v6148, %v6847
        %v6890 = vadd.f32 %v6153, %v6852
        %v6891 = vadd.f32 %v6156, %v6855
        %v6892 = vadd.f32 %v6161, %v6860
        %v6893 = vadd.f32 %v6164, %v6863
        %v6894 = vadd.f32 %v6169, %v6868
        %v6895 = vadd.f32 %v6172, %v6871
        %v6896 = vadd.f32 %v6177, %v6876
        %v6897 = vadd.f32 %v6180, %v6879
        %6898 = vrot.lane.b32.xlu0 %v4609, 32
        %v6899 = vpop.permute.xlu0 %6898
        %6900 = vrot.lane.b32.xlu0 %v4610, 32
        %v6901 = vpop.permute.xlu0 %6900
        %6902 = vrot.lane.b32.xlu0 %v4611, 32
        %v6903 = vpop.permute.xlu0 %6902
        %6904 = vrot.lane.b32.xlu0 %v4612, 32
        %v6905 = vpop.permute.xlu0 %6904
        %6906 = vrot.lane.b32.xlu0 %v4613, 32
        %v6907 = vpop.permute.xlu0 %6906
        %6908 = vrot.lane.b32.xlu0 %v4614, 32
        %v6909 = vpop.permute.xlu0 %6908
        %6910 = vrot.lane.b32.xlu0 %v4615, 32
        %v6911 = vpop.permute.xlu0 %6910
        %6912 = vrot.lane.b32.xlu0 %v4616, 32
        %v6913 = vpop.permute.xlu0 %6912
        %v6915 = vsel %vm2065, %v6899, 0
        %v6918 = vsel %vm2065, %v6901, 0
        %v6921 = vsel %vm2065, %v6903, 0
        %v6924 = vsel %vm2065, %v6905, 0
        %v6927 = vsel %vm2065, %v6907, 0
        %v6930 = vsel %vm2065, %v6909, 0
        %v6933 = vsel %vm2065, %v6911, 0
        %v6936 = vsel %vm2065, %v6913, 0
        %6938 = vmatprep.subr.bf16.mxu0 %v4374
        %6939 = vmatpush1.bf16.msra.mxu0 %v4373
        %6940 = vmatprep.subr.bf16.mxu0 %v4376
        %6941 = vmatpush1.bf16.msra.mxu0 %v4375
        %6942 = vmatprep.subr.bf16.mxu0 0
        %6943 = vmatpush1.bf16.msra.mxu0 0
        %6944 = vmatprep.subr.bf16.mxu0 0
        %6945 = vmatpush1.bf16.msra.mxu0 0
        %6946 = vmatprep.subr.bf16.mxu0 0
        %6947 = vmatpush1.bf16.msra.mxu0 0
        %6948 = vmatprep.subr.bf16.mxu0 0
        %6949 = vmatpush1.bf16.msra.mxu0 0
        %6950 = vmatprep.subr.bf16.mxu0 0
        %6951 = vmatpush1.bf16.msra.mxu0 0
        %6952 = vmatprep.subr.bf16.mxu0 0
        %6953 = vmatpush1.bf16.msra.mxu0 0
        %6954 = vmatprep.subr.bf16.mxu0 0
        %6955 = vmatpush1.bf16.msra.mxu0 0
        %6956 = vmatprep.subr.bf16.mxu0 0
        %6957 = vmatpush1.bf16.msra.mxu0 0
        %6958 = vmatprep.subr.bf16.mxu0 0
        %6959 = vmatpush1.bf16.msra.mxu0 0
        %6960 = vmatprep.subr.bf16.mxu0 0
        %6961 = vmatpush1.bf16.msra.mxu0 0
        %6962 = vmatprep.subr.bf16.mxu0 0
        %6963 = vmatpush1.bf16.msra.mxu0 0
        %6964 = vmatprep.subr.bf16.mxu0 0
        %6965 = vmatpush1.bf16.msra.mxu0 0
        %6966 = vmatprep.subr.bf16.mxu0 0
        %6967 = vmatpush1.bf16.msra.mxu0 0
        %6968 = vmatprep.subr.bf16.mxu0 0
        %6969 = vmatpush1.bf16.msra.mxu0 0
        %6970 = vmatprep.mubr.bf16.mxu0 0
        %6971 = vmatmul.mubr.bf16.gmra.mrb[0].mxu0 %v6915
        %v6972 = vpop.f32.mrb[0].mxu0
        %v6973 = vadd.f32 0.0, %v6972
        %v6974 = vpop.f32.mrb[0].mxu0
        %v6975 = vadd.f32 0.0, %v6974
        %v6976 = vpop.f32.mrb[0].mxu0
        %v6977 = vadd.f32 0.0, %v6976
        %v6978 = vpop.f32.mrb[0].mxu0
        %v6979 = vadd.f32 0.0, %v6978
        %6980 = vmatprep.mubr.bf16.mxu0 0
        %6981 = vmatmul.mubr.bf16.gmra.mrb[0].mxu0 %v6918
        %v6982 = vpop.f32.mrb[0].mxu0
        %v6983 = vadd.f32 0.0, %v6982
        %v6984 = vpop.f32.mrb[0].mxu0
        %v6985 = vadd.f32 0.0, %v6984
        %v6986 = vpop.f32.mrb[0].mxu0
        %v6987 = vadd.f32 0.0, %v6986
        %v6988 = vpop.f32.mrb[0].mxu0
        %v6989 = vadd.f32 0.0, %v6988
        %6990 = vmatprep.mubr.bf16.mxu0 0
        %6991 = vmatmul.mubr.bf16.gmra.mrb[0].mxu0 %v6921
        %v6992 = vpop.f32.mrb[0].mxu0
        %v6993 = vadd.f32 0.0, %v6992
        %v6994 = vpop.f32.mrb[0].mxu0
        %v6995 = vadd.f32 0.0, %v6994
        %v6996 = vpop.f32.mrb[0].mxu0
        %v6997 = vadd.f32 0.0, %v6996
        %v6998 = vpop.f32.mrb[0].mxu0
        %v6999 = vadd.f32 0.0, %v6998
        %7000 = vmatprep.mubr.bf16.mxu0 0
        %7001 = vmatmul.mubr.bf16.gmra.mrb[0].mxu0 %v6924
        %v7002 = vpop.f32.mrb[0].mxu0
        %v7003 = vadd.f32 0.0, %v7002
        %v7004 = vpop.f32.mrb[0].mxu0
        %v7005 = vadd.f32 0.0, %v7004
        %v7006 = vpop.f32.mrb[0].mxu0
        %v7007 = vadd.f32 0.0, %v7006
        %v7008 = vpop.f32.mrb[0].mxu0
        %v7009 = vadd.f32 0.0, %v7008
        %7010 = vmatprep.mubr.bf16.mxu0 0
        %7011 = vmatmul.mubr.bf16.gmra.mrb[0].mxu0 %v6927
        %v7012 = vpop.f32.mrb[0].mxu0
        %v7013 = vadd.f32 0.0, %v7012
        %v7014 = vpop.f32.mrb[0].mxu0
        %v7015 = vadd.f32 0.0, %v7014
        %v7016 = vpop.f32.mrb[0].mxu0
        %v7017 = vadd.f32 0.0, %v7016
        %v7018 = vpop.f32.mrb[0].mxu0
        %v7019 = vadd.f32 0.0, %v7018
        %7020 = vmatprep.mubr.bf16.mxu0 0
        %7021 = vmatmul.mubr.bf16.gmra.mrb[0].mxu0 %v6930
        %v7022 = vpop.f32.mrb[0].mxu0
        %v7023 = vadd.f32 0.0, %v7022
        %v7024 = vpop.f32.mrb[0].mxu0
        %v7025 = vadd.f32 0.0, %v7024
        %v7026 = vpop.f32.mrb[0].mxu0
        %v7027 = vadd.f32 0.0, %v7026
        %v7028 = vpop.f32.mrb[0].mxu0
        %v7029 = vadd.f32 0.0, %v7028
        %7030 = vmatprep.mubr.bf16.mxu0 0
        %7031 = vmatmul.mubr.bf16.gmra.mrb[0].mxu0 %v6933
        %v7032 = vpop.f32.mrb[0].mxu0
        %v7033 = vadd.f32 0.0, %v7032
        %v7034 = vpop.f32.mrb[0].mxu0
        %v7035 = vadd.f32 0.0, %v7034
        %v7036 = vpop.f32.mrb[0].mxu0
        %v7037 = vadd.f32 0.0, %v7036
        %v7038 = vpop.f32.mrb[0].mxu0
        %v7039 = vadd.f32 0.0, %v7038
        %7040 = vmatprep.mubr.bf16.mxu0 0
        %7041 = vmatmul.mubr.bf16.gmra.mrb[0].mxu0 %v6936
        %v7042 = vpop.f32.mrb[0].mxu0
        %v7043 = vadd.f32 0.0, %v7042
        %v7044 = vpop.f32.mrb[0].mxu0
        %v7045 = vadd.f32 0.0, %v7044
        %v7046 = vpop.f32.mrb[0].mxu0
        %v7047 = vadd.f32 0.0, %v7046
        %v7048 = vpop.f32.mrb[0].mxu0
        %v7049 = vadd.f32 0.0, %v7048
        %7050 = vdwg.mxu0
        %v7051 = vmax.f32 %v6973, %v6975
        %7052 = vmax.xlane.f32.xlu0 %v7051
        %v7053 = vpop.xlane.xlu0 %7052
        %v7054 = vmax.f32 %v6977, %v6979
        %7055 = vmax.xlane.f32.xlu0 %v7054
        %v7056 = vpop.xlane.xlu0 %7055
        %v7057 = vmax.f32 %v6983, %v6985
        %7058 = vmax.xlane.f32.xlu0 %v7057
        %v7059 = vpop.xlane.xlu0 %7058
        %v7060 = vmax.f32 %v6987, %v6989
        %7061 = vmax.xlane.f32.xlu0 %v7060
        %v7062 = vpop.xlane.xlu0 %7061
        %v7063 = vmax.f32 %v6993, %v6995
        %7064 = vmax.xlane.f32.xlu0 %v7063
        %v7065 = vpop.xlane.xlu0 %7064
        %v7066 = vmax.f32 %v6997, %v6999
        %7067 = vmax.xlane.f32.xlu0 %v7066
        %v7068 = vpop.xlane.xlu0 %7067
        %v7069 = vmax.f32 %v7003, %v7005
        %7070 = vmax.xlane.f32.xlu0 %v7069
        %v7071 = vpop.xlane.xlu0 %7070
        %v7072 = vmax.f32 %v7007, %v7009
        %7073 = vmax.xlane.f32.xlu0 %v7072
        %v7074 = vpop.xlane.xlu0 %7073
        %v7075 = vmax.f32 %v7013, %v7015
        %7076 = vmax.xlane.f32.xlu0 %v7075
        %v7077 = vpop.xlane.xlu0 %7076
        %v7078 = vmax.f32 %v7017, %v7019
        %7079 = vmax.xlane.f32.xlu0 %v7078
        %v7080 = vpop.xlane.xlu0 %7079
        %v7081 = vmax.f32 %v7023, %v7025
        %7082 = vmax.xlane.f32.xlu0 %v7081
        %v7083 = vpop.xlane.xlu0 %7082
        %v7084 = vmax.f32 %v7027, %v7029
        %7085 = vmax.xlane.f32.xlu0 %v7084
        %v7086 = vpop.xlane.xlu0 %7085
        %v7087 = vmax.f32 %v7033, %v7035
        %7088 = vmax.xlane.f32.xlu0 %v7087
        %v7089 = vpop.xlane.xlu0 %7088
        %v7090 = vmax.f32 %v7037, %v7039
        %7091 = vmax.xlane.f32.xlu0 %v7090
        %v7092 = vpop.xlane.xlu0 %7091
        %v7093 = vmax.f32 %v7043, %v7045
        %7094 = vmax.xlane.f32.xlu0 %v7093
        %v7095 = vpop.xlane.xlu0 %7094
        %v7096 = vmax.f32 %v7047, %v7049
        %7097 = vmax.xlane.f32.xlu0 %v7096
        %v7098 = vpop.xlane.xlu0 %7097
        %v7099 = vsub.f32 %v6973, %v7053
        %v7100 = vsub.f32 %v6975, %v7053
        %v7101 = vsub.f32 %v6977, %v7056
        %v7102 = vsub.f32 %v6979, %v7056
        %v7103 = vsub.f32 %v6983, %v7059
        %v7104 = vsub.f32 %v6985, %v7059
        %v7105 = vsub.f32 %v6987, %v7062
        %v7106 = vsub.f32 %v6989, %v7062
        %v7107 = vsub.f32 %v6993, %v7065
        %v7108 = vsub.f32 %v6995, %v7065
        %v7109 = vsub.f32 %v6997, %v7068
        %v7110 = vsub.f32 %v6999, %v7068
        %v7111 = vsub.f32 %v7003, %v7071
        %v7112 = vsub.f32 %v7005, %v7071
        %v7113 = vsub.f32 %v7007, %v7074
        %v7114 = vsub.f32 %v7009, %v7074
        %v7115 = vsub.f32 %v7013, %v7077
        %v7116 = vsub.f32 %v7015, %v7077
        %v7117 = vsub.f32 %v7017, %v7080
        %v7118 = vsub.f32 %v7019, %v7080
        %v7119 = vsub.f32 %v7023, %v7083
        %v7120 = vsub.f32 %v7025, %v7083
        %v7121 = vsub.f32 %v7027, %v7086
        %v7122 = vsub.f32 %v7029, %v7086
        %v7123 = vsub.f32 %v7033, %v7089
        %v7124 = vsub.f32 %v7035, %v7089
        %v7125 = vsub.f32 %v7037, %v7092
        %v7126 = vsub.f32 %v7039, %v7092
        %v7127 = vsub.f32 %v7043, %v7095
        %v7128 = vsub.f32 %v7045, %v7095
        %v7129 = vsub.f32 %v7047, %v7098
        %v7130 = vsub.f32 %v7049, %v7098
        %v7131 = vmul.f32 %v7099, 1.442695
        %v7132 = vpow.pop %v7131
        %v7133 = vmul.f32 %v7100, 1.442695
        %v7134 = vpow.pop %v7133
        %v7135 = vmul.f32 %v7101, 1.442695
        %v7136 = vpow.pop %v7135
        %v7137 = vmul.f32 %v7102, 1.442695
        %v7138 = vpow.pop %v7137
        %v7139 = vmul.f32 %v7103, 1.442695
        %v7140 = vpow.pop %v7139
        %v7141 = vmul.f32 %v7104, 1.442695
        %v7142 = vpow.pop %v7141
        %v7143 = vmul.f32 %v7105, 1.442695
        %v7144 = vpow.pop %v7143
        %v7145 = vmul.f32 %v7106, 1.442695
        %v7146 = vpow.pop %v7145
        %v7147 = vmul.f32 %v7107, 1.442695
        %v7148 = vpow.pop %v7147
        %v7149 = vmul.f32 %v7108, 1.442695
        %v7150 = vpow.pop %v7149
        %v7151 = vmul.f32 %v7109, 1.442695
        %v7152 = vpow.pop %v7151
        %v7153 = vmul.f32 %v7110, 1.442695
        %v7154 = vpow.pop %v7153
        %v7155 = vmul.f32 %v7111, 1.442695
        %v7156 = vpow.pop %v7155
        %v7157 = vmul.f32 %v7112, 1.442695
        %v7158 = vpow.pop %v7157
        %v7159 = vmul.f32 %v7113, 1.442695
        %v7160 = vpow.pop %v7159
        %v7161 = vmul.f32 %v7114, 1.442695
        %v7162 = vpow.pop %v7161
        %v7163 = vmul.f32 %v7115, 1.442695
        %v7164 = vpow.pop %v7163
        %v7165 = vmul.f32 %v7116, 1.442695
        %v7166 = vpow.pop %v7165
        %v7167 = vmul.f32 %v7117, 1.442695
        %v7168 = vpow.pop %v7167
        %v7169 = vmul.f32 %v7118, 1.442695
        %v7170 = vpow.pop %v7169
        %v7171 = vmul.f32 %v7119, 1.442695
        %v7172 = vpow.pop %v7171
        %v7173 = vmul.f32 %v7120, 1.442695
        %v7174 = vpow.pop %v7173
        %v7175 = vmul.f32 %v7121, 1.442695
        %v7176 = vpow.pop %v7175
        %v7177 = vmul.f32 %v7122, 1.442695
        %v7178 = vpow.pop %v7177
        %v7179 = vmul.f32 %v7123, 1.442695
        %v7180 = vpow.pop %v7179
        %v7181 = vmul.f32 %v7124, 1.442695
        %v7182 = vpow.pop %v7181
        %v7183 = vmul.f32 %v7125, 1.442695
        %v7184 = vpow.pop %v7183
        %v7185 = vmul.f32 %v7126, 1.442695
        %v7186 = vpow.pop %v7185
        %v7187 = vmul.f32 %v7127, 1.442695
        %v7188 = vpow.pop %v7187
        %v7189 = vmul.f32 %v7128, 1.442695
        %v7190 = vpow.pop %v7189
        %v7191 = vmul.f32 %v7129, 1.442695
        %v7192 = vpow.pop %v7191
        %v7193 = vmul.f32 %v7130, 1.442695
        %v7194 = vpow.pop %v7193
        %v7195 = vadd.f32 %v7132, %v7134
        %7196 = vadd.xlane.f32.xlu0 %v7195
        %v7197 = vpop.xlane.xlu0 %7196
        %v7198 = vadd.f32 %v7136, %v7138
        %7199 = vadd.xlane.f32.xlu0 %v7198
        %v7200 = vpop.xlane.xlu0 %7199
        %v7201 = vadd.f32 %v7140, %v7142
        %7202 = vadd.xlane.f32.xlu0 %v7201
        %v7203 = vpop.xlane.xlu0 %7202
        %v7204 = vadd.f32 %v7144, %v7146
        %7205 = vadd.xlane.f32.xlu0 %v7204
        %v7206 = vpop.xlane.xlu0 %7205
        %v7207 = vadd.f32 %v7148, %v7150
        %7208 = vadd.xlane.f32.xlu0 %v7207
        %v7209 = vpop.xlane.xlu0 %7208
        %v7210 = vadd.f32 %v7152, %v7154
        %7211 = vadd.xlane.f32.xlu0 %v7210
        %v7212 = vpop.xlane.xlu0 %7211
        %v7213 = vadd.f32 %v7156, %v7158
        %7214 = vadd.xlane.f32.xlu0 %v7213
        %v7215 = vpop.xlane.xlu0 %7214
        %v7216 = vadd.f32 %v7160, %v7162
        %7217 = vadd.xlane.f32.xlu0 %v7216
        %v7218 = vpop.xlane.xlu0 %7217
        %v7219 = vadd.f32 %v7164, %v7166
        %7220 = vadd.xlane.f32.xlu0 %v7219
        %v7221 = vpop.xlane.xlu0 %7220
        %v7222 = vadd.f32 %v7168, %v7170
        %7223 = vadd.xlane.f32.xlu0 %v7222
        %v7224 = vpop.xlane.xlu0 %7223
        %v7225 = vadd.f32 %v7172, %v7174
        %7226 = vadd.xlane.f32.xlu0 %v7225
        %v7227 = vpop.xlane.xlu0 %7226
        %v7228 = vadd.f32 %v7176, %v7178
        %7229 = vadd.xlane.f32.xlu0 %v7228
        %v7230 = vpop.xlane.xlu0 %7229
        %v7231 = vadd.f32 %v7180, %v7182
        %7232 = vadd.xlane.f32.xlu0 %v7231
        %v7233 = vpop.xlane.xlu0 %7232
        %v7234 = vadd.f32 %v7184, %v7186
        %7235 = vadd.xlane.f32.xlu0 %v7234
        %v7236 = vpop.xlane.xlu0 %7235
        %v7237 = vadd.f32 %v7188, %v7190
        %7238 = vadd.xlane.f32.xlu0 %v7237
        %v7239 = vpop.xlane.xlu0 %7238
        %v7240 = vadd.f32 %v7192, %v7194
        %7241 = vadd.xlane.f32.xlu0 %v7240
        %v7242 = vpop.xlane.xlu0 %7241
        %v7243 = vrcp.pop %v7197
        %v7244 = vrcp.pop %v7200
        %v7245 = vrcp.pop %v7203
        %v7246 = vrcp.pop %v7206
        %v7247 = vrcp.pop %v7209
        %v7248 = vrcp.pop %v7212
        %v7249 = vrcp.pop %v7215
        %v7250 = vrcp.pop %v7218
        %v7251 = vrcp.pop %v7221
        %v7252 = vrcp.pop %v7224
        %v7253 = vrcp.pop %v7227
        %v7254 = vrcp.pop %v7230
        %v7255 = vrcp.pop %v7233
        %v7256 = vrcp.pop %v7236
        %v7257 = vrcp.pop %v7239
        %v7258 = vrcp.pop %v7242
        %v7259 = vmul.f32 %v7132, %v7243
        %v7260 = vmul.f32 %v7134, %v7243
        %v7261 = vmul.f32 %v7136, %v7244
        %v7262 = vmul.f32 %v7138, %v7244
        %v7263 = vmul.f32 %v7140, %v7245
        %v7264 = vmul.f32 %v7142, %v7245
        %v7265 = vmul.f32 %v7144, %v7246
        %v7266 = vmul.f32 %v7146, %v7246
        %v7267 = vmul.f32 %v7148, %v7247
        %v7268 = vmul.f32 %v7150, %v7247
        %v7269 = vmul.f32 %v7152, %v7248
        %v7270 = vmul.f32 %v7154, %v7248
        %v7271 = vmul.f32 %v7156, %v7249
        %v7272 = vmul.f32 %v7158, %v7249
        %v7273 = vmul.f32 %v7160, %v7250
        %v7274 = vmul.f32 %v7162, %v7250
        %v7275 = vmul.f32 %v7164, %v7251
        %v7276 = vmul.f32 %v7166, %v7251
        %v7277 = vmul.f32 %v7168, %v7252
        %v7278 = vmul.f32 %v7170, %v7252
        %v7279 = vmul.f32 %v7172, %v7253
        %v7280 = vmul.f32 %v7174, %v7253
        %v7281 = vmul.f32 %v7176, %v7254
        %v7282 = vmul.f32 %v7178, %v7254
        %v7283 = vmul.f32 %v7180, %v7255
        %v7284 = vmul.f32 %v7182, %v7255
        %v7285 = vmul.f32 %v7184, %v7256
        %v7286 = vmul.f32 %v7186, %v7256
        %v7287 = vmul.f32 %v7188, %v7257
        %v7288 = vmul.f32 %v7190, %v7257
        %v7289 = vmul.f32 %v7192, %v7258
        %v7290 = vmul.f32 %v7194, %v7258
        %v7291 = vpack.c.bf16 %v7261, %v7259
        %v7292 = vpack.c.bf16 %v7262, %v7260
        %v7293 = vpack.c.bf16 %v7265, %v7263
        %v7294 = vpack.c.bf16 %v7266, %v7264
        %v7295 = vpack.c.bf16 %v7269, %v7267
        %v7296 = vpack.c.bf16 %v7270, %v7268
        %v7297 = vpack.c.bf16 %v7273, %v7271
        %v7298 = vpack.c.bf16 %v7274, %v7272
        %v7299 = vpack.c.bf16 %v7277, %v7275
        %v7300 = vpack.c.bf16 %v7278, %v7276
        %v7301 = vpack.c.bf16 %v7281, %v7279
        %v7302 = vpack.c.bf16 %v7282, %v7280
        %v7303 = vpack.c.bf16 %v7285, %v7283
        %v7304 = vpack.c.bf16 %v7286, %v7284
        %v7305 = vpack.c.bf16 %v7289, %v7287
        %v7306 = vpack.c.bf16 %v7290, %v7288
        %7307 = vrot.lane.b32.xlu0 %v4809, 32
        %v7308 = vpop.permute.xlu0 %7307
        %7309 = vrot.lane.b32.xlu0 %v4810, 32
        %v7310 = vpop.permute.xlu0 %7309
        %7311 = vrot.lane.b32.xlu0 %v4811, 32
        %v7312 = vpop.permute.xlu0 %7311
        %7313 = vrot.lane.b32.xlu0 %v4812, 32
        %v7314 = vpop.permute.xlu0 %7313
        %7315 = vrot.lane.b32.xlu0 %v4813, 32
        %v7316 = vpop.permute.xlu0 %7315
        %7317 = vrot.lane.b32.xlu0 %v4814, 32
        %v7318 = vpop.permute.xlu0 %7317
        %7319 = vrot.lane.b32.xlu0 %v4815, 32
        %v7320 = vpop.permute.xlu0 %7319
        %7321 = vrot.lane.b32.xlu0 %v4816, 32
        %v7322 = vpop.permute.xlu0 %7321
        %7323 = vrot.lane.b32.xlu0 %v4817, 32
        %v7324 = vpop.permute.xlu0 %7323
        %7325 = vrot.lane.b32.xlu0 %v4818, 32
        %v7326 = vpop.permute.xlu0 %7325
        %7327 = vrot.lane.b32.xlu0 %v4819, 32
        %v7328 = vpop.permute.xlu0 %7327
        %7329 = vrot.lane.b32.xlu0 %v4820, 32
        %v7330 = vpop.permute.xlu0 %7329
        %7331 = vrot.lane.b32.xlu0 %v4821, 32
        %v7332 = vpop.permute.xlu0 %7331
        %7333 = vrot.lane.b32.xlu0 %v4822, 32
        %v7334 = vpop.permute.xlu0 %7333
        %7335 = vrot.lane.b32.xlu0 %v4823, 32
        %v7336 = vpop.permute.xlu0 %7335
        %7337 = vrot.lane.b32.xlu0 %v4824, 32
        %v7338 = vpop.permute.xlu0 %7337
        %7355 = vmatprep.subr.bf16.mxu0 0
        %7356 = vmatpush1.bf16.msra.mxu0 %v7308
        %7357 = vmatprep.subr.bf16.mxu0 0
        %7358 = vmatpush1.bf16.msra.mxu0 %v7310
        %7359 = vmatprep.subr.bf16.mxu0 0
        %7360 = vmatpush1.bf16.msra.mxu0 %v7312
        %7361 = vmatprep.subr.bf16.mxu0 0
        %7362 = vmatpush1.bf16.msra.mxu0 %v7314
        %7363 = vmatprep.subr.bf16.mxu0 0
        %7364 = vmatpush1.bf16.msra.mxu0 %v7316
        %7365 = vmatprep.subr.bf16.mxu0 0
        %7366 = vmatpush1.bf16.msra.mxu0 %v7318
        %7367 = vmatprep.subr.bf16.mxu0 0
        %7368 = vmatpush1.bf16.msra.mxu0 %v7320
        %7369 = vmatprep.subr.bf16.mxu0 0
        %7370 = vmatpush1.bf16.msra.mxu0 %v7322
        %7371 = vmatprep.subr.bf16.mxu0 0
        %7372 = vmatpush1.bf16.msra.mxu0 %v7324
        %7373 = vmatprep.subr.bf16.mxu0 0
        %7374 = vmatpush1.bf16.msra.mxu0 %v7326
        %7375 = vmatprep.subr.bf16.mxu0 0
        %7376 = vmatpush1.bf16.msra.mxu0 %v7328
        %7377 = vmatprep.subr.bf16.mxu0 0
        %7378 = vmatpush1.bf16.msra.mxu0 %v7330
        %7379 = vmatprep.subr.bf16.mxu0 0
        %7380 = vmatpush1.bf16.msra.mxu0 %v7332
        %7381 = vmatprep.subr.bf16.mxu0 0
        %7382 = vmatpush1.bf16.msra.mxu0 %v7334
        %7383 = vmatprep.subr.bf16.mxu0 0
        %7384 = vmatpush1.bf16.msra.mxu0 %v7336
        %7385 = vmatprep.subr.bf16.mxu0 0
        %7386 = vmatpush1.bf16.msra.mxu0 %v7338
        %7387 = vmatprep.mubr.bf16.mxu0 %v7292
        %7388 = vmatmul.mubr.bf16.gmra.mrb[0].mxu0 %v7291
        %v7389 = vpop.f32.mrb[0].mxu0
        %v7390 = vadd.f32 0.0, %v7389
        %v7391 = vpop.f32.mrb[0].mxu0
        %v7392 = vpop.f32.mrb[0].mxu0
        %v7393 = vadd.f32 0.0, %v7392
        %v7394 = vpop.f32.mrb[0].mxu0
        %7395 = vmatprep.mubr.bf16.mxu0 %v7294
        %7396 = vmatmul.mubr.bf16.gmra.mrb[0].mxu0 %v7293
        %v7397 = vpop.f32.mrb[0].mxu0
        %v7398 = vadd.f32 0.0, %v7397
        %v7399 = vpop.f32.mrb[0].mxu0
        %v7400 = vpop.f32.mrb[0].mxu0
        %v7401 = vadd.f32 0.0, %v7400
        %v7402 = vpop.f32.mrb[0].mxu0
        %7403 = vmatprep.mubr.bf16.mxu0 %v7296
        %7404 = vmatmul.mubr.bf16.gmra.mrb[0].mxu0 %v7295
        %v7405 = vpop.f32.mrb[0].mxu0
        %v7406 = vadd.f32 0.0, %v7405
        %v7407 = vpop.f32.mrb[0].mxu0
        %v7408 = vpop.f32.mrb[0].mxu0
        %v7409 = vadd.f32 0.0, %v7408
        %v7410 = vpop.f32.mrb[0].mxu0
        %7411 = vmatprep.mubr.bf16.mxu0 %v7298
        %7412 = vmatmul.mubr.bf16.gmra.mrb[0].mxu0 %v7297
        %v7413 = vpop.f32.mrb[0].mxu0
        %v7414 = vadd.f32 0.0, %v7413
        %v7415 = vpop.f32.mrb[0].mxu0
        %v7416 = vpop.f32.mrb[0].mxu0
        %v7417 = vadd.f32 0.0, %v7416
        %v7418 = vpop.f32.mrb[0].mxu0
        %7419 = vmatprep.mubr.bf16.mxu0 %v7300
        %7420 = vmatmul.mubr.bf16.gmra.mrb[0].mxu0 %v7299
        %v7421 = vpop.f32.mrb[0].mxu0
        %v7422 = vadd.f32 0.0, %v7421
        %v7423 = vpop.f32.mrb[0].mxu0
        %v7424 = vpop.f32.mrb[0].mxu0
        %v7425 = vadd.f32 0.0, %v7424
        %v7426 = vpop.f32.mrb[0].mxu0
        %7427 = vmatprep.mubr.bf16.mxu0 %v7302
        %7428 = vmatmul.mubr.bf16.gmra.mrb[0].mxu0 %v7301
        %v7429 = vpop.f32.mrb[0].mxu0
        %v7430 = vadd.f32 0.0, %v7429
        %v7431 = vpop.f32.mrb[0].mxu0
        %v7432 = vpop.f32.mrb[0].mxu0
        %v7433 = vadd.f32 0.0, %v7432
        %v7434 = vpop.f32.mrb[0].mxu0
        %7435 = vmatprep.mubr.bf16.mxu0 %v7304
        %7436 = vmatmul.mubr.bf16.gmra.mrb[0].mxu0 %v7303
        %v7437 = vpop.f32.mrb[0].mxu0
        %v7438 = vadd.f32 0.0, %v7437
        %v7439 = vpop.f32.mrb[0].mxu0
        %v7440 = vpop.f32.mrb[0].mxu0
        %v7441 = vadd.f32 0.0, %v7440
        %v7442 = vpop.f32.mrb[0].mxu0
        %7443 = vmatprep.mubr.bf16.mxu0 %v7306
        %7444 = vmatmul.mubr.bf16.gmra.mrb[0].mxu0 %v7305
        %v7445 = vpop.f32.mrb[0].mxu0
        %v7446 = vadd.f32 0.0, %v7445
        %v7447 = vpop.f32.mrb[0].mxu0
        %v7448 = vpop.f32.mrb[0].mxu0
        %v7449 = vadd.f32 0.0, %v7448
        %v7450 = vpop.f32.mrb[0].mxu0
        %7451 = vdwg.mxu0
        %v7452 = vpack.c.bf16 %v7393, %v7390
        %v7453 = vpack.c.bf16 %v7401, %v7398
        %v7454 = vpack.c.bf16 %v7409, %v7406
        %v7455 = vpack.c.bf16 %v7417, %v7414
        %v7456 = vpack.c.bf16 %v7425, %v7422
        %v7457 = vpack.c.bf16 %v7433, %v7430
        %v7458 = vpack.c.bf16 %v7441, %v7438
        %v7459 = vpack.c.bf16 %v7449, %v7446
        %v7460 = vld [vmem:[%s23 + $0x30] sm:$0xf]
        %v7461 = vld [vmem:[%s23 + $0x34] sm:$0xf]
        %v7462 = vld [vmem:[%s23 + $0x38] sm:$0xf]
        %v7463 = vld [vmem:[%s23 + $0x3c] sm:$0xf]
        %v7468 = vunpack.c.l.b16 %v7460
        %v7469 = vunpack.c.l.b16 %v7461
        %v7470 = vunpack.c.l.b16 %v7462
        %v7471 = vunpack.c.l.b16 %v7463
        %v7472 = vpack.c.b16 %v7469, %v7468
        %v7473 = vpack.c.b16 %v7471, %v7470
        %v7477 = vsel %vm2065, %v7452, 0
        %v7480 = vsel %vm2065, %v7453, 0
        %v7483 = vsel %vm2065, %v7454, 0
        %v7486 = vsel %vm2065, %v7455, 0
        %v7489 = vsel %vm2065, %v7456, 0
        %v7492 = vsel %vm2065, %v7457, 0
        %v7495 = vsel %vm2065, %v7458, 0
        %v7498 = vsel %vm2065, %v7459, 0
        %7500 = vmatprep.subr.bf16.mxu0 0
        %7501 = vmatpush1.bf16.msra.mxu0 %v7472
        %7502 = vmatprep.subr.bf16.mxu0 0
        %7503 = vmatpush1.bf16.msra.mxu0 %v7473
        %7504 = vmatprep.subr.bf16.mxu0 0
        %7505 = vmatpush1.bf16.msra.mxu0 0
        %7506 = vmatprep.subr.bf16.mxu0 0
        %7507 = vmatpush1.bf16.msra.mxu0 0
        %7508 = vmatprep.subr.bf16.mxu0 0
        %7509 = vmatpush1.bf16.msra.mxu0 0
        %7510 = vmatprep.subr.bf16.mxu0 0
        %7511 = vmatpush1.bf16.msra.mxu0 0
        %7512 = vmatprep.subr.bf16.mxu0 0
        %7513 = vmatpush1.bf16.msra.mxu0 0
        %7514 = vmatprep.subr.bf16.mxu0 0
        %7515 = vmatpush1.bf16.msra.mxu0 0
        %7516 = vmatprep.subr.bf16.mxu0 0
        %7517 = vmatpush1.bf16.msra.mxu0 0
        %7518 = vmatprep.subr.bf16.mxu0 0
        %7519 = vmatpush1.bf16.msra.mxu0 0
        %7520 = vmatprep.subr.bf16.mxu0 0
        %7521 = vmatpush1.bf16.msra.mxu0 0
        %7522 = vmatprep.subr.bf16.mxu0 0
        %7523 = vmatpush1.bf16.msra.mxu0 0
        %7524 = vmatprep.subr.bf16.mxu0 0
        %7525 = vmatpush1.bf16.msra.mxu0 0
        %7526 = vmatprep.subr.bf16.mxu0 0
        %7527 = vmatpush1.bf16.msra.mxu0 0
        %7528 = vmatprep.subr.bf16.mxu0 0
        %7529 = vmatpush1.bf16.msra.mxu0 0
        %7530 = vmatprep.subr.bf16.mxu0 0
        %7531 = vmatpush1.bf16.msra.mxu0 0
        %7532 = vmatprep.mubr.bf16.mxu0 0
        %7533 = vmatmul.mubr.bf16.gmra.mrb[0].mxu0 %v7477
        %v7534 = vpop.f32.mrb[0].mxu0
        %v7535 = vadd.f32 0.0, %v7534
        %v7536 = vpop.f32.mrb[0].mxu0
        %v7537 = vpop.f32.mrb[0].mxu0
        %v7538 = vadd.f32 0.0, %v7537
        %v7539 = vpop.f32.mrb[0].mxu0
        %7540 = vmatprep.mubr.bf16.mxu0 0
        %7541 = vmatmul.mubr.bf16.gmra.mrb[0].mxu0 %v7480
        %v7542 = vpop.f32.mrb[0].mxu0
        %v7543 = vadd.f32 0.0, %v7542
        %v7544 = vpop.f32.mrb[0].mxu0
        %v7545 = vpop.f32.mrb[0].mxu0
        %v7546 = vadd.f32 0.0, %v7545
        %v7547 = vpop.f32.mrb[0].mxu0
        %7548 = vmatprep.mubr.bf16.mxu0 0
        %7549 = vmatmul.mubr.bf16.gmra.mrb[0].mxu0 %v7483
        %v7550 = vpop.f32.mrb[0].mxu0
        %v7551 = vadd.f32 0.0, %v7550
        %v7552 = vpop.f32.mrb[0].mxu0
        %v7553 = vpop.f32.mrb[0].mxu0
        %v7554 = vadd.f32 0.0, %v7553
        %v7555 = vpop.f32.mrb[0].mxu0
        %7556 = vmatprep.mubr.bf16.mxu0 0
        %7557 = vmatmul.mubr.bf16.gmra.mrb[0].mxu0 %v7486
        %v7558 = vpop.f32.mrb[0].mxu0
        %v7559 = vadd.f32 0.0, %v7558
        %v7560 = vpop.f32.mrb[0].mxu0
        %v7561 = vpop.f32.mrb[0].mxu0
        %v7562 = vadd.f32 0.0, %v7561
        %v7563 = vpop.f32.mrb[0].mxu0
        %7564 = vmatprep.mubr.bf16.mxu0 0
        %7565 = vmatmul.mubr.bf16.gmra.mrb[0].mxu0 %v7489
        %v7566 = vpop.f32.mrb[0].mxu0
        %v7567 = vadd.f32 0.0, %v7566
        %v7568 = vpop.f32.mrb[0].mxu0
        %v7569 = vpop.f32.mrb[0].mxu0
        %v7570 = vadd.f32 0.0, %v7569
        %v7571 = vpop.f32.mrb[0].mxu0
        %7572 = vmatprep.mubr.bf16.mxu0 0
        %7573 = vmatmul.mubr.bf16.gmra.mrb[0].mxu0 %v7492
        %v7574 = vpop.f32.mrb[0].mxu0
        %v7575 = vadd.f32 0.0, %v7574
        %v7576 = vpop.f32.mrb[0].mxu0
        %v7577 = vpop.f32.mrb[0].mxu0
        %v7578 = vadd.f32 0.0, %v7577
        %v7579 = vpop.f32.mrb[0].mxu0
        %7580 = vmatprep.mubr.bf16.mxu0 0
        %7581 = vmatmul.mubr.bf16.gmra.mrb[0].mxu0 %v7495
        %v7582 = vpop.f32.mrb[0].mxu0
        %v7583 = vadd.f32 0.0, %v7582
        %v7584 = vpop.f32.mrb[0].mxu0
        %v7585 = vpop.f32.mrb[0].mxu0
        %v7586 = vadd.f32 0.0, %v7585
        %v7587 = vpop.f32.mrb[0].mxu0
        %7588 = vmatprep.mubr.bf16.mxu0 0
        %7589 = vmatmul.mubr.bf16.gmra.mrb[0].mxu0 %v7498
        %v7590 = vpop.f32.mrb[0].mxu0
        %v7591 = vadd.f32 0.0, %v7590
        %v7592 = vpop.f32.mrb[0].mxu0
        %v7593 = vpop.f32.mrb[0].mxu0
        %v7594 = vadd.f32 0.0, %v7593
        %v7595 = vpop.f32.mrb[0].mxu0
        %7596 = vdwg.mxu0
        %v7597 = vadd.f32 %v6882, %v7535
        %v7598 = vadd.f32 %v6883, %v7538
        %v7599 = vadd.f32 %v6884, %v7543
        %v7600 = vadd.f32 %v6885, %v7546
        %v7601 = vadd.f32 %v6886, %v7551
        %v7602 = vadd.f32 %v6887, %v7554
        %v7603 = vadd.f32 %v6888, %v7559
        %v7604 = vadd.f32 %v6889, %v7562
        %v7605 = vadd.f32 %v6890, %v7567
        %v7606 = vadd.f32 %v6891, %v7570
        %v7607 = vadd.f32 %v6892, %v7575
        %v7608 = vadd.f32 %v6893, %v7578
        %v7609 = vadd.f32 %v6894, %v7583
        %v7610 = vadd.f32 %v6895, %v7586
        %v7611 = vadd.f32 %v6896, %v7591
        %v7612 = vadd.f32 %v6897, %v7594
        %v7614 = vsel %vm2065, %v4617, 0
        %v7617 = vsel %vm2065, %v4618, 0
        %v7620 = vsel %vm2065, %v4619, 0
        %v7623 = vsel %vm2065, %v4620, 0
        %v7626 = vsel %vm2065, %v4621, 0
        %v7629 = vsel %vm2065, %v4622, 0
        %v7632 = vsel %vm2065, %v4623, 0
        %v7635 = vsel %vm2065, %v4624, 0
        %7637 = vmatprep.subr.bf16.mxu0 %v4362
        %7638 = vmatpush1.bf16.msra.mxu0 %v4361
        %7639 = vmatprep.subr.bf16.mxu0 %v4364
        %7640 = vmatpush1.bf16.msra.mxu0 %v4363
        %7641 = vmatprep.subr.bf16.mxu0 0
        %7642 = vmatpush1.bf16.msra.mxu0 0
        %7643 = vmatprep.subr.bf16.mxu0 0
        %7644 = vmatpush1.bf16.msra.mxu0 0
        %7645 = vmatprep.subr.bf16.mxu0 0
        %7646 = vmatpush1.bf16.msra.mxu0 0
        %7647 = vmatprep.subr.bf16.mxu0 0
        %7648 = vmatpush1.bf16.msra.mxu0 0
        %7649 = vmatprep.subr.bf16.mxu0 0
        %7650 = vmatpush1.bf16.msra.mxu0 0
        %7651 = vmatprep.subr.bf16.mxu0 0
        %7652 = vmatpush1.bf16.msra.mxu0 0
        %7653 = vmatprep.subr.bf16.mxu0 0
        %7654 = vmatpush1.bf16.msra.mxu0 0
        %7655 = vmatprep.subr.bf16.mxu0 0
        %7656 = vmatpush1.bf16.msra.mxu0 0
        %7657 = vmatprep.subr.bf16.mxu0 0
        %7658 = vmatpush1.bf16.msra.mxu0 0
        %7659 = vmatprep.subr.bf16.mxu0 0
        %7660 = vmatpush1.bf16.msra.mxu0 0
        %7661 = vmatprep.subr.bf16.mxu0 0
        %7662 = vmatpush1.bf16.msra.mxu0 0
        %7663 = vmatprep.subr.bf16.mxu0 0
        %7664 = vmatpush1.bf16.msra.mxu0 0
        %7665 = vmatprep.subr.bf16.mxu0 0
        %7666 = vmatpush1.bf16.msra.mxu0 0
        %7667 = vmatprep.subr.bf16.mxu0 0
        %7668 = vmatpush1.bf16.msra.mxu0 0
        %7669 = vmatprep.mubr.bf16.mxu0 0
        %7670 = vmatmul.mubr.bf16.gmra.mrb[0].mxu0 %v7614
        %v7671 = vpop.f32.mrb[0].mxu0
        %v7672 = vadd.f32 0.0, %v7671
        %v7673 = vpop.f32.mrb[0].mxu0
        %v7674 = vadd.f32 0.0, %v7673
        %v7675 = vpop.f32.mrb[0].mxu0
        %v7676 = vadd.f32 0.0, %v7675
        %v7677 = vpop.f32.mrb[0].mxu0
        %v7678 = vadd.f32 0.0, %v7677
        %7679 = vmatprep.mubr.bf16.mxu0 0
        %7680 = vmatmul.mubr.bf16.gmra.mrb[0].mxu0 %v7617
        %v7681 = vpop.f32.mrb[0].mxu0
        %v7682 = vadd.f32 0.0, %v7681
        %v7683 = vpop.f32.mrb[0].mxu0
        %v7684 = vadd.f32 0.0, %v7683
        %v7685 = vpop.f32.mrb[0].mxu0
        %v7686 = vadd.f32 0.0, %v7685
        %v7687 = vpop.f32.mrb[0].mxu0
        %v7688 = vadd.f32 0.0, %v7687
        %7689 = vmatprep.mubr.bf16.mxu0 0
        %7690 = vmatmul.mubr.bf16.gmra.mrb[0].mxu0 %v7620
        %v7691 = vpop.f32.mrb[0].mxu0
        %v7692 = vadd.f32 0.0, %v7691
        %v7693 = vpop.f32.mrb[0].mxu0
        %v7694 = vadd.f32 0.0, %v7693
        %v7695 = vpop.f32.mrb[0].mxu0
        %v7696 = vadd.f32 0.0, %v7695
        %v7697 = vpop.f32.mrb[0].mxu0
        %v7698 = vadd.f32 0.0, %v7697
        %7699 = vmatprep.mubr.bf16.mxu0 0
        %7700 = vmatmul.mubr.bf16.gmra.mrb[0].mxu0 %v7623
        %v7701 = vpop.f32.mrb[0].mxu0
        %v7702 = vadd.f32 0.0, %v7701
        %v7703 = vpop.f32.mrb[0].mxu0
        %v7704 = vadd.f32 0.0, %v7703
        %v7705 = vpop.f32.mrb[0].mxu0
        %v7706 = vadd.f32 0.0, %v7705
        %v7707 = vpop.f32.mrb[0].mxu0
        %v7708 = vadd.f32 0.0, %v7707
        %7709 = vmatprep.mubr.bf16.mxu0 0
        %7710 = vmatmul.mubr.bf16.gmra.mrb[0].mxu0 %v7626
        %v7711 = vpop.f32.mrb[0].mxu0
        %v7712 = vadd.f32 0.0, %v7711
        %v7713 = vpop.f32.mrb[0].mxu0
        %v7714 = vadd.f32 0.0, %v7713
        %v7715 = vpop.f32.mrb[0].mxu0
        %v7716 = vadd.f32 0.0, %v7715
        %v7717 = vpop.f32.mrb[0].mxu0
        %v7718 = vadd.f32 0.0, %v7717
        %7719 = vmatprep.mubr.bf16.mxu0 0
        %7720 = vmatmul.mubr.bf16.gmra.mrb[0].mxu0 %v7629
        %v7721 = vpop.f32.mrb[0].mxu0
        %v7722 = vadd.f32 0.0, %v7721
        %v7723 = vpop.f32.mrb[0].mxu0
        %v7724 = vadd.f32 0.0, %v7723
        %v7725 = vpop.f32.mrb[0].mxu0
        %v7726 = vadd.f32 0.0, %v7725
        %v7727 = vpop.f32.mrb[0].mxu0
        %v7728 = vadd.f32 0.0, %v7727
        %7729 = vmatprep.mubr.bf16.mxu0 0
        %7730 = vmatmul.mubr.bf16.gmra.mrb[0].mxu0 %v7632
        %v7731 = vpop.f32.mrb[0].mxu0
        %v7732 = vadd.f32 0.0, %v7731
        %v7733 = vpop.f32.mrb[0].mxu0
        %v7734 = vadd.f32 0.0, %v7733
        %v7735 = vpop.f32.mrb[0].mxu0
        %v7736 = vadd.f32 0.0, %v7735
        %v7737 = vpop.f32.mrb[0].mxu0
        %v7738 = vadd.f32 0.0, %v7737
        %7739 = vmatprep.mubr.bf16.mxu0 0
        %7740 = vmatmul.mubr.bf16.gmra.mrb[0].mxu0 %v7635
        %v7741 = vpop.f32.mrb[0].mxu0
        %v7742 = vadd.f32 0.0, %v7741
        %v7743 = vpop.f32.mrb[0].mxu0
        %v7744 = vadd.f32 0.0, %v7743
        %v7745 = vpop.f32.mrb[0].mxu0
        %v7746 = vadd.f32 0.0, %v7745
        %v7747 = vpop.f32.mrb[0].mxu0
        %v7748 = vadd.f32 0.0, %v7747
        %7749 = vdwg.mxu0
        %v7750 = vmax.f32 %v7672, %v7674
        %7751 = vmax.xlane.f32.xlu0 %v7750
        %v7752 = vpop.xlane.xlu0 %7751
        %v7753 = vmax.f32 %v7676, %v7678
        %7754 = vmax.xlane.f32.xlu0 %v7753
        %v7755 = vpop.xlane.xlu0 %7754
        %v7756 = vmax.f32 %v7682, %v7684
        %7757 = vmax.xlane.f32.xlu0 %v7756
        %v7758 = vpop.xlane.xlu0 %7757
        %v7759 = vmax.f32 %v7686, %v7688
        %7760 = vmax.xlane.f32.xlu0 %v7759
        %v7761 = vpop.xlane.xlu0 %7760
        %v7762 = vmax.f32 %v7692, %v7694
        %7763 = vmax.xlane.f32.xlu0 %v7762
        %v7764 = vpop.xlane.xlu0 %7763
        %v7765 = vmax.f32 %v7696, %v7698
        %7766 = vmax.xlane.f32.xlu0 %v7765
        %v7767 = vpop.xlane.xlu0 %7766
        %v7768 = vmax.f32 %v7702, %v7704
        %7769 = vmax.xlane.f32.xlu0 %v7768
        %v7770 = vpop.xlane.xlu0 %7769
        %v7771 = vmax.f32 %v7706, %v7708
        %7772 = vmax.xlane.f32.xlu0 %v7771
        %v7773 = vpop.xlane.xlu0 %7772
        %v7774 = vmax.f32 %v7712, %v7714
        %7775 = vmax.xlane.f32.xlu0 %v7774
        %v7776 = vpop.xlane.xlu0 %7775
        %v7777 = vmax.f32 %v7716, %v7718
        %7778 = vmax.xlane.f32.xlu0 %v7777
        %v7779 = vpop.xlane.xlu0 %7778
        %v7780 = vmax.f32 %v7722, %v7724
        %7781 = vmax.xlane.f32.xlu0 %v7780
        %v7782 = vpop.xlane.xlu0 %7781
        %v7783 = vmax.f32 %v7726, %v7728
        %7784 = vmax.xlane.f32.xlu0 %v7783
        %v7785 = vpop.xlane.xlu0 %7784
        %v7786 = vmax.f32 %v7732, %v7734
        %7787 = vmax.xlane.f32.xlu0 %v7786
        %v7788 = vpop.xlane.xlu0 %7787
        %v7789 = vmax.f32 %v7736, %v7738
        %7790 = vmax.xlane.f32.xlu0 %v7789
        %v7791 = vpop.xlane.xlu0 %7790
        %v7792 = vmax.f32 %v7742, %v7744
        %7793 = vmax.xlane.f32.xlu0 %v7792
        %v7794 = vpop.xlane.xlu0 %7793
        %v7795 = vmax.f32 %v7746, %v7748
        %7796 = vmax.xlane.f32.xlu0 %v7795
        %v7797 = vpop.xlane.xlu0 %7796
        %v7798 = vsub.f32 %v7672, %v7752
        %v7799 = vsub.f32 %v7674, %v7752
        %v7800 = vsub.f32 %v7676, %v7755
        %v7801 = vsub.f32 %v7678, %v7755
        %v7802 = vsub.f32 %v7682, %v7758
        %v7803 = vsub.f32 %v7684, %v7758
        %v7804 = vsub.f32 %v7686, %v7761
        %v7805 = vsub.f32 %v7688, %v7761
        %v7806 = vsub.f32 %v7692, %v7764
        %v7807 = vsub.f32 %v7694, %v7764
        %v7808 = vsub.f32 %v7696, %v7767
        %v7809 = vsub.f32 %v7698, %v7767
        %v7810 = vsub.f32 %v7702, %v7770
        %v7811 = vsub.f32 %v7704, %v7770
        %v7812 = vsub.f32 %v7706, %v7773
        %v7813 = vsub.f32 %v7708, %v7773
        %v7814 = vsub.f32 %v7712, %v7776
        %v7815 = vsub.f32 %v7714, %v7776
        %v7816 = vsub.f32 %v7716, %v7779
        %v7817 = vsub.f32 %v7718, %v7779
        %v7818 = vsub.f32 %v7722, %v7782
        %v7819 = vsub.f32 %v7724, %v7782
        %v7820 = vsub.f32 %v7726, %v7785
        %v7821 = vsub.f32 %v7728, %v7785
        %v7822 = vsub.f32 %v7732, %v7788
        %v7823 = vsub.f32 %v7734, %v7788
        %v7824 = vsub.f32 %v7736, %v7791
        %v7825 = vsub.f32 %v7738, %v7791
        %v7826 = vsub.f32 %v7742, %v7794
        %v7827 = vsub.f32 %v7744, %v7794
        %v7828 = vsub.f32 %v7746, %v7797
        %v7829 = vsub.f32 %v7748, %v7797
        %v7830 = vmul.f32 %v7798, 1.442695
        %v7831 = vpow.pop %v7830
        %v7832 = vmul.f32 %v7799, 1.442695
        %v7833 = vpow.pop %v7832
        %v7834 = vmul.f32 %v7800, 1.442695
        %v7835 = vpow.pop %v7834
        %v7836 = vmul.f32 %v7801, 1.442695
        %v7837 = vpow.pop %v7836
        %v7838 = vmul.f32 %v7802, 1.442695
        %v7839 = vpow.pop %v7838
        %v7840 = vmul.f32 %v7803, 1.442695
        %v7841 = vpow.pop %v7840
        %v7842 = vmul.f32 %v7804, 1.442695
        %v7843 = vpow.pop %v7842
        %v7844 = vmul.f32 %v7805, 1.442695
        %v7845 = vpow.pop %v7844
        %v7846 = vmul.f32 %v7806, 1.442695
        %v7847 = vpow.pop %v7846
        %v7848 = vmul.f32 %v7807, 1.442695
        %v7849 = vpow.pop %v7848
        %v7850 = vmul.f32 %v7808, 1.442695
        %v7851 = vpow.pop %v7850
        %v7852 = vmul.f32 %v7809, 1.442695
        %v7853 = vpow.pop %v7852
        %v7854 = vmul.f32 %v7810, 1.442695
        %v7855 = vpow.pop %v7854
        %v7856 = vmul.f32 %v7811, 1.442695
        %v7857 = vpow.pop %v7856
        %v7858 = vmul.f32 %v7812, 1.442695
        %v7859 = vpow.pop %v7858
        %v7860 = vmul.f32 %v7813, 1.442695
        %v7861 = vpow.pop %v7860
        %v7862 = vmul.f32 %v7814, 1.442695
        %v7863 = vpow.pop %v7862
        %v7864 = vmul.f32 %v7815, 1.442695
        %v7865 = vpow.pop %v7864
        %v7866 = vmul.f32 %v7816, 1.442695
        %v7867 = vpow.pop %v7866
        %v7868 = vmul.f32 %v7817, 1.442695
        %v7869 = vpow.pop %v7868
        %v7870 = vmul.f32 %v7818, 1.442695
        %v7871 = vpow.pop %v7870
        %v7872 = vmul.f32 %v7819, 1.442695
        %v7873 = vpow.pop %v7872
        %v7874 = vmul.f32 %v7820, 1.442695
        %v7875 = vpow.pop %v7874
        %v7876 = vmul.f32 %v7821, 1.442695
        %v7877 = vpow.pop %v7876
        %v7878 = vmul.f32 %v7822, 1.442695
        %v7879 = vpow.pop %v7878
        %v7880 = vmul.f32 %v7823, 1.442695
        %v7881 = vpow.pop %v7880
        %v7882 = vmul.f32 %v7824, 1.442695
        %v7883 = vpow.pop %v7882
        %v7884 = vmul.f32 %v7825, 1.442695
        %v7885 = vpow.pop %v7884
        %v7886 = vmul.f32 %v7826, 1.442695
        %v7887 = vpow.pop %v7886
        %v7888 = vmul.f32 %v7827, 1.442695
        %v7889 = vpow.pop %v7888
        %v7890 = vmul.f32 %v7828, 1.442695
        %v7891 = vpow.pop %v7890
        %v7892 = vmul.f32 %v7829, 1.442695
        %v7893 = vpow.pop %v7892
        %v7894 = vadd.f32 %v7831, %v7833
        %7895 = vadd.xlane.f32.xlu0 %v7894
        %v7896 = vpop.xlane.xlu0 %7895
        %v7897 = vadd.f32 %v7835, %v7837
        %7898 = vadd.xlane.f32.xlu0 %v7897
        %v7899 = vpop.xlane.xlu0 %7898
        %v7900 = vadd.f32 %v7839, %v7841
        %7901 = vadd.xlane.f32.xlu0 %v7900
        %v7902 = vpop.xlane.xlu0 %7901
        %v7903 = vadd.f32 %v7843, %v7845
        %7904 = vadd.xlane.f32.xlu0 %v7903
        %v7905 = vpop.xlane.xlu0 %7904
        %v7906 = vadd.f32 %v7847, %v7849
        %7907 = vadd.xlane.f32.xlu0 %v7906
        %v7908 = vpop.xlane.xlu0 %7907
        %v7909 = vadd.f32 %v7851, %v7853
        %7910 = vadd.xlane.f32.xlu0 %v7909
        %v7911 = vpop.xlane.xlu0 %7910
        %v7912 = vadd.f32 %v7855, %v7857
        %7913 = vadd.xlane.f32.xlu0 %v7912
        %v7914 = vpop.xlane.xlu0 %7913
        %v7915 = vadd.f32 %v7859, %v7861
        %7916 = vadd.xlane.f32.xlu0 %v7915
        %v7917 = vpop.xlane.xlu0 %7916
        %v7918 = vadd.f32 %v7863, %v7865
        %7919 = vadd.xlane.f32.xlu0 %v7918
        %v7920 = vpop.xlane.xlu0 %7919
        %v7921 = vadd.f32 %v7867, %v7869
        %7922 = vadd.xlane.f32.xlu0 %v7921
        %v7923 = vpop.xlane.xlu0 %7922
        %v7924 = vadd.f32 %v7871, %v7873
        %7925 = vadd.xlane.f32.xlu0 %v7924
        %v7926 = vpop.xlane.xlu0 %7925
        %v7927 = vadd.f32 %v7875, %v7877
        %7928 = vadd.xlane.f32.xlu0 %v7927
        %v7929 = vpop.xlane.xlu0 %7928
        %v7930 = vadd.f32 %v7879, %v7881
        %7931 = vadd.xlane.f32.xlu0 %v7930
        %v7932 = vpop.xlane.xlu0 %7931
        %v7933 = vadd.f32 %v7883, %v7885
        %7934 = vadd.xlane.f32.xlu0 %v7933
        %v7935 = vpop.xlane.xlu0 %7934
        %v7936 = vadd.f32 %v7887, %v7889
        %7937 = vadd.xlane.f32.xlu0 %v7936
        %v7938 = vpop.xlane.xlu0 %7937
        %v7939 = vadd.f32 %v7891, %v7893
        %7940 = vadd.xlane.f32.xlu0 %v7939
        %v7941 = vpop.xlane.xlu0 %7940
        %v7942 = vrcp.pop %v7896
        %v7943 = vrcp.pop %v7899
        %v7944 = vrcp.pop %v7902
        %v7945 = vrcp.pop %v7905
        %v7946 = vrcp.pop %v7908
        %v7947 = vrcp.pop %v7911
        %v7948 = vrcp.pop %v7914
        %v7949 = vrcp.pop %v7917
        %v7950 = vrcp.pop %v7920
        %v7951 = vrcp.pop %v7923
        %v7952 = vrcp.pop %v7926
        %v7953 = vrcp.pop %v7929
        %v7954 = vrcp.pop %v7932
        %v7955 = vrcp.pop %v7935
        %v7956 = vrcp.pop %v7938
        %v7957 = vrcp.pop %v7941
        %v7958 = vmul.f32 %v7831, %v7942
        %v7959 = vmul.f32 %v7833, %v7942
        %v7960 = vmul.f32 %v7835, %v7943
        %v7961 = vmul.f32 %v7837, %v7943
        %v7962 = vmul.f32 %v7839, %v7944
        %v7963 = vmul.f32 %v7841, %v7944
        %v7964 = vmul.f32 %v7843, %v7945
        %v7965 = vmul.f32 %v7845, %v7945
        %v7966 = vmul.f32 %v7847, %v7946
        %v7967 = vmul.f32 %v7849, %v7946
        %v7968 = vmul.f32 %v7851, %v7947
        %v7969 = vmul.f32 %v7853, %v7947
        %v7970 = vmul.f32 %v7855, %v7948
        %v7971 = vmul.f32 %v7857, %v7948
        %v7972 = vmul.f32 %v7859, %v7949
        %v7973 = vmul.f32 %v7861, %v7949
        %v7974 = vmul.f32 %v7863, %v7950
        %v7975 = vmul.f32 %v7865, %v7950
        %v7976 = vmul.f32 %v7867, %v7951
        %v7977 = vmul.f32 %v7869, %v7951
        %v7978 = vmul.f32 %v7871, %v7952
        %v7979 = vmul.f32 %v7873, %v7952
        %v7980 = vmul.f32 %v7875, %v7953
        %v7981 = vmul.f32 %v7877, %v7953
        %v7982 = vmul.f32 %v7879, %v7954
        %v7983 = vmul.f32 %v7881, %v7954
        %v7984 = vmul.f32 %v7883, %v7955
        %v7985 = vmul.f32 %v7885, %v7955
        %v7986 = vmul.f32 %v7887, %v7956
        %v7987 = vmul.f32 %v7889, %v7956
        %v7988 = vmul.f32 %v7891, %v7957
        %v7989 = vmul.f32 %v7893, %v7957
        %v7990 = vpack.c.bf16 %v7960, %v7958
        %v7991 = vpack.c.bf16 %v7961, %v7959
        %v7992 = vpack.c.bf16 %v7964, %v7962
        %v7993 = vpack.c.bf16 %v7965, %v7963
        %v7994 = vpack.c.bf16 %v7968, %v7966
        %v7995 = vpack.c.bf16 %v7969, %v7967
        %v7996 = vpack.c.bf16 %v7972, %v7970
        %v7997 = vpack.c.bf16 %v7973, %v7971
        %v7998 = vpack.c.bf16 %v7976, %v7974
        %v7999 = vpack.c.bf16 %v7977, %v7975
        %v8000 = vpack.c.bf16 %v7980, %v7978
        %v8001 = vpack.c.bf16 %v7981, %v7979
        %v8002 = vpack.c.bf16 %v7984, %v7982
        %v8003 = vpack.c.bf16 %v7985, %v7983
        %v8004 = vpack.c.bf16 %v7988, %v7986
        %v8005 = vpack.c.bf16 %v7989, %v7987
        %8006 = vmatprep.subr.bf16.mxu0 0
        %8007 = vmatpush1.bf16.msra.mxu0 %v4809
        %8008 = vmatprep.subr.bf16.mxu0 0
        %8009 = vmatpush1.bf16.msra.mxu0 %v4810
        %8010 = vmatprep.subr.bf16.mxu0 0
        %8011 = vmatpush1.bf16.msra.mxu0 %v4811
        %8012 = vmatprep.subr.bf16.mxu0 0
        %8013 = vmatpush1.bf16.msra.mxu0 %v4812
        %8014 = vmatprep.subr.bf16.mxu0 0
        %8015 = vmatpush1.bf16.msra.mxu0 %v4813
        %8016 = vmatprep.subr.bf16.mxu0 0
        %8017 = vmatpush1.bf16.msra.mxu0 %v4814
        %8018 = vmatprep.subr.bf16.mxu0 0
        %8019 = vmatpush1.bf16.msra.mxu0 %v4815
        %8020 = vmatprep.subr.bf16.mxu0 0
        %8021 = vmatpush1.bf16.msra.mxu0 %v4816
        %8022 = vmatprep.subr.bf16.mxu0 0
        %8023 = vmatpush1.bf16.msra.mxu0 %v4817
        %8024 = vmatprep.subr.bf16.mxu0 0
        %8025 = vmatpush1.bf16.msra.mxu0 %v4818
        %8026 = vmatprep.subr.bf16.mxu0 0
        %8027 = vmatpush1.bf16.msra.mxu0 %v4819
        %8028 = vmatprep.subr.bf16.mxu0 0
        %8029 = vmatpush1.bf16.msra.mxu0 %v4820
        %8030 = vmatprep.subr.bf16.mxu0 0
        %8031 = vmatpush1.bf16.msra.mxu0 %v4821
        %8032 = vmatprep.subr.bf16.mxu0 0
        %8033 = vmatpush1.bf16.msra.mxu0 %v4822
        %8034 = vmatprep.subr.bf16.mxu0 0
        %8035 = vmatpush1.bf16.msra.mxu0 %v4823
        %8036 = vmatprep.subr.bf16.mxu0 0
        %8037 = vmatpush1.bf16.msra.mxu0 %v4824
        %8038 = vmatprep.mubr.bf16.mxu0 %v7991
        %8039 = vmatmul.mubr.bf16.gmra.mrb[0].mxu0 %v7990
        %v8040 = vpop.f32.mrb[0].mxu0
        %v8041 = vadd.f32 0.0, %v8040
        %v8042 = vpop.f32.mrb[0].mxu0
        %v8043 = vpop.f32.mrb[0].mxu0
        %v8044 = vadd.f32 0.0, %v8043
        %v8045 = vpop.f32.mrb[0].mxu0
        %8046 = vmatprep.mubr.bf16.mxu0 %v7993
        %8047 = vmatmul.mubr.bf16.gmra.mrb[0].mxu0 %v7992
        %v8048 = vpop.f32.mrb[0].mxu0
        %v8049 = vadd.f32 0.0, %v8048
        %v8050 = vpop.f32.mrb[0].mxu0
        %v8051 = vpop.f32.mrb[0].mxu0
        %v8052 = vadd.f32 0.0, %v8051
        %v8053 = vpop.f32.mrb[0].mxu0
        %8054 = vmatprep.mubr.bf16.mxu0 %v7995
        %8055 = vmatmul.mubr.bf16.gmra.mrb[0].mxu0 %v7994
        %v8056 = vpop.f32.mrb[0].mxu0
        %v8057 = vadd.f32 0.0, %v8056
        %v8058 = vpop.f32.mrb[0].mxu0
        %v8059 = vpop.f32.mrb[0].mxu0
        %v8060 = vadd.f32 0.0, %v8059
        %v8061 = vpop.f32.mrb[0].mxu0
        %8062 = vmatprep.mubr.bf16.mxu0 %v7997
        %8063 = vmatmul.mubr.bf16.gmra.mrb[0].mxu0 %v7996
        %v8064 = vpop.f32.mrb[0].mxu0
        %v8065 = vadd.f32 0.0, %v8064
        %v8066 = vpop.f32.mrb[0].mxu0
        %v8067 = vpop.f32.mrb[0].mxu0
        %v8068 = vadd.f32 0.0, %v8067
        %v8069 = vpop.f32.mrb[0].mxu0
        %8070 = vmatprep.mubr.bf16.mxu0 %v7999
        %8071 = vmatmul.mubr.bf16.gmra.mrb[0].mxu0 %v7998
        %v8072 = vpop.f32.mrb[0].mxu0
        %v8073 = vadd.f32 0.0, %v8072
        %v8074 = vpop.f32.mrb[0].mxu0
        %v8075 = vpop.f32.mrb[0].mxu0
        %v8076 = vadd.f32 0.0, %v8075
        %v8077 = vpop.f32.mrb[0].mxu0
        %8078 = vmatprep.mubr.bf16.mxu0 %v8001
        %8079 = vmatmul.mubr.bf16.gmra.mrb[0].mxu0 %v8000
        %v8080 = vpop.f32.mrb[0].mxu0
        %v8081 = vadd.f32 0.0, %v8080
        %v8082 = vpop.f32.mrb[0].mxu0
        %v8083 = vpop.f32.mrb[0].mxu0
        %v8084 = vadd.f32 0.0, %v8083
        %v8085 = vpop.f32.mrb[0].mxu0
        %8086 = vmatprep.mubr.bf16.mxu0 %v8003
        %8087 = vmatmul.mubr.bf16.gmra.mrb[0].mxu0 %v8002
        %v8088 = vpop.f32.mrb[0].mxu0
        %v8089 = vadd.f32 0.0, %v8088
        %v8090 = vpop.f32.mrb[0].mxu0
        %v8091 = vpop.f32.mrb[0].mxu0
        %v8092 = vadd.f32 0.0, %v8091
        %v8093 = vpop.f32.mrb[0].mxu0
        %8094 = vmatprep.mubr.bf16.mxu0 %v8005
        %8095 = vmatmul.mubr.bf16.gmra.mrb[0].mxu0 %v8004
        %v8096 = vpop.f32.mrb[0].mxu0
        %v8097 = vadd.f32 0.0, %v8096
        %v8098 = vpop.f32.mrb[0].mxu0
        %v8099 = vpop.f32.mrb[0].mxu0
        %v8100 = vadd.f32 0.0, %v8099
        %v8101 = vpop.f32.mrb[0].mxu0
        %8102 = vdwg.mxu0
        %v8103 = vpack.c.bf16 %v8044, %v8041
        %v8104 = vpack.c.bf16 %v8052, %v8049
        %v8105 = vpack.c.bf16 %v8060, %v8057
        %v8106 = vpack.c.bf16 %v8068, %v8065
        %v8107 = vpack.c.bf16 %v8076, %v8073
        %v8108 = vpack.c.bf16 %v8084, %v8081
        %v8109 = vpack.c.bf16 %v8092, %v8089
        %v8110 = vpack.c.bf16 %v8100, %v8097
        %8119 = vrot.lane.b32.xlu0 %v4617, 96
        %v8120 = vpop.permute.xlu0 %8119
        %8121 = vrot.lane.b32.xlu0 %v4618, 96
        %v8122 = vpop.permute.xlu0 %8121
        %8123 = vrot.lane.b32.xlu0 %v4619, 96
        %v8124 = vpop.permute.xlu0 %8123
        %8125 = vrot.lane.b32.xlu0 %v4620, 96
        %v8126 = vpop.permute.xlu0 %8125
        %8127 = vrot.lane.b32.xlu0 %v4621, 96
        %v8128 = vpop.permute.xlu0 %8127
        %8129 = vrot.lane.b32.xlu0 %v4622, 96
        %v8130 = vpop.permute.xlu0 %8129
        %8131 = vrot.lane.b32.xlu0 %v4623, 96
        %v8132 = vpop.permute.xlu0 %8131
        %8133 = vrot.lane.b32.xlu0 %v4624, 96
        %v8134 = vpop.permute.xlu0 %8133
        %v8136 = vsel %vm2065, %v8120, 0
        %v8139 = vsel %vm2065, %v8122, 0
        %v8142 = vsel %vm2065, %v8124, 0
        %v8145 = vsel %vm2065, %v8126, 0
        %v8148 = vsel %vm2065, %v8128, 0
        %v8151 = vsel %vm2065, %v8130, 0
        %v8154 = vsel %vm2065, %v8132, 0
        %v8157 = vsel %vm2065, %v8134, 0
        %8159 = vmatprep.subr.bf16.mxu0 %v4366
        %8160 = vmatpush1.bf16.msra.mxu0 %v4365
        %8161 = vmatprep.subr.bf16.mxu0 %v4368
        %8162 = vmatpush1.bf16.msra.mxu0 %v4367
        %8163 = vmatprep.subr.bf16.mxu0 0
        %8164 = vmatpush1.bf16.msra.mxu0 0
        %8165 = vmatprep.subr.bf16.mxu0 0
        %8166 = vmatpush1.bf16.msra.mxu0 0
        %8167 = vmatprep.subr.bf16.mxu0 0
        %8168 = vmatpush1.bf16.msra.mxu0 0
        %8169 = vmatprep.subr.bf16.mxu0 0
        %8170 = vmatpush1.bf16.msra.mxu0 0
        %8171 = vmatprep.subr.bf16.mxu0 0
        %8172 = vmatpush1.bf16.msra.mxu0 0
        %8173 = vmatprep.subr.bf16.mxu0 0
        %8174 = vmatpush1.bf16.msra.mxu0 0
        %8175 = vmatprep.subr.bf16.mxu0 0
        %8176 = vmatpush1.bf16.msra.mxu0 0
        %8177 = vmatprep.subr.bf16.mxu0 0
        %8178 = vmatpush1.bf16.msra.mxu0 0
        %8179 = vmatprep.subr.bf16.mxu0 0
        %8180 = vmatpush1.bf16.msra.mxu0 0
        %8181 = vmatprep.subr.bf16.mxu0 0
        %8182 = vmatpush1.bf16.msra.mxu0 0
        %8183 = vmatprep.subr.bf16.mxu0 0
        %8184 = vmatpush1.bf16.msra.mxu0 0
        %8185 = vmatprep.subr.bf16.mxu0 0
        %8186 = vmatpush1.bf16.msra.mxu0 0
        %8187 = vmatprep.subr.bf16.mxu0 0
        %8188 = vmatpush1.bf16.msra.mxu0 0
        %8189 = vmatprep.subr.bf16.mxu0 0
        %8190 = vmatpush1.bf16.msra.mxu0 0
        %8191 = vmatprep.mubr.bf16.mxu0 0
        %8192 = vmatmul.mubr.bf16.gmra.mrb[0].mxu0 %v8136
        %v8193 = vpop.f32.mrb[0].mxu0
        %v8194 = vadd.f32 0.0, %v8193
        %v8195 = vpop.f32.mrb[0].mxu0
        %v8196 = vadd.f32 0.0, %v8195
        %v8197 = vpop.f32.mrb[0].mxu0
        %v8198 = vadd.f32 0.0, %v8197
        %v8199 = vpop.f32.mrb[0].mxu0
        %v8200 = vadd.f32 0.0, %v8199
        %8201 = vmatprep.mubr.bf16.mxu0 0
        %8202 = vmatmul.mubr.bf16.gmra.mrb[0].mxu0 %v8139
        %v8203 = vpop.f32.mrb[0].mxu0
        %v8204 = vadd.f32 0.0, %v8203
        %v8205 = vpop.f32.mrb[0].mxu0
        %v8206 = vadd.f32 0.0, %v8205
        %v8207 = vpop.f32.mrb[0].mxu0
        %v8208 = vadd.f32 0.0, %v8207
        %v8209 = vpop.f32.mrb[0].mxu0
        %v8210 = vadd.f32 0.0, %v8209
        %8211 = vmatprep.mubr.bf16.mxu0 0
        %8212 = vmatmul.mubr.bf16.gmra.mrb[0].mxu0 %v8142
        %v8213 = vpop.f32.mrb[0].mxu0
        %v8214 = vadd.f32 0.0, %v8213
        %v8215 = vpop.f32.mrb[0].mxu0
        %v8216 = vadd.f32 0.0, %v8215
        %v8217 = vpop.f32.mrb[0].mxu0
        %v8218 = vadd.f32 0.0, %v8217
        %v8219 = vpop.f32.mrb[0].mxu0
        %v8220 = vadd.f32 0.0, %v8219
        %8221 = vmatprep.mubr.bf16.mxu0 0
        %8222 = vmatmul.mubr.bf16.gmra.mrb[0].mxu0 %v8145
        %v8223 = vpop.f32.mrb[0].mxu0
        %v8224 = vadd.f32 0.0, %v8223
        %v8225 = vpop.f32.mrb[0].mxu0
        %v8226 = vadd.f32 0.0, %v8225
        %v8227 = vpop.f32.mrb[0].mxu0
        %v8228 = vadd.f32 0.0, %v8227
        %v8229 = vpop.f32.mrb[0].mxu0
        %v8230 = vadd.f32 0.0, %v8229
        %8231 = vmatprep.mubr.bf16.mxu0 0
        %8232 = vmatmul.mubr.bf16.gmra.mrb[0].mxu0 %v8148
        %v8233 = vpop.f32.mrb[0].mxu0
        %v8234 = vadd.f32 0.0, %v8233
        %v8235 = vpop.f32.mrb[0].mxu0
        %v8236 = vadd.f32 0.0, %v8235
        %v8237 = vpop.f32.mrb[0].mxu0
        %v8238 = vadd.f32 0.0, %v8237
        %v8239 = vpop.f32.mrb[0].mxu0
        %v8240 = vadd.f32 0.0, %v8239
        %8241 = vmatprep.mubr.bf16.mxu0 0
        %8242 = vmatmul.mubr.bf16.gmra.mrb[0].mxu0 %v8151
        %v8243 = vpop.f32.mrb[0].mxu0
        %v8244 = vadd.f32 0.0, %v8243
        %v8245 = vpop.f32.mrb[0].mxu0
        %v8246 = vadd.f32 0.0, %v8245
        %v8247 = vpop.f32.mrb[0].mxu0
        %v8248 = vadd.f32 0.0, %v8247
        %v8249 = vpop.f32.mrb[0].mxu0
        %v8250 = vadd.f32 0.0, %v8249
        %8251 = vmatprep.mubr.bf16.mxu0 0
        %8252 = vmatmul.mubr.bf16.gmra.mrb[0].mxu0 %v8154
        %v8253 = vpop.f32.mrb[0].mxu0
        %v8254 = vadd.f32 0.0, %v8253
        %v8255 = vpop.f32.mrb[0].mxu0
        %v8256 = vadd.f32 0.0, %v8255
        %v8257 = vpop.f32.mrb[0].mxu0
        %v8258 = vadd.f32 0.0, %v8257
        %v8259 = vpop.f32.mrb[0].mxu0
        %v8260 = vadd.f32 0.0, %v8259
        %8261 = vmatprep.mubr.bf16.mxu0 0
        %8262 = vmatmul.mubr.bf16.gmra.mrb[0].mxu0 %v8157
        %v8263 = vpop.f32.mrb[0].mxu0
        %v8264 = vadd.f32 0.0, %v8263
        %v8265 = vpop.f32.mrb[0].mxu0
        %v8266 = vadd.f32 0.0, %v8265
        %v8267 = vpop.f32.mrb[0].mxu0
        %v8268 = vadd.f32 0.0, %v8267
        %v8269 = vpop.f32.mrb[0].mxu0
        %v8270 = vadd.f32 0.0, %v8269
        %8271 = vdwg.mxu0
        %v8272 = vmax.f32 %v8194, %v8196
        %8273 = vmax.xlane.f32.xlu0 %v8272
        %v8274 = vpop.xlane.xlu0 %8273
        %v8275 = vmax.f32 %v8198, %v8200
        %8276 = vmax.xlane.f32.xlu0 %v8275
        %v8277 = vpop.xlane.xlu0 %8276
        %v8278 = vmax.f32 %v8204, %v8206
        %8279 = vmax.xlane.f32.xlu0 %v8278
        %v8280 = vpop.xlane.xlu0 %8279
        %v8281 = vmax.f32 %v8208, %v8210
        %8282 = vmax.xlane.f32.xlu0 %v8281
        %v8283 = vpop.xlane.xlu0 %8282
        %v8284 = vmax.f32 %v8214, %v8216
        %8285 = vmax.xlane.f32.xlu0 %v8284
        %v8286 = vpop.xlane.xlu0 %8285
        %v8287 = vmax.f32 %v8218, %v8220
        %8288 = vmax.xlane.f32.xlu0 %v8287
        %v8289 = vpop.xlane.xlu0 %8288
        %v8290 = vmax.f32 %v8224, %v8226
        %8291 = vmax.xlane.f32.xlu0 %v8290
        %v8292 = vpop.xlane.xlu0 %8291
        %v8293 = vmax.f32 %v8228, %v8230
        %8294 = vmax.xlane.f32.xlu0 %v8293
        %v8295 = vpop.xlane.xlu0 %8294
        %v8296 = vmax.f32 %v8234, %v8236
        %8297 = vmax.xlane.f32.xlu0 %v8296
        %v8298 = vpop.xlane.xlu0 %8297
        %v8299 = vmax.f32 %v8238, %v8240
        %8300 = vmax.xlane.f32.xlu0 %v8299
        %v8301 = vpop.xlane.xlu0 %8300
        %v8302 = vmax.f32 %v8244, %v8246
        %8303 = vmax.xlane.f32.xlu0 %v8302
        %v8304 = vpop.xlane.xlu0 %8303
        %v8305 = vmax.f32 %v8248, %v8250
        %8306 = vmax.xlane.f32.xlu0 %v8305
        %v8307 = vpop.xlane.xlu0 %8306
        %v8308 = vmax.f32 %v8254, %v8256
        %8309 = vmax.xlane.f32.xlu0 %v8308
        %v8310 = vpop.xlane.xlu0 %8309
        %v8311 = vmax.f32 %v8258, %v8260
        %8312 = vmax.xlane.f32.xlu0 %v8311
        %v8313 = vpop.xlane.xlu0 %8312
        %v8314 = vmax.f32 %v8264, %v8266
        %8315 = vmax.xlane.f32.xlu0 %v8314
        %v8316 = vpop.xlane.xlu0 %8315
        %v8317 = vmax.f32 %v8268, %v8270
        %8318 = vmax.xlane.f32.xlu0 %v8317
        %v8319 = vpop.xlane.xlu0 %8318
        %v8320 = vsub.f32 %v8194, %v8274
        %v8321 = vsub.f32 %v8196, %v8274
        %v8322 = vsub.f32 %v8198, %v8277
        %v8323 = vsub.f32 %v8200, %v8277
        %v8324 = vsub.f32 %v8204, %v8280
        %v8325 = vsub.f32 %v8206, %v8280
        %v8326 = vsub.f32 %v8208, %v8283
        %v8327 = vsub.f32 %v8210, %v8283
        %v8328 = vsub.f32 %v8214, %v8286
        %v8329 = vsub.f32 %v8216, %v8286
        %v8330 = vsub.f32 %v8218, %v8289
        %v8331 = vsub.f32 %v8220, %v8289
        %v8332 = vsub.f32 %v8224, %v8292
        %v8333 = vsub.f32 %v8226, %v8292
        %v8334 = vsub.f32 %v8228, %v8295
        %v8335 = vsub.f32 %v8230, %v8295
        %v8336 = vsub.f32 %v8234, %v8298
        %v8337 = vsub.f32 %v8236, %v8298
        %v8338 = vsub.f32 %v8238, %v8301
        %v8339 = vsub.f32 %v8240, %v8301
        %v8340 = vsub.f32 %v8244, %v8304
        %v8341 = vsub.f32 %v8246, %v8304
        %v8342 = vsub.f32 %v8248, %v8307
        %v8343 = vsub.f32 %v8250, %v8307
        %v8344 = vsub.f32 %v8254, %v8310
        %v8345 = vsub.f32 %v8256, %v8310
        %v8346 = vsub.f32 %v8258, %v8313
        %v8347 = vsub.f32 %v8260, %v8313
        %v8348 = vsub.f32 %v8264, %v8316
        %v8349 = vsub.f32 %v8266, %v8316
        %v8350 = vsub.f32 %v8268, %v8319
        %v8351 = vsub.f32 %v8270, %v8319
        %v8352 = vmul.f32 %v8320, 1.442695
        %v8353 = vpow.pop %v8352
        %v8354 = vmul.f32 %v8321, 1.442695
        %v8355 = vpow.pop %v8354
        %v8356 = vmul.f32 %v8322, 1.442695
        %v8357 = vpow.pop %v8356
        %v8358 = vmul.f32 %v8323, 1.442695
        %v8359 = vpow.pop %v8358
        %v8360 = vmul.f32 %v8324, 1.442695
        %v8361 = vpow.pop %v8360
        %v8362 = vmul.f32 %v8325, 1.442695
        %v8363 = vpow.pop %v8362
        %v8364 = vmul.f32 %v8326, 1.442695
        %v8365 = vpow.pop %v8364
        %v8366 = vmul.f32 %v8327, 1.442695
        %v8367 = vpow.pop %v8366
        %v8368 = vmul.f32 %v8328, 1.442695
        %v8369 = vpow.pop %v8368
        %v8370 = vmul.f32 %v8329, 1.442695
        %v8371 = vpow.pop %v8370
        %v8372 = vmul.f32 %v8330, 1.442695
        %v8373 = vpow.pop %v8372
        %v8374 = vmul.f32 %v8331, 1.442695
        %v8375 = vpow.pop %v8374
        %v8376 = vmul.f32 %v8332, 1.442695
        %v8377 = vpow.pop %v8376
        %v8378 = vmul.f32 %v8333, 1.442695
        %v8379 = vpow.pop %v8378
        %v8380 = vmul.f32 %v8334, 1.442695
        %v8381 = vpow.pop %v8380
        %v8382 = vmul.f32 %v8335, 1.442695
        %v8383 = vpow.pop %v8382
        %v8384 = vmul.f32 %v8336, 1.442695
        %v8385 = vpow.pop %v8384
        %v8386 = vmul.f32 %v8337, 1.442695
        %v8387 = vpow.pop %v8386
        %v8388 = vmul.f32 %v8338, 1.442695
        %v8389 = vpow.pop %v8388
        %v8390 = vmul.f32 %v8339, 1.442695
        %v8391 = vpow.pop %v8390
        %v8392 = vmul.f32 %v8340, 1.442695
        %v8393 = vpow.pop %v8392
        %v8394 = vmul.f32 %v8341, 1.442695
        %v8395 = vpow.pop %v8394
        %v8396 = vmul.f32 %v8342, 1.442695
        %v8397 = vpow.pop %v8396
        %v8398 = vmul.f32 %v8343, 1.442695
        %v8399 = vpow.pop %v8398
        %v8400 = vmul.f32 %v8344, 1.442695
        %v8401 = vpow.pop %v8400
        %v8402 = vmul.f32 %v8345, 1.442695
        %v8403 = vpow.pop %v8402
        %v8404 = vmul.f32 %v8346, 1.442695
        %v8405 = vpow.pop %v8404
        %v8406 = vmul.f32 %v8347, 1.442695
        %v8407 = vpow.pop %v8406
        %v8408 = vmul.f32 %v8348, 1.442695
        %v8409 = vpow.pop %v8408
        %v8410 = vmul.f32 %v8349, 1.442695
        %v8411 = vpow.pop %v8410
        %v8412 = vmul.f32 %v8350, 1.442695
        %v8413 = vpow.pop %v8412
        %v8414 = vmul.f32 %v8351, 1.442695
        %v8415 = vpow.pop %v8414
        %v8416 = vadd.f32 %v8353, %v8355
        %8417 = vadd.xlane.f32.xlu0 %v8416
        %v8418 = vpop.xlane.xlu0 %8417
        %v8419 = vadd.f32 %v8357, %v8359
        %8420 = vadd.xlane.f32.xlu0 %v8419
        %v8421 = vpop.xlane.xlu0 %8420
        %v8422 = vadd.f32 %v8361, %v8363
        %8423 = vadd.xlane.f32.xlu0 %v8422
        %v8424 = vpop.xlane.xlu0 %8423
        %v8425 = vadd.f32 %v8365, %v8367
        %8426 = vadd.xlane.f32.xlu0 %v8425
        %v8427 = vpop.xlane.xlu0 %8426
        %v8428 = vadd.f32 %v8369, %v8371
        %8429 = vadd.xlane.f32.xlu0 %v8428
        %v8430 = vpop.xlane.xlu0 %8429
        %v8431 = vadd.f32 %v8373, %v8375
        %8432 = vadd.xlane.f32.xlu0 %v8431
        %v8433 = vpop.xlane.xlu0 %8432
        %v8434 = vadd.f32 %v8377, %v8379
        %8435 = vadd.xlane.f32.xlu0 %v8434
        %v8436 = vpop.xlane.xlu0 %8435
        %v8437 = vadd.f32 %v8381, %v8383
        %8438 = vadd.xlane.f32.xlu0 %v8437
        %v8439 = vpop.xlane.xlu0 %8438
        %v8440 = vadd.f32 %v8385, %v8387
        %8441 = vadd.xlane.f32.xlu0 %v8440
        %v8442 = vpop.xlane.xlu0 %8441
        %v8443 = vadd.f32 %v8389, %v8391
        %8444 = vadd.xlane.f32.xlu0 %v8443
        %v8445 = vpop.xlane.xlu0 %8444
        %v8446 = vadd.f32 %v8393, %v8395
        %8447 = vadd.xlane.f32.xlu0 %v8446
        %v8448 = vpop.xlane.xlu0 %8447
        %v8449 = vadd.f32 %v8397, %v8399
        %8450 = vadd.xlane.f32.xlu0 %v8449
        %v8451 = vpop.xlane.xlu0 %8450
        %v8452 = vadd.f32 %v8401, %v8403
        %8453 = vadd.xlane.f32.xlu0 %v8452
        %v8454 = vpop.xlane.xlu0 %8453
        %v8455 = vadd.f32 %v8405, %v8407
        %8456 = vadd.xlane.f32.xlu0 %v8455
        %v8457 = vpop.xlane.xlu0 %8456
        %v8458 = vadd.f32 %v8409, %v8411
        %8459 = vadd.xlane.f32.xlu0 %v8458
        %v8460 = vpop.xlane.xlu0 %8459
        %v8461 = vadd.f32 %v8413, %v8415
        %8462 = vadd.xlane.f32.xlu0 %v8461
        %v8463 = vpop.xlane.xlu0 %8462
        %v8464 = vrcp.pop %v8418
        %v8465 = vrcp.pop %v8421
        %v8466 = vrcp.pop %v8424
        %v8467 = vrcp.pop %v8427
        %v8468 = vrcp.pop %v8430
        %v8469 = vrcp.pop %v8433
        %v8470 = vrcp.pop %v8436
        %v8471 = vrcp.pop %v8439
        %v8472 = vrcp.pop %v8442
        %v8473 = vrcp.pop %v8445
        %v8474 = vrcp.pop %v8448
        %v8475 = vrcp.pop %v8451
        %v8476 = vrcp.pop %v8454
        %v8477 = vrcp.pop %v8457
        %v8478 = vrcp.pop %v8460
        %v8479 = vrcp.pop %v8463
        %v8480 = vmul.f32 %v8353, %v8464
        %v8481 = vmul.f32 %v8355, %v8464
        %v8482 = vmul.f32 %v8357, %v8465
        %v8483 = vmul.f32 %v8359, %v8465
        %v8484 = vmul.f32 %v8361, %v8466
        %v8485 = vmul.f32 %v8363, %v8466
        %v8486 = vmul.f32 %v8365, %v8467
        %v8487 = vmul.f32 %v8367, %v8467
        %v8488 = vmul.f32 %v8369, %v8468
        %v8489 = vmul.f32 %v8371, %v8468
        %v8490 = vmul.f32 %v8373, %v8469
        %v8491 = vmul.f32 %v8375, %v8469
        %v8492 = vmul.f32 %v8377, %v8470
        %v8493 = vmul.f32 %v8379, %v8470
        %v8494 = vmul.f32 %v8381, %v8471
        %v8495 = vmul.f32 %v8383, %v8471
        %v8496 = vmul.f32 %v8385, %v8472
        %v8497 = vmul.f32 %v8387, %v8472
        %v8498 = vmul.f32 %v8389, %v8473
        %v8499 = vmul.f32 %v8391, %v8473
        %v8500 = vmul.f32 %v8393, %v8474
        %v8501 = vmul.f32 %v8395, %v8474
        %v8502 = vmul.f32 %v8397, %v8475
        %v8503 = vmul.f32 %v8399, %v8475
        %v8504 = vmul.f32 %v8401, %v8476
        %v8505 = vmul.f32 %v8403, %v8476
        %v8506 = vmul.f32 %v8405, %v8477
        %v8507 = vmul.f32 %v8407, %v8477
        %v8508 = vmul.f32 %v8409, %v8478
        %v8509 = vmul.f32 %v8411, %v8478
        %v8510 = vmul.f32 %v8413, %v8479
        %v8511 = vmul.f32 %v8415, %v8479
        %v8512 = vpack.c.bf16 %v8482, %v8480
        %v8513 = vpack.c.bf16 %v8483, %v8481
        %v8514 = vpack.c.bf16 %v8486, %v8484
        %v8515 = vpack.c.bf16 %v8487, %v8485
        %v8516 = vpack.c.bf16 %v8490, %v8488
        %v8517 = vpack.c.bf16 %v8491, %v8489
        %v8518 = vpack.c.bf16 %v8494, %v8492
        %v8519 = vpack.c.bf16 %v8495, %v8493
        %v8520 = vpack.c.bf16 %v8498, %v8496
        %v8521 = vpack.c.bf16 %v8499, %v8497
        %v8522 = vpack.c.bf16 %v8502, %v8500
        %v8523 = vpack.c.bf16 %v8503, %v8501
        %v8524 = vpack.c.bf16 %v8506, %v8504
        %v8525 = vpack.c.bf16 %v8507, %v8505
        %v8526 = vpack.c.bf16 %v8510, %v8508
        %v8527 = vpack.c.bf16 %v8511, %v8509
        %8528 = vmatprep.subr.bf16.mxu0 0
        %8529 = vmatpush1.bf16.msra.mxu0 %v5761
        %8530 = vmatprep.subr.bf16.mxu0 0
        %8531 = vmatpush1.bf16.msra.mxu0 %v5763
        %8532 = vmatprep.subr.bf16.mxu0 0
        %8533 = vmatpush1.bf16.msra.mxu0 %v5765
        %8534 = vmatprep.subr.bf16.mxu0 0
        %8535 = vmatpush1.bf16.msra.mxu0 %v5767
        %8536 = vmatprep.subr.bf16.mxu0 0
        %8537 = vmatpush1.bf16.msra.mxu0 %v5769
        %8538 = vmatprep.subr.bf16.mxu0 0
        %8539 = vmatpush1.bf16.msra.mxu0 %v5771
        %8540 = vmatprep.subr.bf16.mxu0 0
        %8541 = vmatpush1.bf16.msra.mxu0 %v5773
        %8542 = vmatprep.subr.bf16.mxu0 0
        %8543 = vmatpush1.bf16.msra.mxu0 %v5775
        %8544 = vmatprep.subr.bf16.mxu0 0
        %8545 = vmatpush1.bf16.msra.mxu0 %v5777
        %8546 = vmatprep.subr.bf16.mxu0 0
        %8547 = vmatpush1.bf16.msra.mxu0 %v5779
        %8548 = vmatprep.subr.bf16.mxu0 0
        %8549 = vmatpush1.bf16.msra.mxu0 %v5781
        %8550 = vmatprep.subr.bf16.mxu0 0
        %8551 = vmatpush1.bf16.msra.mxu0 %v5783
        %8552 = vmatprep.subr.bf16.mxu0 0
        %8553 = vmatpush1.bf16.msra.mxu0 %v5785
        %8554 = vmatprep.subr.bf16.mxu0 0
        %8555 = vmatpush1.bf16.msra.mxu0 %v5787
        %8556 = vmatprep.subr.bf16.mxu0 0
        %8557 = vmatpush1.bf16.msra.mxu0 %v5789
        %8558 = vmatprep.subr.bf16.mxu0 0
        %8559 = vmatpush1.bf16.msra.mxu0 %v5791
        %8560 = vmatprep.mubr.bf16.mxu0 %v8513
        %8561 = vmatmul.mubr.bf16.gmra.mrb[0].mxu0 %v8512
        %v8562 = vpop.f32.mrb[0].mxu0
        %v8563 = vadd.f32 0.0, %v8562
        %v8564 = vpop.f32.mrb[0].mxu0
        %v8565 = vpop.f32.mrb[0].mxu0
        %v8566 = vadd.f32 0.0, %v8565
        %v8567 = vpop.f32.mrb[0].mxu0
        %8568 = vmatprep.mubr.bf16.mxu0 %v8515
        %8569 = vmatmul.mubr.bf16.gmra.mrb[0].mxu0 %v8514
        %v8570 = vpop.f32.mrb[0].mxu0
        %v8571 = vadd.f32 0.0, %v8570
        %v8572 = vpop.f32.mrb[0].mxu0
        %v8573 = vpop.f32.mrb[0].mxu0
        %v8574 = vadd.f32 0.0, %v8573
        %v8575 = vpop.f32.mrb[0].mxu0
        %8576 = vmatprep.mubr.bf16.mxu0 %v8517
        %8577 = vmatmul.mubr.bf16.gmra.mrb[0].mxu0 %v8516
        %v8578 = vpop.f32.mrb[0].mxu0
        %v8579 = vadd.f32 0.0, %v8578
        %v8580 = vpop.f32.mrb[0].mxu0
        %v8581 = vpop.f32.mrb[0].mxu0
        %v8582 = vadd.f32 0.0, %v8581
        %v8583 = vpop.f32.mrb[0].mxu0
        %8584 = vmatprep.mubr.bf16.mxu0 %v8519
        %8585 = vmatmul.mubr.bf16.gmra.mrb[0].mxu0 %v8518
        %v8586 = vpop.f32.mrb[0].mxu0
        %v8587 = vadd.f32 0.0, %v8586
        %v8588 = vpop.f32.mrb[0].mxu0
        %v8589 = vpop.f32.mrb[0].mxu0
        %v8590 = vadd.f32 0.0, %v8589
        %v8591 = vpop.f32.mrb[0].mxu0
        %8592 = vmatprep.mubr.bf16.mxu0 %v8521
        %8593 = vmatmul.mubr.bf16.gmra.mrb[0].mxu0 %v8520
        %v8594 = vpop.f32.mrb[0].mxu0
        %v8595 = vadd.f32 0.0, %v8594
        %v8596 = vpop.f32.mrb[0].mxu0
        %v8597 = vpop.f32.mrb[0].mxu0
        %v8598 = vadd.f32 0.0, %v8597
        %v8599 = vpop.f32.mrb[0].mxu0
        %8600 = vmatprep.mubr.bf16.mxu0 %v8523
        %8601 = vmatmul.mubr.bf16.gmra.mrb[0].mxu0 %v8522
        %v8602 = vpop.f32.mrb[0].mxu0
        %v8603 = vadd.f32 0.0, %v8602
        %v8604 = vpop.f32.mrb[0].mxu0
        %v8605 = vpop.f32.mrb[0].mxu0
        %v8606 = vadd.f32 0.0, %v8605
        %v8607 = vpop.f32.mrb[0].mxu0
        %8608 = vmatprep.mubr.bf16.mxu0 %v8525
        %8609 = vmatmul.mubr.bf16.gmra.mrb[0].mxu0 %v8524
        %v8610 = vpop.f32.mrb[0].mxu0
        %v8611 = vadd.f32 0.0, %v8610
        %v8612 = vpop.f32.mrb[0].mxu0
        %v8613 = vpop.f32.mrb[0].mxu0
        %v8614 = vadd.f32 0.0, %v8613
        %v8615 = vpop.f32.mrb[0].mxu0
        %8616 = vmatprep.mubr.bf16.mxu0 %v8527
        %8617 = vmatmul.mubr.bf16.gmra.mrb[0].mxu0 %v8526
        %v8618 = vpop.f32.mrb[0].mxu0
        %v8619 = vadd.f32 0.0, %v8618
        %v8620 = vpop.f32.mrb[0].mxu0
        %v8621 = vpop.f32.mrb[0].mxu0
        %v8622 = vadd.f32 0.0, %v8621
        %v8623 = vpop.f32.mrb[0].mxu0
        %8624 = vdwg.mxu0
        %v8625 = vpack.c.bf16 %v8566, %v8563
        %v8626 = vpack.c.bf16 %v8574, %v8571
        %v8627 = vpack.c.bf16 %v8582, %v8579
        %v8628 = vpack.c.bf16 %v8590, %v8587
        %v8629 = vpack.c.bf16 %v8598, %v8595
        %v8630 = vpack.c.bf16 %v8606, %v8603
        %v8631 = vpack.c.bf16 %v8614, %v8611
        %v8632 = vpack.c.bf16 %v8622, %v8619
        %v8634 = vsel %vm2065, %v8625, 0
        %v8637 = vsel %vm2065, %v8626, 0
        %v8640 = vsel %vm2065, %v8627, 0
        %v8643 = vsel %vm2065, %v8628, 0
        %v8646 = vsel %vm2065, %v8629, 0
        %v8649 = vsel %vm2065, %v8630, 0
        %v8652 = vsel %vm2065, %v8631, 0
        %v8655 = vsel %vm2065, %v8632, 0
        %8657 = vmatprep.subr.bf16.mxu0 0
        %8658 = vmatpush1.bf16.msra.mxu0 %v5925
        %8659 = vmatprep.subr.bf16.mxu0 0
        %8660 = vmatpush1.bf16.msra.mxu0 %v5926
        %8661 = vmatprep.subr.bf16.mxu0 0
        %8662 = vmatpush1.bf16.msra.mxu0 0
        %8663 = vmatprep.subr.bf16.mxu0 0
        %8664 = vmatpush1.bf16.msra.mxu0 0
        %8665 = vmatprep.subr.bf16.mxu0 0
        %8666 = vmatpush1.bf16.msra.mxu0 0
        %8667 = vmatprep.subr.bf16.mxu0 0
        %8668 = vmatpush1.bf16.msra.mxu0 0
        %8669 = vmatprep.subr.bf16.mxu0 0
        %8670 = vmatpush1.bf16.msra.mxu0 0
        %8671 = vmatprep.subr.bf16.mxu0 0
        %8672 = vmatpush1.bf16.msra.mxu0 0
        %8673 = vmatprep.subr.bf16.mxu0 0
        %8674 = vmatpush1.bf16.msra.mxu0 0
        %8675 = vmatprep.subr.bf16.mxu0 0
        %8676 = vmatpush1.bf16.msra.mxu0 0
        %8677 = vmatprep.subr.bf16.mxu0 0
        %8678 = vmatpush1.bf16.msra.mxu0 0
        %8679 = vmatprep.subr.bf16.mxu0 0
        %8680 = vmatpush1.bf16.msra.mxu0 0
        %8681 = vmatprep.subr.bf16.mxu0 0
        %8682 = vmatpush1.bf16.msra.mxu0 0
        %8683 = vmatprep.subr.bf16.mxu0 0
        %8684 = vmatpush1.bf16.msra.mxu0 0
        %8685 = vmatprep.subr.bf16.mxu0 0
        %8686 = vmatpush1.bf16.msra.mxu0 0
        %8687 = vmatprep.subr.bf16.mxu0 0
        %8688 = vmatpush1.bf16.msra.mxu0 0
        %8689 = vmatprep.mubr.bf16.mxu0 0
        %8690 = vmatmul.mubr.bf16.gmra.mrb[0].mxu0 %v8634
        %v8691 = vpop.f32.mrb[0].mxu0
        %v8692 = vadd.f32 0.0, %v8691
        %v8693 = vpop.f32.mrb[0].mxu0
        %v8694 = vpop.f32.mrb[0].mxu0
        %v8695 = vadd.f32 0.0, %v8694
        %v8696 = vpop.f32.mrb[0].mxu0
        %8697 = vmatprep.mubr.bf16.mxu0 0
        %8698 = vmatmul.mubr.bf16.gmra.mrb[0].mxu0 %v8637
        %v8699 = vpop.f32.mrb[0].mxu0
        %v8700 = vadd.f32 0.0, %v8699
        %v8701 = vpop.f32.mrb[0].mxu0
        %v8702 = vpop.f32.mrb[0].mxu0
        %v8703 = vadd.f32 0.0, %v8702
        %v8704 = vpop.f32.mrb[0].mxu0
        %8705 = vmatprep.mubr.bf16.mxu0 0
        %8706 = vmatmul.mubr.bf16.gmra.mrb[0].mxu0 %v8640
        %v8707 = vpop.f32.mrb[0].mxu0
        %v8708 = vadd.f32 0.0, %v8707
        %v8709 = vpop.f32.mrb[0].mxu0
        %v8710 = vpop.f32.mrb[0].mxu0
        %v8711 = vadd.f32 0.0, %v8710
        %v8712 = vpop.f32.mrb[0].mxu0
        %8713 = vmatprep.mubr.bf16.mxu0 0
        %8714 = vmatmul.mubr.bf16.gmra.mrb[0].mxu0 %v8643
        %v8715 = vpop.f32.mrb[0].mxu0
        %v8716 = vadd.f32 0.0, %v8715
        %v8717 = vpop.f32.mrb[0].mxu0
        %v8718 = vpop.f32.mrb[0].mxu0
        %v8719 = vadd.f32 0.0, %v8718
        %v8720 = vpop.f32.mrb[0].mxu0
        %8721 = vmatprep.mubr.bf16.mxu0 0
        %8722 = vmatmul.mubr.bf16.gmra.mrb[0].mxu0 %v8646
        %v8723 = vpop.f32.mrb[0].mxu0
        %v8724 = vadd.f32 0.0, %v8723
        %v8725 = vpop.f32.mrb[0].mxu0
        %v8726 = vpop.f32.mrb[0].mxu0
        %v8727 = vadd.f32 0.0, %v8726
        %v8728 = vpop.f32.mrb[0].mxu0
        %8729 = vmatprep.mubr.bf16.mxu0 0
        %8730 = vmatmul.mubr.bf16.gmra.mrb[0].mxu0 %v8649
        %v8731 = vpop.f32.mrb[0].mxu0
        %v8732 = vadd.f32 0.0, %v8731
        %v8733 = vpop.f32.mrb[0].mxu0
        %v8734 = vpop.f32.mrb[0].mxu0
        %v8735 = vadd.f32 0.0, %v8734
        %v8736 = vpop.f32.mrb[0].mxu0
        %8737 = vmatprep.mubr.bf16.mxu0 0
        %8738 = vmatmul.mubr.bf16.gmra.mrb[0].mxu0 %v8652
        %v8739 = vpop.f32.mrb[0].mxu0
        %v8740 = vadd.f32 0.0, %v8739
        %v8741 = vpop.f32.mrb[0].mxu0
        %v8742 = vpop.f32.mrb[0].mxu0
        %v8743 = vadd.f32 0.0, %v8742
        %v8744 = vpop.f32.mrb[0].mxu0
        %8745 = vmatprep.mubr.bf16.mxu0 0
        %8746 = vmatmul.mubr.bf16.gmra.mrb[0].mxu0 %v8655
        %v8747 = vpop.f32.mrb[0].mxu0
        %v8748 = vadd.f32 0.0, %v8747
        %v8749 = vpop.f32.mrb[0].mxu0
        %v8750 = vpop.f32.mrb[0].mxu0
        %v8751 = vadd.f32 0.0, %v8750
        %v8752 = vpop.f32.mrb[0].mxu0
        %8753 = vdwg.mxu0
        %v8755 = vsel %vm2065, %v8103, 0
        %v8758 = vsel %vm2065, %v8104, 0
        %v8761 = vsel %vm2065, %v8105, 0
        %v8764 = vsel %vm2065, %v8106, 0
        %v8767 = vsel %vm2065, %v8107, 0
        %v8770 = vsel %vm2065, %v8108, 0
        %v8773 = vsel %vm2065, %v8109, 0
        %v8776 = vsel %vm2065, %v8110, 0
        %8778 = vmatprep.subr.bf16.mxu0 0
        %8779 = vmatpush1.bf16.msra.mxu0 %v6058
        %8780 = vmatprep.subr.bf16.mxu0 0
        %8781 = vmatpush1.bf16.msra.mxu0 %v6059
        %8782 = vmatprep.subr.bf16.mxu0 0
        %8783 = vmatpush1.bf16.msra.mxu0 0
        %8784 = vmatprep.subr.bf16.mxu0 0
        %8785 = vmatpush1.bf16.msra.mxu0 0
        %8786 = vmatprep.subr.bf16.mxu0 0
        %8787 = vmatpush1.bf16.msra.mxu0 0
        %8788 = vmatprep.subr.bf16.mxu0 0
        %8789 = vmatpush1.bf16.msra.mxu0 0
        %8790 = vmatprep.subr.bf16.mxu0 0
        %8791 = vmatpush1.bf16.msra.mxu0 0
        %8792 = vmatprep.subr.bf16.mxu0 0
        %8793 = vmatpush1.bf16.msra.mxu0 0
        %8794 = vmatprep.subr.bf16.mxu0 0
        %8795 = vmatpush1.bf16.msra.mxu0 0
        %8796 = vmatprep.subr.bf16.mxu0 0
        %8797 = vmatpush1.bf16.msra.mxu0 0
        %8798 = vmatprep.subr.bf16.mxu0 0
        %8799 = vmatpush1.bf16.msra.mxu0 0
        %8800 = vmatprep.subr.bf16.mxu0 0
        %8801 = vmatpush1.bf16.msra.mxu0 0
        %8802 = vmatprep.subr.bf16.mxu0 0
        %8803 = vmatpush1.bf16.msra.mxu0 0
        %8804 = vmatprep.subr.bf16.mxu0 0
        %8805 = vmatpush1.bf16.msra.mxu0 0
        %8806 = vmatprep.subr.bf16.mxu0 0
        %8807 = vmatpush1.bf16.msra.mxu0 0
        %8808 = vmatprep.subr.bf16.mxu0 0
        %8809 = vmatpush1.bf16.msra.mxu0 0
        %8810 = vmatprep.mubr.bf16.mxu0 0
        %8811 = vmatmul.mubr.bf16.gmra.mrb[0].mxu0 %v8755
        %v8812 = vpop.f32.mrb[0].mxu0
        %v8813 = vadd.f32 %v8692, %v8812
        %v8814 = vpop.f32.mrb[0].mxu0
        %v8815 = vpop.f32.mrb[0].mxu0
        %v8816 = vadd.f32 %v8695, %v8815
        %v8817 = vpop.f32.mrb[0].mxu0
        %8818 = vmatprep.mubr.bf16.mxu0 0
        %8819 = vmatmul.mubr.bf16.gmra.mrb[0].mxu0 %v8758
        %v8820 = vpop.f32.mrb[0].mxu0
        %v8821 = vadd.f32 %v8700, %v8820
        %v8822 = vpop.f32.mrb[0].mxu0
        %v8823 = vpop.f32.mrb[0].mxu0
        %v8824 = vadd.f32 %v8703, %v8823
        %v8825 = vpop.f32.mrb[0].mxu0
        %8826 = vmatprep.mubr.bf16.mxu0 0
        %8827 = vmatmul.mubr.bf16.gmra.mrb[0].mxu0 %v8761
        %v8828 = vpop.f32.mrb[0].mxu0
        %v8829 = vadd.f32 %v8708, %v8828
        %v8830 = vpop.f32.mrb[0].mxu0
        %v8831 = vpop.f32.mrb[0].mxu0
        %v8832 = vadd.f32 %v8711, %v8831
        %v8833 = vpop.f32.mrb[0].mxu0
        %8834 = vmatprep.mubr.bf16.mxu0 0
        %8835 = vmatmul.mubr.bf16.gmra.mrb[0].mxu0 %v8764
        %v8836 = vpop.f32.mrb[0].mxu0
        %v8837 = vadd.f32 %v8716, %v8836
        %v8838 = vpop.f32.mrb[0].mxu0
        %v8839 = vpop.f32.mrb[0].mxu0
        %v8840 = vadd.f32 %v8719, %v8839
        %v8841 = vpop.f32.mrb[0].mxu0
        %8842 = vmatprep.mubr.bf16.mxu0 0
        %8843 = vmatmul.mubr.bf16.gmra.mrb[0].mxu0 %v8767
        %v8844 = vpop.f32.mrb[0].mxu0
        %v8845 = vadd.f32 %v8724, %v8844
        %v8846 = vpop.f32.mrb[0].mxu0
        %v8847 = vpop.f32.mrb[0].mxu0
        %v8848 = vadd.f32 %v8727, %v8847
        %v8849 = vpop.f32.mrb[0].mxu0
        %8850 = vmatprep.mubr.bf16.mxu0 0
        %8851 = vmatmul.mubr.bf16.gmra.mrb[0].mxu0 %v8770
        %v8852 = vpop.f32.mrb[0].mxu0
        %v8853 = vadd.f32 %v8732, %v8852
        %v8854 = vpop.f32.mrb[0].mxu0
        %v8855 = vpop.f32.mrb[0].mxu0
        %v8856 = vadd.f32 %v8735, %v8855
        %v8857 = vpop.f32.mrb[0].mxu0
        %8858 = vmatprep.mubr.bf16.mxu0 0
        %8859 = vmatmul.mubr.bf16.gmra.mrb[0].mxu0 %v8773
        %v8860 = vpop.f32.mrb[0].mxu0
        %v8861 = vadd.f32 %v8740, %v8860
        %v8862 = vpop.f32.mrb[0].mxu0
        %v8863 = vpop.f32.mrb[0].mxu0
        %v8864 = vadd.f32 %v8743, %v8863
        %v8865 = vpop.f32.mrb[0].mxu0
        %8866 = vmatprep.mubr.bf16.mxu0 0
        %8867 = vmatmul.mubr.bf16.gmra.mrb[0].mxu0 %v8776
        %v8868 = vpop.f32.mrb[0].mxu0
        %v8869 = vadd.f32 %v8748, %v8868
        %v8870 = vpop.f32.mrb[0].mxu0
        %v8871 = vpop.f32.mrb[0].mxu0
        %v8872 = vadd.f32 %v8751, %v8871
        %v8873 = vpop.f32.mrb[0].mxu0
        %8874 = vdwg.mxu0
        %8875 = vrot.lane.b32.xlu0 %v4617, 64
        %v8876 = vpop.permute.xlu0 %8875
        %8877 = vrot.lane.b32.xlu0 %v4618, 64
        %v8878 = vpop.permute.xlu0 %8877
        %8879 = vrot.lane.b32.xlu0 %v4619, 64
        %v8880 = vpop.permute.xlu0 %8879
        %8881 = vrot.lane.b32.xlu0 %v4620, 64
        %v8882 = vpop.permute.xlu0 %8881
        %8883 = vrot.lane.b32.xlu0 %v4621, 64
        %v8884 = vpop.permute.xlu0 %8883
        %8885 = vrot.lane.b32.xlu0 %v4622, 64
        %v8886 = vpop.permute.xlu0 %8885
        %8887 = vrot.lane.b32.xlu0 %v4623, 64
        %v8888 = vpop.permute.xlu0 %8887
        %8889 = vrot.lane.b32.xlu0 %v4624, 64
        %v8890 = vpop.permute.xlu0 %8889
        %v8892 = vsel %vm2065, %v8876, 0
        %v8895 = vsel %vm2065, %v8878, 0
        %v8898 = vsel %vm2065, %v8880, 0
        %v8901 = vsel %vm2065, %v8882, 0
        %v8904 = vsel %vm2065, %v8884, 0
        %v8907 = vsel %vm2065, %v8886, 0
        %v8910 = vsel %vm2065, %v8888, 0
        %v8913 = vsel %vm2065, %v8890, 0
        %8915 = vmatprep.subr.bf16.mxu0 %v4370
        %8916 = vmatpush1.bf16.msra.mxu0 %v4369
        %8917 = vmatprep.subr.bf16.mxu0 %v4372
        %8918 = vmatpush1.bf16.msra.mxu0 %v4371
        %8919 = vmatprep.subr.bf16.mxu0 0
        %8920 = vmatpush1.bf16.msra.mxu0 0
        %8921 = vmatprep.subr.bf16.mxu0 0
        %8922 = vmatpush1.bf16.msra.mxu0 0
        %8923 = vmatprep.subr.bf16.mxu0 0
        %8924 = vmatpush1.bf16.msra.mxu0 0
        %8925 = vmatprep.subr.bf16.mxu0 0
        %8926 = vmatpush1.bf16.msra.mxu0 0
        %8927 = vmatprep.subr.bf16.mxu0 0
        %8928 = vmatpush1.bf16.msra.mxu0 0
        %8929 = vmatprep.subr.bf16.mxu0 0
        %8930 = vmatpush1.bf16.msra.mxu0 0
        %8931 = vmatprep.subr.bf16.mxu0 0
        %8932 = vmatpush1.bf16.msra.mxu0 0
        %8933 = vmatprep.subr.bf16.mxu0 0
        %8934 = vmatpush1.bf16.msra.mxu0 0
        %8935 = vmatprep.subr.bf16.mxu0 0
        %8936 = vmatpush1.bf16.msra.mxu0 0
        %8937 = vmatprep.subr.bf16.mxu0 0
        %8938 = vmatpush1.bf16.msra.mxu0 0
        %8939 = vmatprep.subr.bf16.mxu0 0
        %8940 = vmatpush1.bf16.msra.mxu0 0
        %8941 = vmatprep.subr.bf16.mxu0 0
        %8942 = vmatpush1.bf16.msra.mxu0 0
        %8943 = vmatprep.subr.bf16.mxu0 0
        %8944 = vmatpush1.bf16.msra.mxu0 0
        %8945 = vmatprep.subr.bf16.mxu0 0
        %8946 = vmatpush1.bf16.msra.mxu0 0
        %8947 = vmatprep.mubr.bf16.mxu0 0
        %8948 = vmatmul.mubr.bf16.gmra.mrb[0].mxu0 %v8892
        %v8949 = vpop.f32.mrb[0].mxu0
        %v8950 = vadd.f32 0.0, %v8949
        %v8951 = vpop.f32.mrb[0].mxu0
        %v8952 = vadd.f32 0.0, %v8951
        %v8953 = vpop.f32.mrb[0].mxu0
        %v8954 = vadd.f32 0.0, %v8953
        %v8955 = vpop.f32.mrb[0].mxu0
        %v8956 = vadd.f32 0.0, %v8955
        %8957 = vmatprep.mubr.bf16.mxu0 0
        %8958 = vmatmul.mubr.bf16.gmra.mrb[0].mxu0 %v8895
        %v8959 = vpop.f32.mrb[0].mxu0
        %v8960 = vadd.f32 0.0, %v8959
        %v8961 = vpop.f32.mrb[0].mxu0
        %v8962 = vadd.f32 0.0, %v8961
        %v8963 = vpop.f32.mrb[0].mxu0
        %v8964 = vadd.f32 0.0, %v8963
        %v8965 = vpop.f32.mrb[0].mxu0
        %v8966 = vadd.f32 0.0, %v8965
        %8967 = vmatprep.mubr.bf16.mxu0 0
        %8968 = vmatmul.mubr.bf16.gmra.mrb[0].mxu0 %v8898
        %v8969 = vpop.f32.mrb[0].mxu0
        %v8970 = vadd.f32 0.0, %v8969
        %v8971 = vpop.f32.mrb[0].mxu0
        %v8972 = vadd.f32 0.0, %v8971
        %v8973 = vpop.f32.mrb[0].mxu0
        %v8974 = vadd.f32 0.0, %v8973
        %v8975 = vpop.f32.mrb[0].mxu0
        %v8976 = vadd.f32 0.0, %v8975
        %8977 = vmatprep.mubr.bf16.mxu0 0
        %8978 = vmatmul.mubr.bf16.gmra.mrb[0].mxu0 %v8901
        %v8979 = vpop.f32.mrb[0].mxu0
        %v8980 = vadd.f32 0.0, %v8979
        %v8981 = vpop.f32.mrb[0].mxu0
        %v8982 = vadd.f32 0.0, %v8981
        %v8983 = vpop.f32.mrb[0].mxu0
        %v8984 = vadd.f32 0.0, %v8983
        %v8985 = vpop.f32.mrb[0].mxu0
        %v8986 = vadd.f32 0.0, %v8985
        %8987 = vmatprep.mubr.bf16.mxu0 0
        %8988 = vmatmul.mubr.bf16.gmra.mrb[0].mxu0 %v8904
        %v8989 = vpop.f32.mrb[0].mxu0
        %v8990 = vadd.f32 0.0, %v8989
        %v8991 = vpop.f32.mrb[0].mxu0
        %v8992 = vadd.f32 0.0, %v8991
        %v8993 = vpop.f32.mrb[0].mxu0
        %v8994 = vadd.f32 0.0, %v8993
        %v8995 = vpop.f32.mrb[0].mxu0
        %v8996 = vadd.f32 0.0, %v8995
        %8997 = vmatprep.mubr.bf16.mxu0 0
        %8998 = vmatmul.mubr.bf16.gmra.mrb[0].mxu0 %v8907
        %v8999 = vpop.f32.mrb[0].mxu0
        %v9000 = vadd.f32 0.0, %v8999
        %v9001 = vpop.f32.mrb[0].mxu0
        %v9002 = vadd.f32 0.0, %v9001
        %v9003 = vpop.f32.mrb[0].mxu0
        %v9004 = vadd.f32 0.0, %v9003
        %v9005 = vpop.f32.mrb[0].mxu0
        %v9006 = vadd.f32 0.0, %v9005
        %9007 = vmatprep.mubr.bf16.mxu0 0
        %9008 = vmatmul.mubr.bf16.gmra.mrb[0].mxu0 %v8910
        %v9009 = vpop.f32.mrb[0].mxu0
        %v9010 = vadd.f32 0.0, %v9009
        %v9011 = vpop.f32.mrb[0].mxu0
        %v9012 = vadd.f32 0.0, %v9011
        %v9013 = vpop.f32.mrb[0].mxu0
        %v9014 = vadd.f32 0.0, %v9013
        %v9015 = vpop.f32.mrb[0].mxu0
        %v9016 = vadd.f32 0.0, %v9015
        %9017 = vmatprep.mubr.bf16.mxu0 0
        %9018 = vmatmul.mubr.bf16.gmra.mrb[0].mxu0 %v8913
        %v9019 = vpop.f32.mrb[0].mxu0
        %v9020 = vadd.f32 0.0, %v9019
        %v9021 = vpop.f32.mrb[0].mxu0
        %v9022 = vadd.f32 0.0, %v9021
        %v9023 = vpop.f32.mrb[0].mxu0
        %v9024 = vadd.f32 0.0, %v9023
        %v9025 = vpop.f32.mrb[0].mxu0
        %v9026 = vadd.f32 0.0, %v9025
        %9027 = vdwg.mxu0
        %v9028 = vmax.f32 %v8950, %v8952
        %9029 = vmax.xlane.f32.xlu0 %v9028
        %v9030 = vpop.xlane.xlu0 %9029
        %v9031 = vmax.f32 %v8954, %v8956
        %9032 = vmax.xlane.f32.xlu0 %v9031
        %v9033 = vpop.xlane.xlu0 %9032
        %v9034 = vmax.f32 %v8960, %v8962
        %9035 = vmax.xlane.f32.xlu0 %v9034
        %v9036 = vpop.xlane.xlu0 %9035
        %v9037 = vmax.f32 %v8964, %v8966
        %9038 = vmax.xlane.f32.xlu0 %v9037
        %v9039 = vpop.xlane.xlu0 %9038
        %v9040 = vmax.f32 %v8970, %v8972
        %9041 = vmax.xlane.f32.xlu0 %v9040
        %v9042 = vpop.xlane.xlu0 %9041
        %v9043 = vmax.f32 %v8974, %v8976
        %9044 = vmax.xlane.f32.xlu0 %v9043
        %v9045 = vpop.xlane.xlu0 %9044
        %v9046 = vmax.f32 %v8980, %v8982
        %9047 = vmax.xlane.f32.xlu0 %v9046
        %v9048 = vpop.xlane.xlu0 %9047
        %v9049 = vmax.f32 %v8984, %v8986
        %9050 = vmax.xlane.f32.xlu0 %v9049
        %v9051 = vpop.xlane.xlu0 %9050
        %v9052 = vmax.f32 %v8990, %v8992
        %9053 = vmax.xlane.f32.xlu0 %v9052
        %v9054 = vpop.xlane.xlu0 %9053
        %v9055 = vmax.f32 %v8994, %v8996
        %9056 = vmax.xlane.f32.xlu0 %v9055
        %v9057 = vpop.xlane.xlu0 %9056
        %v9058 = vmax.f32 %v9000, %v9002
        %9059 = vmax.xlane.f32.xlu0 %v9058
        %v9060 = vpop.xlane.xlu0 %9059
        %v9061 = vmax.f32 %v9004, %v9006
        %9062 = vmax.xlane.f32.xlu0 %v9061
        %v9063 = vpop.xlane.xlu0 %9062
        %v9064 = vmax.f32 %v9010, %v9012
        %9065 = vmax.xlane.f32.xlu0 %v9064
        %v9066 = vpop.xlane.xlu0 %9065
        %v9067 = vmax.f32 %v9014, %v9016
        %9068 = vmax.xlane.f32.xlu0 %v9067
        %v9069 = vpop.xlane.xlu0 %9068
        %v9070 = vmax.f32 %v9020, %v9022
        %9071 = vmax.xlane.f32.xlu0 %v9070
        %v9072 = vpop.xlane.xlu0 %9071
        %v9073 = vmax.f32 %v9024, %v9026
        %9074 = vmax.xlane.f32.xlu0 %v9073
        %v9075 = vpop.xlane.xlu0 %9074
        %v9076 = vsub.f32 %v8950, %v9030
        %v9077 = vsub.f32 %v8952, %v9030
        %v9078 = vsub.f32 %v8954, %v9033
        %v9079 = vsub.f32 %v8956, %v9033
        %v9080 = vsub.f32 %v8960, %v9036
        %v9081 = vsub.f32 %v8962, %v9036
        %v9082 = vsub.f32 %v8964, %v9039
        %v9083 = vsub.f32 %v8966, %v9039
        %v9084 = vsub.f32 %v8970, %v9042
        %v9085 = vsub.f32 %v8972, %v9042
        %v9086 = vsub.f32 %v8974, %v9045
        %v9087 = vsub.f32 %v8976, %v9045
        %v9088 = vsub.f32 %v8980, %v9048
        %v9089 = vsub.f32 %v8982, %v9048
        %v9090 = vsub.f32 %v8984, %v9051
        %v9091 = vsub.f32 %v8986, %v9051
        %v9092 = vsub.f32 %v8990, %v9054
        %v9093 = vsub.f32 %v8992, %v9054
        %v9094 = vsub.f32 %v8994, %v9057
        %v9095 = vsub.f32 %v8996, %v9057
        %v9096 = vsub.f32 %v9000, %v9060
        %v9097 = vsub.f32 %v9002, %v9060
        %v9098 = vsub.f32 %v9004, %v9063
        %v9099 = vsub.f32 %v9006, %v9063
        %v9100 = vsub.f32 %v9010, %v9066
        %v9101 = vsub.f32 %v9012, %v9066
        %v9102 = vsub.f32 %v9014, %v9069
        %v9103 = vsub.f32 %v9016, %v9069
        %v9104 = vsub.f32 %v9020, %v9072
        %v9105 = vsub.f32 %v9022, %v9072
        %v9106 = vsub.f32 %v9024, %v9075
        %v9107 = vsub.f32 %v9026, %v9075
        %v9108 = vmul.f32 %v9076, 1.442695
        %v9109 = vpow.pop %v9108
        %v9110 = vmul.f32 %v9077, 1.442695
        %v9111 = vpow.pop %v9110
        %v9112 = vmul.f32 %v9078, 1.442695
        %v9113 = vpow.pop %v9112
        %v9114 = vmul.f32 %v9079, 1.442695
        %v9115 = vpow.pop %v9114
        %v9116 = vmul.f32 %v9080, 1.442695
        %v9117 = vpow.pop %v9116
        %v9118 = vmul.f32 %v9081, 1.442695
        %v9119 = vpow.pop %v9118
        %v9120 = vmul.f32 %v9082, 1.442695
        %v9121 = vpow.pop %v9120
        %v9122 = vmul.f32 %v9083, 1.442695
        %v9123 = vpow.pop %v9122
        %v9124 = vmul.f32 %v9084, 1.442695
        %v9125 = vpow.pop %v9124
        %v9126 = vmul.f32 %v9085, 1.442695
        %v9127 = vpow.pop %v9126
        %v9128 = vmul.f32 %v9086, 1.442695
        %v9129 = vpow.pop %v9128
        %v9130 = vmul.f32 %v9087, 1.442695
        %v9131 = vpow.pop %v9130
        %v9132 = vmul.f32 %v9088, 1.442695
        %v9133 = vpow.pop %v9132
        %v9134 = vmul.f32 %v9089, 1.442695
        %v9135 = vpow.pop %v9134
        %v9136 = vmul.f32 %v9090, 1.442695
        %v9137 = vpow.pop %v9136
        %v9138 = vmul.f32 %v9091, 1.442695
        %v9139 = vpow.pop %v9138
        %v9140 = vmul.f32 %v9092, 1.442695
        %v9141 = vpow.pop %v9140
        %v9142 = vmul.f32 %v9093, 1.442695
        %v9143 = vpow.pop %v9142
        %v9144 = vmul.f32 %v9094, 1.442695
        %v9145 = vpow.pop %v9144
        %v9146 = vmul.f32 %v9095, 1.442695
        %v9147 = vpow.pop %v9146
        %v9148 = vmul.f32 %v9096, 1.442695
        %v9149 = vpow.pop %v9148
        %v9150 = vmul.f32 %v9097, 1.442695
        %v9151 = vpow.pop %v9150
        %v9152 = vmul.f32 %v9098, 1.442695
        %v9153 = vpow.pop %v9152
        %v9154 = vmul.f32 %v9099, 1.442695
        %v9155 = vpow.pop %v9154
        %v9156 = vmul.f32 %v9100, 1.442695
        %v9157 = vpow.pop %v9156
        %v9158 = vmul.f32 %v9101, 1.442695
        %v9159 = vpow.pop %v9158
        %v9160 = vmul.f32 %v9102, 1.442695
        %v9161 = vpow.pop %v9160
        %v9162 = vmul.f32 %v9103, 1.442695
        %v9163 = vpow.pop %v9162
        %v9164 = vmul.f32 %v9104, 1.442695
        %v9165 = vpow.pop %v9164
        %v9166 = vmul.f32 %v9105, 1.442695
        %v9167 = vpow.pop %v9166
        %v9168 = vmul.f32 %v9106, 1.442695
        %v9169 = vpow.pop %v9168
        %v9170 = vmul.f32 %v9107, 1.442695
        %v9171 = vpow.pop %v9170
        %v9172 = vadd.f32 %v9109, %v9111
        %9173 = vadd.xlane.f32.xlu0 %v9172
        %v9174 = vpop.xlane.xlu0 %9173
        %v9175 = vadd.f32 %v9113, %v9115
        %9176 = vadd.xlane.f32.xlu0 %v9175
        %v9177 = vpop.xlane.xlu0 %9176
        %v9178 = vadd.f32 %v9117, %v9119
        %9179 = vadd.xlane.f32.xlu0 %v9178
        %v9180 = vpop.xlane.xlu0 %9179
        %v9181 = vadd.f32 %v9121, %v9123
        %9182 = vadd.xlane.f32.xlu0 %v9181
        %v9183 = vpop.xlane.xlu0 %9182
        %v9184 = vadd.f32 %v9125, %v9127
        %9185 = vadd.xlane.f32.xlu0 %v9184
        %v9186 = vpop.xlane.xlu0 %9185
        %v9187 = vadd.f32 %v9129, %v9131
        %9188 = vadd.xlane.f32.xlu0 %v9187
        %v9189 = vpop.xlane.xlu0 %9188
        %v9190 = vadd.f32 %v9133, %v9135
        %9191 = vadd.xlane.f32.xlu0 %v9190
        %v9192 = vpop.xlane.xlu0 %9191
        %v9193 = vadd.f32 %v9137, %v9139
        %9194 = vadd.xlane.f32.xlu0 %v9193
        %v9195 = vpop.xlane.xlu0 %9194
        %v9196 = vadd.f32 %v9141, %v9143
        %9197 = vadd.xlane.f32.xlu0 %v9196
        %v9198 = vpop.xlane.xlu0 %9197
        %v9199 = vadd.f32 %v9145, %v9147
        %9200 = vadd.xlane.f32.xlu0 %v9199
        %v9201 = vpop.xlane.xlu0 %9200
        %v9202 = vadd.f32 %v9149, %v9151
        %9203 = vadd.xlane.f32.xlu0 %v9202
        %v9204 = vpop.xlane.xlu0 %9203
        %v9205 = vadd.f32 %v9153, %v9155
        %9206 = vadd.xlane.f32.xlu0 %v9205
        %v9207 = vpop.xlane.xlu0 %9206
        %v9208 = vadd.f32 %v9157, %v9159
        %9209 = vadd.xlane.f32.xlu0 %v9208
        %v9210 = vpop.xlane.xlu0 %9209
        %v9211 = vadd.f32 %v9161, %v9163
        %9212 = vadd.xlane.f32.xlu0 %v9211
        %v9213 = vpop.xlane.xlu0 %9212
        %v9214 = vadd.f32 %v9165, %v9167
        %9215 = vadd.xlane.f32.xlu0 %v9214
        %v9216 = vpop.xlane.xlu0 %9215
        %v9217 = vadd.f32 %v9169, %v9171
        %9218 = vadd.xlane.f32.xlu0 %v9217
        %v9219 = vpop.xlane.xlu0 %9218
        %v9220 = vrcp.pop %v9174
        %v9221 = vrcp.pop %v9177
        %v9222 = vrcp.pop %v9180
        %v9223 = vrcp.pop %v9183
        %v9224 = vrcp.pop %v9186
        %v9225 = vrcp.pop %v9189
        %v9226 = vrcp.pop %v9192
        %v9227 = vrcp.pop %v9195
        %v9228 = vrcp.pop %v9198
        %v9229 = vrcp.pop %v9201
        %v9230 = vrcp.pop %v9204
        %v9231 = vrcp.pop %v9207
        %v9232 = vrcp.pop %v9210
        %v9233 = vrcp.pop %v9213
        %v9234 = vrcp.pop %v9216
        %v9235 = vrcp.pop %v9219
        %v9236 = vmul.f32 %v9109, %v9220
        %v9237 = vmul.f32 %v9111, %v9220
        %v9238 = vmul.f32 %v9113, %v9221
        %v9239 = vmul.f32 %v9115, %v9221
        %v9240 = vmul.f32 %v9117, %v9222
        %v9241 = vmul.f32 %v9119, %v9222
        %v9242 = vmul.f32 %v9121, %v9223
        %v9243 = vmul.f32 %v9123, %v9223
        %v9244 = vmul.f32 %v9125, %v9224
        %v9245 = vmul.f32 %v9127, %v9224
        %v9246 = vmul.f32 %v9129, %v9225
        %v9247 = vmul.f32 %v9131, %v9225
        %v9248 = vmul.f32 %v9133, %v9226
        %v9249 = vmul.f32 %v9135, %v9226
        %v9250 = vmul.f32 %v9137, %v9227
        %v9251 = vmul.f32 %v9139, %v9227
        %v9252 = vmul.f32 %v9141, %v9228
        %v9253 = vmul.f32 %v9143, %v9228
        %v9254 = vmul.f32 %v9145, %v9229
        %v9255 = vmul.f32 %v9147, %v9229
        %v9256 = vmul.f32 %v9149, %v9230
        %v9257 = vmul.f32 %v9151, %v9230
        %v9258 = vmul.f32 %v9153, %v9231
        %v9259 = vmul.f32 %v9155, %v9231
        %v9260 = vmul.f32 %v9157, %v9232
        %v9261 = vmul.f32 %v9159, %v9232
        %v9262 = vmul.f32 %v9161, %v9233
        %v9263 = vmul.f32 %v9163, %v9233
        %v9264 = vmul.f32 %v9165, %v9234
        %v9265 = vmul.f32 %v9167, %v9234
        %v9266 = vmul.f32 %v9169, %v9235
        %v9267 = vmul.f32 %v9171, %v9235
        %v9268 = vpack.c.bf16 %v9238, %v9236
        %v9269 = vpack.c.bf16 %v9239, %v9237
        %v9270 = vpack.c.bf16 %v9242, %v9240
        %v9271 = vpack.c.bf16 %v9243, %v9241
        %v9272 = vpack.c.bf16 %v9246, %v9244
        %v9273 = vpack.c.bf16 %v9247, %v9245
        %v9274 = vpack.c.bf16 %v9250, %v9248
        %v9275 = vpack.c.bf16 %v9251, %v9249
        %v9276 = vpack.c.bf16 %v9254, %v9252
        %v9277 = vpack.c.bf16 %v9255, %v9253
        %v9278 = vpack.c.bf16 %v9258, %v9256
        %v9279 = vpack.c.bf16 %v9259, %v9257
        %v9280 = vpack.c.bf16 %v9262, %v9260
        %v9281 = vpack.c.bf16 %v9263, %v9261
        %v9282 = vpack.c.bf16 %v9266, %v9264
        %v9283 = vpack.c.bf16 %v9267, %v9265
        %9284 = vmatprep.subr.bf16.mxu0 0
        %9285 = vmatpush1.bf16.msra.mxu0 %v6593
        %9286 = vmatprep.subr.bf16.mxu0 0
        %9287 = vmatpush1.bf16.msra.mxu0 %v6595
        %9288 = vmatprep.subr.bf16.mxu0 0
        %9289 = vmatpush1.bf16.msra.mxu0 %v6597
        %9290 = vmatprep.subr.bf16.mxu0 0
        %9291 = vmatpush1.bf16.msra.mxu0 %v6599
        %9292 = vmatprep.subr.bf16.mxu0 0
        %9293 = vmatpush1.bf16.msra.mxu0 %v6601
        %9294 = vmatprep.subr.bf16.mxu0 0
        %9295 = vmatpush1.bf16.msra.mxu0 %v6603
        %9296 = vmatprep.subr.bf16.mxu0 0
        %9297 = vmatpush1.bf16.msra.mxu0 %v6605
        %9298 = vmatprep.subr.bf16.mxu0 0
        %9299 = vmatpush1.bf16.msra.mxu0 %v6607
        %9300 = vmatprep.subr.bf16.mxu0 0
        %9301 = vmatpush1.bf16.msra.mxu0 %v6609
        %9302 = vmatprep.subr.bf16.mxu0 0
        %9303 = vmatpush1.bf16.msra.mxu0 %v6611
        %9304 = vmatprep.subr.bf16.mxu0 0
        %9305 = vmatpush1.bf16.msra.mxu0 %v6613
        %9306 = vmatprep.subr.bf16.mxu0 0
        %9307 = vmatpush1.bf16.msra.mxu0 %v6615
        %9308 = vmatprep.subr.bf16.mxu0 0
        %9309 = vmatpush1.bf16.msra.mxu0 %v6617
        %9310 = vmatprep.subr.bf16.mxu0 0
        %9311 = vmatpush1.bf16.msra.mxu0 %v6619
        %9312 = vmatprep.subr.bf16.mxu0 0
        %9313 = vmatpush1.bf16.msra.mxu0 %v6621
        %9314 = vmatprep.subr.bf16.mxu0 0
        %9315 = vmatpush1.bf16.msra.mxu0 %v6623
        %9316 = vmatprep.mubr.bf16.mxu0 %v9269
        %9317 = vmatmul.mubr.bf16.gmra.mrb[0].mxu0 %v9268
        %v9318 = vpop.f32.mrb[0].mxu0
        %v9319 = vadd.f32 0.0, %v9318
        %v9320 = vpop.f32.mrb[0].mxu0
        %v9321 = vpop.f32.mrb[0].mxu0
        %v9322 = vadd.f32 0.0, %v9321
        %v9323 = vpop.f32.mrb[0].mxu0
        %9324 = vmatprep.mubr.bf16.mxu0 %v9271
        %9325 = vmatmul.mubr.bf16.gmra.mrb[0].mxu0 %v9270
        %v9326 = vpop.f32.mrb[0].mxu0
        %v9327 = vadd.f32 0.0, %v9326
        %v9328 = vpop.f32.mrb[0].mxu0
        %v9329 = vpop.f32.mrb[0].mxu0
        %v9330 = vadd.f32 0.0, %v9329
        %v9331 = vpop.f32.mrb[0].mxu0
        %9332 = vmatprep.mubr.bf16.mxu0 %v9273
        %9333 = vmatmul.mubr.bf16.gmra.mrb[0].mxu0 %v9272
        %v9334 = vpop.f32.mrb[0].mxu0
        %v9335 = vadd.f32 0.0, %v9334
        %v9336 = vpop.f32.mrb[0].mxu0
        %v9337 = vpop.f32.mrb[0].mxu0
        %v9338 = vadd.f32 0.0, %v9337
        %v9339 = vpop.f32.mrb[0].mxu0
        %9340 = vmatprep.mubr.bf16.mxu0 %v9275
        %9341 = vmatmul.mubr.bf16.gmra.mrb[0].mxu0 %v9274
        %v9342 = vpop.f32.mrb[0].mxu0
        %v9343 = vadd.f32 0.0, %v9342
        %v9344 = vpop.f32.mrb[0].mxu0
        %v9345 = vpop.f32.mrb[0].mxu0
        %v9346 = vadd.f32 0.0, %v9345
        %v9347 = vpop.f32.mrb[0].mxu0
        %9348 = vmatprep.mubr.bf16.mxu0 %v9277
        %9349 = vmatmul.mubr.bf16.gmra.mrb[0].mxu0 %v9276
        %v9350 = vpop.f32.mrb[0].mxu0
        %v9351 = vadd.f32 0.0, %v9350
        %v9352 = vpop.f32.mrb[0].mxu0
        %v9353 = vpop.f32.mrb[0].mxu0
        %v9354 = vadd.f32 0.0, %v9353
        %v9355 = vpop.f32.mrb[0].mxu0
        %9356 = vmatprep.mubr.bf16.mxu0 %v9279
        %9357 = vmatmul.mubr.bf16.gmra.mrb[0].mxu0 %v9278
        %v9358 = vpop.f32.mrb[0].mxu0
        %v9359 = vadd.f32 0.0, %v9358
        %v9360 = vpop.f32.mrb[0].mxu0
        %v9361 = vpop.f32.mrb[0].mxu0
        %v9362 = vadd.f32 0.0, %v9361
        %v9363 = vpop.f32.mrb[0].mxu0
        %9364 = vmatprep.mubr.bf16.mxu0 %v9281
        %9365 = vmatmul.mubr.bf16.gmra.mrb[0].mxu0 %v9280
        %v9366 = vpop.f32.mrb[0].mxu0
        %v9367 = vadd.f32 0.0, %v9366
        %v9368 = vpop.f32.mrb[0].mxu0
        %v9369 = vpop.f32.mrb[0].mxu0
        %v9370 = vadd.f32 0.0, %v9369
        %v9371 = vpop.f32.mrb[0].mxu0
        %9372 = vmatprep.mubr.bf16.mxu0 %v9283
        %9373 = vmatmul.mubr.bf16.gmra.mrb[0].mxu0 %v9282
        %v9374 = vpop.f32.mrb[0].mxu0
        %v9375 = vadd.f32 0.0, %v9374
        %v9376 = vpop.f32.mrb[0].mxu0
        %v9377 = vpop.f32.mrb[0].mxu0
        %v9378 = vadd.f32 0.0, %v9377
        %v9379 = vpop.f32.mrb[0].mxu0
        %9380 = vdwg.mxu0
        %v9381 = vpack.c.bf16 %v9322, %v9319
        %v9382 = vpack.c.bf16 %v9330, %v9327
        %v9383 = vpack.c.bf16 %v9338, %v9335
        %v9384 = vpack.c.bf16 %v9346, %v9343
        %v9385 = vpack.c.bf16 %v9354, %v9351
        %v9386 = vpack.c.bf16 %v9362, %v9359
        %v9387 = vpack.c.bf16 %v9370, %v9367
        %v9388 = vpack.c.bf16 %v9378, %v9375
        %v9390 = vsel %vm2065, %v9381, 0
        %v9393 = vsel %vm2065, %v9382, 0
        %v9396 = vsel %vm2065, %v9383, 0
        %v9399 = vsel %vm2065, %v9384, 0
        %v9402 = vsel %vm2065, %v9385, 0
        %v9405 = vsel %vm2065, %v9386, 0
        %v9408 = vsel %vm2065, %v9387, 0
        %v9411 = vsel %vm2065, %v9388, 0
        %9413 = vmatprep.subr.bf16.mxu0 0
        %9414 = vmatpush1.bf16.msra.mxu0 %v6757
        %9415 = vmatprep.subr.bf16.mxu0 0
        %9416 = vmatpush1.bf16.msra.mxu0 %v6758
        %9417 = vmatprep.subr.bf16.mxu0 0
        %9418 = vmatpush1.bf16.msra.mxu0 0
        %9419 = vmatprep.subr.bf16.mxu0 0
        %9420 = vmatpush1.bf16.msra.mxu0 0
        %9421 = vmatprep.subr.bf16.mxu0 0
        %9422 = vmatpush1.bf16.msra.mxu0 0
        %9423 = vmatprep.subr.bf16.mxu0 0
        %9424 = vmatpush1.bf16.msra.mxu0 0
        %9425 = vmatprep.subr.bf16.mxu0 0
        %9426 = vmatpush1.bf16.msra.mxu0 0
        %9427 = vmatprep.subr.bf16.mxu0 0
        %9428 = vmatpush1.bf16.msra.mxu0 0
        %9429 = vmatprep.subr.bf16.mxu0 0
        %9430 = vmatpush1.bf16.msra.mxu0 0
        %9431 = vmatprep.subr.bf16.mxu0 0
        %9432 = vmatpush1.bf16.msra.mxu0 0
        %9433 = vmatprep.subr.bf16.mxu0 0
        %9434 = vmatpush1.bf16.msra.mxu0 0
        %9435 = vmatprep.subr.bf16.mxu0 0
        %9436 = vmatpush1.bf16.msra.mxu0 0
        %9437 = vmatprep.subr.bf16.mxu0 0
        %9438 = vmatpush1.bf16.msra.mxu0 0
        %9439 = vmatprep.subr.bf16.mxu0 0
        %9440 = vmatpush1.bf16.msra.mxu0 0
        %9441 = vmatprep.subr.bf16.mxu0 0
        %9442 = vmatpush1.bf16.msra.mxu0 0
        %9443 = vmatprep.subr.bf16.mxu0 0
        %9444 = vmatpush1.bf16.msra.mxu0 0
        %9445 = vmatprep.mubr.bf16.mxu0 0
        %9446 = vmatmul.mubr.bf16.gmra.mrb[0].mxu0 %v9390
        %v9447 = vpop.f32.mrb[0].mxu0
        %v9448 = vadd.f32 0.0, %v9447
        %v9449 = vpop.f32.mrb[0].mxu0
        %v9450 = vpop.f32.mrb[0].mxu0
        %v9451 = vadd.f32 0.0, %v9450
        %v9452 = vpop.f32.mrb[0].mxu0
        %9453 = vmatprep.mubr.bf16.mxu0 0
        %9454 = vmatmul.mubr.bf16.gmra.mrb[0].mxu0 %v9393
        %v9455 = vpop.f32.mrb[0].mxu0
        %v9456 = vadd.f32 0.0, %v9455
        %v9457 = vpop.f32.mrb[0].mxu0
        %v9458 = vpop.f32.mrb[0].mxu0
        %v9459 = vadd.f32 0.0, %v9458
        %v9460 = vpop.f32.mrb[0].mxu0
        %9461 = vmatprep.mubr.bf16.mxu0 0
        %9462 = vmatmul.mubr.bf16.gmra.mrb[0].mxu0 %v9396
        %v9463 = vpop.f32.mrb[0].mxu0
        %v9464 = vadd.f32 0.0, %v9463
        %v9465 = vpop.f32.mrb[0].mxu0
        %v9466 = vpop.f32.mrb[0].mxu0
        %v9467 = vadd.f32 0.0, %v9466
        %v9468 = vpop.f32.mrb[0].mxu0
        %9469 = vmatprep.mubr.bf16.mxu0 0
        %9470 = vmatmul.mubr.bf16.gmra.mrb[0].mxu0 %v9399
        %v9471 = vpop.f32.mrb[0].mxu0
        %v9472 = vadd.f32 0.0, %v9471
        %v9473 = vpop.f32.mrb[0].mxu0
        %v9474 = vpop.f32.mrb[0].mxu0
        %v9475 = vadd.f32 0.0, %v9474
        %v9476 = vpop.f32.mrb[0].mxu0
        %9477 = vmatprep.mubr.bf16.mxu0 0
        %9478 = vmatmul.mubr.bf16.gmra.mrb[0].mxu0 %v9402
        %v9479 = vpop.f32.mrb[0].mxu0
        %v9480 = vadd.f32 0.0, %v9479
        %v9481 = vpop.f32.mrb[0].mxu0
        %v9482 = vpop.f32.mrb[0].mxu0
        %v9483 = vadd.f32 0.0, %v9482
        %v9484 = vpop.f32.mrb[0].mxu0
        %9485 = vmatprep.mubr.bf16.mxu0 0
        %9486 = vmatmul.mubr.bf16.gmra.mrb[0].mxu0 %v9405
        %v9487 = vpop.f32.mrb[0].mxu0
        %v9488 = vadd.f32 0.0, %v9487
        %v9489 = vpop.f32.mrb[0].mxu0
        %v9490 = vpop.f32.mrb[0].mxu0
        %v9491 = vadd.f32 0.0, %v9490
        %v9492 = vpop.f32.mrb[0].mxu0
        %9493 = vmatprep.mubr.bf16.mxu0 0
        %9494 = vmatmul.mubr.bf16.gmra.mrb[0].mxu0 %v9408
        %v9495 = vpop.f32.mrb[0].mxu0
        %v9496 = vadd.f32 0.0, %v9495
        %v9497 = vpop.f32.mrb[0].mxu0
        %v9498 = vpop.f32.mrb[0].mxu0
        %v9499 = vadd.f32 0.0, %v9498
        %v9500 = vpop.f32.mrb[0].mxu0
        %9501 = vmatprep.mubr.bf16.mxu0 0
        %9502 = vmatmul.mubr.bf16.gmra.mrb[0].mxu0 %v9411
        %v9503 = vpop.f32.mrb[0].mxu0
        %v9504 = vadd.f32 0.0, %v9503
        %v9505 = vpop.f32.mrb[0].mxu0
        %v9506 = vpop.f32.mrb[0].mxu0
        %v9507 = vadd.f32 0.0, %v9506
        %v9508 = vpop.f32.mrb[0].mxu0
        %9509 = vdwg.mxu0
        %v9510 = vadd.f32 %v8813, %v9448
        %v9511 = vadd.f32 %v8816, %v9451
        %v9512 = vadd.f32 %v8821, %v9456
        %v9513 = vadd.f32 %v8824, %v9459
        %v9514 = vadd.f32 %v8829, %v9464
        %v9515 = vadd.f32 %v8832, %v9467
        %v9516 = vadd.f32 %v8837, %v9472
        %v9517 = vadd.f32 %v8840, %v9475
        %v9518 = vadd.f32 %v8845, %v9480
        %v9519 = vadd.f32 %v8848, %v9483
        %v9520 = vadd.f32 %v8853, %v9488
        %v9521 = vadd.f32 %v8856, %v9491
        %v9522 = vadd.f32 %v8861, %v9496
        %v9523 = vadd.f32 %v8864, %v9499
        %v9524 = vadd.f32 %v8869, %v9504
        %v9525 = vadd.f32 %v8872, %v9507
        %9526 = vrot.lane.b32.xlu0 %v4617, 32
        %v9527 = vpop.permute.xlu0 %9526
        %9528 = vrot.lane.b32.xlu0 %v4618, 32
        %v9529 = vpop.permute.xlu0 %9528
        %9530 = vrot.lane.b32.xlu0 %v4619, 32
        %v9531 = vpop.permute.xlu0 %9530
        %9532 = vrot.lane.b32.xlu0 %v4620, 32
        %v9533 = vpop.permute.xlu0 %9532
        %9534 = vrot.lane.b32.xlu0 %v4621, 32
        %v9535 = vpop.permute.xlu0 %9534
        %9536 = vrot.lane.b32.xlu0 %v4622, 32
        %v9537 = vpop.permute.xlu0 %9536
        %9538 = vrot.lane.b32.xlu0 %v4623, 32
        %v9539 = vpop.permute.xlu0 %9538
        %9540 = vrot.lane.b32.xlu0 %v4624, 32
        %v9541 = vpop.permute.xlu0 %9540
        %v9543 = vsel %vm2065, %v9527, 0
        %v9546 = vsel %vm2065, %v9529, 0
        %v9549 = vsel %vm2065, %v9531, 0
        %v9552 = vsel %vm2065, %v9533, 0
        %v9555 = vsel %vm2065, %v9535, 0
        %v9558 = vsel %vm2065, %v9537, 0
        %v9561 = vsel %vm2065, %v9539, 0
        %v9564 = vsel %vm2065, %v9541, 0
        %9566 = vmatprep.subr.bf16.mxu0 %v4374
        %9567 = vmatpush1.bf16.msra.mxu0 %v4373
        %9568 = vmatprep.subr.bf16.mxu0 %v4376
        %9569 = vmatpush1.bf16.msra.mxu0 %v4375
        %9570 = vmatprep.subr.bf16.mxu0 0
        %9571 = vmatpush1.bf16.msra.mxu0 0
        %9572 = vmatprep.subr.bf16.mxu0 0
        %9573 = vmatpush1.bf16.msra.mxu0 0
        %9574 = vmatprep.subr.bf16.mxu0 0
        %9575 = vmatpush1.bf16.msra.mxu0 0
        %9576 = vmatprep.subr.bf16.mxu0 0
        %9577 = vmatpush1.bf16.msra.mxu0 0
        %9578 = vmatprep.subr.bf16.mxu0 0
        %9579 = vmatpush1.bf16.msra.mxu0 0
        %9580 = vmatprep.subr.bf16.mxu0 0
        %9581 = vmatpush1.bf16.msra.mxu0 0
        %9582 = vmatprep.subr.bf16.mxu0 0
        %9583 = vmatpush1.bf16.msra.mxu0 0
        %9584 = vmatprep.subr.bf16.mxu0 0
        %9585 = vmatpush1.bf16.msra.mxu0 0
        %9586 = vmatprep.subr.bf16.mxu0 0
        %9587 = vmatpush1.bf16.msra.mxu0 0
        %9588 = vmatprep.subr.bf16.mxu0 0
        %9589 = vmatpush1.bf16.msra.mxu0 0
        %9590 = vmatprep.subr.bf16.mxu0 0
        %9591 = vmatpush1.bf16.msra.mxu0 0
        %9592 = vmatprep.subr.bf16.mxu0 0
        %9593 = vmatpush1.bf16.msra.mxu0 0
        %9594 = vmatprep.subr.bf16.mxu0 0
        %9595 = vmatpush1.bf16.msra.mxu0 0
        %9596 = vmatprep.subr.bf16.mxu0 0
        %9597 = vmatpush1.bf16.msra.mxu0 0
        %9598 = vmatprep.mubr.bf16.mxu0 0
        %9599 = vmatmul.mubr.bf16.gmra.mrb[0].mxu0 %v9543
        %v9600 = vpop.f32.mrb[0].mxu0
        %v9601 = vadd.f32 0.0, %v9600
        %v9602 = vpop.f32.mrb[0].mxu0
        %v9603 = vadd.f32 0.0, %v9602
        %v9604 = vpop.f32.mrb[0].mxu0
        %v9605 = vadd.f32 0.0, %v9604
        %v9606 = vpop.f32.mrb[0].mxu0
        %v9607 = vadd.f32 0.0, %v9606
        %9608 = vmatprep.mubr.bf16.mxu0 0
        %9609 = vmatmul.mubr.bf16.gmra.mrb[0].mxu0 %v9546
        %v9610 = vpop.f32.mrb[0].mxu0
        %v9611 = vadd.f32 0.0, %v9610
        %v9612 = vpop.f32.mrb[0].mxu0
        %v9613 = vadd.f32 0.0, %v9612
        %v9614 = vpop.f32.mrb[0].mxu0
        %v9615 = vadd.f32 0.0, %v9614
        %v9616 = vpop.f32.mrb[0].mxu0
        %v9617 = vadd.f32 0.0, %v9616
        %9618 = vmatprep.mubr.bf16.mxu0 0
        %9619 = vmatmul.mubr.bf16.gmra.mrb[0].mxu0 %v9549
        %v9620 = vpop.f32.mrb[0].mxu0
        %v9621 = vadd.f32 0.0, %v9620
        %v9622 = vpop.f32.mrb[0].mxu0
        %v9623 = vadd.f32 0.0, %v9622
        %v9624 = vpop.f32.mrb[0].mxu0
        %v9625 = vadd.f32 0.0, %v9624
        %v9626 = vpop.f32.mrb[0].mxu0
        %v9627 = vadd.f32 0.0, %v9626
        %9628 = vmatprep.mubr.bf16.mxu0 0
        %9629 = vmatmul.mubr.bf16.gmra.mrb[0].mxu0 %v9552
        %v9630 = vpop.f32.mrb[0].mxu0
        %v9631 = vadd.f32 0.0, %v9630
        %v9632 = vpop.f32.mrb[0].mxu0
        %v9633 = vadd.f32 0.0, %v9632
        %v9634 = vpop.f32.mrb[0].mxu0
        %v9635 = vadd.f32 0.0, %v9634
        %v9636 = vpop.f32.mrb[0].mxu0
        %v9637 = vadd.f32 0.0, %v9636
        %9638 = vmatprep.mubr.bf16.mxu0 0
        %9639 = vmatmul.mubr.bf16.gmra.mrb[0].mxu0 %v9555
        %v9640 = vpop.f32.mrb[0].mxu0
        %v9641 = vadd.f32 0.0, %v9640
        %v9642 = vpop.f32.mrb[0].mxu0
        %v9643 = vadd.f32 0.0, %v9642
        %v9644 = vpop.f32.mrb[0].mxu0
        %v9645 = vadd.f32 0.0, %v9644
        %v9646 = vpop.f32.mrb[0].mxu0
        %v9647 = vadd.f32 0.0, %v9646
        %9648 = vmatprep.mubr.bf16.mxu0 0
        %9649 = vmatmul.mubr.bf16.gmra.mrb[0].mxu0 %v9558
        %v9650 = vpop.f32.mrb[0].mxu0
        %v9651 = vadd.f32 0.0, %v9650
        %v9652 = vpop.f32.mrb[0].mxu0
        %v9653 = vadd.f32 0.0, %v9652
        %v9654 = vpop.f32.mrb[0].mxu0
        %v9655 = vadd.f32 0.0, %v9654
        %v9656 = vpop.f32.mrb[0].mxu0
        %v9657 = vadd.f32 0.0, %v9656
        %9658 = vmatprep.mubr.bf16.mxu0 0
        %9659 = vmatmul.mubr.bf16.gmra.mrb[0].mxu0 %v9561
        %v9660 = vpop.f32.mrb[0].mxu0
        %v9661 = vadd.f32 0.0, %v9660
        %v9662 = vpop.f32.mrb[0].mxu0
        %v9663 = vadd.f32 0.0, %v9662
        %v9664 = vpop.f32.mrb[0].mxu0
        %v9665 = vadd.f32 0.0, %v9664
        %v9666 = vpop.f32.mrb[0].mxu0
        %v9667 = vadd.f32 0.0, %v9666
        %9668 = vmatprep.mubr.bf16.mxu0 0
        %9669 = vmatmul.mubr.bf16.gmra.mrb[0].mxu0 %v9564
        %v9670 = vpop.f32.mrb[0].mxu0
        %v9671 = vadd.f32 0.0, %v9670
        %v9672 = vpop.f32.mrb[0].mxu0
        %v9673 = vadd.f32 0.0, %v9672
        %v9674 = vpop.f32.mrb[0].mxu0
        %v9675 = vadd.f32 0.0, %v9674
        %v9676 = vpop.f32.mrb[0].mxu0
        %v9677 = vadd.f32 0.0, %v9676
        %9678 = vdwg.mxu0
        %v9679 = vmax.f32 %v9601, %v9603
        %9680 = vmax.xlane.f32.xlu0 %v9679
        %v9681 = vpop.xlane.xlu0 %9680
        %v9682 = vmax.f32 %v9605, %v9607
        %9683 = vmax.xlane.f32.xlu0 %v9682
        %v9684 = vpop.xlane.xlu0 %9683
        %v9685 = vmax.f32 %v9611, %v9613
        %9686 = vmax.xlane.f32.xlu0 %v9685
        %v9687 = vpop.xlane.xlu0 %9686
        %v9688 = vmax.f32 %v9615, %v9617
        %9689 = vmax.xlane.f32.xlu0 %v9688
        %v9690 = vpop.xlane.xlu0 %9689
        %v9691 = vmax.f32 %v9621, %v9623
        %9692 = vmax.xlane.f32.xlu0 %v9691
        %v9693 = vpop.xlane.xlu0 %9692
        %v9694 = vmax.f32 %v9625, %v9627
        %9695 = vmax.xlane.f32.xlu0 %v9694
        %v9696 = vpop.xlane.xlu0 %9695
        %v9697 = vmax.f32 %v9631, %v9633
        %9698 = vmax.xlane.f32.xlu0 %v9697
        %v9699 = vpop.xlane.xlu0 %9698
        %v9700 = vmax.f32 %v9635, %v9637
        %9701 = vmax.xlane.f32.xlu0 %v9700
        %v9702 = vpop.xlane.xlu0 %9701
        %v9703 = vmax.f32 %v9641, %v9643
        %9704 = vmax.xlane.f32.xlu0 %v9703
        %v9705 = vpop.xlane.xlu0 %9704
        %v9706 = vmax.f32 %v9645, %v9647
        %9707 = vmax.xlane.f32.xlu0 %v9706
        %v9708 = vpop.xlane.xlu0 %9707
        %v9709 = vmax.f32 %v9651, %v9653
        %9710 = vmax.xlane.f32.xlu0 %v9709
        %v9711 = vpop.xlane.xlu0 %9710
        %v9712 = vmax.f32 %v9655, %v9657
        %9713 = vmax.xlane.f32.xlu0 %v9712
        %v9714 = vpop.xlane.xlu0 %9713
        %v9715 = vmax.f32 %v9661, %v9663
        %9716 = vmax.xlane.f32.xlu0 %v9715
        %v9717 = vpop.xlane.xlu0 %9716
        %v9718 = vmax.f32 %v9665, %v9667
        %9719 = vmax.xlane.f32.xlu0 %v9718
        %v9720 = vpop.xlane.xlu0 %9719
        %v9721 = vmax.f32 %v9671, %v9673
        %9722 = vmax.xlane.f32.xlu0 %v9721
        %v9723 = vpop.xlane.xlu0 %9722
        %v9724 = vmax.f32 %v9675, %v9677
        %9725 = vmax.xlane.f32.xlu0 %v9724
        %v9726 = vpop.xlane.xlu0 %9725
        %v9727 = vsub.f32 %v9601, %v9681
        %v9728 = vsub.f32 %v9603, %v9681
        %v9729 = vsub.f32 %v9605, %v9684
        %v9730 = vsub.f32 %v9607, %v9684
        %v9731 = vsub.f32 %v9611, %v9687
        %v9732 = vsub.f32 %v9613, %v9687
        %v9733 = vsub.f32 %v9615, %v9690
        %v9734 = vsub.f32 %v9617, %v9690
        %v9735 = vsub.f32 %v9621, %v9693
        %v9736 = vsub.f32 %v9623, %v9693
        %v9737 = vsub.f32 %v9625, %v9696
        %v9738 = vsub.f32 %v9627, %v9696
        %v9739 = vsub.f32 %v9631, %v9699
        %v9740 = vsub.f32 %v9633, %v9699
        %v9741 = vsub.f32 %v9635, %v9702
        %v9742 = vsub.f32 %v9637, %v9702
        %v9743 = vsub.f32 %v9641, %v9705
        %v9744 = vsub.f32 %v9643, %v9705
        %v9745 = vsub.f32 %v9645, %v9708
        %v9746 = vsub.f32 %v9647, %v9708
        %v9747 = vsub.f32 %v9651, %v9711
        %v9748 = vsub.f32 %v9653, %v9711
        %v9749 = vsub.f32 %v9655, %v9714
        %v9750 = vsub.f32 %v9657, %v9714
        %v9751 = vsub.f32 %v9661, %v9717
        %v9752 = vsub.f32 %v9663, %v9717
        %v9753 = vsub.f32 %v9665, %v9720
        %v9754 = vsub.f32 %v9667, %v9720
        %v9755 = vsub.f32 %v9671, %v9723
        %v9756 = vsub.f32 %v9673, %v9723
        %v9757 = vsub.f32 %v9675, %v9726
        %v9758 = vsub.f32 %v9677, %v9726
        %v9759 = vmul.f32 %v9727, 1.442695
        %v9760 = vpow.pop %v9759
        %v9761 = vmul.f32 %v9728, 1.442695
        %v9762 = vpow.pop %v9761
        %v9763 = vmul.f32 %v9729, 1.442695
        %v9764 = vpow.pop %v9763
        %v9765 = vmul.f32 %v9730, 1.442695
        %v9766 = vpow.pop %v9765
        %v9767 = vmul.f32 %v9731, 1.442695
        %v9768 = vpow.pop %v9767
        %v9769 = vmul.f32 %v9732, 1.442695
        %v9770 = vpow.pop %v9769
        %v9771 = vmul.f32 %v9733, 1.442695
        %v9772 = vpow.pop %v9771
        %v9773 = vmul.f32 %v9734, 1.442695
        %v9774 = vpow.pop %v9773
        %v9775 = vmul.f32 %v9735, 1.442695
        %v9776 = vpow.pop %v9775
        %v9777 = vmul.f32 %v9736, 1.442695
        %v9778 = vpow.pop %v9777
        %v9779 = vmul.f32 %v9737, 1.442695
        %v9780 = vpow.pop %v9779
        %v9781 = vmul.f32 %v9738, 1.442695
        %v9782 = vpow.pop %v9781
        %v9783 = vmul.f32 %v9739, 1.442695
        %v9784 = vpow.pop %v9783
        %v9785 = vmul.f32 %v9740, 1.442695
        %v9786 = vpow.pop %v9785
        %v9787 = vmul.f32 %v9741, 1.442695
        %v9788 = vpow.pop %v9787
        %v9789 = vmul.f32 %v9742, 1.442695
        %v9790 = vpow.pop %v9789
        %v9791 = vmul.f32 %v9743, 1.442695
        %v9792 = vpow.pop %v9791
        %v9793 = vmul.f32 %v9744, 1.442695
        %v9794 = vpow.pop %v9793
        %v9795 = vmul.f32 %v9745, 1.442695
        %v9796 = vpow.pop %v9795
        %v9797 = vmul.f32 %v9746, 1.442695
        %v9798 = vpow.pop %v9797
        %v9799 = vmul.f32 %v9747, 1.442695
        %v9800 = vpow.pop %v9799
        %v9801 = vmul.f32 %v9748, 1.442695
        %v9802 = vpow.pop %v9801
        %v9803 = vmul.f32 %v9749, 1.442695
        %v9804 = vpow.pop %v9803
        %v9805 = vmul.f32 %v9750, 1.442695
        %v9806 = vpow.pop %v9805
        %v9807 = vmul.f32 %v9751, 1.442695
        %v9808 = vpow.pop %v9807
        %v9809 = vmul.f32 %v9752, 1.442695
        %v9810 = vpow.pop %v9809
        %v9811 = vmul.f32 %v9753, 1.442695
        %v9812 = vpow.pop %v9811
        %v9813 = vmul.f32 %v9754, 1.442695
        %v9814 = vpow.pop %v9813
        %v9815 = vmul.f32 %v9755, 1.442695
        %v9816 = vpow.pop %v9815
        %v9817 = vmul.f32 %v9756, 1.442695
        %v9818 = vpow.pop %v9817
        %v9819 = vmul.f32 %v9757, 1.442695
        %v9820 = vpow.pop %v9819
        %v9821 = vmul.f32 %v9758, 1.442695
        %v9822 = vpow.pop %v9821
        %v9823 = vadd.f32 %v9760, %v9762
        %9824 = vadd.xlane.f32.xlu0 %v9823
        %v9825 = vpop.xlane.xlu0 %9824
        %v9826 = vadd.f32 %v9764, %v9766
        %9827 = vadd.xlane.f32.xlu0 %v9826
        %v9828 = vpop.xlane.xlu0 %9827
        %v9829 = vadd.f32 %v9768, %v9770
        %9830 = vadd.xlane.f32.xlu0 %v9829
        %v9831 = vpop.xlane.xlu0 %9830
        %v9832 = vadd.f32 %v9772, %v9774
        %9833 = vadd.xlane.f32.xlu0 %v9832
        %v9834 = vpop.xlane.xlu0 %9833
        %v9835 = vadd.f32 %v9776, %v9778
        %9836 = vadd.xlane.f32.xlu0 %v9835
        %v9837 = vpop.xlane.xlu0 %9836
        %v9838 = vadd.f32 %v9780, %v9782
        %9839 = vadd.xlane.f32.xlu0 %v9838
        %v9840 = vpop.xlane.xlu0 %9839
        %v9841 = vadd.f32 %v9784, %v9786
        %9842 = vadd.xlane.f32.xlu0 %v9841
        %v9843 = vpop.xlane.xlu0 %9842
        %v9844 = vadd.f32 %v9788, %v9790
        %9845 = vadd.xlane.f32.xlu0 %v9844
        %v9846 = vpop.xlane.xlu0 %9845
        %v9847 = vadd.f32 %v9792, %v9794
        %9848 = vadd.xlane.f32.xlu0 %v9847
        %v9849 = vpop.xlane.xlu0 %9848
        %v9850 = vadd.f32 %v9796, %v9798
        %9851 = vadd.xlane.f32.xlu0 %v9850
        %v9852 = vpop.xlane.xlu0 %9851
        %v9853 = vadd.f32 %v9800, %v9802
        %9854 = vadd.xlane.f32.xlu0 %v9853
        %v9855 = vpop.xlane.xlu0 %9854
        %v9856 = vadd.f32 %v9804, %v9806
        %9857 = vadd.xlane.f32.xlu0 %v9856
        %v9858 = vpop.xlane.xlu0 %9857
        %v9859 = vadd.f32 %v9808, %v9810
        %9860 = vadd.xlane.f32.xlu0 %v9859
        %v9861 = vpop.xlane.xlu0 %9860
        %v9862 = vadd.f32 %v9812, %v9814
        %9863 = vadd.xlane.f32.xlu0 %v9862
        %v9864 = vpop.xlane.xlu0 %9863
        %v9865 = vadd.f32 %v9816, %v9818
        %9866 = vadd.xlane.f32.xlu0 %v9865
        %v9867 = vpop.xlane.xlu0 %9866
        %v9868 = vadd.f32 %v9820, %v9822
        %9869 = vadd.xlane.f32.xlu0 %v9868
        %v9870 = vpop.xlane.xlu0 %9869
        %v9871 = vrcp.pop %v9825
        %v9872 = vrcp.pop %v9828
        %v9873 = vrcp.pop %v9831
        %v9874 = vrcp.pop %v9834
        %v9875 = vrcp.pop %v9837
        %v9876 = vrcp.pop %v9840
        %v9877 = vrcp.pop %v9843
        %v9878 = vrcp.pop %v9846
        %v9879 = vrcp.pop %v9849
        %v9880 = vrcp.pop %v9852
        %v9881 = vrcp.pop %v9855
        %v9882 = vrcp.pop %v9858
        %v9883 = vrcp.pop %v9861
        %v9884 = vrcp.pop %v9864
        %v9885 = vrcp.pop %v9867
        %v9886 = vrcp.pop %v9870
        %v9887 = vmul.f32 %v9760, %v9871
        %v9888 = vmul.f32 %v9762, %v9871
        %v9889 = vmul.f32 %v9764, %v9872
        %v9890 = vmul.f32 %v9766, %v9872
        %v9891 = vmul.f32 %v9768, %v9873
        %v9892 = vmul.f32 %v9770, %v9873
        %v9893 = vmul.f32 %v9772, %v9874
        %v9894 = vmul.f32 %v9774, %v9874
        %v9895 = vmul.f32 %v9776, %v9875
        %v9896 = vmul.f32 %v9778, %v9875
        %v9897 = vmul.f32 %v9780, %v9876
        %v9898 = vmul.f32 %v9782, %v9876
        %v9899 = vmul.f32 %v9784, %v9877
        %v9900 = vmul.f32 %v9786, %v9877
        %v9901 = vmul.f32 %v9788, %v9878
        %v9902 = vmul.f32 %v9790, %v9878
        %v9903 = vmul.f32 %v9792, %v9879
        %v9904 = vmul.f32 %v9794, %v9879
        %v9905 = vmul.f32 %v9796, %v9880
        %v9906 = vmul.f32 %v9798, %v9880
        %v9907 = vmul.f32 %v9800, %v9881
        %v9908 = vmul.f32 %v9802, %v9881
        %v9909 = vmul.f32 %v9804, %v9882
        %v9910 = vmul.f32 %v9806, %v9882
        %v9911 = vmul.f32 %v9808, %v9883
        %v9912 = vmul.f32 %v9810, %v9883
        %v9913 = vmul.f32 %v9812, %v9884
        %v9914 = vmul.f32 %v9814, %v9884
        %v9915 = vmul.f32 %v9816, %v9885
        %v9916 = vmul.f32 %v9818, %v9885
        %v9917 = vmul.f32 %v9820, %v9886
        %v9918 = vmul.f32 %v9822, %v9886
        %v9919 = vpack.c.bf16 %v9889, %v9887
        %v9920 = vpack.c.bf16 %v9890, %v9888
        %v9921 = vpack.c.bf16 %v9893, %v9891
        %v9922 = vpack.c.bf16 %v9894, %v9892
        %v9923 = vpack.c.bf16 %v9897, %v9895
        %v9924 = vpack.c.bf16 %v9898, %v9896
        %v9925 = vpack.c.bf16 %v9901, %v9899
        %v9926 = vpack.c.bf16 %v9902, %v9900
        %v9927 = vpack.c.bf16 %v9905, %v9903
        %v9928 = vpack.c.bf16 %v9906, %v9904
        %v9929 = vpack.c.bf16 %v9909, %v9907
        %v9930 = vpack.c.bf16 %v9910, %v9908
        %v9931 = vpack.c.bf16 %v9913, %v9911
        %v9932 = vpack.c.bf16 %v9914, %v9912
        %v9933 = vpack.c.bf16 %v9917, %v9915
        %v9934 = vpack.c.bf16 %v9918, %v9916
        %9935 = vmatprep.subr.bf16.mxu0 0
        %9936 = vmatpush1.bf16.msra.mxu0 %v7308
        %9937 = vmatprep.subr.bf16.mxu0 0
        %9938 = vmatpush1.bf16.msra.mxu0 %v7310
        %9939 = vmatprep.subr.bf16.mxu0 0
        %9940 = vmatpush1.bf16.msra.mxu0 %v7312
        %9941 = vmatprep.subr.bf16.mxu0 0
        %9942 = vmatpush1.bf16.msra.mxu0 %v7314
        %9943 = vmatprep.subr.bf16.mxu0 0
        %9944 = vmatpush1.bf16.msra.mxu0 %v7316
        %9945 = vmatprep.subr.bf16.mxu0 0
        %9946 = vmatpush1.bf16.msra.mxu0 %v7318
        %9947 = vmatprep.subr.bf16.mxu0 0
        %9948 = vmatpush1.bf16.msra.mxu0 %v7320
        %9949 = vmatprep.subr.bf16.mxu0 0
        %9950 = vmatpush1.bf16.msra.mxu0 %v7322
        %9951 = vmatprep.subr.bf16.mxu0 0
        %9952 = vmatpush1.bf16.msra.mxu0 %v7324
        %9953 = vmatprep.subr.bf16.mxu0 0
        %9954 = vmatpush1.bf16.msra.mxu0 %v7326
        %9955 = vmatprep.subr.bf16.mxu0 0
        %9956 = vmatpush1.bf16.msra.mxu0 %v7328
        %9957 = vmatprep.subr.bf16.mxu0 0
        %9958 = vmatpush1.bf16.msra.mxu0 %v7330
        %9959 = vmatprep.subr.bf16.mxu0 0
        %9960 = vmatpush1.bf16.msra.mxu0 %v7332
        %9961 = vmatprep.subr.bf16.mxu0 0
        %9962 = vmatpush1.bf16.msra.mxu0 %v7334
        %9963 = vmatprep.subr.bf16.mxu0 0
        %9964 = vmatpush1.bf16.msra.mxu0 %v7336
        %9965 = vmatprep.subr.bf16.mxu0 0
        %9966 = vmatpush1.bf16.msra.mxu0 %v7338
        %9967 = vmatprep.mubr.bf16.mxu0 %v9920
        %9968 = vmatmul.mubr.bf16.gmra.mrb[0].mxu0 %v9919
        %v9969 = vpop.f32.mrb[0].mxu0
        %v9970 = vadd.f32 0.0, %v9969
        %v9971 = vpop.f32.mrb[0].mxu0
        %v9972 = vpop.f32.mrb[0].mxu0
        %v9973 = vadd.f32 0.0, %v9972
        %v9974 = vpop.f32.mrb[0].mxu0
        %9975 = vmatprep.mubr.bf16.mxu0 %v9922
        %9976 = vmatmul.mubr.bf16.gmra.mrb[0].mxu0 %v9921
        %v9977 = vpop.f32.mrb[0].mxu0
        %v9978 = vadd.f32 0.0, %v9977
        %v9979 = vpop.f32.mrb[0].mxu0
        %v9980 = vpop.f32.mrb[0].mxu0
        %v9981 = vadd.f32 0.0, %v9980
        %v9982 = vpop.f32.mrb[0].mxu0
        %9983 = vmatprep.mubr.bf16.mxu0 %v9924
        %9984 = vmatmul.mubr.bf16.gmra.mrb[0].mxu0 %v9923
        %v9985 = vpop.f32.mrb[0].mxu0
        %v9986 = vadd.f32 0.0, %v9985
        %v9987 = vpop.f32.mrb[0].mxu0
        %v9988 = vpop.f32.mrb[0].mxu0
        %v9989 = vadd.f32 0.0, %v9988
        %v9990 = vpop.f32.mrb[0].mxu0
        %9991 = vmatprep.mubr.bf16.mxu0 %v9926
        %9992 = vmatmul.mubr.bf16.gmra.mrb[0].mxu0 %v9925
        %v9993 = vpop.f32.mrb[0].mxu0
        %v9994 = vadd.f32 0.0, %v9993
        %v9995 = vpop.f32.mrb[0].mxu0
        %v9996 = vpop.f32.mrb[0].mxu0
        %v9997 = vadd.f32 0.0, %v9996
        %v9998 = vpop.f32.mrb[0].mxu0
        %9999 = vmatprep.mubr.bf16.mxu0 %v9928
        %10000 = vmatmul.mubr.bf16.gmra.mrb[0].mxu0 %v9927
        %v10001 = vpop.f32.mrb[0].mxu0
        %v10002 = vadd.f32 0.0, %v10001
        %v10003 = vpop.f32.mrb[0].mxu0
        %v10004 = vpop.f32.mrb[0].mxu0
        %v10005 = vadd.f32 0.0, %v10004
        %v10006 = vpop.f32.mrb[0].mxu0
        %10007 = vmatprep.mubr.bf16.mxu0 %v9930
        %10008 = vmatmul.mubr.bf16.gmra.mrb[0].mxu0 %v9929
        %v10009 = vpop.f32.mrb[0].mxu0
        %v10010 = vadd.f32 0.0, %v10009
        %v10011 = vpop.f32.mrb[0].mxu0
        %v10012 = vpop.f32.mrb[0].mxu0
        %v10013 = vadd.f32 0.0, %v10012
        %v10014 = vpop.f32.mrb[0].mxu0
        %10015 = vmatprep.mubr.bf16.mxu0 %v9932
        %10016 = vmatmul.mubr.bf16.gmra.mrb[0].mxu0 %v9931
        %v10017 = vpop.f32.mrb[0].mxu0
        %v10018 = vadd.f32 0.0, %v10017
        %v10019 = vpop.f32.mrb[0].mxu0
        %v10020 = vpop.f32.mrb[0].mxu0
        %v10021 = vadd.f32 0.0, %v10020
        %v10022 = vpop.f32.mrb[0].mxu0
        %10023 = vmatprep.mubr.bf16.mxu0 %v9934
        %10024 = vmatmul.mubr.bf16.gmra.mrb[0].mxu0 %v9933
        %v10025 = vpop.f32.mrb[0].mxu0
        %v10026 = vadd.f32 0.0, %v10025
        %v10027 = vpop.f32.mrb[0].mxu0
        %v10028 = vpop.f32.mrb[0].mxu0
        %v10029 = vadd.f32 0.0, %v10028
        %v10030 = vpop.f32.mrb[0].mxu0
        %10031 = vdwg.mxu0
        %v10032 = vpack.c.bf16 %v9973, %v9970
        %v10033 = vpack.c.bf16 %v9981, %v9978
        %v10034 = vpack.c.bf16 %v9989, %v9986
        %v10035 = vpack.c.bf16 %v9997, %v9994
        %v10036 = vpack.c.bf16 %v10005, %v10002
        %v10037 = vpack.c.bf16 %v10013, %v10010
        %v10038 = vpack.c.bf16 %v10021, %v10018
        %v10039 = vpack.c.bf16 %v10029, %v10026
        %v10041 = vsel %vm2065, %v10032, 0
        %v10044 = vsel %vm2065, %v10033, 0
        %v10047 = vsel %vm2065, %v10034, 0
        %v10050 = vsel %vm2065, %v10035, 0
        %v10053 = vsel %vm2065, %v10036, 0
        %v10056 = vsel %vm2065, %v10037, 0
        %v10059 = vsel %vm2065, %v10038, 0
        %v10062 = vsel %vm2065, %v10039, 0
        %10064 = vmatprep.subr.bf16.mxu0 0
        %10065 = vmatpush1.bf16.msra.mxu0 %v7472
        %10066 = vmatprep.subr.bf16.mxu0 0
        %10067 = vmatpush1.bf16.msra.mxu0 %v7473
        %10068 = vmatprep.subr.bf16.mxu0 0
        %10069 = vmatpush1.bf16.msra.mxu0 0
        %10070 = vmatprep.subr.bf16.mxu0 0
        %10071 = vmatpush1.bf16.msra.mxu0 0
        %10072 = vmatprep.subr.bf16.mxu0 0
        %10073 = vmatpush1.bf16.msra.mxu0 0
        %10074 = vmatprep.subr.bf16.mxu0 0
        %10075 = vmatpush1.bf16.msra.mxu0 0
        %10076 = vmatprep.subr.bf16.mxu0 0
        %10077 = vmatpush1.bf16.msra.mxu0 0
        %10078 = vmatprep.subr.bf16.mxu0 0
        %10079 = vmatpush1.bf16.msra.mxu0 0
        %10080 = vmatprep.subr.bf16.mxu0 0
        %10081 = vmatpush1.bf16.msra.mxu0 0
        %10082 = vmatprep.subr.bf16.mxu0 0
        %10083 = vmatpush1.bf16.msra.mxu0 0
        %10084 = vmatprep.subr.bf16.mxu0 0
        %10085 = vmatpush1.bf16.msra.mxu0 0
        %10086 = vmatprep.subr.bf16.mxu0 0
        %10087 = vmatpush1.bf16.msra.mxu0 0
        %10088 = vmatprep.subr.bf16.mxu0 0
        %10089 = vmatpush1.bf16.msra.mxu0 0
        %10090 = vmatprep.subr.bf16.mxu0 0
        %10091 = vmatpush1.bf16.msra.mxu0 0
        %10092 = vmatprep.subr.bf16.mxu0 0
        %10093 = vmatpush1.bf16.msra.mxu0 0
        %10094 = vmatprep.subr.bf16.mxu0 0
        %10095 = vmatpush1.bf16.msra.mxu0 0
        %10096 = vmatprep.mubr.bf16.mxu0 0
        %10097 = vmatmul.mubr.bf16.gmra.mrb[0].mxu0 %v10041
        %v10098 = vpop.f32.mrb[0].mxu0
        %v10099 = vadd.f32 0.0, %v10098
        %v10100 = vpop.f32.mrb[0].mxu0
        %v10101 = vpop.f32.mrb[0].mxu0
        %v10102 = vadd.f32 0.0, %v10101
        %v10103 = vpop.f32.mrb[0].mxu0
        %10104 = vmatprep.mubr.bf16.mxu0 0
        %10105 = vmatmul.mubr.bf16.gmra.mrb[0].mxu0 %v10044
        %v10106 = vpop.f32.mrb[0].mxu0
        %v10107 = vadd.f32 0.0, %v10106
        %v10108 = vpop.f32.mrb[0].mxu0
        %v10109 = vpop.f32.mrb[0].mxu0
        %v10110 = vadd.f32 0.0, %v10109
        %v10111 = vpop.f32.mrb[0].mxu0
        %10112 = vmatprep.mubr.bf16.mxu0 0
        %10113 = vmatmul.mubr.bf16.gmra.mrb[0].mxu0 %v10047
        %v10114 = vpop.f32.mrb[0].mxu0
        %v10115 = vadd.f32 0.0, %v10114
        %v10116 = vpop.f32.mrb[0].mxu0
        %v10117 = vpop.f32.mrb[0].mxu0
        %v10118 = vadd.f32 0.0, %v10117
        %v10119 = vpop.f32.mrb[0].mxu0
        %10120 = vmatprep.mubr.bf16.mxu0 0
        %10121 = vmatmul.mubr.bf16.gmra.mrb[0].mxu0 %v10050
        %v10122 = vpop.f32.mrb[0].mxu0
        %v10123 = vadd.f32 0.0, %v10122
        %v10124 = vpop.f32.mrb[0].mxu0
        %v10125 = vpop.f32.mrb[0].mxu0
        %v10126 = vadd.f32 0.0, %v10125
        %v10127 = vpop.f32.mrb[0].mxu0
        %10128 = vmatprep.mubr.bf16.mxu0 0
        %10129 = vmatmul.mubr.bf16.gmra.mrb[0].mxu0 %v10053
        %v10130 = vpop.f32.mrb[0].mxu0
        %v10131 = vadd.f32 0.0, %v10130
        %v10132 = vpop.f32.mrb[0].mxu0
        %v10133 = vpop.f32.mrb[0].mxu0
        %v10134 = vadd.f32 0.0, %v10133
        %v10135 = vpop.f32.mrb[0].mxu0
        %10136 = vmatprep.mubr.bf16.mxu0 0
        %10137 = vmatmul.mubr.bf16.gmra.mrb[0].mxu0 %v10056
        %v10138 = vpop.f32.mrb[0].mxu0
        %v10139 = vadd.f32 0.0, %v10138
        %v10140 = vpop.f32.mrb[0].mxu0
        %v10141 = vpop.f32.mrb[0].mxu0
        %v10142 = vadd.f32 0.0, %v10141
        %v10143 = vpop.f32.mrb[0].mxu0
        %10144 = vmatprep.mubr.bf16.mxu0 0
        %10145 = vmatmul.mubr.bf16.gmra.mrb[0].mxu0 %v10059
        %v10146 = vpop.f32.mrb[0].mxu0
        %v10147 = vadd.f32 0.0, %v10146
        %v10148 = vpop.f32.mrb[0].mxu0
        %v10149 = vpop.f32.mrb[0].mxu0
        %v10150 = vadd.f32 0.0, %v10149
        %v10151 = vpop.f32.mrb[0].mxu0
        %10152 = vmatprep.mubr.bf16.mxu0 0
        %10153 = vmatmul.mubr.bf16.gmra.mrb[0].mxu0 %v10062
        %v10154 = vpop.f32.mrb[0].mxu0
        %v10155 = vadd.f32 0.0, %v10154
        %v10156 = vpop.f32.mrb[0].mxu0
        %v10157 = vpop.f32.mrb[0].mxu0
        %v10158 = vadd.f32 0.0, %v10157
        %v10159 = vpop.f32.mrb[0].mxu0
        %10160 = vdwg.mxu0
        %v10161 = vadd.f32 %v9510, %v10099
        %v10162 = vadd.f32 %v9511, %v10102
        %v10163 = vadd.f32 %v9512, %v10107
        %v10164 = vadd.f32 %v9513, %v10110
        %v10165 = vadd.f32 %v9514, %v10115
        %v10166 = vadd.f32 %v9515, %v10118
        %v10167 = vadd.f32 %v9516, %v10123
        %v10168 = vadd.f32 %v9517, %v10126
        %v10169 = vadd.f32 %v9518, %v10131
        %v10170 = vadd.f32 %v9519, %v10134
        %v10171 = vadd.f32 %v9520, %v10139
        %v10172 = vadd.f32 %v9521, %v10142
        %v10173 = vadd.f32 %v9522, %v10147
        %v10174 = vadd.f32 %v9523, %v10150
        %v10175 = vadd.f32 %v9524, %v10155
        %v10176 = vadd.f32 %v9525, %v10158
        %10177 = vxpose.xlu0.b32.start [1/16] %v7597, 128
        %10178 = vxpose.xlu0.b32.cont [2/16] %v7598, 128
        %10179 = vxpose.xlu0.b32.cont [3/16] %v7599, 128
        %10180 = vxpose.xlu0.b32.cont [4/16] %v7600, 128
        %10181 = vxpose.xlu0.b32.cont [5/16] %v7601, 128
        %10182 = vxpose.xlu0.b32.cont [6/16] %v7602, 128
        %10183 = vxpose.xlu0.b32.cont [7/16] %v7603, 128
        %10184 = vxpose.xlu0.b32.cont [8/16] %v7604, 128
        %10185 = vxpose.xlu0.b32.cont [9/16] %v7605, 128
        %10186 = vxpose.xlu0.b32.cont [10/16] %v7606, 128
        %10187 = vxpose.xlu0.b32.cont [11/16] %v7607, 128
        %10188 = vxpose.xlu0.b32.cont [12/16] %v7608, 128
        %10189 = vxpose.xlu0.b32.cont [13/16] %v7609, 128
        %10190 = vxpose.xlu0.b32.cont [14/16] %v7610, 128
        %10191 = vxpose.xlu0.b32.cont [15/16] %v7611, 128
        %10192 = vxpose.xlu0.b32.end [16/16] %v7612, 128
        %v10193 = vpop.trf.xlu0
        %v10194 = vpop.trf.xlu0
        %v10195 = vpop.trf.xlu0
        %v10196 = vpop.trf.xlu0
        %v10197 = vpop.trf.xlu0
        %v10198 = vpop.trf.xlu0
        %v10199 = vpop.trf.xlu0
        %v10200 = vpop.trf.xlu0
        %v10201 = vpop.trf.xlu0
        %v10202 = vpop.trf.xlu0
        %v10203 = vpop.trf.xlu0
        %v10204 = vpop.trf.xlu0
        %v10205 = vpop.trf.xlu0
        %v10206 = vpop.trf.xlu0
        %v10207 = vpop.trf.xlu0
        %v10208 = vpop.trf.xlu0
        %10209 = vxpose.xlu0.b32.start [1/16] %v10161, 128
        %10210 = vxpose.xlu0.b32.cont [2/16] %v10162, 128
        %10211 = vxpose.xlu0.b32.cont [3/16] %v10163, 128
        %10212 = vxpose.xlu0.b32.cont [4/16] %v10164, 128
        %10213 = vxpose.xlu0.b32.cont [5/16] %v10165, 128
        %10214 = vxpose.xlu0.b32.cont [6/16] %v10166, 128
        %10215 = vxpose.xlu0.b32.cont [7/16] %v10167, 128
        %10216 = vxpose.xlu0.b32.cont [8/16] %v10168, 128
        %10217 = vxpose.xlu0.b32.cont [9/16] %v10169, 128
        %10218 = vxpose.xlu0.b32.cont [10/16] %v10170, 128
        %10219 = vxpose.xlu0.b32.cont [11/16] %v10171, 128
        %10220 = vxpose.xlu0.b32.cont [12/16] %v10172, 128
        %10221 = vxpose.xlu0.b32.cont [13/16] %v10173, 128
        %10222 = vxpose.xlu0.b32.cont [14/16] %v10174, 128
        %10223 = vxpose.xlu0.b32.cont [15/16] %v10175, 128
        %10224 = vxpose.xlu0.b32.end [16/16] %v10176, 128
        %v10225 = vpop.trf.xlu0
        %v10226 = vpop.trf.xlu0
        %v10227 = vpop.trf.xlu0
        %v10228 = vpop.trf.xlu0
        %v10229 = vpop.trf.xlu0
        %v10230 = vpop.trf.xlu0
        %v10231 = vpop.trf.xlu0
        %v10232 = vpop.trf.xlu0
        %v10233 = vpop.trf.xlu0
        %v10234 = vpop.trf.xlu0
        %v10235 = vpop.trf.xlu0
        %v10236 = vpop.trf.xlu0
        %v10237 = vpop.trf.xlu0
        %v10238 = vpop.trf.xlu0
        %v10239 = vpop.trf.xlu0
        %v10240 = vpop.trf.xlu0
        %v10241 = vadd.f32 %v3699, %v10193
        %v10242 = vadd.f32 %v3700, %v10225
        %v10243 = vadd.f32 %v3701, %v10194
        %v10244 = vadd.f32 %v3702, %v10226
        %v10245 = vadd.f32 %v3703, %v10195
        %v10246 = vadd.f32 %v3704, %v10227
        %v10247 = vadd.f32 %v3705, %v10196
        %v10248 = vadd.f32 %v3706, %v10228
        %v10249 = vld [vmem:[%s24] sm:$0xff]
        %v10250 = vld [vmem:[%s24 + $0x8] sm:$0xff]
        %v10251 = vld [vmem:[%s24 + $0x10] sm:$0xff]
        %v10252 = vld [vmem:[%s24 + $0x18] sm:$0xff]
        %10254 = vset.pattern.permute.xlu0 0
        %10255 = vperm.xlu0 %10254, %v10249
        %v10256 = vpop.permute.xlu0 %10255
        %10259 = vset.pattern.permute.xlu0 0
        %10260 = vperm.xlu0 %10259, %v10250
        %v10261 = vpop.permute.xlu0 %10260
        %10264 = vset.pattern.permute.xlu0 0
        %10265 = vperm.xlu0 %10264, %v10251
        %v10266 = vpop.permute.xlu0 %10265
        %10269 = vset.pattern.permute.xlu0 0
        %10270 = vperm.xlu0 %10269, %v10252
        %v10271 = vpop.permute.xlu0 %10270
        %v10273 = vadd.f32 %v10241, %v10256
        %v10274 = vadd.f32 %v10242, %v10256
        %v10275 = vadd.f32 %v10243, %v10261
        %v10276 = vadd.f32 %v10244, %v10261
        %v10277 = vadd.f32 %v10245, %v10266
        %v10278 = vadd.f32 %v10246, %v10266
        %v10279 = vadd.f32 %v10247, %v10271
        %v10280 = vadd.f32 %v10248, %v10271
        %10281 = vst [vmem:[%s772] sm:$0xff] %v10273
        %10282 = vst [vmem:[%s772 + $0x8] sm:$0xff] %v10274
        %10283 = vst [vmem:[%s772 + $0x10] sm:$0xff] %v10275
        %10284 = vst [vmem:[%s772 + $0x18] sm:$0xff] %v10276
        %10285 = vst [vmem:[%s772 + $0x20] sm:$0xff] %v10277
        %10286 = vst [vmem:[%s772 + $0x28] sm:$0xff] %v10278
        %10287 = vst [vmem:[%s772 + $0x30] sm:$0xff] %v10279
        %10288 = vst [vmem:[%s772 + $0x38] sm:$0xff] %v10280
        %s10289 = sand.u32 %s582, 1
        %s10290 = scalar_lea.sflag [#allocation3], %s10289
        %s10291 = sand.u32 %s582, 1
        %s10292 = smul.addr %s10291, 64
        %s10293 = scalar_lea.vmem [#allocation2], %s10292
        // Predicated region
        $region121: #{tpu_custom_call.1} parent=119 // pred_check
          %p10294 = pneg %p592
        $region122: #{tpu_custom_call.1} parent=119 // pred_check_branch
          %10296 = sbr.rel (%p10294) target = $region124
        $region123: #{tpu_custom_call.1} parent=119 // pred_region
          %s10298 = ssub.s32 1024, 1024
          %10299 = vsyncadd %s10290, %s10298
          %s10300 = smul.addr %s39, 8
          %s10301 = smul.addr %s10300, 128
          %s10302 = scalar_lea.hbm %s25, %s10301
          %s10303 = sshll.u32 %s10293, 4
          %s10304 = int_to_ptr.vmem [resolvable:$true] %s10303
          %10309 = dma.vmem_to_hbm [thread:$0]  %s10304, 1024, %s10302, %s10290, 256, 256, 16
        $region124: #{tpu_custom_call.1} parent=119 // pred_fallthru
          _
      $region120: #{tpu_custom_call.1} parent=5 // pred_fallthru
        _
      %p10310 = scmp.le.s32.totalorder 2, %s34
      // Predicated region
      $region125: #{tpu_custom_call.1} parent=5 // pred_check
        %p10311 = pneg %p10310
      $region126: #{tpu_custom_call.1} parent=5 // pred_check_branch
        %10313 = sbr.rel (%p10311) target = $region128
      $region127: #{tpu_custom_call.1} parent=5 // pred_region
        %s10314 = ssub.s32 %s34, 2
        // Predicated region
        $region129: #{tpu_custom_call.1} parent=127 // pred_check
          %p10315 = pneg %p598
        $region130: #{tpu_custom_call.1} parent=127 // pred_check_branch
          %10317 = sbr.rel (%p10315) target = $region132
        $region131: #{tpu_custom_call.1} parent=127 // pred_region
          %s10318 = sand.u32 %s583, 1
          %s10319 = scalar_lea.sflag [#allocation3], %s10318
          %s10320 = sand.u32 %s583, 1
          %s10321 = smul.addr %s10320, 64
          %s10322 = scalar_lea.vmem [#allocation2], %s10321
          %10323 = dma.done %s10319, 1024
        $region132: #{tpu_custom_call.1} parent=127 // pred_fallthru
          _
      $region128: #{tpu_custom_call.1} parent=5 // pred_fallthru
        _
    $region6: #{tpu_custom_call.1} parent=1 // loop_footer
      %s38 = sadd.s32 1, %s34
    $region7: #{tpu_custom_call.1} parent=1 // loop_footer_branch
      %33 = sbr.rel target = $region3
    $region8: #{tpu_custom_call.1} parent=1 // loop_exit
      _
    %10324 = vsyncpa [#allocation3], 1
    %s10325 = scalar_lea.sflag [#allocation3], 1
    %10326 = vsyncpa %s10325, 1

</llo_original>
